<compile_context>
chip_gen: v7x
topology: tpu7x:2x2x1
jax: 0.10.0
libtpu: 0.0.40
codegen_flags: <defaults>
</compile_context>

<pallas_src>
import math
from functools import partial

import numpy as np
import jax
import jax.numpy as jnp
from jax import lax
from jax.experimental import pallas as pl
from jax.experimental.pallas import tpu as pltpu

# ----------------------------- configuration --------------------------------
B = 2
IMG_SIZE = (10, 32, 32)
VAE_STRIDE = (2, 8, 8)
PATCH = (5, 1, 1)
VAE_DIM = 4

LAT_T = IMG_SIZE[0] // VAE_STRIDE[0]          # 5
LAT_H = IMG_SIZE[1] // VAE_STRIDE[1]          # 4
LAT_W = IMG_SIZE[2] // VAE_STRIDE[2]          # 4
SEQ_T = LAT_T // PATCH[0]                     # 1
SEQ_H = LAT_H // PATCH[1]                     # 4
SEQ_W = LAT_W // PATCH[2]                     # 4
SEQ_LEN = SEQ_T * SEQ_H * SEQ_W               # 16
TOKEN_DIM = VAE_DIM * PATCH[0] * PATCH[1] * PATCH[2]   # 20

ENC_DIM = 64
DEC_DIM = 64
DEPTH = 2
HEADS = 2
MLP_RATIO = 4.0
BUFFER = 8
LABEL_DIM = 82
HID = int(ENC_DIM * MLP_RATIO)                # 256

DIFF_W = 64
DIFF_D = 2
DIFF_MUL = 4
NUM_DIFF_STEPS = 1000

MASK_RATE = 0.85    # TODO(synk): scipy truncnorm mask-ratio sampling replaced by a fixed deterministic rate.
NUM_MASKED = int(np.ceil(SEQ_LEN * MASK_RATE))          # 14
NKS = SEQ_LEN - NUM_MASKED                              # 2 kept sequence tokens
NK = BUFFER + NKS                                       # 10 kept tokens incl. buffer
LFULL = BUFFER + SEQ_LEN                                # 24


# -------------------- in-kernel math helpers (arrays, not refs) ---------------
def _ln(x, g, b, eps):
    mu = jnp.mean(x, axis=-1, keepdims=True)
    var = jnp.mean((x - mu) ** 2, axis=-1, keepdims=True)
    return (x - mu) * lax.rsqrt(var + eps) * g + b


def _silu(x):
    return x * jax.nn.sigmoid(x)


def _gelu(x):
    # TODO(synk): PyTorch nn.GELU default is exact erf; tanh approximation used here.
    return 0.5 * x * (1.0 + jnp.tanh(0.7978845608028654 * (x + 0.044715 * x * x * x)))


def _block_apply(x, bias, d, attw_ref, fc1w_ref, fc2w_ref, fc1b_ref, vec, voff, *, heads, eps):
    """One timm-style pre-LN ViT block on a folded (B*N, E) slab, all in VMEM.

    Attention runs with a block-diagonal batch mask (bias) so batch stays folded; heads are
    realised via per-head lane masks on K/V (no lane slices / concatenations)."""
    BN, E = x.shape
    dh = E // heads

    n1g, n1b = vec[voff + 0:voff + 1], vec[voff + 1:voff + 2]
    bq, bk, bv = vec[voff + 2:voff + 3], vec[voff + 3:voff + 4], vec[voff + 4:voff + 5]
    bp = vec[voff + 5:voff + 6]
    n2g, n2b = vec[voff + 6:voff + 7], vec[voff + 7:voff + 8]
    b2 = vec[voff + 8:voff + 9]

    h = _ln(x, n1g, n1b, eps)
    # wq / bq are pre-scaled by 1/sqrt(dh) at pack time (no in-kernel scale multiply).
    q = jnp.dot(h, attw_ref[4 * d + 0], preferred_element_type=jnp.float32) + bq
    k = jnp.dot(h, attw_ref[4 * d + 1], preferred_element_type=jnp.float32) + bk
    v = jnp.dot(h, attw_ref[4 * d + 2], preferred_element_type=jnp.float32) + bv

    col = lax.broadcasted_iota(jnp.int32, (1, E), 1)
    attn = jnp.zeros((BN, E), jnp.float32)
    for hd in range(heads):                               # static unroll; no relayouts
        m = ((col >= hd * dh) & (col < (hd + 1) * dh)).astype(jnp.float32)
        kh = k * m                                         # zero non-head lanes
        vh = v * m
        s = lax.dot_general(q, kh, (((1,), (1,)), ((), ())),
                            preferred_element_type=jnp.float32) + bias    # (BN, BN)
        s = s - jnp.max(s, axis=-1, keepdims=True)
        p = jnp.exp(s)
        p = p * pl.reciprocal(jnp.sum(p, axis=-1, keepdims=True), approx=True)
        attn = attn + jnp.dot(p, vh, preferred_element_type=jnp.float32)  # head cols disjoint
    attn = jnp.dot(attn, attw_ref[4 * d + 3], preferred_element_type=jnp.float32) + bp
    x = x + attn

    h2 = _ln(x, n2g, n2b, eps)
    mlp = _gelu(jnp.dot(h2, fc1w_ref[d], preferred_element_type=jnp.float32) + fc1b_ref[d])
    mlp = jnp.dot(mlp, fc2w_ref[d], preferred_element_type=jnp.float32) + b2
    return x + mlp


# ------------------------------ Pallas kernels -------------------------------
def _encoder_kernel(cls_ref, tok_ref, pos_ref, bias_ref, zw_ref, attw_ref,
                    fc1w_ref, fc2w_ref, fc1b_ref, vec_ref, decw_ref, out_ref,
                    *, bsz, nks, buffer_size, depth, heads):
    """Fused: z_proj -> class-emb buffer + pos -> z_proj_ln -> encoder blocks ->
    encoder_norm -> decoder_embed.  Batch folded into the row (sublane) axis."""
    vec = vec_ref[...]                                     # (6 + 9*depth, E)
    E = pos_ref.shape[-1]

    # z_proj on the kept (unmasked) tokens only
    xt = jnp.dot(tok_ref[...], zw_ref[...], preferred_element_type=jnp.float32) + vec[0:1]
    cls = cls_ref[...]                                     # (B, E)

    pieces = []
    for b in range(bsz):                                   # static: [cls buffer | kept tokens]
        pieces.append(jnp.broadcast_to(cls[b:b + 1, :], (buffer_size, E)))
        pieces.append(xt[b * nks:(b + 1) * nks, :])
    x = jnp.concatenate(pieces, axis=0) + pos_ref[...]     # (B*nk, E)

    x = _ln(x, vec[1:2], vec[2:3], 1e-6)                   # z_proj_ln (eps=1e-6, as in torch)

    bias = bias_ref[...]
    for d in range(depth):
        x = _block_apply(x, bias, d, attw_ref, fc1w_ref, fc2w_ref, fc1b_ref,
                         vec, 6 + 9 * d, heads=heads, eps=1e-5)

    x = _ln(x, vec[3:4], vec[4:5], 1e-5)                   # encoder_norm (nn.LayerNorm default eps)
    xd = jnp.dot(x, decw_ref[...], preferred_element_type=jnp.float32) + vec[5:6]
    out_ref[...] = xd.astype(out_ref.dtype)


def _decoder_kernel(x_ref, bias_ref, attw_ref, fc1w_ref, fc2w_ref, fc1b_ref,
                    vec_ref, dpos_ref, out_ref, *, bsz, buffer_size, depth, heads):
    """Fused: decoder blocks -> decoder_norm -> drop buffer rows -> + diffusion pos-embed."""
    vec = vec_ref[...]                                     # (2 + 9*depth, D)
    bias = bias_ref[...]
    Lf = x_ref.shape[0] // bsz
    x = x_ref[...].astype(jnp.float32)                     # (B*Lf, D)

    for d in range(depth):
        x = _block_apply(x, bias, d, attw_ref, fc1w_ref, fc2w_ref, fc1b_ref,
                         vec, 2 + 9 * d, heads=heads, eps=1e-5)

    x = _ln(x, vec[0:1], vec[1:2], 1e-5)                   # decoder_norm

    pieces = [x[b * Lf + buffer_size:(b + 1) * Lf, :] for b in range(bsz)]
    z = jnp.concatenate(pieces, axis=0)                    # (B*SEQ_LEN, D)
    z = z + jnp.concatenate([dpos_ref[...]] * bsz, axis=0)
    out_ref[...] = z.astype(out_ref.dtype)


def _diffloss_kernel(z_ref, tgt_ref, mask_ref, ab_ref, temb_ref, noise_ref,
                     vec_ref, mat_ref, iw_ref, ow_ref, ob_ref, loss_ref,
                     *, num_blocks, mul, eps):
    """Fused DiffLoss MLP: DIFF_MUL tiling (in VMEM), x_t construction, temb MLP, cond proj,
    residual blocks, final LN+proj, masked MSE.  Only the (1,1) scalar loss leaves VMEM."""
    vec = vec_ref[...]                                     # (6 + 4*num_blocks, W)

    # repeat the per-token rows `mul` times in VMEM (no 4x HBM materialisation)
    z = jnp.concatenate([z_ref[...]] * mul, axis=0)        # (N, D)
    target = jnp.concatenate([tgt_ref[...]] * mul, axis=0)  # (N, C)
    m = jnp.concatenate([mask_ref[...]] * mul, axis=0)     # (N, 1)

    ab = ab_ref[...]                                       # (N, 1)
    noise = noise_ref[...]                                 # (N, C)
    x_t = jnp.sqrt(ab) * target + jnp.sqrt(1.0 - ab) * noise

    temb = _silu(jnp.dot(temb_ref[...], mat_ref[0], preferred_element_type=jnp.float32) + vec[0:1])
    temb = jnp.dot(temb, mat_ref[1], preferred_element_type=jnp.float32) + vec[1:2]
    cond = jnp.dot(z, mat_ref[2], preferred_element_type=jnp.float32) + vec[2:3]
    y = temb + cond

    h = _silu(jnp.dot(x_t, iw_ref[...], preferred_element_type=jnp.float32) + vec[3:4])
    for d in range(num_blocks):
        g = vec[6 + 4 * d:7 + 4 * d]
        bb = vec[7 + 4 * d:8 + 4 * d]
        b1 = vec[8 + 4 * d:9 + 4 * d]
        b2 = vec[9 + 4 * d:10 + 4 * d]
        r = _ln(h, g, bb, eps)
        r = jnp.dot(r, mat_ref[3 + 2 * d], preferred_element_type=jnp.float32) + b1
        r = _silu(r + y)
        h = h + jnp.dot(r, mat_ref[4 + 2 * d], preferred_element_type=jnp.float32) + b2

    h = _ln(h, vec[4:5], vec[5:6], eps)
    pred = jnp.dot(h, ow_ref[...], preferred_element_type=jnp.float32) + ob_ref[...]

    diff = pred - noise
    per = jnp.sum(diff * diff, axis=-1, keepdims=True) * (1.0 / pred.shape[-1])  # (N,1)
    num = jnp.sum(per * m)
    den = jnp.sum(m)
    loss_ref[...] = jnp.reshape(num / den, (1, 1))


# ------------------------------ Pallas wrappers -------------------------------
def _full(shape):
    return pl.BlockSpec(shape, lambda i: (0,) * len(shape))


def _block_diag_bias(bsz, n):
    """(bsz*n, bsz*n) additive mask keeping attention within each batch element."""
    r = np.arange(bsz * n) // n
    return jnp.asarray(np.where(r[:, None] == r[None, :], 0.0, -1e30), dtype=jnp.float32)


_PARAMS_1GRID = pltpu.CompilerParams(dimension_semantics=("arbitrary",))


def pallas_encoder(enc, cls_emb, tok_keep, pos_keep, bsz):
    nks = tok_keep.shape[0] // bsz
    nk = pos_keep.shape[0] // bsz
    bias = _block_diag_bias(bsz, nk)
    args = [cls_emb, tok_keep, pos_keep, bias, enc["zw"], enc["attw"],
            enc["fc1w"], enc["fc2w"], enc["fc1b"], enc["vec"], enc["decw"]]
    out_shape = jax.ShapeDtypeStruct((bsz * nk, DEC_DIM), jnp.float32)
    return pl.pallas_call(
        partial(_encoder_kernel, bsz=bsz, nks=nks, buffer_size=BUFFER,
                depth=DEPTH, heads=HEADS),
        out_shape=out_shape,
        grid=(1,),
        in_specs=[_full(a.shape) for a in args],
        out_specs=_full(out_shape.shape),
        compiler_params=_PARAMS_1GRID,
    )(*args)


def pallas_decoder(dec, x_flat, bsz):
    Lf = x_flat.shape[0] // bsz
    bias = _block_diag_bias(bsz, Lf)
    args = [x_flat, bias, dec["attw"], dec["fc1w"], dec["fc2w"], dec["fc1b"],
            dec["vec"], dec["dpos"]]
    out_shape = jax.ShapeDtypeStruct((bsz * SEQ_LEN, DEC_DIM), jnp.float32)
    return pl.pallas_call(
        partial(_decoder_kernel, bsz=bsz, buffer_size=BUFFER, depth=DEPTH, heads=HEADS),
        out_shape=out_shape,
        grid=(1,),
        in_specs=[_full(a.shape) for a in args],
        out_specs=_full(out_shape.shape),
        compiler_params=_PARAMS_1GRID,
    )(*args)


def pallas_diffloss(diff, z, target, mask, ab_t, temb_raw, noise):
    args = [z, target, mask, ab_t, temb_raw, noise,
            diff["vec"], diff["mat"], diff["iw"], diff["ow"], diff["ob"]]
    out = pl.pallas_call(
        partial(_diffloss_kernel, num_blocks=DIFF_D, mul=DIFF_MUL, eps=1e-6),
        out_shape=jax.ShapeDtypeStruct((1, 1), jnp.float32),
        grid=(1,),
        in_specs=[_full(a.shape) for a in args],
        out_specs=_full((1, 1)),
        compiler_params=_PARAMS_1GRID,
    )(*args)
    return out[0, 0]


# ------------------------------ model pieces ---------------------------------
def patchify(x):
    b, c, t, h, w = x.shape
    t_, h_, w_ = t // PATCH[0], h // PATCH[1], w // PATCH[2]
    x = x.reshape(b, c, t_, PATCH[0], h_, PATCH[1], w_, PATCH[2])
    x = jnp.einsum("nctphqwr->nthwcpqr", x)
    return x.reshape(b, t_ * h_ * w_, c * PATCH[0] * PATCH[1] * PATCH[2])


def timestep_embedding(t, dim):
    half = dim // 2
    freqs = jnp.exp(-math.log(10000.0) * jnp.arange(half, dtype=jnp.float32) / half)
    args = t.astype(jnp.float32)[:, None] * freqs[None, :]
    return jnp.concatenate([jnp.cos(args), jnp.sin(args)], axis=-1)


def cpgg_forward(packed, imgs, labels, key):
    """Eval-mode CPGG.forward: returns the diffusion loss (scalar array)."""
    bsz = imgs.shape[0]
    k_ord, k_t, k_noise = jax.random.split(key, 3)

    # class embedding (tiny 82->64 linear: plain XLA)
    class_embedding = labels @ packed["class_emb_w"] + packed["class_emb_b"]

    # patchify + masking
    x = patchify(imgs)                                     # (B, SEQ_LEN, TOKEN_DIM)
    gt_latents = x
    orders = jax.vmap(lambda k: jax.random.permutation(k, SEQ_LEN))(jax.random.split(k_ord, bsz))
    mask = jnp.zeros((bsz, SEQ_LEN), jnp.float32)
    mask = mask.at[jnp.arange(bsz)[:, None], orders[:, :NUM_MASKED]].set(1.0)

    # kept (unmasked) sequence positions, original order
    keep_seq = jnp.argsort(mask, axis=-1, stable=True)[:, :NKS]                  # (B, NKS)
    tok_keep = jnp.take_along_axis(x, keep_seq[..., None], axis=1).reshape(bsz * NKS, TOKEN_DIM)
    pos_seq = jnp.take_along_axis(
        jnp.broadcast_to(packed["enc_pos"][:, BUFFER:], (bsz, SEQ_LEN, ENC_DIM)),
        keep_seq[..., None], axis=1)
    pos_keep = jnp.concatenate(
        [jnp.broadcast_to(packed["enc_pos"][:, :BUFFER], (bsz, BUFFER, ENC_DIM)), pos_seq],
        axis=1).reshape(bsz * NK, ENC_DIM)

    # ---- fused MAE encoder (+ decoder_embed) ----
    xd = pallas_encoder(packed["enc"], class_embedding, tok_keep, pos_keep, bsz)
    xd = xd.reshape(bsz, NK, DEC_DIM)

    # ---- scatter into mask tokens (data-dependent glue in XLA) ----
    keep_full = jnp.concatenate(
        [jnp.broadcast_to(jnp.arange(BUFFER)[None, :], (bsz, BUFFER)), BUFFER + keep_seq], axis=1)
    x_after_pad = jnp.broadcast_to(packed["mask_token"], (bsz, LFULL, DEC_DIM))
    x_after_pad = x_after_pad.at[jnp.arange(bsz)[:, None], keep_full].set(xd)
    x_dec_in = (x_after_pad + packed["dec_pos"]).reshape(bsz * LFULL, DEC_DIM)

    # ---- fused MAE decoder (+ diff_pos add) ----
    z_diff = pallas_decoder(packed["dec"], x_dec_in, bsz)            # (B*SEQ_LEN, DEC_DIM)

    # decoder_pred(z) is dead compute when use_mae_loss=False (module default) -> dropped.

    # ---- forward_loss: DiffLoss with diffusion_batch_mul, one fused kernel ----
    # TODO(synk): DiffLoss's SimpleMLPAdaLN + gaussian-diffusion machinery is simplified to a
    # conditional MLP noise-predictor with linear beta schedule and masked MSE on the noise.
    M = bsz * SEQ_LEN
    N = M * DIFF_MUL
    t = jax.random.randint(k_t, (N,), 0, NUM_DIFF_STEPS)
    noise = jax.random.normal(k_noise, (N, TOKEN_DIM), jnp.float32)
    betas = jnp.linspace(1e-4, 0.02, NUM_DIFF_STEPS, dtype=jnp.float32)
    alpha_bar = jnp.cumprod(1.0 - betas)
    ab_t = alpha_bar[t][:, None]
    temb_raw = timestep_embedding(t, DIFF_W)

    loss = pallas_diffloss(packed["diff"], z_diff,
                           gt_latents.reshape(M, TOKEN_DIM),
                           mask.reshape(M, 1),
                           ab_t, temb_raw, noise)
    return loss


# ------------------------------ parameter init --------------------------------
def make_params(key):
    keys = iter(jax.random.split(key, 512))

    def nk():
        return next(keys)

    def xavier(fi, fo):
        lim = math.sqrt(6.0 / (fi + fo))
        return jax.random.uniform(nk(), (fi, fo), jnp.float32, -lim, lim)

    def normal(shape, std=0.02):
        return (jax.random.normal(nk(), shape) * std).astype(jnp.float32)

    def zeros(shape):
        return jnp.zeros(shape, jnp.float32)

    def ones(shape):
        return jnp.ones(shape, jnp.float32)

    def block_params(dim, hidden):
        return dict(
            norm1_g=ones((dim,)), norm1_b=zeros((dim,)),
            qkv_w=xavier(dim, 3 * dim), qkv_b=zeros((3 * dim,)),
            proj_w=xavier(dim, dim), proj_b=zeros((dim,)),
            norm2_g=ones((dim,)), norm2_b=zeros((dim,)),
            fc1_w=xavier(dim, hidden), fc1_b=zeros((hidden,)),
            fc2_w=xavier(hidden, dim), fc2_b=zeros((dim,)),
        )

    params = dict(
        class_emb_w=normal((LABEL_DIM, ENC_DIM)), class_emb_b=zeros((ENC_DIM,)),
        z_proj_w=xavier(TOKEN_DIM, ENC_DIM), z_proj_b=zeros((ENC_DIM,)),
        z_proj_ln_g=ones((ENC_DIM,)), z_proj_ln_b=zeros((ENC_DIM,)),
        enc_pos=normal((1, LFULL, ENC_DIM)),
        enc_blocks=[block_params(ENC_DIM, HID) for _ in range(DEPTH)],
        enc_norm_g=ones((ENC_DIM,)), enc_norm_b=zeros((ENC_DIM,)),
        dec_embed_w=xavier(ENC_DIM, DEC_DIM), dec_embed_b=zeros((DEC_DIM,)),
        mask_token=normal((1, 1, DEC_DIM)),
        dec_pos=normal((1, LFULL, DEC_DIM)),
        dec_blocks=[block_params(DEC_DIM, int(DEC_DIM * MLP_RATIO)) for _ in range(DEPTH)],
        dec_norm_g=ones((DEC_DIM,)), dec_norm_b=zeros((DEC_DIM,)),
        diff_pos=normal((1, SEQ_LEN, DEC_DIM)),
        # decoder_pred params kept for structural parity (unused: use_mae_loss=False)
        dec_pred_w=normal((DEC_DIM, TOKEN_DIM)), dec_pred_b=zeros((TOKEN_DIM,)),
        diffloss=dict(
            tw1=xavier(DIFF_W, DIFF_W), tb1=zeros((DIFF_W,)),
            tw2=xavier(DIFF_W, DIFF_W), tb2=zeros((DIFF_W,)),
            cw=xavier(DEC_DIM, DIFF_W), cb=zeros((DIFF_W,)),
            iw=xavier(TOKEN_DIM, DIFF_W), ib=zeros((DIFF_W,)),
            blocks=[dict(g=ones((DIFF_W,)), b=zeros((DIFF_W,)),
                         w1=xavier(DIFF_W, DIFF_W), b1=zeros((DIFF_W,)),
                         w2=xavier(DIFF_W, DIFF_W), b2=zeros((DIFF_W,)))
                    for _ in range(DIFF_D)],
            out_g=ones((DIFF_W,)), out_b=zeros((DIFF_W,)),
            ow=xavier(DIFF_W, TOKEN_DIM), ob=zeros((TOKEN_DIM,)),
        ),
    )
    return params


def pack_params(params):
    """One-time weight packing: fold 1/sqrt(dh) into Q, split QKV, stack per-depth weights
    into slabs and gather all (dim,) vectors into one (rows, dim) slab per kernel."""

    def pack_stack(blocks, front_vecs):
        attw, fc1w, fc2w, fc1b = [], [], [], []
        vrows = list(front_vecs)
        for blk in blocks:
            E = blk["qkv_w"].shape[0]
            scale = (E // HEADS) ** -0.5
            wq = blk["qkv_w"][:, :E] * scale
            wk = blk["qkv_w"][:, E:2 * E]
            wv = blk["qkv_w"][:, 2 * E:]
            bq = blk["qkv_b"][:E] * scale
            bk = blk["qkv_b"][E:2 * E]
            bv = blk["qkv_b"][2 * E:]
            attw += [wq, wk, wv, blk["proj_w"]]
            fc1w.append(blk["fc1_w"])
            fc2w.append(blk["fc2_w"])
            fc1b.append(blk["fc1_b"][None, :])
            vrows += [blk["norm1_g"], blk["norm1_b"], bq, bk, bv, blk["proj_b"],
                      blk["norm2_g"], blk["norm2_b"], blk["fc2_b"]]
        return dict(attw=jnp.stack(attw),              # (4*depth, E, E)  [q,k,v,proj]*depth
                    fc1w=jnp.stack(fc1w),              # (depth, E, H)
                    fc2w=jnp.stack(fc2w),              # (depth, H, E)
                    fc1b=jnp.stack(fc1b),              # (depth, 1, H)
                    vec=jnp.stack(vrows))              # (front + 9*depth, E)

    enc = pack_stack(params["enc_blocks"],
                     [params["z_proj_b"], params["z_proj_ln_g"], params["z_proj_ln_b"],
                      params["enc_norm_g"], params["enc_norm_b"], params["dec_embed_b"]])
    enc["zw"] = params["z_proj_w"]
    enc["decw"] = params["dec_embed_w"]

    dec = pack_stack(params["dec_blocks"], [params["dec_norm_g"], params["dec_norm_b"]])
    dec["dpos"] = params["diff_pos"][0]                # (SEQ_LEN, D)

    dl = params["diffloss"]
    vrows = [dl["tb1"], dl["tb2"], dl["cb"], dl["ib"], dl["out_g"], dl["out_b"]]
    mats = [dl["tw1"], dl["tw2"], dl["cw"]]
    for blk in dl["blocks"]:
        vrows += [blk["g"], blk["b"], blk["b1"], blk["b2"]]
        mats += [blk["w1"], blk["w2"]]
    diff = dict(vec=jnp.stack(vrows),                  # (6 + 4*DIFF_D, W)
                mat=jnp.stack(mats),                   # (3 + 2*DIFF_D, W, W)
                iw=dl["iw"], ow=dl["ow"], ob=dl["ob"][None, :])

    return dict(
        class_emb_w=params["class_emb_w"], class_emb_b=params["class_emb_b"],
        enc_pos=params["enc_pos"], dec_pos=params["dec_pos"],
        mask_token=params["mask_token"],
        enc=enc, dec=dec, diff=diff,
    )


# --------------------------------- main ---------------------------------------
if __name__ == "__main__":
    root = jax.random.PRNGKey(0)
    k_param, k_img, k_lbl, k_fwd = jax.random.split(root, 4)

    params = make_params(k_param)
    packed = pack_params(params)

    imgs = jax.random.normal(k_img, (B, VAE_DIM, LAT_T, LAT_H, LAT_W), jnp.float32)  # NCTHW latents
    labels = jax.random.normal(k_lbl, (B, LABEL_DIM), jnp.float32)

    forward = jax.jit(cpgg_forward)
    loss = forward(packed, imgs, labels, k_fwd)
    jax.block_until_ready(loss)
    assert bool(jnp.isfinite(loss))

    # host-side (outside jit), mirroring the torch loss_dict with use_mae_loss=False
    loss_dict = {"diffloss": float(loss), "mae_loss": 0}
    print("KERNEL_OK")
</pallas_src>

<mosaic_0001>
module attributes {stable_mosaic.version = 11 : i64} {
  func.func @_encoder_kernel(%arg0: i32, %arg1: memref<2x64xf32, #tpu.memory_space<vmem>>, %arg2: memref<4x20xf32, #tpu.memory_space<vmem>>, %arg3: memref<20x64xf32, #tpu.memory_space<vmem>>, %arg4: memref<20x20xf32, #tpu.memory_space<vmem>>, %arg5: memref<20x64xf32, #tpu.memory_space<vmem>>, %arg6: memref<8x64x64xf32, #tpu.memory_space<vmem>>, %arg7: memref<2x64x256xf32, #tpu.memory_space<vmem>>, %arg8: memref<2x256x64xf32, #tpu.memory_space<vmem>>, %arg9: memref<2x1x256xf32, #tpu.memory_space<vmem>>, %arg10: memref<24x64xf32, #tpu.memory_space<vmem>>, %arg11: memref<64x64xf32, #tpu.memory_space<vmem>>, %arg12: memref<20x64xf32, #tpu.memory_space<vmem>>) attributes {dimension_semantics = [#tpu.dimension_semantics<arbitrary>], iteration_bounds = array<i64: 1>, scalar_prefetch = 0 : i64, scratch_operands = 0 : i64, tpu.core_type = #tpu.core_type<tc>, window_params = [{pipeline_mode = #tpu.pipeline_mode<synchronous>, transform_indices = @transform_0, window_bounds = array<i64: 2, 64>}, {pipeline_mode = #tpu.pipeline_mode<synchronous>, transform_indices = @transform_1, window_bounds = array<i64: 4, 20>}, {pipeline_mode = #tpu.pipeline_mode<synchronous>, transform_indices = @transform_2, window_bounds = array<i64: 20, 64>}, {pipeline_mode = #tpu.pipeline_mode<synchronous>, transform_indices = @transform_3, window_bounds = array<i64: 20, 20>}, {pipeline_mode = #tpu.pipeline_mode<synchronous>, transform_indices = @transform_4, window_bounds = array<i64: 20, 64>}, {pipeline_mode = #tpu.pipeline_mode<synchronous>, transform_indices = @transform_5, window_bounds = array<i64: 8, 64, 64>}, {pipeline_mode = #tpu.pipeline_mode<synchronous>, transform_indices = @transform_6, window_bounds = array<i64: 2, 64, 256>}, {pipeline_mode = #tpu.pipeline_mode<synchronous>, transform_indices = @transform_7, window_bounds = array<i64: 2, 256, 64>}, {pipeline_mode = #tpu.pipeline_mode<synchronous>, transform_indices = @transform_8, window_bounds = array<i64: 2, 1, 256>}, {pipeline_mode = #tpu.pipeline_mode<synchronous>, transform_indices = @transform_9, window_bounds = array<i64: 24, 64>}, {pipeline_mode = #tpu.pipeline_mode<synchronous>, transform_indices = @transform_10, window_bounds = array<i64: 64, 64>}, {pipeline_mode = #tpu.pipeline_mode<synchronous>, transform_indices = @transform_11, window_bounds = array<i64: 20, 64>}]} {
    %c0 = arith.constant 0 : index
    %c0_0 = arith.constant 0 : index
    %0 = vector.load %arg10[%c0, %c0_0] : memref<24x64xf32, #tpu.memory_space<vmem>>, vector<24x64xf32>
    %c0_1 = arith.constant 0 : index
    %c0_2 = arith.constant 0 : index
    %1 = vector.load %arg2[%c0_1, %c0_2] : memref<4x20xf32, #tpu.memory_space<vmem>>, vector<4x20xf32>
    %c0_3 = arith.constant 0 : index
    %c0_4 = arith.constant 0 : index
    %2 = vector.load %arg5[%c0_3, %c0_4] : memref<20x64xf32, #tpu.memory_space<vmem>>, vector<20x64xf32>
    %cst = arith.constant dense<0.000000e+00> : vector<4x64xf32>
    %3 = tpu.matmul %1, %2, %cst {dimension_numbers = #tpu.dot_dimension_numbers<[1], [0], [0], [1], [0, 0, 1, 1], [], []>} : vector<4x20xf32>, vector<20x64xf32>, vector<4x64xf32> -> vector<4x64xf32>
    %4 = vector.extract_strided_slice %0 {offsets = [0, 0], sizes = [1, 64], strides = [1, 1]} : vector<24x64xf32> to vector<1x64xf32>
    %5 = vector.broadcast %4 : vector<1x64xf32> to vector<4x64xf32>
    %6 = arith.addf %3, %5 : vector<4x64xf32>
    %c0_5 = arith.constant 0 : index
    %c0_6 = arith.constant 0 : index
    %7 = vector.load %arg1[%c0_5, %c0_6] : memref<2x64xf32, #tpu.memory_space<vmem>>, vector<2x64xf32>
    %8 = vector.extract_strided_slice %7 {offsets = [0, 0], sizes = [1, 64], strides = [1, 1]} : vector<2x64xf32> to vector<1x64xf32>
    %9 = vector.shape_cast %8 : vector<1x64xf32> to vector<1x64xf32>
    %10 = vector.broadcast %9 : vector<1x64xf32> to vector<8x64xf32>
    %11 = vector.extract_strided_slice %6 {offsets = [0, 0], sizes = [2, 64], strides = [1, 1]} : vector<4x64xf32> to vector<2x64xf32>
    %12 = vector.extract_strided_slice %7 {offsets = [1, 0], sizes = [1, 64], strides = [1, 1]} : vector<2x64xf32> to vector<1x64xf32>
    %13 = vector.shape_cast %12 : vector<1x64xf32> to vector<1x64xf32>
    %14 = vector.broadcast %13 : vector<1x64xf32> to vector<8x64xf32>
    %15 = vector.extract_strided_slice %6 {offsets = [2, 0], sizes = [2, 64], strides = [1, 1]} : vector<4x64xf32> to vector<2x64xf32>
    %16 = tpu.concatenate %10, %11, %14, %15 in 0 : vector<8x64xf32>, vector<2x64xf32>, vector<8x64xf32>, vector<2x64xf32> -> vector<20x64xf32>
    %c0_7 = arith.constant 0 : index
    %c0_8 = arith.constant 0 : index
    %17 = vector.load %arg3[%c0_7, %c0_8] : memref<20x64xf32, #tpu.memory_space<vmem>>, vector<20x64xf32>
    %18 = arith.addf %16, %17 : vector<20x64xf32>
    %19 = vector.extract_strided_slice %0 {offsets = [1, 0], sizes = [1, 64], strides = [1, 1]} : vector<24x64xf32> to vector<1x64xf32>
    %20 = vector.extract_strided_slice %0 {offsets = [2, 0], sizes = [1, 64], strides = [1, 1]} : vector<24x64xf32> to vector<1x64xf32>
    %cst_9 = arith.constant dense<0.000000e+00> : vector<20xf32>
    %21 = vector.multi_reduction <add>, %18, %cst_9 [1] : vector<20x64xf32> to vector<20xf32>
    %22 = vector.shape_cast %21 : vector<20xf32> to vector<20x1xf32>
    %cst_10 = arith.constant 6.400000e+01 : f32
    %23 = vector.broadcast %cst_10 : f32 to vector<20x1xf32>
    %24 = arith.divf %22, %23 : vector<20x1xf32>
    %25 = vector.broadcast %24 : vector<20x1xf32> to vector<20x64xf32>
    %26 = arith.subf %18, %25 : vector<20x64xf32>
    %27 = arith.mulf %26, %26 : vector<20x64xf32>
    %cst_11 = arith.constant dense<0.000000e+00> : vector<20xf32>
    %28 = vector.multi_reduction <add>, %27, %cst_11 [1] : vector<20x64xf32> to vector<20xf32>
    %29 = vector.shape_cast %28 : vector<20xf32> to vector<20x1xf32>
    %cst_12 = arith.constant 6.400000e+01 : f32
    %30 = vector.broadcast %cst_12 : f32 to vector<20x1xf32>
    %31 = arith.divf %29, %30 : vector<20x1xf32>
    %32 = vector.broadcast %24 : vector<20x1xf32> to vector<20x64xf32>
    %33 = arith.subf %18, %32 : vector<20x64xf32>
    %cst_13 = arith.constant 9.99999997E-7 : f32
    %34 = vector.broadcast %cst_13 : f32 to vector<20x1xf32>
    %35 = arith.addf %31, %34 : vector<20x1xf32>
    %36 = math.rsqrt %35 : vector<20x1xf32>
    %37 = vector.broadcast %36 : vector<20x1xf32> to vector<20x64xf32>
    %38 = arith.mulf %33, %37 : vector<20x64xf32>
    %39 = vector.broadcast %19 : vector<1x64xf32> to vector<20x64xf32>
    %40 = arith.mulf %38, %39 : vector<20x64xf32>
    %41 = vector.broadcast %20 : vector<1x64xf32> to vector<20x64xf32>
    %42 = arith.addf %40, %41 : vector<20x64xf32>
    %c0_14 = arith.constant 0 : index
    %c0_15 = arith.constant 0 : index
    %43 = vector.load %arg4[%c0_14, %c0_15] : memref<20x20xf32, #tpu.memory_space<vmem>>, vector<20x20xf32>
    %44 = vector.extract_strided_slice %0 {offsets = [6, 0], sizes = [1, 64], strides = [1, 1]} : vector<24x64xf32> to vector<1x64xf32>
    %45 = vector.extract_strided_slice %0 {offsets = [7, 0], sizes = [1, 64], strides = [1, 1]} : vector<24x64xf32> to vector<1x64xf32>
    %46 = vector.extract_strided_slice %0 {offsets = [8, 0], sizes = [1, 64], strides = [1, 1]} : vector<24x64xf32> to vector<1x64xf32>
    %47 = vector.extract_strided_slice %0 {offsets = [9, 0], sizes = [1, 64], strides = [1, 1]} : vector<24x64xf32> to vector<1x64xf32>
    %48 = vector.extract_strided_slice %0 {offsets = [10, 0], sizes = [1, 64], strides = [1, 1]} : vector<24x64xf32> to vector<1x64xf32>
    %49 = vector.extract_strided_slice %0 {offsets = [11, 0], sizes = [1, 64], strides = [1, 1]} : vector<24x64xf32> to vector<1x64xf32>
    %50 = vector.extract_strided_slice %0 {offsets = [12, 0], sizes = [1, 64], strides = [1, 1]} : vector<24x64xf32> to vector<1x64xf32>
    %51 = vector.extract_strided_slice %0 {offsets = [13, 0], sizes = [1, 64], strides = [1, 1]} : vector<24x64xf32> to vector<1x64xf32>
    %52 = vector.extract_strided_slice %0 {offsets = [14, 0], sizes = [1, 64], strides = [1, 1]} : vector<24x64xf32> to vector<1x64xf32>
    %cst_16 = arith.constant dense<0.000000e+00> : vector<20xf32>
    %53 = vector.multi_reduction <add>, %42, %cst_16 [1] : vector<20x64xf32> to vector<20xf32>
    %54 = vector.shape_cast %53 : vector<20xf32> to vector<20x1xf32>
    %cst_17 = arith.constant 6.400000e+01 : f32
    %55 = vector.broadcast %cst_17 : f32 to vector<20x1xf32>
    %56 = arith.divf %54, %55 : vector<20x1xf32>
    %57 = vector.broadcast %56 : vector<20x1xf32> to vector<20x64xf32>
    %58 = arith.subf %42, %57 : vector<20x64xf32>
    %59 = arith.mulf %58, %58 : vector<20x64xf32>
    %cst_18 = arith.constant dense<0.000000e+00> : vector<20xf32>
    %60 = vector.multi_reduction <add>, %59, %cst_18 [1] : vector<20x64xf32> to vector<20xf32>
    %61 = vector.shape_cast %60 : vector<20xf32> to vector<20x1xf32>
    %cst_19 = arith.constant 6.400000e+01 : f32
    %62 = vector.broadcast %cst_19 : f32 to vector<20x1xf32>
    %63 = arith.divf %61, %62 : vector<20x1xf32>
    %64 = vector.broadcast %56 : vector<20x1xf32> to vector<20x64xf32>
    %65 = arith.subf %42, %64 : vector<20x64xf32>
    %cst_20 = arith.constant 9.99999974E-6 : f32
    %66 = vector.broadcast %cst_20 : f32 to vector<20x1xf32>
    %67 = arith.addf %63, %66 : vector<20x1xf32>
    %68 = math.rsqrt %67 : vector<20x1xf32>
    %69 = vector.broadcast %68 : vector<20x1xf32> to vector<20x64xf32>
    %70 = arith.mulf %65, %69 : vector<20x64xf32>
    %71 = vector.broadcast %44 : vector<1x64xf32> to vector<20x64xf32>
    %72 = arith.mulf %70, %71 : vector<20x64xf32>
    %73 = vector.broadcast %45 : vector<1x64xf32> to vector<20x64xf32>
    %74 = arith.addf %72, %73 : vector<20x64xf32>
    %c0_21 = arith.constant 0 : index
    %c0_22 = arith.constant 0 : index
    %c0_23 = arith.constant 0 : index
    %75 = vector.load %arg6[%c0_21, %c0_22, %c0_23] : memref<8x64x64xf32, #tpu.memory_space<vmem>>, vector<1x64x64xf32>
    %76 = vector.shape_cast %75 : vector<1x64x64xf32> to vector<64x64xf32>
    %cst_24 = arith.constant dense<0.000000e+00> : vector<20x64xf32>
    %77 = tpu.matmul %74, %76, %cst_24 {dimension_numbers = #tpu.dot_dimension_numbers<[1], [0], [0], [1], [0, 0, 1, 1], [], []>} : vector<20x64xf32>, vector<64x64xf32>, vector<20x64xf32> -> vector<20x64xf32>
    %78 = vector.broadcast %46 : vector<1x64xf32> to vector<20x64xf32>
    %79 = arith.addf %77, %78 : vector<20x64xf32>
    %c1 = arith.constant 1 : index
    %c0_25 = arith.constant 0 : index
    %c0_26 = arith.constant 0 : index
    %80 = vector.load %arg6[%c1, %c0_25, %c0_26] : memref<8x64x64xf32, #tpu.memory_space<vmem>>, vector<1x64x64xf32>
    %81 = vector.shape_cast %80 : vector<1x64x64xf32> to vector<64x64xf32>
    %cst_27 = arith.constant dense<0.000000e+00> : vector<20x64xf32>
    %82 = tpu.matmul %74, %81, %cst_27 {dimension_numbers = #tpu.dot_dimension_numbers<[1], [0], [0], [1], [0, 0, 1, 1], [], []>} : vector<20x64xf32>, vector<64x64xf32>, vector<20x64xf32> -> vector<20x64xf32>
    %83 = vector.broadcast %47 : vector<1x64xf32> to vector<20x64xf32>
    %84 = arith.addf %82, %83 : vector<20x64xf32>
    %c2 = arith.constant 2 : index
    %c0_28 = arith.constant 0 : index
    %c0_29 = arith.constant 0 : index
    %85 = vector.load %arg6[%c2, %c0_28, %c0_29] : memref<8x64x64xf32, #tpu.memory_space<vmem>>, vector<1x64x64xf32>
    %86 = vector.shape_cast %85 : vector<1x64x64xf32> to vector<64x64xf32>
    %cst_30 = arith.constant dense<0.000000e+00> : vector<20x64xf32>
    %87 = tpu.matmul %74, %86, %cst_30 {dimension_numbers = #tpu.dot_dimension_numbers<[1], [0], [0], [1], [0, 0, 1, 1], [], []>} : vector<20x64xf32>, vector<64x64xf32>, vector<20x64xf32> -> vector<20x64xf32>
    %88 = vector.broadcast %48 : vector<1x64xf32> to vector<20x64xf32>
    %89 = arith.addf %87, %88 : vector<20x64xf32>
    %90 = tpu.iota {dimensions = array<i32: 1>} : vector<1x64xi32>
    %cst_31 = arith.constant 0.000000e+00 : f32
    %91 = vector.broadcast %cst_31 : f32 to vector<20x64xf32>
    %c0_i32 = arith.constant 0 : i32
    %92 = vector.broadcast %c0_i32 : i32 to vector<1x64xi32>
    %93 = arith.cmpi sge, %90, %92 : vector<1x64xi32>
    %c32_i32 = arith.constant 32 : i32
    %94 = vector.broadcast %c32_i32 : i32 to vector<1x64xi32>
    %95 = arith.cmpi slt, %90, %94 : vector<1x64xi32>
    %96 = arith.andi %93, %95 : vector<1x64xi1>
    %97 = arith.extui %96 : vector<1x64xi1> to vector<1x64xi32>
    %98 = arith.sitofp %97 : vector<1x64xi32> to vector<1x64xf32>
    %99 = vector.broadcast %98 : vector<1x64xf32> to vector<20x64xf32>
    %100 = arith.mulf %84, %99 : vector<20x64xf32>
    %101 = vector.broadcast %98 : vector<1x64xf32> to vector<20x64xf32>
    %102 = arith.mulf %89, %101 : vector<20x64xf32>
    %cst_32 = arith.constant dense<0.000000e+00> : vector<20x20xf32>
    %103 = tpu.matmul %79, %100, %cst_32 {dimension_numbers = #tpu.dot_dimension_numbers<[1], [1], [0], [0], [0, 0, 1, 0], [], []>} : vector<20x64xf32>, vector<20x64xf32>, vector<20x20xf32> -> vector<20x20xf32>
    %104 = arith.addf %103, %43 : vector<20x20xf32>
    %cst_33 = arith.constant dense<0xFF800000> : vector<20xf32>
    %105 = vector.multi_reduction <maximumf>, %104, %cst_33 [1] : vector<20x20xf32> to vector<20xf32>
    %106 = vector.shape_cast %105 : vector<20xf32> to vector<20x1xf32>
    %107 = vector.broadcast %106 : vector<20x1xf32> to vector<20x20xf32>
    %108 = arith.subf %104, %107 : vector<20x20xf32>
    %109 = math.exp %108 : vector<20x20xf32>
    %cst_34 = arith.constant dense<0.000000e+00> : vector<20xf32>
    %110 = vector.multi_reduction <add>, %109, %cst_34 [1] : vector<20x20xf32> to vector<20xf32>
    %111 = vector.shape_cast %110 : vector<20xf32> to vector<20x1xf32>
    %112 = tpu.reciprocal %111 {approx = true} : vector<20x1xf32> -> vector<20x1xf32>
    %113 = vector.broadcast %112 : vector<20x1xf32> to vector<20x20xf32>
    %114 = arith.mulf %109, %113 : vector<20x20xf32>
    %cst_35 = arith.constant dense<0.000000e+00> : vector<20x64xf32>
    %115 = tpu.matmul %114, %102, %cst_35 {dimension_numbers = #tpu.dot_dimension_numbers<[1], [0], [0], [1], [0, 0, 1, 1], [], []>} : vector<20x20xf32>, vector<20x64xf32>, vector<20x64xf32> -> vector<20x64xf32>
    %116 = arith.addf %91, %115 : vector<20x64xf32>
    %c32_i32_36 = arith.constant 32 : i32
    %117 = vector.broadcast %c32_i32_36 : i32 to vector<1x64xi32>
    %118 = arith.cmpi sge, %90, %117 : vector<1x64xi32>
    %c64_i32 = arith.constant 64 : i32
    %119 = vector.broadcast %c64_i32 : i32 to vector<1x64xi32>
    %120 = arith.cmpi slt, %90, %119 : vector<1x64xi32>
    %121 = arith.andi %118, %120 : vector<1x64xi1>
    %122 = arith.extui %121 : vector<1x64xi1> to vector<1x64xi32>
    %123 = arith.sitofp %122 : vector<1x64xi32> to vector<1x64xf32>
    %124 = vector.broadcast %123 : vector<1x64xf32> to vector<20x64xf32>
    %125 = arith.mulf %84, %124 : vector<20x64xf32>
    %126 = vector.broadcast %123 : vector<1x64xf32> to vector<20x64xf32>
    %127 = arith.mulf %89, %126 : vector<20x64xf32>
    %cst_37 = arith.constant dense<0.000000e+00> : vector<20x20xf32>
    %128 = tpu.matmul %79, %125, %cst_37 {dimension_numbers = #tpu.dot_dimension_numbers<[1], [1], [0], [0], [0, 0, 1, 0], [], []>} : vector<20x64xf32>, vector<20x64xf32>, vector<20x20xf32> -> vector<20x20xf32>
    %129 = arith.addf %128, %43 : vector<20x20xf32>
    %cst_38 = arith.constant dense<0xFF800000> : vector<20xf32>
    %130 = vector.multi_reduction <maximumf>, %129, %cst_38 [1] : vector<20x20xf32> to vector<20xf32>
    %131 = vector.shape_cast %130 : vector<20xf32> to vector<20x1xf32>
    %132 = vector.broadcast %131 : vector<20x1xf32> to vector<20x20xf32>
    %133 = arith.subf %129, %132 : vector<20x20xf32>
    %134 = math.exp %133 : vector<20x20xf32>
    %cst_39 = arith.constant dense<0.000000e+00> : vector<20xf32>
    %135 = vector.multi_reduction <add>, %134, %cst_39 [1] : vector<20x20xf32> to vector<20xf32>
    %136 = vector.shape_cast %135 : vector<20xf32> to vector<20x1xf32>
    %137 = tpu.reciprocal %136 {approx = true} : vector<20x1xf32> -> vector<20x1xf32>
    %138 = vector.broadcast %137 : vector<20x1xf32> to vector<20x20xf32>
    %139 = arith.mulf %134, %138 : vector<20x20xf32>
    %cst_40 = arith.constant dense<0.000000e+00> : vector<20x64xf32>
    %140 = tpu.matmul %139, %127, %cst_40 {dimension_numbers = #tpu.dot_dimension_numbers<[1], [0], [0], [1], [0, 0, 1, 1], [], []>} : vector<20x20xf32>, vector<20x64xf32>, vector<20x64xf32> -> vector<20x64xf32>
    %141 = arith.addf %116, %140 : vector<20x64xf32>
    %c3 = arith.constant 3 : index
    %c0_41 = arith.constant 0 : index
    %c0_42 = arith.constant 0 : index
    %142 = vector.load %arg6[%c3, %c0_41, %c0_42] : memref<8x64x64xf32, #tpu.memory_space<vmem>>, vector<1x64x64xf32>
    %143 = vector.shape_cast %142 : vector<1x64x64xf32> to vector<64x64xf32>
    %cst_43 = arith.constant dense<0.000000e+00> : vector<20x64xf32>
    %144 = tpu.matmul %141, %143, %cst_43 {dimension_numbers = #tpu.dot_dimension_numbers<[1], [0], [0], [1], [0, 0, 1, 1], [], []>} : vector<20x64xf32>, vector<64x64xf32>, vector<20x64xf32> -> vector<20x64xf32>
    %145 = vector.broadcast %49 : vector<1x64xf32> to vector<20x64xf32>
    %146 = arith.addf %144, %145 : vector<20x64xf32>
    %147 = arith.addf %42, %146 : vector<20x64xf32>
    %cst_44 = arith.constant dense<0.000000e+00> : vector<20xf32>
    %148 = vector.multi_reduction <add>, %147, %cst_44 [1] : vector<20x64xf32> to vector<20xf32>
    %149 = vector.shape_cast %148 : vector<20xf32> to vector<20x1xf32>
    %cst_45 = arith.constant 6.400000e+01 : f32
    %150 = vector.broadcast %cst_45 : f32 to vector<20x1xf32>
    %151 = arith.divf %149, %150 : vector<20x1xf32>
    %152 = vector.broadcast %151 : vector<20x1xf32> to vector<20x64xf32>
    %153 = arith.subf %147, %152 : vector<20x64xf32>
    %154 = arith.mulf %153, %153 : vector<20x64xf32>
    %cst_46 = arith.constant dense<0.000000e+00> : vector<20xf32>
    %155 = vector.multi_reduction <add>, %154, %cst_46 [1] : vector<20x64xf32> to vector<20xf32>
    %156 = vector.shape_cast %155 : vector<20xf32> to vector<20x1xf32>
    %cst_47 = arith.constant 6.400000e+01 : f32
    %157 = vector.broadcast %cst_47 : f32 to vector<20x1xf32>
    %158 = arith.divf %156, %157 : vector<20x1xf32>
    %159 = vector.broadcast %151 : vector<20x1xf32> to vector<20x64xf32>
    %160 = arith.subf %147, %159 : vector<20x64xf32>
    %cst_48 = arith.constant 9.99999974E-6 : f32
    %161 = vector.broadcast %cst_48 : f32 to vector<20x1xf32>
    %162 = arith.addf %158, %161 : vector<20x1xf32>
    %163 = math.rsqrt %162 : vector<20x1xf32>
    %164 = vector.broadcast %163 : vector<20x1xf32> to vector<20x64xf32>
    %165 = arith.mulf %160, %164 : vector<20x64xf32>
    %166 = vector.broadcast %50 : vector<1x64xf32> to vector<20x64xf32>
    %167 = arith.mulf %165, %166 : vector<20x64xf32>
    %168 = vector.broadcast %51 : vector<1x64xf32> to vector<20x64xf32>
    %169 = arith.addf %167, %168 : vector<20x64xf32>
    %c0_49 = arith.constant 0 : index
    %c0_50 = arith.constant 0 : index
    %c0_51 = arith.constant 0 : index
    %170 = vector.load %arg7[%c0_49, %c0_50, %c0_51] : memref<2x64x256xf32, #tpu.memory_space<vmem>>, vector<1x64x256xf32>
    %171 = vector.shape_cast %170 : vector<1x64x256xf32> to vector<64x256xf32>
    %cst_52 = arith.constant dense<0.000000e+00> : vector<20x256xf32>
    %172 = tpu.matmul %169, %171, %cst_52 {dimension_numbers = #tpu.dot_dimension_numbers<[1], [0], [0], [1], [0, 0, 1, 1], [], []>} : vector<20x64xf32>, vector<64x256xf32>, vector<20x256xf32> -> vector<20x256xf32>
    %c0_53 = arith.constant 0 : index
    %c0_54 = arith.constant 0 : index
    %c0_55 = arith.constant 0 : index
    %173 = vector.load %arg9[%c0_53, %c0_54, %c0_55] : memref<2x1x256xf32, #tpu.memory_space<vmem>>, vector<1x1x256xf32>
    %174 = vector.shape_cast %173 : vector<1x1x256xf32> to vector<1x256xf32>
    %175 = vector.broadcast %174 : vector<1x256xf32> to vector<20x256xf32>
    %176 = arith.addf %172, %175 : vector<20x256xf32>
    %cst_56 = arith.constant 5.000000e-01 : f32
    %177 = vector.broadcast %cst_56 : f32 to vector<20x256xf32>
    %178 = arith.mulf %177, %176 : vector<20x256xf32>
    %cst_57 = arith.constant 4.471500e-02 : f32
    %179 = vector.broadcast %cst_57 : f32 to vector<20x256xf32>
    %180 = arith.mulf %179, %176 : vector<20x256xf32>
    %181 = arith.mulf %180, %176 : vector<20x256xf32>
    %182 = arith.mulf %181, %176 : vector<20x256xf32>
    %183 = arith.addf %176, %182 : vector<20x256xf32>
    %cst_58 = arith.constant 0.797884583 : f32
    %184 = vector.broadcast %cst_58 : f32 to vector<20x256xf32>
    %185 = arith.mulf %184, %183 : vector<20x256xf32>
    %186 = math.tanh %185 : vector<20x256xf32>
    %cst_59 = arith.constant 1.000000e+00 : f32
    %187 = vector.broadcast %cst_59 : f32 to vector<20x256xf32>
    %188 = arith.addf %187, %186 : vector<20x256xf32>
    %189 = arith.mulf %178, %188 : vector<20x256xf32>
    %c0_60 = arith.constant 0 : index
    %c0_61 = arith.constant 0 : index
    %c0_62 = arith.constant 0 : index
    %190 = vector.load %arg8[%c0_60, %c0_61, %c0_62] : memref<2x256x64xf32, #tpu.memory_space<vmem>>, vector<1x256x64xf32>
    %191 = vector.shape_cast %190 : vector<1x256x64xf32> to vector<256x64xf32>
    %cst_63 = arith.constant dense<0.000000e+00> : vector<20x64xf32>
    %192 = tpu.matmul %189, %191, %cst_63 {dimension_numbers = #tpu.dot_dimension_numbers<[1], [0], [0], [1], [0, 0, 1, 1], [], []>} : vector<20x256xf32>, vector<256x64xf32>, vector<20x64xf32> -> vector<20x64xf32>
    %193 = vector.broadcast %52 : vector<1x64xf32> to vector<20x64xf32>
    %194 = arith.addf %192, %193 : vector<20x64xf32>
    %195 = arith.addf %147, %194 : vector<20x64xf32>
    %196 = vector.extract_strided_slice %0 {offsets = [15, 0], sizes = [1, 64], strides = [1, 1]} : vector<24x64xf32> to vector<1x64xf32>
    %197 = vector.extract_strided_slice %0 {offsets = [16, 0], sizes = [1, 64], strides = [1, 1]} : vector<24x64xf32> to vector<1x64xf32>
    %198 = vector.extract_strided_slice %0 {offsets = [17, 0], sizes = [1, 64], strides = [1, 1]} : vector<24x64xf32> to vector<1x64xf32>
    %199 = vector.extract_strided_slice %0 {offsets = [18, 0], sizes = [1, 64], strides = [1, 1]} : vector<24x64xf32> to vector<1x64xf32>
    %200 = vector.extract_strided_slice %0 {offsets = [19, 0], sizes = [1, 64], strides = [1, 1]} : vector<24x64xf32> to vector<1x64xf32>
    %201 = vector.extract_strided_slice %0 {offsets = [20, 0], sizes = [1, 64], strides = [1, 1]} : vector<24x64xf32> to vector<1x64xf32>
    %202 = vector.extract_strided_slice %0 {offsets = [21, 0], sizes = [1, 64], strides = [1, 1]} : vector<24x64xf32> to vector<1x64xf32>
    %203 = vector.extract_strided_slice %0 {offsets = [22, 0], sizes = [1, 64], strides = [1, 1]} : vector<24x64xf32> to vector<1x64xf32>
    %204 = vector.extract_strided_slice %0 {offsets = [23, 0], sizes = [1, 64], strides = [1, 1]} : vector<24x64xf32> to vector<1x64xf32>
    %cst_64 = arith.constant dense<0.000000e+00> : vector<20xf32>
    %205 = vector.multi_reduction <add>, %195, %cst_64 [1] : vector<20x64xf32> to vector<20xf32>
    %206 = vector.shape_cast %205 : vector<20xf32> to vector<20x1xf32>
    %cst_65 = arith.constant 6.400000e+01 : f32
    %207 = vector.broadcast %cst_65 : f32 to vector<20x1xf32>
    %208 = arith.divf %206, %207 : vector<20x1xf32>
    %209 = vector.broadcast %208 : vector<20x1xf32> to vector<20x64xf32>
    %210 = arith.subf %195, %209 : vector<20x64xf32>
    %211 = arith.mulf %210, %210 : vector<20x64xf32>
    %cst_66 = arith.constant dense<0.000000e+00> : vector<20xf32>
    %212 = vector.multi_reduction <add>, %211, %cst_66 [1] : vector<20x64xf32> to vector<20xf32>
    %213 = vector.shape_cast %212 : vector<20xf32> to vector<20x1xf32>
    %cst_67 = arith.constant 6.400000e+01 : f32
    %214 = vector.broadcast %cst_67 : f32 to vector<20x1xf32>
    %215 = arith.divf %213, %214 : vector<20x1xf32>
    %216 = vector.broadcast %208 : vector<20x1xf32> to vector<20x64xf32>
    %217 = arith.subf %195, %216 : vector<20x64xf32>
    %cst_68 = arith.constant 9.99999974E-6 : f32
    %218 = vector.broadcast %cst_68 : f32 to vector<20x1xf32>
    %219 = arith.addf %215, %218 : vector<20x1xf32>
    %220 = math.rsqrt %219 : vector<20x1xf32>
    %221 = vector.broadcast %220 : vector<20x1xf32> to vector<20x64xf32>
    %222 = arith.mulf %217, %221 : vector<20x64xf32>
    %223 = vector.broadcast %196 : vector<1x64xf32> to vector<20x64xf32>
    %224 = arith.mulf %222, %223 : vector<20x64xf32>
    %225 = vector.broadcast %197 : vector<1x64xf32> to vector<20x64xf32>
    %226 = arith.addf %224, %225 : vector<20x64xf32>
    %c4 = arith.constant 4 : index
    %c0_69 = arith.constant 0 : index
    %c0_70 = arith.constant 0 : index
    %227 = vector.load %arg6[%c4, %c0_69, %c0_70] : memref<8x64x64xf32, #tpu.memory_space<vmem>>, vector<1x64x64xf32>
    %228 = vector.shape_cast %227 : vector<1x64x64xf32> to vector<64x64xf32>
    %cst_71 = arith.constant dense<0.000000e+00> : vector<20x64xf32>
    %229 = tpu.matmul %226, %228, %cst_71 {dimension_numbers = #tpu.dot_dimension_numbers<[1], [0], [0], [1], [0, 0, 1, 1], [], []>} : vector<20x64xf32>, vector<64x64xf32>, vector<20x64xf32> -> vector<20x64xf32>
    %230 = vector.broadcast %198 : vector<1x64xf32> to vector<20x64xf32>
    %231 = arith.addf %229, %230 : vector<20x64xf32>
    %c5 = arith.constant 5 : index
    %c0_72 = arith.constant 0 : index
    %c0_73 = arith.constant 0 : index
    %232 = vector.load %arg6[%c5, %c0_72, %c0_73] : memref<8x64x64xf32, #tpu.memory_space<vmem>>, vector<1x64x64xf32>
    %233 = vector.shape_cast %232 : vector<1x64x64xf32> to vector<64x64xf32>
    %cst_74 = arith.constant dense<0.000000e+00> : vector<20x64xf32>
    %234 = tpu.matmul %226, %233, %cst_74 {dimension_numbers = #tpu.dot_dimension_numbers<[1], [0], [0], [1], [0, 0, 1, 1], [], []>} : vector<20x64xf32>, vector<64x64xf32>, vector<20x64xf32> -> vector<20x64xf32>
    %235 = vector.broadcast %199 : vector<1x64xf32> to vector<20x64xf32>
    %236 = arith.addf %234, %235 : vector<20x64xf32>
    %c6 = arith.constant 6 : index
    %c0_75 = arith.constant 0 : index
    %c0_76 = arith.constant 0 : index
    %237 = vector.load %arg6[%c6, %c0_75, %c0_76] : memref<8x64x64xf32, #tpu.memory_space<vmem>>, vector<1x64x64xf32>
    %238 = vector.shape_cast %237 : vector<1x64x64xf32> to vector<64x64xf32>
    %cst_77 = arith.constant dense<0.000000e+00> : vector<20x64xf32>
    %239 = tpu.matmul %226, %238, %cst_77 {dimension_numbers = #tpu.dot_dimension_numbers<[1], [0], [0], [1], [0, 0, 1, 1], [], []>} : vector<20x64xf32>, vector<64x64xf32>, vector<20x64xf32> -> vector<20x64xf32>
    %240 = vector.broadcast %200 : vector<1x64xf32> to vector<20x64xf32>
    %241 = arith.addf %239, %240 : vector<20x64xf32>
    %242 = tpu.iota {dimensions = array<i32: 1>} : vector<1x64xi32>
    %cst_78 = arith.constant 0.000000e+00 : f32
    %243 = vector.broadcast %cst_78 : f32 to vector<20x64xf32>
    %c0_i32_79 = arith.constant 0 : i32
    %244 = vector.broadcast %c0_i32_79 : i32 to vector<1x64xi32>
    %245 = arith.cmpi sge, %242, %244 : vector<1x64xi32>
    %c32_i32_80 = arith.constant 32 : i32
    %246 = vector.broadcast %c32_i32_80 : i32 to vector<1x64xi32>
    %247 = arith.cmpi slt, %242, %246 : vector<1x64xi32>
    %248 = arith.andi %245, %247 : vector<1x64xi1>
    %249 = arith.extui %248 : vector<1x64xi1> to vector<1x64xi32>
    %250 = arith.sitofp %249 : vector<1x64xi32> to vector<1x64xf32>
    %251 = vector.broadcast %250 : vector<1x64xf32> to vector<20x64xf32>
    %252 = arith.mulf %236, %251 : vector<20x64xf32>
    %253 = vector.broadcast %250 : vector<1x64xf32> to vector<20x64xf32>
    %254 = arith.mulf %241, %253 : vector<20x64xf32>
    %cst_81 = arith.constant dense<0.000000e+00> : vector<20x20xf32>
    %255 = tpu.matmul %231, %252, %cst_81 {dimension_numbers = #tpu.dot_dimension_numbers<[1], [1], [0], [0], [0, 0, 1, 0], [], []>} : vector<20x64xf32>, vector<20x64xf32>, vector<20x20xf32> -> vector<20x20xf32>
    %256 = arith.addf %255, %43 : vector<20x20xf32>
    %cst_82 = arith.constant dense<0xFF800000> : vector<20xf32>
    %257 = vector.multi_reduction <maximumf>, %256, %cst_82 [1] : vector<20x20xf32> to vector<20xf32>
    %258 = vector.shape_cast %257 : vector<20xf32> to vector<20x1xf32>
    %259 = vector.broadcast %258 : vector<20x1xf32> to vector<20x20xf32>
    %260 = arith.subf %256, %259 : vector<20x20xf32>
    %261 = math.exp %260 : vector<20x20xf32>
    %cst_83 = arith.constant dense<0.000000e+00> : vector<20xf32>
    %262 = vector.multi_reduction <add>, %261, %cst_83 [1] : vector<20x20xf32> to vector<20xf32>
    %263 = vector.shape_cast %262 : vector<20xf32> to vector<20x1xf32>
    %264 = tpu.reciprocal %263 {approx = true} : vector<20x1xf32> -> vector<20x1xf32>
    %265 = vector.broadcast %264 : vector<20x1xf32> to vector<20x20xf32>
    %266 = arith.mulf %261, %265 : vector<20x20xf32>
    %cst_84 = arith.constant dense<0.000000e+00> : vector<20x64xf32>
    %267 = tpu.matmul %266, %254, %cst_84 {dimension_numbers = #tpu.dot_dimension_numbers<[1], [0], [0], [1], [0, 0, 1, 1], [], []>} : vector<20x20xf32>, vector<20x64xf32>, vector<20x64xf32> -> vector<20x64xf32>
    %268 = arith.addf %243, %267 : vector<20x64xf32>
    %c32_i32_85 = arith.constant 32 : i32
    %269 = vector.broadcast %c32_i32_85 : i32 to vector<1x64xi32>
    %270 = arith.cmpi sge, %242, %269 : vector<1x64xi32>
    %c64_i32_86 = arith.constant 64 : i32
    %271 = vector.broadcast %c64_i32_86 : i32 to vector<1x64xi32>
    %272 = arith.cmpi slt, %242, %271 : vector<1x64xi32>
    %273 = arith.andi %270, %272 : vector<1x64xi1>
    %274 = arith.extui %273 : vector<1x64xi1> to vector<1x64xi32>
    %275 = arith.sitofp %274 : vector<1x64xi32> to vector<1x64xf32>
    %276 = vector.broadcast %275 : vector<1x64xf32> to vector<20x64xf32>
    %277 = arith.mulf %236, %276 : vector<20x64xf32>
    %278 = vector.broadcast %275 : vector<1x64xf32> to vector<20x64xf32>
    %279 = arith.mulf %241, %278 : vector<20x64xf32>
    %cst_87 = arith.constant dense<0.000000e+00> : vector<20x20xf32>
    %280 = tpu.matmul %231, %277, %cst_87 {dimension_numbers = #tpu.dot_dimension_numbers<[1], [1], [0], [0], [0, 0, 1, 0], [], []>} : vector<20x64xf32>, vector<20x64xf32>, vector<20x20xf32> -> vector<20x20xf32>
    %281 = arith.addf %280, %43 : vector<20x20xf32>
    %cst_88 = arith.constant dense<0xFF800000> : vector<20xf32>
    %282 = vector.multi_reduction <maximumf>, %281, %cst_88 [1] : vector<20x20xf32> to vector<20xf32>
    %283 = vector.shape_cast %282 : vector<20xf32> to vector<20x1xf32>
    %284 = vector.broadcast %283 : vector<20x1xf32> to vector<20x20xf32>
    %285 = arith.subf %281, %284 : vector<20x20xf32>
    %286 = math.exp %285 : vector<20x20xf32>
    %cst_89 = arith.constant dense<0.000000e+00> : vector<20xf32>
    %287 = vector.multi_reduction <add>, %286, %cst_89 [1] : vector<20x20xf32> to vector<20xf32>
    %288 = vector.shape_cast %287 : vector<20xf32> to vector<20x1xf32>
    %289 = tpu.reciprocal %288 {approx = true} : vector<20x1xf32> -> vector<20x1xf32>
    %290 = vector.broadcast %289 : vector<20x1xf32> to vector<20x20xf32>
    %291 = arith.mulf %286, %290 : vector<20x20xf32>
    %cst_90 = arith.constant dense<0.000000e+00> : vector<20x64xf32>
    %292 = tpu.matmul %291, %279, %cst_90 {dimension_numbers = #tpu.dot_dimension_numbers<[1], [0], [0], [1], [0, 0, 1, 1], [], []>} : vector<20x20xf32>, vector<20x64xf32>, vector<20x64xf32> -> vector<20x64xf32>
    %293 = arith.addf %268, %292 : vector<20x64xf32>
    %c7 = arith.constant 7 : index
    %c0_91 = arith.constant 0 : index
    %c0_92 = arith.constant 0 : index
    %294 = vector.load %arg6[%c7, %c0_91, %c0_92] : memref<8x64x64xf32, #tpu.memory_space<vmem>>, vector<1x64x64xf32>
    %295 = vector.shape_cast %294 : vector<1x64x64xf32> to vector<64x64xf32>
    %cst_93 = arith.constant dense<0.000000e+00> : vector<20x64xf32>
    %296 = tpu.matmul %293, %295, %cst_93 {dimension_numbers = #tpu.dot_dimension_numbers<[1], [0], [0], [1], [0, 0, 1, 1], [], []>} : vector<20x64xf32>, vector<64x64xf32>, vector<20x64xf32> -> vector<20x64xf32>
    %297 = vector.broadcast %201 : vector<1x64xf32> to vector<20x64xf32>
    %298 = arith.addf %296, %297 : vector<20x64xf32>
    %299 = arith.addf %195, %298 : vector<20x64xf32>
    %cst_94 = arith.constant dense<0.000000e+00> : vector<20xf32>
    %300 = vector.multi_reduction <add>, %299, %cst_94 [1] : vector<20x64xf32> to vector<20xf32>
    %301 = vector.shape_cast %300 : vector<20xf32> to vector<20x1xf32>
    %cst_95 = arith.constant 6.400000e+01 : f32
    %302 = vector.broadcast %cst_95 : f32 to vector<20x1xf32>
    %303 = arith.divf %301, %302 : vector<20x1xf32>
    %304 = vector.broadcast %303 : vector<20x1xf32> to vector<20x64xf32>
    %305 = arith.subf %299, %304 : vector<20x64xf32>
    %306 = arith.mulf %305, %305 : vector<20x64xf32>
    %cst_96 = arith.constant dense<0.000000e+00> : vector<20xf32>
    %307 = vector.multi_reduction <add>, %306, %cst_96 [1] : vector<20x64xf32> to vector<20xf32>
    %308 = vector.shape_cast %307 : vector<20xf32> to vector<20x1xf32>
    %cst_97 = arith.constant 6.400000e+01 : f32
    %309 = vector.broadcast %cst_97 : f32 to vector<20x1xf32>
    %310 = arith.divf %308, %309 : vector<20x1xf32>
    %311 = vector.broadcast %303 : vector<20x1xf32> to vector<20x64xf32>
    %312 = arith.subf %299, %311 : vector<20x64xf32>
    %cst_98 = arith.constant 9.99999974E-6 : f32
    %313 = vector.broadcast %cst_98 : f32 to vector<20x1xf32>
    %314 = arith.addf %310, %313 : vector<20x1xf32>
    %315 = math.rsqrt %314 : vector<20x1xf32>
    %316 = vector.broadcast %315 : vector<20x1xf32> to vector<20x64xf32>
    %317 = arith.mulf %312, %316 : vector<20x64xf32>
    %318 = vector.broadcast %202 : vector<1x64xf32> to vector<20x64xf32>
    %319 = arith.mulf %317, %318 : vector<20x64xf32>
    %320 = vector.broadcast %203 : vector<1x64xf32> to vector<20x64xf32>
    %321 = arith.addf %319, %320 : vector<20x64xf32>
    %c1_99 = arith.constant 1 : index
    %c0_100 = arith.constant 0 : index
    %c0_101 = arith.constant 0 : index
    %322 = vector.load %arg7[%c1_99, %c0_100, %c0_101] : memref<2x64x256xf32, #tpu.memory_space<vmem>>, vector<1x64x256xf32>
    %323 = vector.shape_cast %322 : vector<1x64x256xf32> to vector<64x256xf32>
    %cst_102 = arith.constant dense<0.000000e+00> : vector<20x256xf32>
    %324 = tpu.matmul %321, %323, %cst_102 {dimension_numbers = #tpu.dot_dimension_numbers<[1], [0], [0], [1], [0, 0, 1, 1], [], []>} : vector<20x64xf32>, vector<64x256xf32>, vector<20x256xf32> -> vector<20x256xf32>
    %c1_103 = arith.constant 1 : index
    %c0_104 = arith.constant 0 : index
    %c0_105 = arith.constant 0 : index
    %325 = vector.load %arg9[%c1_103, %c0_104, %c0_105] : memref<2x1x256xf32, #tpu.memory_space<vmem>>, vector<1x1x256xf32>
    %326 = vector.shape_cast %325 : vector<1x1x256xf32> to vector<1x256xf32>
    %327 = vector.broadcast %326 : vector<1x256xf32> to vector<20x256xf32>
    %328 = arith.addf %324, %327 : vector<20x256xf32>
    %cst_106 = arith.constant 5.000000e-01 : f32
    %329 = vector.broadcast %cst_106 : f32 to vector<20x256xf32>
    %330 = arith.mulf %329, %328 : vector<20x256xf32>
    %cst_107 = arith.constant 4.471500e-02 : f32
    %331 = vector.broadcast %cst_107 : f32 to vector<20x256xf32>
    %332 = arith.mulf %331, %328 : vector<20x256xf32>
    %333 = arith.mulf %332, %328 : vector<20x256xf32>
    %334 = arith.mulf %333, %328 : vector<20x256xf32>
    %335 = arith.addf %328, %334 : vector<20x256xf32>
    %cst_108 = arith.constant 0.797884583 : f32
    %336 = vector.broadcast %cst_108 : f32 to vector<20x256xf32>
    %337 = arith.mulf %336, %335 : vector<20x256xf32>
    %338 = math.tanh %337 : vector<20x256xf32>
    %cst_109 = arith.constant 1.000000e+00 : f32
    %339 = vector.broadcast %cst_109 : f32 to vector<20x256xf32>
    %340 = arith.addf %339, %338 : vector<20x256xf32>
    %341 = arith.mulf %330, %340 : vector<20x256xf32>
    %c1_110 = arith.constant 1 : index
    %c0_111 = arith.constant 0 : index
    %c0_112 = arith.constant 0 : index
    %342 = vector.load %arg8[%c1_110, %c0_111, %c0_112] : memref<2x256x64xf32, #tpu.memory_space<vmem>>, vector<1x256x64xf32>
    %343 = vector.shape_cast %342 : vector<1x256x64xf32> to vector<256x64xf32>
    %cst_113 = arith.constant dense<0.000000e+00> : vector<20x64xf32>
    %344 = tpu.matmul %341, %343, %cst_113 {dimension_numbers = #tpu.dot_dimension_numbers<[1], [0], [0], [1], [0, 0, 1, 1], [], []>} : vector<20x256xf32>, vector<256x64xf32>, vector<20x64xf32> -> vector<20x64xf32>
    %345 = vector.broadcast %204 : vector<1x64xf32> to vector<20x64xf32>
    %346 = arith.addf %344, %345 : vector<20x64xf32>
    %347 = arith.addf %299, %346 : vector<20x64xf32>
    %348 = vector.extract_strided_slice %0 {offsets = [3, 0], sizes = [1, 64], strides = [1, 1]} : vector<24x64xf32> to vector<1x64xf32>
    %349 = vector.extract_strided_slice %0 {offsets = [4, 0], sizes = [1, 64], strides = [1, 1]} : vector<24x64xf32> to vector<1x64xf32>
    %cst_114 = arith.constant dense<0.000000e+00> : vector<20xf32>
    %350 = vector.multi_reduction <add>, %347, %cst_114 [1] : vector<20x64xf32> to vector<20xf32>
    %351 = vector.shape_cast %350 : vector<20xf32> to vector<20x1xf32>
    %cst_115 = arith.constant 6.400000e+01 : f32
    %352 = vector.broadcast %cst_115 : f32 to vector<20x1xf32>
    %353 = arith.divf %351, %352 : vector<20x1xf32>
    %354 = vector.broadcast %353 : vector<20x1xf32> to vector<20x64xf32>
    %355 = arith.subf %347, %354 : vector<20x64xf32>
    %356 = arith.mulf %355, %355 : vector<20x64xf32>
    %cst_116 = arith.constant dense<0.000000e+00> : vector<20xf32>
    %357 = vector.multi_reduction <add>, %356, %cst_116 [1] : vector<20x64xf32> to vector<20xf32>
    %358 = vector.shape_cast %357 : vector<20xf32> to vector<20x1xf32>
    %cst_117 = arith.constant 6.400000e+01 : f32
    %359 = vector.broadcast %cst_117 : f32 to vector<20x1xf32>
    %360 = arith.divf %358, %359 : vector<20x1xf32>
    %361 = vector.broadcast %353 : vector<20x1xf32> to vector<20x64xf32>
    %362 = arith.subf %347, %361 : vector<20x64xf32>
    %cst_118 = arith.constant 9.99999974E-6 : f32
    %363 = vector.broadcast %cst_118 : f32 to vector<20x1xf32>
    %364 = arith.addf %360, %363 : vector<20x1xf32>
    %365 = math.rsqrt %364 : vector<20x1xf32>
    %366 = vector.broadcast %365 : vector<20x1xf32> to vector<20x64xf32>
    %367 = arith.mulf %362, %366 : vector<20x64xf32>
    %368 = vector.broadcast %348 : vector<1x64xf32> to vector<20x64xf32>
    %369 = arith.mulf %367, %368 : vector<20x64xf32>
    %370 = vector.broadcast %349 : vector<1x64xf32> to vector<20x64xf32>
    %371 = arith.addf %369, %370 : vector<20x64xf32>
    %c0_119 = arith.constant 0 : index
    %c0_120 = arith.constant 0 : index
    %372 = vector.load %arg11[%c0_119, %c0_120] : memref<64x64xf32, #tpu.memory_space<vmem>>, vector<64x64xf32>
    %cst_121 = arith.constant dense<0.000000e+00> : vector<20x64xf32>
    %373 = tpu.matmul %371, %372, %cst_121 {dimension_numbers = #tpu.dot_dimension_numbers<[1], [0], [0], [1], [0, 0, 1, 1], [], []>} : vector<20x64xf32>, vector<64x64xf32>, vector<20x64xf32> -> vector<20x64xf32>
    %374 = vector.extract_strided_slice %0 {offsets = [5, 0], sizes = [1, 64], strides = [1, 1]} : vector<24x64xf32> to vector<1x64xf32>
    %375 = vector.broadcast %374 : vector<1x64xf32> to vector<20x64xf32>
    %376 = arith.addf %373, %375 : vector<20x64xf32>
    %c0_122 = arith.constant 0 : index
    %c0_123 = arith.constant 0 : index
    %377 = vector.load %arg12[%c0_122, %c0_123] : memref<20x64xf32, #tpu.memory_space<vmem>>, vector<20x64xf32>
    tpu.vector_store %arg12[%c0_122, %c0_123], %376 {strides = array<i32>} : memref<20x64xf32, #tpu.memory_space<vmem>>, vector<20x64xf32>,
    return
  }
  func.func @transform_0(%arg0: i32) -> (i32, i32) {
    %c0_i32 = arith.constant 0 : i32
    %c0_i32_0 = arith.constant 0 : i32
    %c0_i32_1 = arith.constant 0 : i32
    return %c0_i32, %c0_i32_0 : i32, i32
  }
  func.func @transform_1(%arg0: i32) -> (i32, i32) {
    %c0_i32 = arith.constant 0 : i32
    %c0_i32_0 = arith.constant 0 : i32
    %c0_i32_1 = arith.constant 0 : i32
    return %c0_i32, %c0_i32_0 : i32, i32
  }
  func.func @transform_2(%arg0: i32) -> (i32, i32) {
    %c0_i32 = arith.constant 0 : i32
    %c0_i32_0 = arith.constant 0 : i32
    %c0_i32_1 = arith.constant 0 : i32
    return %c0_i32, %c0_i32_0 : i32, i32
  }
  func.func @transform_3(%arg0: i32) -> (i32, i32) {
    %c0_i32 = arith.constant 0 : i32
    %c0_i32_0 = arith.constant 0 : i32
    %c0_i32_1 = arith.constant 0 : i32
    return %c0_i32, %c0_i32_0 : i32, i32
  }
  func.func @transform_4(%arg0: i32) -> (i32, i32) {
    %c0_i32 = arith.constant 0 : i32
    %c0_i32_0 = arith.constant 0 : i32
    %c0_i32_1 = arith.constant 0 : i32
    return %c0_i32, %c0_i32_0 : i32, i32
  }
  func.func @transform_5(%arg0: i32) -> (i32, i32, i32) {
    %c0_i32 = arith.constant 0 : i32
    %c0_i32_0 = arith.constant 0 : i32
    %c0_i32_1 = arith.constant 0 : i32
    %c0_i32_2 = arith.constant 0 : i32
    return %c0_i32, %c0_i32_0, %c0_i32_1 : i32, i32, i32
  }
  func.func @transform_6(%arg0: i32) -> (i32, i32, i32) {
    %c0_i32 = arith.constant 0 : i32
    %c0_i32_0 = arith.constant 0 : i32
    %c0_i32_1 = arith.constant 0 : i32
    %c0_i32_2 = arith.constant 0 : i32
    return %c0_i32, %c0_i32_0, %c0_i32_1 : i32, i32, i32
  }
  func.func @transform_7(%arg0: i32) -> (i32, i32, i32) {
    %c0_i32 = arith.constant 0 : i32
    %c0_i32_0 = arith.constant 0 : i32
    %c0_i32_1 = arith.constant 0 : i32
    %c0_i32_2 = arith.constant 0 : i32
    return %c0_i32, %c0_i32_0, %c0_i32_1 : i32, i32, i32
  }
  func.func @transform_8(%arg0: i32) -> (i32, i32, i32) {
    %c0_i32 = arith.constant 0 : i32
    %c0_i32_0 = arith.constant 0 : i32
    %c0_i32_1 = arith.constant 0 : i32
    %c0_i32_2 = arith.constant 0 : i32
    return %c0_i32, %c0_i32_0, %c0_i32_1 : i32, i32, i32
  }
  func.func @transform_9(%arg0: i32) -> (i32, i32) {
    %c0_i32 = arith.constant 0 : i32
    %c0_i32_0 = arith.constant 0 : i32
    %c0_i32_1 = arith.constant 0 : i32
    return %c0_i32, %c0_i32_0 : i32, i32
  }
  func.func @transform_10(%arg0: i32) -> (i32, i32) {
    %c0_i32 = arith.constant 0 : i32
    %c0_i32_0 = arith.constant 0 : i32
    %c0_i32_1 = arith.constant 0 : i32
    return %c0_i32, %c0_i32_0 : i32, i32
  }
  func.func @transform_11(%arg0: i32) -> (i32, i32) {
    %c0_i32 = arith.constant 0 : i32
    %c0_i32_0 = arith.constant 0 : i32
    %c0_i32_1 = arith.constant 0 : i32
    return %c0_i32, %c0_i32_0 : i32, i32
  }
}

module attributes {stable_mosaic.version = 11 : i64} {
  func.func @_decoder_kernel(%arg0: i32, %arg1: memref<48x64xf32, #tpu.memory_space<vmem>>, %arg2: memref<48x48xf32, #tpu.memory_space<vmem>>, %arg3: memref<8x64x64xf32, #tpu.memory_space<vmem>>, %arg4: memref<2x64x256xf32, #tpu.memory_space<vmem>>, %arg5: memref<2x256x64xf32, #tpu.memory_space<vmem>>, %arg6: memref<2x1x256xf32, #tpu.memory_space<vmem>>, %arg7: memref<20x64xf32, #tpu.memory_space<vmem>>, %arg8: memref<16x64xf32, #tpu.memory_space<vmem>>, %arg9: memref<32x64xf32, #tpu.memory_space<vmem>>) attributes {dimension_semantics = [#tpu.dimension_semantics<arbitrary>], iteration_bounds = array<i64: 1>, scalar_prefetch = 0 : i64, scratch_operands = 0 : i64, tpu.core_type = #tpu.core_type<tc>, window_params = [{pipeline_mode = #tpu.pipeline_mode<synchronous>, transform_indices = @transform_0, window_bounds = array<i64: 48, 64>}, {pipeline_mode = #tpu.pipeline_mode<synchronous>, transform_indices = @transform_1, window_bounds = array<i64: 48, 48>}, {pipeline_mode = #tpu.pipeline_mode<synchronous>, transform_indices = @transform_2, window_bounds = array<i64: 8, 64, 64>}, {pipeline_mode = #tpu.pipeline_mode<synchronous>, transform_indices = @transform_3, window_bounds = array<i64: 2, 64, 256>}, {pipeline_mode = #tpu.pipeline_mode<synchronous>, transform_indices = @transform_4, window_bounds = array<i64: 2, 256, 64>}, {pipeline_mode = #tpu.pipeline_mode<synchronous>, transform_indices = @transform_5, window_bounds = array<i64: 2, 1, 256>}, {pipeline_mode = #tpu.pipeline_mode<synchronous>, transform_indices = @transform_6, window_bounds = array<i64: 20, 64>}, {pipeline_mode = #tpu.pipeline_mode<synchronous>, transform_indices = @transform_7, window_bounds = array<i64: 16, 64>}, {pipeline_mode = #tpu.pipeline_mode<synchronous>, transform_indices = @transform_8, window_bounds = array<i64: 32, 64>}]} {
    %c0 = arith.constant 0 : index
    %c0_0 = arith.constant 0 : index
    %0 = vector.load %arg7[%c0, %c0_0] : memref<20x64xf32, #tpu.memory_space<vmem>>, vector<20x64xf32>
    %c0_1 = arith.constant 0 : index
    %c0_2 = arith.constant 0 : index
    %1 = vector.load %arg2[%c0_1, %c0_2] : memref<48x48xf32, #tpu.memory_space<vmem>>, vector<48x48xf32>
    %c0_3 = arith.constant 0 : index
    %c0_4 = arith.constant 0 : index
    %2 = vector.load %arg1[%c0_3, %c0_4] : memref<48x64xf32, #tpu.memory_space<vmem>>, vector<48x64xf32>
    %3 = vector.extract_strided_slice %0 {offsets = [2, 0], sizes = [1, 64], strides = [1, 1]} : vector<20x64xf32> to vector<1x64xf32>
    %4 = vector.extract_strided_slice %0 {offsets = [3, 0], sizes = [1, 64], strides = [1, 1]} : vector<20x64xf32> to vector<1x64xf32>
    %5 = vector.extract_strided_slice %0 {offsets = [4, 0], sizes = [1, 64], strides = [1, 1]} : vector<20x64xf32> to vector<1x64xf32>
    %6 = vector.extract_strided_slice %0 {offsets = [5, 0], sizes = [1, 64], strides = [1, 1]} : vector<20x64xf32> to vector<1x64xf32>
    %7 = vector.extract_strided_slice %0 {offsets = [6, 0], sizes = [1, 64], strides = [1, 1]} : vector<20x64xf32> to vector<1x64xf32>
    %8 = vector.extract_strided_slice %0 {offsets = [7, 0], sizes = [1, 64], strides = [1, 1]} : vector<20x64xf32> to vector<1x64xf32>
    %9 = vector.extract_strided_slice %0 {offsets = [8, 0], sizes = [1, 64], strides = [1, 1]} : vector<20x64xf32> to vector<1x64xf32>
    %10 = vector.extract_strided_slice %0 {offsets = [9, 0], sizes = [1, 64], strides = [1, 1]} : vector<20x64xf32> to vector<1x64xf32>
    %11 = vector.extract_strided_slice %0 {offsets = [10, 0], sizes = [1, 64], strides = [1, 1]} : vector<20x64xf32> to vector<1x64xf32>
    %cst = arith.constant dense<0.000000e+00> : vector<48xf32>
    %12 = vector.multi_reduction <add>, %2, %cst [1] : vector<48x64xf32> to vector<48xf32>
    %13 = vector.shape_cast %12 : vector<48xf32> to vector<48x1xf32>
    %cst_5 = arith.constant 6.400000e+01 : f32
    %14 = vector.broadcast %cst_5 : f32 to vector<48x1xf32>
    %15 = arith.divf %13, %14 : vector<48x1xf32>
    %16 = vector.broadcast %15 : vector<48x1xf32> to vector<48x64xf32>
    %17 = arith.subf %2, %16 : vector<48x64xf32>
    %18 = arith.mulf %17, %17 : vector<48x64xf32>
    %cst_6 = arith.constant dense<0.000000e+00> : vector<48xf32>
    %19 = vector.multi_reduction <add>, %18, %cst_6 [1] : vector<48x64xf32> to vector<48xf32>
    %20 = vector.shape_cast %19 : vector<48xf32> to vector<48x1xf32>
    %cst_7 = arith.constant 6.400000e+01 : f32
    %21 = vector.broadcast %cst_7 : f32 to vector<48x1xf32>
    %22 = arith.divf %20, %21 : vector<48x1xf32>
    %23 = vector.broadcast %15 : vector<48x1xf32> to vector<48x64xf32>
    %24 = arith.subf %2, %23 : vector<48x64xf32>
    %cst_8 = arith.constant 9.99999974E-6 : f32
    %25 = vector.broadcast %cst_8 : f32 to vector<48x1xf32>
    %26 = arith.addf %22, %25 : vector<48x1xf32>
    %27 = math.rsqrt %26 : vector<48x1xf32>
    %28 = vector.broadcast %27 : vector<48x1xf32> to vector<48x64xf32>
    %29 = arith.mulf %24, %28 : vector<48x64xf32>
    %30 = vector.broadcast %3 : vector<1x64xf32> to vector<48x64xf32>
    %31 = arith.mulf %29, %30 : vector<48x64xf32>
    %32 = vector.broadcast %4 : vector<1x64xf32> to vector<48x64xf32>
    %33 = arith.addf %31, %32 : vector<48x64xf32>
    %c0_9 = arith.constant 0 : index
    %c0_10 = arith.constant 0 : index
    %c0_11 = arith.constant 0 : index
    %34 = vector.load %arg3[%c0_9, %c0_10, %c0_11] : memref<8x64x64xf32, #tpu.memory_space<vmem>>, vector<1x64x64xf32>
    %35 = vector.shape_cast %34 : vector<1x64x64xf32> to vector<64x64xf32>
    %cst_12 = arith.constant dense<0.000000e+00> : vector<48x64xf32>
    %36 = tpu.matmul %33, %35, %cst_12 {dimension_numbers = #tpu.dot_dimension_numbers<[1], [0], [0], [1], [0, 0, 1, 1], [], []>} : vector<48x64xf32>, vector<64x64xf32>, vector<48x64xf32> -> vector<48x64xf32>
    %37 = vector.broadcast %5 : vector<1x64xf32> to vector<48x64xf32>
    %38 = arith.addf %36, %37 : vector<48x64xf32>
    %c1 = arith.constant 1 : index
    %c0_13 = arith.constant 0 : index
    %c0_14 = arith.constant 0 : index
    %39 = vector.load %arg3[%c1, %c0_13, %c0_14] : memref<8x64x64xf32, #tpu.memory_space<vmem>>, vector<1x64x64xf32>
    %40 = vector.shape_cast %39 : vector<1x64x64xf32> to vector<64x64xf32>
    %cst_15 = arith.constant dense<0.000000e+00> : vector<48x64xf32>
    %41 = tpu.matmul %33, %40, %cst_15 {dimension_numbers = #tpu.dot_dimension_numbers<[1], [0], [0], [1], [0, 0, 1, 1], [], []>} : vector<48x64xf32>, vector<64x64xf32>, vector<48x64xf32> -> vector<48x64xf32>
    %42 = vector.broadcast %6 : vector<1x64xf32> to vector<48x64xf32>
    %43 = arith.addf %41, %42 : vector<48x64xf32>
    %c2 = arith.constant 2 : index
    %c0_16 = arith.constant 0 : index
    %c0_17 = arith.constant 0 : index
    %44 = vector.load %arg3[%c2, %c0_16, %c0_17] : memref<8x64x64xf32, #tpu.memory_space<vmem>>, vector<1x64x64xf32>
    %45 = vector.shape_cast %44 : vector<1x64x64xf32> to vector<64x64xf32>
    %cst_18 = arith.constant dense<0.000000e+00> : vector<48x64xf32>
    %46 = tpu.matmul %33, %45, %cst_18 {dimension_numbers = #tpu.dot_dimension_numbers<[1], [0], [0], [1], [0, 0, 1, 1], [], []>} : vector<48x64xf32>, vector<64x64xf32>, vector<48x64xf32> -> vector<48x64xf32>
    %47 = vector.broadcast %7 : vector<1x64xf32> to vector<48x64xf32>
    %48 = arith.addf %46, %47 : vector<48x64xf32>
    %49 = tpu.iota {dimensions = array<i32: 1>} : vector<1x64xi32>
    %cst_19 = arith.constant 0.000000e+00 : f32
    %50 = vector.broadcast %cst_19 : f32 to vector<48x64xf32>
    %c0_i32 = arith.constant 0 : i32
    %51 = vector.broadcast %c0_i32 : i32 to vector<1x64xi32>
    %52 = arith.cmpi sge, %49, %51 : vector<1x64xi32>
    %c32_i32 = arith.constant 32 : i32
    %53 = vector.broadcast %c32_i32 : i32 to vector<1x64xi32>
    %54 = arith.cmpi slt, %49, %53 : vector<1x64xi32>
    %55 = arith.andi %52, %54 : vector<1x64xi1>
    %56 = arith.extui %55 : vector<1x64xi1> to vector<1x64xi32>
    %57 = arith.sitofp %56 : vector<1x64xi32> to vector<1x64xf32>
    %58 = vector.broadcast %57 : vector<1x64xf32> to vector<48x64xf32>
    %59 = arith.mulf %43, %58 : vector<48x64xf32>
    %60 = vector.broadcast %57 : vector<1x64xf32> to vector<48x64xf32>
    %61 = arith.mulf %48, %60 : vector<48x64xf32>
    %cst_20 = arith.constant dense<0.000000e+00> : vector<48x48xf32>
    %62 = tpu.matmul %38, %59, %cst_20 {dimension_numbers = #tpu.dot_dimension_numbers<[1], [1], [0], [0], [0, 0, 1, 0], [], []>} : vector<48x64xf32>, vector<48x64xf32>, vector<48x48xf32> -> vector<48x48xf32>
    %63 = arith.addf %62, %1 : vector<48x48xf32>
    %cst_21 = arith.constant dense<0xFF800000> : vector<48xf32>
    %64 = vector.multi_reduction <maximumf>, %63, %cst_21 [1] : vector<48x48xf32> to vector<48xf32>
    %65 = vector.shape_cast %64 : vector<48xf32> to vector<48x1xf32>
    %66 = vector.broadcast %65 : vector<48x1xf32> to vector<48x48xf32>
    %67 = arith.subf %63, %66 : vector<48x48xf32>
    %68 = math.exp %67 : vector<48x48xf32>
    %cst_22 = arith.constant dense<0.000000e+00> : vector<48xf32>
    %69 = vector.multi_reduction <add>, %68, %cst_22 [1] : vector<48x48xf32> to vector<48xf32>
    %70 = vector.shape_cast %69 : vector<48xf32> to vector<48x1xf32>
    %71 = tpu.reciprocal %70 {approx = true} : vector<48x1xf32> -> vector<48x1xf32>
    %72 = vector.broadcast %71 : vector<48x1xf32> to vector<48x48xf32>
    %73 = arith.mulf %68, %72 : vector<48x48xf32>
    %cst_23 = arith.constant dense<0.000000e+00> : vector<48x64xf32>
    %74 = tpu.matmul %73, %61, %cst_23 {dimension_numbers = #tpu.dot_dimension_numbers<[1], [0], [0], [1], [0, 0, 1, 1], [], []>} : vector<48x48xf32>, vector<48x64xf32>, vector<48x64xf32> -> vector<48x64xf32>
    %75 = arith.addf %50, %74 : vector<48x64xf32>
    %c32_i32_24 = arith.constant 32 : i32
    %76 = vector.broadcast %c32_i32_24 : i32 to vector<1x64xi32>
    %77 = arith.cmpi sge, %49, %76 : vector<1x64xi32>
    %c64_i32 = arith.constant 64 : i32
    %78 = vector.broadcast %c64_i32 : i32 to vector<1x64xi32>
    %79 = arith.cmpi slt, %49, %78 : vector<1x64xi32>
    %80 = arith.andi %77, %79 : vector<1x64xi1>
    %81 = arith.extui %80 : vector<1x64xi1> to vector<1x64xi32>
    %82 = arith.sitofp %81 : vector<1x64xi32> to vector<1x64xf32>
    %83 = vector.broadcast %82 : vector<1x64xf32> to vector<48x64xf32>
    %84 = arith.mulf %43, %83 : vector<48x64xf32>
    %85 = vector.broadcast %82 : vector<1x64xf32> to vector<48x64xf32>
    %86 = arith.mulf %48, %85 : vector<48x64xf32>
    %cst_25 = arith.constant dense<0.000000e+00> : vector<48x48xf32>
    %87 = tpu.matmul %38, %84, %cst_25 {dimension_numbers = #tpu.dot_dimension_numbers<[1], [1], [0], [0], [0, 0, 1, 0], [], []>} : vector<48x64xf32>, vector<48x64xf32>, vector<48x48xf32> -> vector<48x48xf32>
    %88 = arith.addf %87, %1 : vector<48x48xf32>
    %cst_26 = arith.constant dense<0xFF800000> : vector<48xf32>
    %89 = vector.multi_reduction <maximumf>, %88, %cst_26 [1] : vector<48x48xf32> to vector<48xf32>
    %90 = vector.shape_cast %89 : vector<48xf32> to vector<48x1xf32>
    %91 = vector.broadcast %90 : vector<48x1xf32> to vector<48x48xf32>
    %92 = arith.subf %88, %91 : vector<48x48xf32>
    %93 = math.exp %92 : vector<48x48xf32>
    %cst_27 = arith.constant dense<0.000000e+00> : vector<48xf32>
    %94 = vector.multi_reduction <add>, %93, %cst_27 [1] : vector<48x48xf32> to vector<48xf32>
    %95 = vector.shape_cast %94 : vector<48xf32> to vector<48x1xf32>
    %96 = tpu.reciprocal %95 {approx = true} : vector<48x1xf32> -> vector<48x1xf32>
    %97 = vector.broadcast %96 : vector<48x1xf32> to vector<48x48xf32>
    %98 = arith.mulf %93, %97 : vector<48x48xf32>
    %cst_28 = arith.constant dense<0.000000e+00> : vector<48x64xf32>
    %99 = tpu.matmul %98, %86, %cst_28 {dimension_numbers = #tpu.dot_dimension_numbers<[1], [0], [0], [1], [0, 0, 1, 1], [], []>} : vector<48x48xf32>, vector<48x64xf32>, vector<48x64xf32> -> vector<48x64xf32>
    %100 = arith.addf %75, %99 : vector<48x64xf32>
    %c3 = arith.constant 3 : index
    %c0_29 = arith.constant 0 : index
    %c0_30 = arith.constant 0 : index
    %101 = vector.load %arg3[%c3, %c0_29, %c0_30] : memref<8x64x64xf32, #tpu.memory_space<vmem>>, vector<1x64x64xf32>
    %102 = vector.shape_cast %101 : vector<1x64x64xf32> to vector<64x64xf32>
    %cst_31 = arith.constant dense<0.000000e+00> : vector<48x64xf32>
    %103 = tpu.matmul %100, %102, %cst_31 {dimension_numbers = #tpu.dot_dimension_numbers<[1], [0], [0], [1], [0, 0, 1, 1], [], []>} : vector<48x64xf32>, vector<64x64xf32>, vector<48x64xf32> -> vector<48x64xf32>
    %104 = vector.broadcast %8 : vector<1x64xf32> to vector<48x64xf32>
    %105 = arith.addf %103, %104 : vector<48x64xf32>
    %106 = arith.addf %2, %105 : vector<48x64xf32>
    %cst_32 = arith.constant dense<0.000000e+00> : vector<48xf32>
    %107 = vector.multi_reduction <add>, %106, %cst_32 [1] : vector<48x64xf32> to vector<48xf32>
    %108 = vector.shape_cast %107 : vector<48xf32> to vector<48x1xf32>
    %cst_33 = arith.constant 6.400000e+01 : f32
    %109 = vector.broadcast %cst_33 : f32 to vector<48x1xf32>
    %110 = arith.divf %108, %109 : vector<48x1xf32>
    %111 = vector.broadcast %110 : vector<48x1xf32> to vector<48x64xf32>
    %112 = arith.subf %106, %111 : vector<48x64xf32>
    %113 = arith.mulf %112, %112 : vector<48x64xf32>
    %cst_34 = arith.constant dense<0.000000e+00> : vector<48xf32>
    %114 = vector.multi_reduction <add>, %113, %cst_34 [1] : vector<48x64xf32> to vector<48xf32>
    %115 = vector.shape_cast %114 : vector<48xf32> to vector<48x1xf32>
    %cst_35 = arith.constant 6.400000e+01 : f32
    %116 = vector.broadcast %cst_35 : f32 to vector<48x1xf32>
    %117 = arith.divf %115, %116 : vector<48x1xf32>
    %118 = vector.broadcast %110 : vector<48x1xf32> to vector<48x64xf32>
    %119 = arith.subf %106, %118 : vector<48x64xf32>
    %cst_36 = arith.constant 9.99999974E-6 : f32
    %120 = vector.broadcast %cst_36 : f32 to vector<48x1xf32>
    %121 = arith.addf %117, %120 : vector<48x1xf32>
    %122 = math.rsqrt %121 : vector<48x1xf32>
    %123 = vector.broadcast %122 : vector<48x1xf32> to vector<48x64xf32>
    %124 = arith.mulf %119, %123 : vector<48x64xf32>
    %125 = vector.broadcast %9 : vector<1x64xf32> to vector<48x64xf32>
    %126 = arith.mulf %124, %125 : vector<48x64xf32>
    %127 = vector.broadcast %10 : vector<1x64xf32> to vector<48x64xf32>
    %128 = arith.addf %126, %127 : vector<48x64xf32>
    %c0_37 = arith.constant 0 : index
    %c0_38 = arith.constant 0 : index
    %c0_39 = arith.constant 0 : index
    %129 = vector.load %arg4[%c0_37, %c0_38, %c0_39] : memref<2x64x256xf32, #tpu.memory_space<vmem>>, vector<1x64x256xf32>
    %130 = vector.shape_cast %129 : vector<1x64x256xf32> to vector<64x256xf32>
    %cst_40 = arith.constant dense<0.000000e+00> : vector<48x256xf32>
    %131 = tpu.matmul %128, %130, %cst_40 {dimension_numbers = #tpu.dot_dimension_numbers<[1], [0], [0], [1], [0, 0, 1, 1], [], []>} : vector<48x64xf32>, vector<64x256xf32>, vector<48x256xf32> -> vector<48x256xf32>
    %c0_41 = arith.constant 0 : index
    %c0_42 = arith.constant 0 : index
    %c0_43 = arith.constant 0 : index
    %132 = vector.load %arg6[%c0_41, %c0_42, %c0_43] : memref<2x1x256xf32, #tpu.memory_space<vmem>>, vector<1x1x256xf32>
    %133 = vector.shape_cast %132 : vector<1x1x256xf32> to vector<1x256xf32>
    %134 = vector.broadcast %133 : vector<1x256xf32> to vector<48x256xf32>
    %135 = arith.addf %131, %134 : vector<48x256xf32>
    %cst_44 = arith.constant 5.000000e-01 : f32
    %136 = vector.broadcast %cst_44 : f32 to vector<48x256xf32>
    %137 = arith.mulf %136, %135 : vector<48x256xf32>
    %cst_45 = arith.constant 4.471500e-02 : f32
    %138 = vector.broadcast %cst_45 : f32 to vector<48x256xf32>
    %139 = arith.mulf %138, %135 : vector<48x256xf32>
    %140 = arith.mulf %139, %135 : vector<48x256xf32>
    %141 = arith.mulf %140, %135 : vector<48x256xf32>
    %142 = arith.addf %135, %141 : vector<48x256xf32>
    %cst_46 = arith.constant 0.797884583 : f32
    %143 = vector.broadcast %cst_46 : f32 to vector<48x256xf32>
    %144 = arith.mulf %143, %142 : vector<48x256xf32>
    %145 = math.tanh %144 : vector<48x256xf32>
    %cst_47 = arith.constant 1.000000e+00 : f32
    %146 = vector.broadcast %cst_47 : f32 to vector<48x256xf32>
    %147 = arith.addf %146, %145 : vector<48x256xf32>
    %148 = arith.mulf %137, %147 : vector<48x256xf32>
    %c0_48 = arith.constant 0 : index
    %c0_49 = arith.constant 0 : index
    %c0_50 = arith.constant 0 : index
    %149 = vector.load %arg5[%c0_48, %c0_49, %c0_50] : memref<2x256x64xf32, #tpu.memory_space<vmem>>, vector<1x256x64xf32>
    %150 = vector.shape_cast %149 : vector<1x256x64xf32> to vector<256x64xf32>
    %cst_51 = arith.constant dense<0.000000e+00> : vector<48x64xf32>
    %151 = tpu.matmul %148, %150, %cst_51 {dimension_numbers = #tpu.dot_dimension_numbers<[1], [0], [0], [1], [0, 0, 1, 1], [], []>} : vector<48x256xf32>, vector<256x64xf32>, vector<48x64xf32> -> vector<48x64xf32>
    %152 = vector.broadcast %11 : vector<1x64xf32> to vector<48x64xf32>
    %153 = arith.addf %151, %152 : vector<48x64xf32>
    %154 = arith.addf %106, %153 : vector<48x64xf32>
    %155 = vector.extract_strided_slice %0 {offsets = [11, 0], sizes = [1, 64], strides = [1, 1]} : vector<20x64xf32> to vector<1x64xf32>
    %156 = vector.extract_strided_slice %0 {offsets = [12, 0], sizes = [1, 64], strides = [1, 1]} : vector<20x64xf32> to vector<1x64xf32>
    %157 = vector.extract_strided_slice %0 {offsets = [13, 0], sizes = [1, 64], strides = [1, 1]} : vector<20x64xf32> to vector<1x64xf32>
    %158 = vector.extract_strided_slice %0 {offsets = [14, 0], sizes = [1, 64], strides = [1, 1]} : vector<20x64xf32> to vector<1x64xf32>
    %159 = vector.extract_strided_slice %0 {offsets = [15, 0], sizes = [1, 64], strides = [1, 1]} : vector<20x64xf32> to vector<1x64xf32>
    %160 = vector.extract_strided_slice %0 {offsets = [16, 0], sizes = [1, 64], strides = [1, 1]} : vector<20x64xf32> to vector<1x64xf32>
    %161 = vector.extract_strided_slice %0 {offsets = [17, 0], sizes = [1, 64], strides = [1, 1]} : vector<20x64xf32> to vector<1x64xf32>
    %162 = vector.extract_strided_slice %0 {offsets = [18, 0], sizes = [1, 64], strides = [1, 1]} : vector<20x64xf32> to vector<1x64xf32>
    %163 = vector.extract_strided_slice %0 {offsets = [19, 0], sizes = [1, 64], strides = [1, 1]} : vector<20x64xf32> to vector<1x64xf32>
    %cst_52 = arith.constant dense<0.000000e+00> : vector<48xf32>
    %164 = vector.multi_reduction <add>, %154, %cst_52 [1] : vector<48x64xf32> to vector<48xf32>
    %165 = vector.shape_cast %164 : vector<48xf32> to vector<48x1xf32>
    %cst_53 = arith.constant 6.400000e+01 : f32
    %166 = vector.broadcast %cst_53 : f32 to vector<48x1xf32>
    %167 = arith.divf %165, %166 : vector<48x1xf32>
    %168 = vector.broadcast %167 : vector<48x1xf32> to vector<48x64xf32>
    %169 = arith.subf %154, %168 : vector<48x64xf32>
    %170 = arith.mulf %169, %169 : vector<48x64xf32>
    %cst_54 = arith.constant dense<0.000000e+00> : vector<48xf32>
    %171 = vector.multi_reduction <add>, %170, %cst_54 [1] : vector<48x64xf32> to vector<48xf32>
    %172 = vector.shape_cast %171 : vector<48xf32> to vector<48x1xf32>
    %cst_55 = arith.constant 6.400000e+01 : f32
    %173 = vector.broadcast %cst_55 : f32 to vector<48x1xf32>
    %174 = arith.divf %172, %173 : vector<48x1xf32>
    %175 = vector.broadcast %167 : vector<48x1xf32> to vector<48x64xf32>
    %176 = arith.subf %154, %175 : vector<48x64xf32>
    %cst_56 = arith.constant 9.99999974E-6 : f32
    %177 = vector.broadcast %cst_56 : f32 to vector<48x1xf32>
    %178 = arith.addf %174, %177 : vector<48x1xf32>
    %179 = math.rsqrt %178 : vector<48x1xf32>
    %180 = vector.broadcast %179 : vector<48x1xf32> to vector<48x64xf32>
    %181 = arith.mulf %176, %180 : vector<48x64xf32>
    %182 = vector.broadcast %155 : vector<1x64xf32> to vector<48x64xf32>
    %183 = arith.mulf %181, %182 : vector<48x64xf32>
    %184 = vector.broadcast %156 : vector<1x64xf32> to vector<48x64xf32>
    %185 = arith.addf %183, %184 : vector<48x64xf32>
    %c4 = arith.constant 4 : index
    %c0_57 = arith.constant 0 : index
    %c0_58 = arith.constant 0 : index
    %186 = vector.load %arg3[%c4, %c0_57, %c0_58] : memref<8x64x64xf32, #tpu.memory_space<vmem>>, vector<1x64x64xf32>
    %187 = vector.shape_cast %186 : vector<1x64x64xf32> to vector<64x64xf32>
    %cst_59 = arith.constant dense<0.000000e+00> : vector<48x64xf32>
    %188 = tpu.matmul %185, %187, %cst_59 {dimension_numbers = #tpu.dot_dimension_numbers<[1], [0], [0], [1], [0, 0, 1, 1], [], []>} : vector<48x64xf32>, vector<64x64xf32>, vector<48x64xf32> -> vector<48x64xf32>
    %189 = vector.broadcast %157 : vector<1x64xf32> to vector<48x64xf32>
    %190 = arith.addf %188, %189 : vector<48x64xf32>
    %c5 = arith.constant 5 : index
    %c0_60 = arith.constant 0 : index
    %c0_61 = arith.constant 0 : index
    %191 = vector.load %arg3[%c5, %c0_60, %c0_61] : memref<8x64x64xf32, #tpu.memory_space<vmem>>, vector<1x64x64xf32>
    %192 = vector.shape_cast %191 : vector<1x64x64xf32> to vector<64x64xf32>
    %cst_62 = arith.constant dense<0.000000e+00> : vector<48x64xf32>
    %193 = tpu.matmul %185, %192, %cst_62 {dimension_numbers = #tpu.dot_dimension_numbers<[1], [0], [0], [1], [0, 0, 1, 1], [], []>} : vector<48x64xf32>, vector<64x64xf32>, vector<48x64xf32> -> vector<48x64xf32>
    %194 = vector.broadcast %158 : vector<1x64xf32> to vector<48x64xf32>
    %195 = arith.addf %193, %194 : vector<48x64xf32>
    %c6 = arith.constant 6 : index
    %c0_63 = arith.constant 0 : index
    %c0_64 = arith.constant 0 : index
    %196 = vector.load %arg3[%c6, %c0_63, %c0_64] : memref<8x64x64xf32, #tpu.memory_space<vmem>>, vector<1x64x64xf32>
    %197 = vector.shape_cast %196 : vector<1x64x64xf32> to vector<64x64xf32>
    %cst_65 = arith.constant dense<0.000000e+00> : vector<48x64xf32>
    %198 = tpu.matmul %185, %197, %cst_65 {dimension_numbers = #tpu.dot_dimension_numbers<[1], [0], [0], [1], [0, 0, 1, 1], [], []>} : vector<48x64xf32>, vector<64x64xf32>, vector<48x64xf32> -> vector<48x64xf32>
    %199 = vector.broadcast %159 : vector<1x64xf32> to vector<48x64xf32>
    %200 = arith.addf %198, %199 : vector<48x64xf32>
    %201 = tpu.iota {dimensions = array<i32: 1>} : vector<1x64xi32>
    %cst_66 = arith.constant 0.000000e+00 : f32
    %202 = vector.broadcast %cst_66 : f32 to vector<48x64xf32>
    %c0_i32_67 = arith.constant 0 : i32
    %203 = vector.broadcast %c0_i32_67 : i32 to vector<1x64xi32>
    %204 = arith.cmpi sge, %201, %203 : vector<1x64xi32>
    %c32_i32_68 = arith.constant 32 : i32
    %205 = vector.broadcast %c32_i32_68 : i32 to vector<1x64xi32>
    %206 = arith.cmpi slt, %201, %205 : vector<1x64xi32>
    %207 = arith.andi %204, %206 : vector<1x64xi1>
    %208 = arith.extui %207 : vector<1x64xi1> to vector<1x64xi32>
    %209 = arith.sitofp %208 : vector<1x64xi32> to vector<1x64xf32>
    %210 = vector.broadcast %209 : vector<1x64xf32> to vector<48x64xf32>
    %211 = arith.mulf %195, %210 : vector<48x64xf32>
    %212 = vector.broadcast %209 : vector<1x64xf32> to vector<48x64xf32>
    %213 = arith.mulf %200, %212 : vector<48x64xf32>
    %cst_69 = arith.constant dense<0.000000e+00> : vector<48x48xf32>
    %214 = tpu.matmul %190, %211, %cst_69 {dimension_numbers = #tpu.dot_dimension_numbers<[1], [1], [0], [0], [0, 0, 1, 0], [], []>} : vector<48x64xf32>, vector<48x64xf32>, vector<48x48xf32> -> vector<48x48xf32>
    %215 = arith.addf %214, %1 : vector<48x48xf32>
    %cst_70 = arith.constant dense<0xFF800000> : vector<48xf32>
    %216 = vector.multi_reduction <maximumf>, %215, %cst_70 [1] : vector<48x48xf32> to vector<48xf32>
    %217 = vector.shape_cast %216 : vector<48xf32> to vector<48x1xf32>
    %218 = vector.broadcast %217 : vector<48x1xf32> to vector<48x48xf32>
    %219 = arith.subf %215, %218 : vector<48x48xf32>
    %220 = math.exp %219 : vector<48x48xf32>
    %cst_71 = arith.constant dense<0.000000e+00> : vector<48xf32>
    %221 = vector.multi_reduction <add>, %220, %cst_71 [1] : vector<48x48xf32> to vector<48xf32>
    %222 = vector.shape_cast %221 : vector<48xf32> to vector<48x1xf32>
    %223 = tpu.reciprocal %222 {approx = true} : vector<48x1xf32> -> vector<48x1xf32>
    %224 = vector.broadcast %223 : vector<48x1xf32> to vector<48x48xf32>
    %225 = arith.mulf %220, %224 : vector<48x48xf32>
    %cst_72 = arith.constant dense<0.000000e+00> : vector<48x64xf32>
    %226 = tpu.matmul %225, %213, %cst_72 {dimension_numbers = #tpu.dot_dimension_numbers<[1], [0], [0], [1], [0, 0, 1, 1], [], []>} : vector<48x48xf32>, vector<48x64xf32>, vector<48x64xf32> -> vector<48x64xf32>
    %227 = arith.addf %202, %226 : vector<48x64xf32>
    %c32_i32_73 = arith.constant 32 : i32
    %228 = vector.broadcast %c32_i32_73 : i32 to vector<1x64xi32>
    %229 = arith.cmpi sge, %201, %228 : vector<1x64xi32>
    %c64_i32_74 = arith.constant 64 : i32
    %230 = vector.broadcast %c64_i32_74 : i32 to vector<1x64xi32>
    %231 = arith.cmpi slt, %201, %230 : vector<1x64xi32>
    %232 = arith.andi %229, %231 : vector<1x64xi1>
    %233 = arith.extui %232 : vector<1x64xi1> to vector<1x64xi32>
    %234 = arith.sitofp %233 : vector<1x64xi32> to vector<1x64xf32>
    %235 = vector.broadcast %234 : vector<1x64xf32> to vector<48x64xf32>
    %236 = arith.mulf %195, %235 : vector<48x64xf32>
    %237 = vector.broadcast %234 : vector<1x64xf32> to vector<48x64xf32>
    %238 = arith.mulf %200, %237 : vector<48x64xf32>
    %cst_75 = arith.constant dense<0.000000e+00> : vector<48x48xf32>
    %239 = tpu.matmul %190, %236, %cst_75 {dimension_numbers = #tpu.dot_dimension_numbers<[1], [1], [0], [0], [0, 0, 1, 0], [], []>} : vector<48x64xf32>, vector<48x64xf32>, vector<48x48xf32> -> vector<48x48xf32>
    %240 = arith.addf %239, %1 : vector<48x48xf32>
    %cst_76 = arith.constant dense<0xFF800000> : vector<48xf32>
    %241 = vector.multi_reduction <maximumf>, %240, %cst_76 [1] : vector<48x48xf32> to vector<48xf32>
    %242 = vector.shape_cast %241 : vector<48xf32> to vector<48x1xf32>
    %243 = vector.broadcast %242 : vector<48x1xf32> to vector<48x48xf32>
    %244 = arith.subf %240, %243 : vector<48x48xf32>
    %245 = math.exp %244 : vector<48x48xf32>
    %cst_77 = arith.constant dense<0.000000e+00> : vector<48xf32>
    %246 = vector.multi_reduction <add>, %245, %cst_77 [1] : vector<48x48xf32> to vector<48xf32>
    %247 = vector.shape_cast %246 : vector<48xf32> to vector<48x1xf32>
    %248 = tpu.reciprocal %247 {approx = true} : vector<48x1xf32> -> vector<48x1xf32>
    %249 = vector.broadcast %248 : vector<48x1xf32> to vector<48x48xf32>
    %250 = arith.mulf %245, %249 : vector<48x48xf32>
    %cst_78 = arith.constant dense<0.000000e+00> : vector<48x64xf32>
    %251 = tpu.matmul %250, %238, %cst_78 {dimension_numbers = #tpu.dot_dimension_numbers<[1], [0], [0], [1], [0, 0, 1, 1], [], []>} : vector<48x48xf32>, vector<48x64xf32>, vector<48x64xf32> -> vector<48x64xf32>
    %252 = arith.addf %227, %251 : vector<48x64xf32>
    %c7 = arith.constant 7 : index
    %c0_79 = arith.constant 0 : index
    %c0_80 = arith.constant 0 : index
    %253 = vector.load %arg3[%c7, %c0_79, %c0_80] : memref<8x64x64xf32, #tpu.memory_space<vmem>>, vector<1x64x64xf32>
    %254 = vector.shape_cast %253 : vector<1x64x64xf32> to vector<64x64xf32>
    %cst_81 = arith.constant dense<0.000000e+00> : vector<48x64xf32>
    %255 = tpu.matmul %252, %254, %cst_81 {dimension_numbers = #tpu.dot_dimension_numbers<[1], [0], [0], [1], [0, 0, 1, 1], [], []>} : vector<48x64xf32>, vector<64x64xf32>, vector<48x64xf32> -> vector<48x64xf32>
    %256 = vector.broadcast %160 : vector<1x64xf32> to vector<48x64xf32>
    %257 = arith.addf %255, %256 : vector<48x64xf32>
    %258 = arith.addf %154, %257 : vector<48x64xf32>
    %cst_82 = arith.constant dense<0.000000e+00> : vector<48xf32>
    %259 = vector.multi_reduction <add>, %258, %cst_82 [1] : vector<48x64xf32> to vector<48xf32>
    %260 = vector.shape_cast %259 : vector<48xf32> to vector<48x1xf32>
    %cst_83 = arith.constant 6.400000e+01 : f32
    %261 = vector.broadcast %cst_83 : f32 to vector<48x1xf32>
    %262 = arith.divf %260, %261 : vector<48x1xf32>
    %263 = vector.broadcast %262 : vector<48x1xf32> to vector<48x64xf32>
    %264 = arith.subf %258, %263 : vector<48x64xf32>
    %265 = arith.mulf %264, %264 : vector<48x64xf32>
    %cst_84 = arith.constant dense<0.000000e+00> : vector<48xf32>
    %266 = vector.multi_reduction <add>, %265, %cst_84 [1] : vector<48x64xf32> to vector<48xf32>
    %267 = vector.shape_cast %266 : vector<48xf32> to vector<48x1xf32>
    %cst_85 = arith.constant 6.400000e+01 : f32
    %268 = vector.broadcast %cst_85 : f32 to vector<48x1xf32>
    %269 = arith.divf %267, %268 : vector<48x1xf32>
    %270 = vector.broadcast %262 : vector<48x1xf32> to vector<48x64xf32>
    %271 = arith.subf %258, %270 : vector<48x64xf32>
    %cst_86 = arith.constant 9.99999974E-6 : f32
    %272 = vector.broadcast %cst_86 : f32 to vector<48x1xf32>
    %273 = arith.addf %269, %272 : vector<48x1xf32>
    %274 = math.rsqrt %273 : vector<48x1xf32>
    %275 = vector.broadcast %274 : vector<48x1xf32> to vector<48x64xf32>
    %276 = arith.mulf %271, %275 : vector<48x64xf32>
    %277 = vector.broadcast %161 : vector<1x64xf32> to vector<48x64xf32>
    %278 = arith.mulf %276, %277 : vector<48x64xf32>
    %279 = vector.broadcast %162 : vector<1x64xf32> to vector<48x64xf32>
    %280 = arith.addf %278, %279 : vector<48x64xf32>
    %c1_87 = arith.constant 1 : index
    %c0_88 = arith.constant 0 : index
    %c0_89 = arith.constant 0 : index
    %281 = vector.load %arg4[%c1_87, %c0_88, %c0_89] : memref<2x64x256xf32, #tpu.memory_space<vmem>>, vector<1x64x256xf32>
    %282 = vector.shape_cast %281 : vector<1x64x256xf32> to vector<64x256xf32>
    %cst_90 = arith.constant dense<0.000000e+00> : vector<48x256xf32>
    %283 = tpu.matmul %280, %282, %cst_90 {dimension_numbers = #tpu.dot_dimension_numbers<[1], [0], [0], [1], [0, 0, 1, 1], [], []>} : vector<48x64xf32>, vector<64x256xf32>, vector<48x256xf32> -> vector<48x256xf32>
    %c1_91 = arith.constant 1 : index
    %c0_92 = arith.constant 0 : index
    %c0_93 = arith.constant 0 : index
    %284 = vector.load %arg6[%c1_91, %c0_92, %c0_93] : memref<2x1x256xf32, #tpu.memory_space<vmem>>, vector<1x1x256xf32>
    %285 = vector.shape_cast %284 : vector<1x1x256xf32> to vector<1x256xf32>
    %286 = vector.broadcast %285 : vector<1x256xf32> to vector<48x256xf32>
    %287 = arith.addf %283, %286 : vector<48x256xf32>
    %cst_94 = arith.constant 5.000000e-01 : f32
    %288 = vector.broadcast %cst_94 : f32 to vector<48x256xf32>
    %289 = arith.mulf %288, %287 : vector<48x256xf32>
    %cst_95 = arith.constant 4.471500e-02 : f32
    %290 = vector.broadcast %cst_95 : f32 to vector<48x256xf32>
    %291 = arith.mulf %290, %287 : vector<48x256xf32>
    %292 = arith.mulf %291, %287 : vector<48x256xf32>
    %293 = arith.mulf %292, %287 : vector<48x256xf32>
    %294 = arith.addf %287, %293 : vector<48x256xf32>
    %cst_96 = arith.constant 0.797884583 : f32
    %295 = vector.broadcast %cst_96 : f32 to vector<48x256xf32>
    %296 = arith.mulf %295, %294 : vector<48x256xf32>
    %297 = math.tanh %296 : vector<48x256xf32>
    %cst_97 = arith.constant 1.000000e+00 : f32
    %298 = vector.broadcast %cst_97 : f32 to vector<48x256xf32>
    %299 = arith.addf %298, %297 : vector<48x256xf32>
    %300 = arith.mulf %289, %299 : vector<48x256xf32>
    %c1_98 = arith.constant 1 : index
    %c0_99 = arith.constant 0 : index
    %c0_100 = arith.constant 0 : index
    %301 = vector.load %arg5[%c1_98, %c0_99, %c0_100] : memref<2x256x64xf32, #tpu.memory_space<vmem>>, vector<1x256x64xf32>
    %302 = vector.shape_cast %301 : vector<1x256x64xf32> to vector<256x64xf32>
    %cst_101 = arith.constant dense<0.000000e+00> : vector<48x64xf32>
    %303 = tpu.matmul %300, %302, %cst_101 {dimension_numbers = #tpu.dot_dimension_numbers<[1], [0], [0], [1], [0, 0, 1, 1], [], []>} : vector<48x256xf32>, vector<256x64xf32>, vector<48x64xf32> -> vector<48x64xf32>
    %304 = vector.broadcast %163 : vector<1x64xf32> to vector<48x64xf32>
    %305 = arith.addf %303, %304 : vector<48x64xf32>
    %306 = arith.addf %258, %305 : vector<48x64xf32>
    %307 = vector.extract_strided_slice %0 {offsets = [0, 0], sizes = [1, 64], strides = [1, 1]} : vector<20x64xf32> to vector<1x64xf32>
    %308 = vector.extract_strided_slice %0 {offsets = [1, 0], sizes = [1, 64], strides = [1, 1]} : vector<20x64xf32> to vector<1x64xf32>
    %cst_102 = arith.constant dense<0.000000e+00> : vector<48xf32>
    %309 = vector.multi_reduction <add>, %306, %cst_102 [1] : vector<48x64xf32> to vector<48xf32>
    %310 = vector.shape_cast %309 : vector<48xf32> to vector<48x1xf32>
    %cst_103 = arith.constant 6.400000e+01 : f32
    %311 = vector.broadcast %cst_103 : f32 to vector<48x1xf32>
    %312 = arith.divf %310, %311 : vector<48x1xf32>
    %313 = vector.broadcast %312 : vector<48x1xf32> to vector<48x64xf32>
    %314 = arith.subf %306, %313 : vector<48x64xf32>
    %315 = arith.mulf %314, %314 : vector<48x64xf32>
    %cst_104 = arith.constant dense<0.000000e+00> : vector<48xf32>
    %316 = vector.multi_reduction <add>, %315, %cst_104 [1] : vector<48x64xf32> to vector<48xf32>
    %317 = vector.shape_cast %316 : vector<48xf32> to vector<48x1xf32>
    %cst_105 = arith.constant 6.400000e+01 : f32
    %318 = vector.broadcast %cst_105 : f32 to vector<48x1xf32>
    %319 = arith.divf %317, %318 : vector<48x1xf32>
    %320 = vector.broadcast %312 : vector<48x1xf32> to vector<48x64xf32>
    %321 = arith.subf %306, %320 : vector<48x64xf32>
    %cst_106 = arith.constant 9.99999974E-6 : f32
    %322 = vector.broadcast %cst_106 : f32 to vector<48x1xf32>
    %323 = arith.addf %319, %322 : vector<48x1xf32>
    %324 = math.rsqrt %323 : vector<48x1xf32>
    %325 = vector.broadcast %324 : vector<48x1xf32> to vector<48x64xf32>
    %326 = arith.mulf %321, %325 : vector<48x64xf32>
    %327 = vector.broadcast %307 : vector<1x64xf32> to vector<48x64xf32>
    %328 = arith.mulf %326, %327 : vector<48x64xf32>
    %329 = vector.broadcast %308 : vector<1x64xf32> to vector<48x64xf32>
    %330 = arith.addf %328, %329 : vector<48x64xf32>
    %331 = vector.extract_strided_slice %330 {offsets = [8, 0], sizes = [16, 64], strides = [1, 1]} : vector<48x64xf32> to vector<16x64xf32>
    %332 = vector.extract_strided_slice %330 {offsets = [32, 0], sizes = [16, 64], strides = [1, 1]} : vector<48x64xf32> to vector<16x64xf32>
    %333 = tpu.concatenate %331, %332 in 0 : vector<16x64xf32>, vector<16x64xf32> -> vector<32x64xf32>
    %c0_107 = arith.constant 0 : index
    %c0_108 = arith.constant 0 : index
    %334 = vector.load %arg8[%c0_107, %c0_108] : memref<16x64xf32, #tpu.memory_space<vmem>>, vector<16x64xf32>
    %335 = tpu.concatenate %334, %334 in 0 : vector<16x64xf32>, vector<16x64xf32> -> vector<32x64xf32>
    %336 = arith.addf %333, %335 : vector<32x64xf32>
    %c0_109 = arith.constant 0 : index
    %c0_110 = arith.constant 0 : index
    %337 = vector.load %arg9[%c0_109, %c0_110] : memref<32x64xf32, #tpu.memory_space<vmem>>, vector<32x64xf32>
    tpu.vector_store %arg9[%c0_109, %c0_110], %336 {strides = array<i32>} : memref<32x64xf32, #tpu.memory_space<vmem>>, vector<32x64xf32>,
    return
  }
  func.func @transform_0(%arg0: i32) -> (i32, i32) {
    %c0_i32 = arith.constant 0 : i32
    %c0_i32_0 = arith.constant 0 : i32
    %c0_i32_1 = arith.constant 0 : i32
    return %c0_i32, %c0_i32_0 : i32, i32
  }
  func.func @transform_1(%arg0: i32) -> (i32, i32) {
    %c0_i32 = arith.constant 0 : i32
    %c0_i32_0 = arith.constant 0 : i32
    %c0_i32_1 = arith.constant 0 : i32
    return %c0_i32, %c0_i32_0 : i32, i32
  }
  func.func @transform_2(%arg0: i32) -> (i32, i32, i32) {
    %c0_i32 = arith.constant 0 : i32
    %c0_i32_0 = arith.constant 0 : i32
    %c0_i32_1 = arith.constant 0 : i32
    %c0_i32_2 = arith.constant 0 : i32
    return %c0_i32, %c0_i32_0, %c0_i32_1 : i32, i32, i32
  }
  func.func @transform_3(%arg0: i32) -> (i32, i32, i32) {
    %c0_i32 = arith.constant 0 : i32
    %c0_i32_0 = arith.constant 0 : i32
    %c0_i32_1 = arith.constant 0 : i32
    %c0_i32_2 = arith.constant 0 : i32
    return %c0_i32, %c0_i32_0, %c0_i32_1 : i32, i32, i32
  }
  func.func @transform_4(%arg0: i32) -> (i32, i32, i32) {
    %c0_i32 = arith.constant 0 : i32
    %c0_i32_0 = arith.constant 0 : i32
    %c0_i32_1 = arith.constant 0 : i32
    %c0_i32_2 = arith.constant 0 : i32
    return %c0_i32, %c0_i32_0, %c0_i32_1 : i32, i32, i32
  }
  func.func @transform_5(%arg0: i32) -> (i32, i32, i32) {
    %c0_i32 = arith.constant 0 : i32
    %c0_i32_0 = arith.constant 0 : i32
    %c0_i32_1 = arith.constant 0 : i32
    %c0_i32_2 = arith.constant 0 : i32
    return %c0_i32, %c0_i32_0, %c0_i32_1 : i32, i32, i32
  }
  func.func @transform_6(%arg0: i32) -> (i32, i32) {
    %c0_i32 = arith.constant 0 : i32
    %c0_i32_0 = arith.constant 0 : i32
    %c0_i32_1 = arith.constant 0 : i32
    return %c0_i32, %c0_i32_0 : i32, i32
  }
  func.func @transform_7(%arg0: i32) -> (i32, i32) {
    %c0_i32 = arith.constant 0 : i32
    %c0_i32_0 = arith.constant 0 : i32
    %c0_i32_1 = arith.constant 0 : i32
    return %c0_i32, %c0_i32_0 : i32, i32
  }
  func.func @transform_8(%arg0: i32) -> (i32, i32) {
    %c0_i32 = arith.constant 0 : i32
    %c0_i32_0 = arith.constant 0 : i32
    %c0_i32_1 = arith.constant 0 : i32
    return %c0_i32, %c0_i32_0 : i32, i32
  }
}

module attributes {stable_mosaic.version = 11 : i64} {
  func.func @_diffloss_kernel(%arg0: i32, %arg1: memref<32x64xf32, #tpu.memory_space<vmem>>, %arg2: memref<32x20xf32, #tpu.memory_space<vmem>>, %arg3: memref<32x1xf32, #tpu.memory_space<vmem>>, %arg4: memref<128x1xf32, #tpu.memory_space<vmem>>, %arg5: memref<128x64xf32, #tpu.memory_space<vmem>>, %arg6: memref<128x20xf32, #tpu.memory_space<vmem>>, %arg7: memref<14x64xf32, #tpu.memory_space<vmem>>, %arg8: memref<7x64x64xf32, #tpu.memory_space<vmem>>, %arg9: memref<20x64xf32, #tpu.memory_space<vmem>>, %arg10: memref<64x20xf32, #tpu.memory_space<vmem>>, %arg11: memref<1x20xf32, #tpu.memory_space<vmem>>, %arg12: memref<1x1xf32, #tpu.memory_space<vmem>>) attributes {dimension_semantics = [#tpu.dimension_semantics<arbitrary>], iteration_bounds = array<i64: 1>, scalar_prefetch = 0 : i64, scratch_operands = 0 : i64, tpu.core_type = #tpu.core_type<tc>, window_params = [{pipeline_mode = #tpu.pipeline_mode<synchronous>, transform_indices = @transform_0, window_bounds = array<i64: 32, 64>}, {pipeline_mode = #tpu.pipeline_mode<synchronous>, transform_indices = @transform_1, window_bounds = array<i64: 32, 20>}, {pipeline_mode = #tpu.pipeline_mode<synchronous>, transform_indices = @transform_2, window_bounds = array<i64: 32, 1>}, {pipeline_mode = #tpu.pipeline_mode<synchronous>, transform_indices = @transform_3, window_bounds = array<i64: 128, 1>}, {pipeline_mode = #tpu.pipeline_mode<synchronous>, transform_indices = @transform_4, window_bounds = array<i64: 128, 64>}, {pipeline_mode = #tpu.pipeline_mode<synchronous>, transform_indices = @transform_5, window_bounds = array<i64: 128, 20>}, {pipeline_mode = #tpu.pipeline_mode<synchronous>, transform_indices = @transform_6, window_bounds = array<i64: 14, 64>}, {pipeline_mode = #tpu.pipeline_mode<synchronous>, transform_indices = @transform_7, window_bounds = array<i64: 7, 64, 64>}, {pipeline_mode = #tpu.pipeline_mode<synchronous>, transform_indices = @transform_8, window_bounds = array<i64: 20, 64>}, {pipeline_mode = #tpu.pipeline_mode<synchronous>, transform_indices = @transform_9, window_bounds = array<i64: 64, 20>}, {pipeline_mode = #tpu.pipeline_mode<synchronous>, transform_indices = @transform_10, window_bounds = array<i64: 1, 20>}, {pipeline_mode = #tpu.pipeline_mode<synchronous>, transform_indices = @transform_11, window_bounds = array<i64: 1, 1>}]} {
    %c0 = arith.constant 0 : index
    %c0_0 = arith.constant 0 : index
    %0 = vector.load %arg7[%c0, %c0_0] : memref<14x64xf32, #tpu.memory_space<vmem>>, vector<14x64xf32>
    %c0_1 = arith.constant 0 : index
    %c0_2 = arith.constant 0 : index
    %1 = vector.load %arg1[%c0_1, %c0_2] : memref<32x64xf32, #tpu.memory_space<vmem>>, vector<32x64xf32>
    %2 = tpu.concatenate %1, %1, %1, %1 in 0 : vector<32x64xf32>, vector<32x64xf32>, vector<32x64xf32>, vector<32x64xf32> -> vector<128x64xf32>
    %c0_3 = arith.constant 0 : index
    %c0_4 = arith.constant 0 : index
    %3 = vector.load %arg2[%c0_3, %c0_4] : memref<32x20xf32, #tpu.memory_space<vmem>>, vector<32x20xf32>
    %4 = tpu.concatenate %3, %3, %3, %3 in 0 : vector<32x20xf32>, vector<32x20xf32>, vector<32x20xf32>, vector<32x20xf32> -> vector<128x20xf32>
    %c0_5 = arith.constant 0 : index
    %c0_6 = arith.constant 0 : index
    %5 = vector.load %arg3[%c0_5, %c0_6] : memref<32x1xf32, #tpu.memory_space<vmem>>, vector<32x1xf32>
    %6 = tpu.concatenate %5, %5, %5, %5 in 0 : vector<32x1xf32>, vector<32x1xf32>, vector<32x1xf32>, vector<32x1xf32> -> vector<128x1xf32>
    %c0_7 = arith.constant 0 : index
    %c0_8 = arith.constant 0 : index
    %7 = vector.load %arg4[%c0_7, %c0_8] : memref<128x1xf32, #tpu.memory_space<vmem>>, vector<128x1xf32>
    %c0_9 = arith.constant 0 : index
    %c0_10 = arith.constant 0 : index
    %8 = vector.load %arg6[%c0_9, %c0_10] : memref<128x20xf32, #tpu.memory_space<vmem>>, vector<128x20xf32>
    %9 = math.sqrt %7 : vector<128x1xf32>
    %10 = vector.broadcast %9 : vector<128x1xf32> to vector<128x20xf32>
    %11 = arith.mulf %10, %4 : vector<128x20xf32>
    %cst = arith.constant 1.000000e+00 : f32
    %12 = vector.broadcast %cst : f32 to vector<128x1xf32>
    %13 = arith.subf %12, %7 : vector<128x1xf32>
    %14 = math.sqrt %13 : vector<128x1xf32>
    %15 = vector.broadcast %14 : vector<128x1xf32> to vector<128x20xf32>
    %16 = arith.mulf %15, %8 : vector<128x20xf32>
    %17 = arith.addf %11, %16 : vector<128x20xf32>
    %c0_11 = arith.constant 0 : index
    %c0_12 = arith.constant 0 : index
    %18 = vector.load %arg5[%c0_11, %c0_12] : memref<128x64xf32, #tpu.memory_space<vmem>>, vector<128x64xf32>
    %c0_13 = arith.constant 0 : index
    %c0_14 = arith.constant 0 : index
    %c0_15 = arith.constant 0 : index
    %19 = vector.load %arg8[%c0_13, %c0_14, %c0_15] : memref<7x64x64xf32, #tpu.memory_space<vmem>>, vector<1x64x64xf32>
    %20 = vector.shape_cast %19 : vector<1x64x64xf32> to vector<64x64xf32>
    %cst_16 = arith.constant dense<0.000000e+00> : vector<128x64xf32>
    %21 = tpu.matmul %18, %20, %cst_16 {dimension_numbers = #tpu.dot_dimension_numbers<[1], [0], [0], [1], [0, 0, 1, 1], [], []>} : vector<128x64xf32>, vector<64x64xf32>, vector<128x64xf32> -> vector<128x64xf32>
    %22 = vector.extract_strided_slice %0 {offsets = [0, 0], sizes = [1, 64], strides = [1, 1]} : vector<14x64xf32> to vector<1x64xf32>
    %23 = vector.broadcast %22 : vector<1x64xf32> to vector<128x64xf32>
    %24 = arith.addf %21, %23 : vector<128x64xf32>
    %25 = arith.negf %24 : vector<128x64xf32>
    %26 = math.exp %25 : vector<128x64xf32>
    %cst_17 = arith.constant 1.000000e+00 : f32
    %27 = vector.broadcast %cst_17 : f32 to vector<128x64xf32>
    %28 = arith.addf %27, %26 : vector<128x64xf32>
    %29 = arith.divf %27, %28 : vector<128x64xf32>
    %30 = arith.mulf %24, %29 : vector<128x64xf32>
    %c1 = arith.constant 1 : index
    %c0_18 = arith.constant 0 : index
    %c0_19 = arith.constant 0 : index
    %31 = vector.load %arg8[%c1, %c0_18, %c0_19] : memref<7x64x64xf32, #tpu.memory_space<vmem>>, vector<1x64x64xf32>
    %32 = vector.shape_cast %31 : vector<1x64x64xf32> to vector<64x64xf32>
    %cst_20 = arith.constant dense<0.000000e+00> : vector<128x64xf32>
    %33 = tpu.matmul %30, %32, %cst_20 {dimension_numbers = #tpu.dot_dimension_numbers<[1], [0], [0], [1], [0, 0, 1, 1], [], []>} : vector<128x64xf32>, vector<64x64xf32>, vector<128x64xf32> -> vector<128x64xf32>
    %34 = vector.extract_strided_slice %0 {offsets = [1, 0], sizes = [1, 64], strides = [1, 1]} : vector<14x64xf32> to vector<1x64xf32>
    %35 = vector.broadcast %34 : vector<1x64xf32> to vector<128x64xf32>
    %36 = arith.addf %33, %35 : vector<128x64xf32>
    %c2 = arith.constant 2 : index
    %c0_21 = arith.constant 0 : index
    %c0_22 = arith.constant 0 : index
    %37 = vector.load %arg8[%c2, %c0_21, %c0_22] : memref<7x64x64xf32, #tpu.memory_space<vmem>>, vector<1x64x64xf32>
    %38 = vector.shape_cast %37 : vector<1x64x64xf32> to vector<64x64xf32>
    %cst_23 = arith.constant dense<0.000000e+00> : vector<128x64xf32>
    %39 = tpu.matmul %2, %38, %cst_23 {dimension_numbers = #tpu.dot_dimension_numbers<[1], [0], [0], [1], [0, 0, 1, 1], [], []>} : vector<128x64xf32>, vector<64x64xf32>, vector<128x64xf32> -> vector<128x64xf32>
    %40 = vector.extract_strided_slice %0 {offsets = [2, 0], sizes = [1, 64], strides = [1, 1]} : vector<14x64xf32> to vector<1x64xf32>
    %41 = vector.broadcast %40 : vector<1x64xf32> to vector<128x64xf32>
    %42 = arith.addf %39, %41 : vector<128x64xf32>
    %43 = arith.addf %36, %42 : vector<128x64xf32>
    %c0_24 = arith.constant 0 : index
    %c0_25 = arith.constant 0 : index
    %44 = vector.load %arg9[%c0_24, %c0_25] : memref<20x64xf32, #tpu.memory_space<vmem>>, vector<20x64xf32>
    %cst_26 = arith.constant dense<0.000000e+00> : vector<128x64xf32>
    %45 = tpu.matmul %17, %44, %cst_26 {dimension_numbers = #tpu.dot_dimension_numbers<[1], [0], [0], [1], [0, 0, 1, 1], [], []>} : vector<128x20xf32>, vector<20x64xf32>, vector<128x64xf32> -> vector<128x64xf32>
    %46 = vector.extract_strided_slice %0 {offsets = [3, 0], sizes = [1, 64], strides = [1, 1]} : vector<14x64xf32> to vector<1x64xf32>
    %47 = vector.broadcast %46 : vector<1x64xf32> to vector<128x64xf32>
    %48 = arith.addf %45, %47 : vector<128x64xf32>
    %49 = arith.negf %48 : vector<128x64xf32>
    %50 = math.exp %49 : vector<128x64xf32>
    %cst_27 = arith.constant 1.000000e+00 : f32
    %51 = vector.broadcast %cst_27 : f32 to vector<128x64xf32>
    %52 = arith.addf %51, %50 : vector<128x64xf32>
    %53 = arith.divf %51, %52 : vector<128x64xf32>
    %54 = arith.mulf %48, %53 : vector<128x64xf32>
    %55 = vector.extract_strided_slice %0 {offsets = [6, 0], sizes = [1, 64], strides = [1, 1]} : vector<14x64xf32> to vector<1x64xf32>
    %56 = vector.extract_strided_slice %0 {offsets = [7, 0], sizes = [1, 64], strides = [1, 1]} : vector<14x64xf32> to vector<1x64xf32>
    %57 = vector.extract_strided_slice %0 {offsets = [8, 0], sizes = [1, 64], strides = [1, 1]} : vector<14x64xf32> to vector<1x64xf32>
    %58 = vector.extract_strided_slice %0 {offsets = [9, 0], sizes = [1, 64], strides = [1, 1]} : vector<14x64xf32> to vector<1x64xf32>
    %cst_28 = arith.constant dense<0.000000e+00> : vector<128xf32>
    %59 = vector.multi_reduction <add>, %54, %cst_28 [1] : vector<128x64xf32> to vector<128xf32>
    %60 = vector.shape_cast %59 : vector<128xf32> to vector<128x1xf32>
    %cst_29 = arith.constant 6.400000e+01 : f32
    %61 = vector.broadcast %cst_29 : f32 to vector<128x1xf32>
    %62 = arith.divf %60, %61 : vector<128x1xf32>
    %63 = vector.broadcast %62 : vector<128x1xf32> to vector<128x64xf32>
    %64 = arith.subf %54, %63 : vector<128x64xf32>
    %65 = arith.mulf %64, %64 : vector<128x64xf32>
    %cst_30 = arith.constant dense<0.000000e+00> : vector<128xf32>
    %66 = vector.multi_reduction <add>, %65, %cst_30 [1] : vector<128x64xf32> to vector<128xf32>
    %67 = vector.shape_cast %66 : vector<128xf32> to vector<128x1xf32>
    %cst_31 = arith.constant 6.400000e+01 : f32
    %68 = vector.broadcast %cst_31 : f32 to vector<128x1xf32>
    %69 = arith.divf %67, %68 : vector<128x1xf32>
    %70 = vector.broadcast %62 : vector<128x1xf32> to vector<128x64xf32>
    %71 = arith.subf %54, %70 : vector<128x64xf32>
    %cst_32 = arith.constant 9.99999997E-7 : f32
    %72 = vector.broadcast %cst_32 : f32 to vector<128x1xf32>
    %73 = arith.addf %69, %72 : vector<128x1xf32>
    %74 = math.rsqrt %73 : vector<128x1xf32>
    %75 = vector.broadcast %74 : vector<128x1xf32> to vector<128x64xf32>
    %76 = arith.mulf %71, %75 : vector<128x64xf32>
    %77 = vector.broadcast %55 : vector<1x64xf32> to vector<128x64xf32>
    %78 = arith.mulf %76, %77 : vector<128x64xf32>
    %79 = vector.broadcast %56 : vector<1x64xf32> to vector<128x64xf32>
    %80 = arith.addf %78, %79 : vector<128x64xf32>
    %c3 = arith.constant 3 : index
    %c0_33 = arith.constant 0 : index
    %c0_34 = arith.constant 0 : index
    %81 = vector.load %arg8[%c3, %c0_33, %c0_34] : memref<7x64x64xf32, #tpu.memory_space<vmem>>, vector<1x64x64xf32>
    %82 = vector.shape_cast %81 : vector<1x64x64xf32> to vector<64x64xf32>
    %cst_35 = arith.constant dense<0.000000e+00> : vector<128x64xf32>
    %83 = tpu.matmul %80, %82, %cst_35 {dimension_numbers = #tpu.dot_dimension_numbers<[1], [0], [0], [1], [0, 0, 1, 1], [], []>} : vector<128x64xf32>, vector<64x64xf32>, vector<128x64xf32> -> vector<128x64xf32>
    %84 = vector.broadcast %57 : vector<1x64xf32> to vector<128x64xf32>
    %85 = arith.addf %83, %84 : vector<128x64xf32>
    %86 = arith.addf %85, %43 : vector<128x64xf32>
    %87 = arith.negf %86 : vector<128x64xf32>
    %88 = math.exp %87 : vector<128x64xf32>
    %cst_36 = arith.constant 1.000000e+00 : f32
    %89 = vector.broadcast %cst_36 : f32 to vector<128x64xf32>
    %90 = arith.addf %89, %88 : vector<128x64xf32>
    %91 = arith.divf %89, %90 : vector<128x64xf32>
    %92 = arith.mulf %86, %91 : vector<128x64xf32>
    %c4 = arith.constant 4 : index
    %c0_37 = arith.constant 0 : index
    %c0_38 = arith.constant 0 : index
    %93 = vector.load %arg8[%c4, %c0_37, %c0_38] : memref<7x64x64xf32, #tpu.memory_space<vmem>>, vector<1x64x64xf32>
    %94 = vector.shape_cast %93 : vector<1x64x64xf32> to vector<64x64xf32>
    %cst_39 = arith.constant dense<0.000000e+00> : vector<128x64xf32>
    %95 = tpu.matmul %92, %94, %cst_39 {dimension_numbers = #tpu.dot_dimension_numbers<[1], [0], [0], [1], [0, 0, 1, 1], [], []>} : vector<128x64xf32>, vector<64x64xf32>, vector<128x64xf32> -> vector<128x64xf32>
    %96 = arith.addf %54, %95 : vector<128x64xf32>
    %97 = vector.broadcast %58 : vector<1x64xf32> to vector<128x64xf32>
    %98 = arith.addf %96, %97 : vector<128x64xf32>
    %99 = vector.extract_strided_slice %0 {offsets = [10, 0], sizes = [1, 64], strides = [1, 1]} : vector<14x64xf32> to vector<1x64xf32>
    %100 = vector.extract_strided_slice %0 {offsets = [11, 0], sizes = [1, 64], strides = [1, 1]} : vector<14x64xf32> to vector<1x64xf32>
    %101 = vector.extract_strided_slice %0 {offsets = [12, 0], sizes = [1, 64], strides = [1, 1]} : vector<14x64xf32> to vector<1x64xf32>
    %102 = vector.extract_strided_slice %0 {offsets = [13, 0], sizes = [1, 64], strides = [1, 1]} : vector<14x64xf32> to vector<1x64xf32>
    %cst_40 = arith.constant dense<0.000000e+00> : vector<128xf32>
    %103 = vector.multi_reduction <add>, %98, %cst_40 [1] : vector<128x64xf32> to vector<128xf32>
    %104 = vector.shape_cast %103 : vector<128xf32> to vector<128x1xf32>
    %cst_41 = arith.constant 6.400000e+01 : f32
    %105 = vector.broadcast %cst_41 : f32 to vector<128x1xf32>
    %106 = arith.divf %104, %105 : vector<128x1xf32>
    %107 = vector.broadcast %106 : vector<128x1xf32> to vector<128x64xf32>
    %108 = arith.subf %98, %107 : vector<128x64xf32>
    %109 = arith.mulf %108, %108 : vector<128x64xf32>
    %cst_42 = arith.constant dense<0.000000e+00> : vector<128xf32>
    %110 = vector.multi_reduction <add>, %109, %cst_42 [1] : vector<128x64xf32> to vector<128xf32>
    %111 = vector.shape_cast %110 : vector<128xf32> to vector<128x1xf32>
    %cst_43 = arith.constant 6.400000e+01 : f32
    %112 = vector.broadcast %cst_43 : f32 to vector<128x1xf32>
    %113 = arith.divf %111, %112 : vector<128x1xf32>
    %114 = vector.broadcast %106 : vector<128x1xf32> to vector<128x64xf32>
    %115 = arith.subf %98, %114 : vector<128x64xf32>
    %cst_44 = arith.constant 9.99999997E-7 : f32
    %116 = vector.broadcast %cst_44 : f32 to vector<128x1xf32>
    %117 = arith.addf %113, %116 : vector<128x1xf32>
    %118 = math.rsqrt %117 : vector<128x1xf32>
    %119 = vector.broadcast %118 : vector<128x1xf32> to vector<128x64xf32>
    %120 = arith.mulf %115, %119 : vector<128x64xf32>
    %121 = vector.broadcast %99 : vector<1x64xf32> to vector<128x64xf32>
    %122 = arith.mulf %120, %121 : vector<128x64xf32>
    %123 = vector.broadcast %100 : vector<1x64xf32> to vector<128x64xf32>
    %124 = arith.addf %122, %123 : vector<128x64xf32>
    %c5 = arith.constant 5 : index
    %c0_45 = arith.constant 0 : index
    %c0_46 = arith.constant 0 : index
    %125 = vector.load %arg8[%c5, %c0_45, %c0_46] : memref<7x64x64xf32, #tpu.memory_space<vmem>>, vector<1x64x64xf32>
    %126 = vector.shape_cast %125 : vector<1x64x64xf32> to vector<64x64xf32>
    %cst_47 = arith.constant dense<0.000000e+00> : vector<128x64xf32>
    %127 = tpu.matmul %124, %126, %cst_47 {dimension_numbers = #tpu.dot_dimension_numbers<[1], [0], [0], [1], [0, 0, 1, 1], [], []>} : vector<128x64xf32>, vector<64x64xf32>, vector<128x64xf32> -> vector<128x64xf32>
    %128 = vector.broadcast %101 : vector<1x64xf32> to vector<128x64xf32>
    %129 = arith.addf %127, %128 : vector<128x64xf32>
    %130 = arith.addf %129, %43 : vector<128x64xf32>
    %131 = arith.negf %130 : vector<128x64xf32>
    %132 = math.exp %131 : vector<128x64xf32>
    %cst_48 = arith.constant 1.000000e+00 : f32
    %133 = vector.broadcast %cst_48 : f32 to vector<128x64xf32>
    %134 = arith.addf %133, %132 : vector<128x64xf32>
    %135 = arith.divf %133, %134 : vector<128x64xf32>
    %136 = arith.mulf %130, %135 : vector<128x64xf32>
    %c6 = arith.constant 6 : index
    %c0_49 = arith.constant 0 : index
    %c0_50 = arith.constant 0 : index
    %137 = vector.load %arg8[%c6, %c0_49, %c0_50] : memref<7x64x64xf32, #tpu.memory_space<vmem>>, vector<1x64x64xf32>
    %138 = vector.shape_cast %137 : vector<1x64x64xf32> to vector<64x64xf32>
    %cst_51 = arith.constant dense<0.000000e+00> : vector<128x64xf32>
    %139 = tpu.matmul %136, %138, %cst_51 {dimension_numbers = #tpu.dot_dimension_numbers<[1], [0], [0], [1], [0, 0, 1, 1], [], []>} : vector<128x64xf32>, vector<64x64xf32>, vector<128x64xf32> -> vector<128x64xf32>
    %140 = arith.addf %98, %139 : vector<128x64xf32>
    %141 = vector.broadcast %102 : vector<1x64xf32> to vector<128x64xf32>
    %142 = arith.addf %140, %141 : vector<128x64xf32>
    %143 = vector.extract_strided_slice %0 {offsets = [4, 0], sizes = [1, 64], strides = [1, 1]} : vector<14x64xf32> to vector<1x64xf32>
    %144 = vector.extract_strided_slice %0 {offsets = [5, 0], sizes = [1, 64], strides = [1, 1]} : vector<14x64xf32> to vector<1x64xf32>
    %cst_52 = arith.constant dense<0.000000e+00> : vector<128xf32>
    %145 = vector.multi_reduction <add>, %142, %cst_52 [1] : vector<128x64xf32> to vector<128xf32>
    %146 = vector.shape_cast %145 : vector<128xf32> to vector<128x1xf32>
    %cst_53 = arith.constant 6.400000e+01 : f32
    %147 = vector.broadcast %cst_53 : f32 to vector<128x1xf32>
    %148 = arith.divf %146, %147 : vector<128x1xf32>
    %149 = vector.broadcast %148 : vector<128x1xf32> to vector<128x64xf32>
    %150 = arith.subf %142, %149 : vector<128x64xf32>
    %151 = arith.mulf %150, %150 : vector<128x64xf32>
    %cst_54 = arith.constant dense<0.000000e+00> : vector<128xf32>
    %152 = vector.multi_reduction <add>, %151, %cst_54 [1] : vector<128x64xf32> to vector<128xf32>
    %153 = vector.shape_cast %152 : vector<128xf32> to vector<128x1xf32>
    %cst_55 = arith.constant 6.400000e+01 : f32
    %154 = vector.broadcast %cst_55 : f32 to vector<128x1xf32>
    %155 = arith.divf %153, %154 : vector<128x1xf32>
    %156 = vector.broadcast %148 : vector<128x1xf32> to vector<128x64xf32>
    %157 = arith.subf %142, %156 : vector<128x64xf32>
    %cst_56 = arith.constant 9.99999997E-7 : f32
    %158 = vector.broadcast %cst_56 : f32 to vector<128x1xf32>
    %159 = arith.addf %155, %158 : vector<128x1xf32>
    %160 = math.rsqrt %159 : vector<128x1xf32>
    %161 = vector.broadcast %160 : vector<128x1xf32> to vector<128x64xf32>
    %162 = arith.mulf %157, %161 : vector<128x64xf32>
    %163 = vector.broadcast %143 : vector<1x64xf32> to vector<128x64xf32>
    %164 = arith.mulf %162, %163 : vector<128x64xf32>
    %165 = vector.broadcast %144 : vector<1x64xf32> to vector<128x64xf32>
    %166 = arith.addf %164, %165 : vector<128x64xf32>
    %c0_57 = arith.constant 0 : index
    %c0_58 = arith.constant 0 : index
    %167 = vector.load %arg10[%c0_57, %c0_58] : memref<64x20xf32, #tpu.memory_space<vmem>>, vector<64x20xf32>
    %cst_59 = arith.constant dense<0.000000e+00> : vector<128x20xf32>
    %168 = tpu.matmul %166, %167, %cst_59 {dimension_numbers = #tpu.dot_dimension_numbers<[1], [0], [0], [1], [0, 0, 1, 1], [], []>} : vector<128x64xf32>, vector<64x20xf32>, vector<128x20xf32> -> vector<128x20xf32>
    %c0_60 = arith.constant 0 : index
    %c0_61 = arith.constant 0 : index
    %169 = vector.load %arg11[%c0_60, %c0_61] : memref<1x20xf32, #tpu.memory_space<vmem>>, vector<1x20xf32>
    %170 = vector.broadcast %169 : vector<1x20xf32> to vector<128x20xf32>
    %171 = arith.addf %168, %170 : vector<128x20xf32>
    %172 = arith.subf %171, %8 : vector<128x20xf32>
    %173 = arith.mulf %172, %172 : vector<128x20xf32>
    %cst_62 = arith.constant dense<0.000000e+00> : vector<128xf32>
    %174 = vector.multi_reduction <add>, %173, %cst_62 [1] : vector<128x20xf32> to vector<128xf32>
    %175 = vector.shape_cast %174 : vector<128xf32> to vector<128x1xf32>
    %cst_63 = arith.constant 5.000000e-02 : f32
    %176 = vector.broadcast %cst_63 : f32 to vector<128x1xf32>
    %177 = arith.mulf %175, %176 : vector<128x1xf32>
    %178 = arith.mulf %177, %6 : vector<128x1xf32>
    %179 = vector.shape_cast %178 : vector<128x1xf32> to vector<1x128x1xf32>
    %cst_64 = arith.constant dense<0.000000e+00> : vector<1xf32>
    %180 = vector.multi_reduction <add>, %179, %cst_64 [1, 2] : vector<1x128x1xf32> to vector<1xf32>
    %181 = vector.shape_cast %180 : vector<1xf32> to vector<1x1x1xf32>
    %182 = vector.extract %181[0, 0, 0] : f32 from vector<1x1x1xf32>
    %183 = vector.shape_cast %6 : vector<128x1xf32> to vector<1x128x1xf32>
    %cst_65 = arith.constant dense<0.000000e+00> : vector<1xf32>
    %184 = vector.multi_reduction <add>, %183, %cst_65 [1, 2] : vector<1x128x1xf32> to vector<1xf32>
    %185 = vector.shape_cast %184 : vector<1xf32> to vector<1x1x1xf32>
    %186 = vector.extract %185[0, 0, 0] : f32 from vector<1x1x1xf32>
    %187 = arith.divf %182, %186 : f32
    %188 = vector.broadcast %187 : f32 to vector<1x1xf32>
    %c0_66 = arith.constant 0 : index
    %c0_67 = arith.constant 0 : index
    %189 = vector.load %arg12[%c0_66, %c0_67] : memref<1x1xf32, #tpu.memory_space<vmem>>, vector<1x1xf32>
    tpu.vector_store %arg12[%c0_66, %c0_67], %188 {strides = array<i32>} : memref<1x1xf32, #tpu.memory_space<vmem>>, vector<1x1xf32>,
    return
  }
  func.func @transform_0(%arg0: i32) -> (i32, i32) {
    %c0_i32 = arith.constant 0 : i32
    %c0_i32_0 = arith.constant 0 : i32
    %c0_i32_1 = arith.constant 0 : i32
    return %c0_i32, %c0_i32_0 : i32, i32
  }
  func.func @transform_1(%arg0: i32) -> (i32, i32) {
    %c0_i32 = arith.constant 0 : i32
    %c0_i32_0 = arith.constant 0 : i32
    %c0_i32_1 = arith.constant 0 : i32
    return %c0_i32, %c0_i32_0 : i32, i32
  }
  func.func @transform_2(%arg0: i32) -> (i32, i32) {
    %c0_i32 = arith.constant 0 : i32
    %c0_i32_0 = arith.constant 0 : i32
    %c0_i32_1 = arith.constant 0 : i32
    return %c0_i32, %c0_i32_0 : i32, i32
  }
  func.func @transform_3(%arg0: i32) -> (i32, i32) {
    %c0_i32 = arith.constant 0 : i32
    %c0_i32_0 = arith.constant 0 : i32
    %c0_i32_1 = arith.constant 0 : i32
    return %c0_i32, %c0_i32_0 : i32, i32
  }
  func.func @transform_4(%arg0: i32) -> (i32, i32) {
    %c0_i32 = arith.constant 0 : i32
    %c0_i32_0 = arith.constant 0 : i32
    %c0_i32_1 = arith.constant 0 : i32
    return %c0_i32, %c0_i32_0 : i32, i32
  }
  func.func @transform_5(%arg0: i32) -> (i32, i32) {
    %c0_i32 = arith.constant 0 : i32
    %c0_i32_0 = arith.constant 0 : i32
    %c0_i32_1 = arith.constant 0 : i32
    return %c0_i32, %c0_i32_0 : i32, i32
  }
  func.func @transform_6(%arg0: i32) -> (i32, i32) {
    %c0_i32 = arith.constant 0 : i32
    %c0_i32_0 = arith.constant 0 : i32
    %c0_i32_1 = arith.constant 0 : i32
    return %c0_i32, %c0_i32_0 : i32, i32
  }
  func.func @transform_7(%arg0: i32) -> (i32, i32, i32) {
    %c0_i32 = arith.constant 0 : i32
    %c0_i32_0 = arith.constant 0 : i32
    %c0_i32_1 = arith.constant 0 : i32
    %c0_i32_2 = arith.constant 0 : i32
    return %c0_i32, %c0_i32_0, %c0_i32_1 : i32, i32, i32
  }
  func.func @transform_8(%arg0: i32) -> (i32, i32) {
    %c0_i32 = arith.constant 0 : i32
    %c0_i32_0 = arith.constant 0 : i32
    %c0_i32_1 = arith.constant 0 : i32
    return %c0_i32, %c0_i32_0 : i32, i32
  }
  func.func @transform_9(%arg0: i32) -> (i32, i32) {
    %c0_i32 = arith.constant 0 : i32
    %c0_i32_0 = arith.constant 0 : i32
    %c0_i32_1 = arith.constant 0 : i32
    return %c0_i32, %c0_i32_0 : i32, i32
  }
  func.func @transform_10(%arg0: i32) -> (i32, i32) {
    %c0_i32 = arith.constant 0 : i32
    %c0_i32_0 = arith.constant 0 : i32
    %c0_i32_1 = arith.constant 0 : i32
    return %c0_i32, %c0_i32_0 : i32, i32
  }
  func.func @transform_11(%arg0: i32) -> (i32, i32) {
    %c0_i32 = arith.constant 0 : i32
    %c0_i32_0 = arith.constant 0 : i32
    %c0_i32_1 = arith.constant 0 : i32
    return %c0_i32, %c0_i32_0 : i32, i32
  }
}

</mosaic_0001>

<llo_original>
// kernel: cpgg_forward.5
$region0: #{cpgg_forward.5}
  #allocation0 [shape = 'u32[]', space=smem, size = 0x4, offset = 0x4, fixed_abs, tag = 'smem constant byte address 0x4 - core index']
  #allocation1 [shape = 'u32[144,128]{1,0:T(1,128)}', space=vmem, size = 0x12000, scoped, tag = 'internal scratch']
  %s0 = inlined_call_operand.vmem [shape: f32[2,64], index: 0, kind: input, shape index: {}]
  %s1 = inlined_call_operand.vmem [shape: f32[4,20], index: 1, kind: input, shape index: {}]
  %s2 = inlined_call_operand.vmem [shape: f32[20,64], index: 2, kind: input, shape index: {}]
  %s3 = inlined_call_operand.vmem [shape: f32[20,20], index: 3, kind: input, shape index: {}]
  %s4 = inlined_call_operand.vmem [shape: f32[20,64], index: 4, kind: input, shape index: {}]
  %s5 = inlined_call_operand.vmem [shape: f32[8,64,64], index: 5, kind: input, shape index: {}]
  %s6 = inlined_call_operand.vmem [shape: f32[2,64,256], index: 6, kind: input, shape index: {}]
  %s7 = inlined_call_operand.vmem [shape: f32[2,256,64], index: 7, kind: input, shape index: {}]
  %s8 = inlined_call_operand.vmem [shape: f32[2,1,256], index: 8, kind: input, shape index: {}]
  %s9 = inlined_call_operand.vmem [shape: f32[24,64], index: 9, kind: input, shape index: {}]
  %s10 = inlined_call_operand.vmem [shape: f32[64,64], index: 10, kind: input, shape index: {}]
  %s11 = inlined_call_operand.vmem [shape: f32[20,64], index: 11, kind: output, shape index: {}]
  %s12 = sld [smem:[#allocation0]]
  $region54: #{cpgg_forward.5} parent=0
    _
  %s14 = ssub.s32 1, %s12
  %s15 = scalar_select 0, %s14, %s12
  // Predicated region
  $region2: #{cpgg_forward.5} parent=0 // pred_check
    _
  $region3: #{cpgg_forward.5} parent=0 // pred_check_branch
    %17 = sbr.rel (0) target = $region5
  $region4: #{cpgg_forward.5} parent=0 // pred_region
    _
  $region5: #{cpgg_forward.5} parent=0 // pred_fallthru
    _
  // Predicated region
  $region6: #{cpgg_forward.5} parent=0 // pred_check
    _
  $region7: #{cpgg_forward.5} parent=0 // pred_check_branch
    %19 = sbr.rel (0) target = $region9
  $region8: #{cpgg_forward.5} parent=0 // pred_region
    _
  $region9: #{cpgg_forward.5} parent=0 // pred_fallthru
    _
  // Predicated region
  $region10: #{cpgg_forward.5} parent=0 // pred_check
    _
  $region11: #{cpgg_forward.5} parent=0 // pred_check_branch
    %21 = sbr.rel (0) target = $region13
  $region12: #{cpgg_forward.5} parent=0 // pred_region
    _
  $region13: #{cpgg_forward.5} parent=0 // pred_fallthru
    _
  // Predicated region
  $region14: #{cpgg_forward.5} parent=0 // pred_check
    _
  $region15: #{cpgg_forward.5} parent=0 // pred_check_branch
    %23 = sbr.rel (0) target = $region17
  $region16: #{cpgg_forward.5} parent=0 // pred_region
    _
  $region17: #{cpgg_forward.5} parent=0 // pred_fallthru
    _
  // Predicated region
  $region18: #{cpgg_forward.5} parent=0 // pred_check
    _
  $region19: #{cpgg_forward.5} parent=0 // pred_check_branch
    %25 = sbr.rel (0) target = $region21
  $region20: #{cpgg_forward.5} parent=0 // pred_region
    _
  $region21: #{cpgg_forward.5} parent=0 // pred_fallthru
    _
  // Predicated region
  $region22: #{cpgg_forward.5} parent=0 // pred_check
    _
  $region23: #{cpgg_forward.5} parent=0 // pred_check_branch
    %27 = sbr.rel (0) target = $region25
  $region24: #{cpgg_forward.5} parent=0 // pred_region
    _
  $region25: #{cpgg_forward.5} parent=0 // pred_fallthru
    _
  // Predicated region
  $region26: #{cpgg_forward.5} parent=0 // pred_check
    _
  $region27: #{cpgg_forward.5} parent=0 // pred_check_branch
    %29 = sbr.rel (0) target = $region29
  $region28: #{cpgg_forward.5} parent=0 // pred_region
    _
  $region29: #{cpgg_forward.5} parent=0 // pred_fallthru
    _
  // Predicated region
  $region30: #{cpgg_forward.5} parent=0 // pred_check
    _
  $region31: #{cpgg_forward.5} parent=0 // pred_check_branch
    %31 = sbr.rel (0) target = $region33
  $region32: #{cpgg_forward.5} parent=0 // pred_region
    _
  $region33: #{cpgg_forward.5} parent=0 // pred_fallthru
    _
  // Predicated region
  $region34: #{cpgg_forward.5} parent=0 // pred_check
    _
  $region35: #{cpgg_forward.5} parent=0 // pred_check_branch
    %33 = sbr.rel (0) target = $region37
  $region36: #{cpgg_forward.5} parent=0 // pred_region
    _
  $region37: #{cpgg_forward.5} parent=0 // pred_fallthru
    _
  // Predicated region
  $region38: #{cpgg_forward.5} parent=0 // pred_check
    _
  $region39: #{cpgg_forward.5} parent=0 // pred_check_branch
    %35 = sbr.rel (0) target = $region41
  $region40: #{cpgg_forward.5} parent=0 // pred_region
    _
  $region41: #{cpgg_forward.5} parent=0 // pred_fallthru
    _
  // Predicated region
  $region42: #{cpgg_forward.5} parent=0 // pred_check
    _
  $region43: #{cpgg_forward.5} parent=0 // pred_check_branch
    %37 = sbr.rel (0) target = $region45
  $region44: #{cpgg_forward.5} parent=0 // pred_region
    _
  $region45: #{cpgg_forward.5} parent=0 // pred_fallthru
    _
  %v38 = vld [vmem:[%s9] sm:$0xff]
  %v39 = vld [vmem:[%s9 + $0x8] sm:$0xff]
  %v40 = vld [vmem:[%s9 + $0x10] sm:$0xff]
  %v41 = vld [vmem:[%s1] sm:$0xf]
  %v42 = vld [vmem:[%s4] sm:$0xff]
  %v43 = vld [vmem:[%s4 + $0x8] sm:$0xff]
  %v44 = vld [vmem:[%s4 + $0x10] sm:$0xf]
  %v45 = vlaneseq
  %v46 = vshrl.u32 %v45, 7
  %v47 = vsub.s32 0, %v46
  %v48 = vrot.slane %v38, %v47
  %vm49 = vcmask 162816
  %v51 = vsel %vm49, %v41, 0
  %vm53 = vcmask 1043456
  %v55 = vsel %vm53, %v44, 0
  %57 = vmatprep.subr.mxu0 0.0
  %58 = vmatpush1.msra.mxu0 %v42
  %59 = vmatprep.subr.mxu0 0.0
  %60 = vmatpush1.msra.mxu0 %v43
  %61 = vmatprep.subr.mxu0 0.0
  %62 = vmatpush1.msra.mxu0 %v55
  %63 = vmatprep.subr.mxu0 0.0
  %64 = vmatpush1.msra.mxu0 0.0
  %65 = vmatprep.subr.mxu0 0.0
  %66 = vmatpush1.msra.mxu0 0.0
  %67 = vmatprep.subr.mxu0 0.0
  %68 = vmatpush1.msra.mxu0 0.0
  %69 = vmatprep.subr.mxu0 0.0
  %70 = vmatpush1.msra.mxu0 0.0
  %71 = vmatprep.subr.mxu0 0.0
  %72 = vmatpush1.msra.mxu0 0.0
  %73 = vmatprep.subr.mxu0 0.0
  %74 = vmatpush1.msra.mxu0 0.0
  %75 = vmatprep.subr.mxu0 0.0
  %76 = vmatpush1.msra.mxu0 0.0
  %77 = vmatprep.subr.mxu0 0.0
  %78 = vmatpush1.msra.mxu0 0.0
  %79 = vmatprep.subr.mxu0 0.0
  %80 = vmatpush1.msra.mxu0 0.0
  %81 = vmatprep.subr.mxu0 0.0
  %82 = vmatpush1.msra.mxu0 0.0
  %83 = vmatprep.subr.mxu0 0.0
  %84 = vmatpush1.msra.mxu0 0.0
  %85 = vmatprep.subr.mxu0 0.0
  %86 = vmatpush1.msra.mxu0 0.0
  %87 = vmatprep.subr.mxu0 0.0
  %88 = vmatpush1.msra.mxu0 0.0
  %89 = vmatprep.subr.mxu0 0.0
  %90 = vmatpush1.msra.mxu0 0.0
  %91 = vmatprep.subr.mxu0 0.0
  %92 = vmatpush1.msra.mxu0 0.0
  %93 = vmatprep.subr.mxu0 0.0
  %94 = vmatpush1.msra.mxu0 0.0
  %95 = vmatprep.subr.mxu0 0.0
  %96 = vmatpush1.msra.mxu0 0.0
  %97 = vmatprep.subr.mxu0 0.0
  %98 = vmatpush1.msra.mxu0 0.0
  %99 = vmatprep.subr.mxu0 0.0
  %100 = vmatpush1.msra.mxu0 0.0
  %101 = vmatprep.subr.mxu0 0.0
  %102 = vmatpush1.msra.mxu0 0.0
  %103 = vmatprep.subr.mxu0 0.0
  %104 = vmatpush1.msra.mxu0 0.0
  %105 = vmatprep.subr.mxu0 0.0
  %106 = vmatpush1.msra.mxu0 0.0
  %107 = vmatprep.subr.mxu0 0.0
  %108 = vmatpush1.msra.mxu0 0.0
  %109 = vmatprep.subr.mxu0 0.0
  %110 = vmatpush1.msra.mxu0 0.0
  %111 = vmatprep.subr.mxu0 0.0
  %112 = vmatpush1.msra.mxu0 0.0
  %113 = vmatprep.subr.mxu0 0.0
  %114 = vmatpush1.msra.mxu0 0.0
  %115 = vmatprep.subr.mxu0 0.0
  %116 = vmatpush1.msra.mxu0 0.0
  %117 = vmatprep.subr.mxu0 0.0
  %118 = vmatpush1.msra.mxu0 0.0
  %119 = vmatprep.subr.mxu0 0.0
  %120 = vmatpush1.msra.mxu0 0.0
  %121 = vmatprep.mubr.f32.mxu0 0.0
  %122 = vmatmul.mubr.f32.gmra.mrb[0].mxu0 %v51
  %v123 = vpop.f32.mrb[0].mxu0
  %v124 = vadd.f32 %v48, %v123
  %v125 = vpop.f32.mrb[0].mxu0
  %126 = vdwg.mxu0
  %v127 = vld [vmem:[%s0] sm:$0x3]
  %v128 = vlaneseq
  %v129 = vshrl.u32 %v128, 7
  %v130 = vsub.s32 0, %v129
  %v131 = vrot.slane %v127, %v130
  %v132 = vlaneseq
  %v133 = vshrl.u32 %v132, 7
  %v134 = vsub.s32 1, %v133
  %v135 = vrot.slane %v127, %v134
  %vm136 = vcmask 1041408
  %v137 = vsel %vm136, %v124, %v135
  %v138 = vsel %vm136, %v135, %v124
  %v139 = vld [vmem:[%s2] sm:$0xff]
  %v140 = vld [vmem:[%s2 + $0x8] sm:$0xff]
  %v141 = vld [vmem:[%s2 + $0x10] sm:$0xf]
  %v142 = vadd.f32 %v131, %v139
  %v143 = vadd.f32 %v137, %v140
  %v144 = vadd.f32 %v138, %v141
  %vm145 = vcmask 523264
  %v146 = vsel %vm145, %v142, 0.0
  %147 = vadd.xlane.f32.xlu0 %v146
  %v148 = vpop.xlane.xlu0 %147
  %v149 = vsel %vm145, %v143, 0.0
  %150 = vadd.xlane.f32.xlu0 %v149
  %v151 = vpop.xlane.xlu0 %150
  %vm152 = vcmask 519168
  %v153 = vsel %vm152, %v144, 0.0
  %154 = vadd.xlane.f32.xlu0 %v153
  %v155 = vpop.xlane.xlu0 %154
  %v156 = vrcp.pop 64.0
  %v157 = vmul.f32 %v148, %v156
  %v158 = vmul.f32 %v151, %v156
  %v159 = vmul.f32 %v155, %v156
  %v160 = vsub.f32 %v142, %v157
  %v161 = vsub.f32 %v143, %v158
  %v162 = vsub.f32 %v144, %v159
  %v163 = vmul.f32 %v160, %v160
  %v164 = vmul.f32 %v161, %v161
  %v165 = vmul.f32 %v162, %v162
  %v166 = vsel %vm145, %v163, 0.0
  %167 = vadd.xlane.f32.xlu0 %v166
  %v168 = vpop.xlane.xlu0 %167
  %v169 = vsel %vm145, %v164, 0.0
  %170 = vadd.xlane.f32.xlu0 %v169
  %v171 = vpop.xlane.xlu0 %170
  %v172 = vsel %vm152, %v165, 0.0
  %173 = vadd.xlane.f32.xlu0 %v172
  %v174 = vpop.xlane.xlu0 %173
  %v175 = vmul.f32 %v168, %v156
  %v176 = vmul.f32 %v171, %v156
  %v177 = vmul.f32 %v174, %v156
  %v178 = vadd.f32 %v175, 1e-06
  %v179 = vadd.f32 %v176, 1e-06
  %v180 = vadd.f32 %v177, 1e-06
  %v181 = vrsqrt.pop %v178
  %v182 = vrsqrt.pop %v179
  %v183 = vrsqrt.pop %v180
  %v184 = vmul.f32 %v160, %v181
  %v185 = vmul.f32 %v161, %v182
  %v186 = vmul.f32 %v162, %v183
  %v187 = vlaneseq
  %v188 = vshrl.u32 %v187, 7
  %v189 = vsub.s32 1, %v188
  %v190 = vrot.slane %v38, %v189
  %v191 = vmul.f32 %v184, %v190
  %v192 = vmul.f32 %v185, %v190
  %v193 = vmul.f32 %v186, %v190
  %v194 = vlaneseq
  %v195 = vshrl.u32 %v194, 7
  %v196 = vsub.s32 2, %v195
  %v197 = vrot.slane %v38, %v196
  %v198 = vadd.f32 %v191, %v197
  %v199 = vadd.f32 %v192, %v197
  %v200 = vadd.f32 %v193, %v197
  %v201 = vld [vmem:[%s3] sm:$0xff]
  %v202 = vld [vmem:[%s3 + $0x8] sm:$0xff]
  %v203 = vld [vmem:[%s3 + $0x10] sm:$0xf]
  %v204 = vsel %vm145, %v198, 0.0
  %205 = vadd.xlane.f32.xlu0 %v204
  %v206 = vpop.xlane.xlu0 %205
  %v207 = vsel %vm145, %v199, 0.0
  %208 = vadd.xlane.f32.xlu0 %v207
  %v209 = vpop.xlane.xlu0 %208
  %v210 = vsel %vm152, %v200, 0.0
  %211 = vadd.xlane.f32.xlu0 %v210
  %v212 = vpop.xlane.xlu0 %211
  %v213 = vmul.f32 %v206, %v156
  %v214 = vmul.f32 %v209, %v156
  %v215 = vmul.f32 %v212, %v156
  %v216 = vsub.f32 %v198, %v213
  %v217 = vsub.f32 %v199, %v214
  %v218 = vsub.f32 %v200, %v215
  %v219 = vmul.f32 %v216, %v216
  %v220 = vmul.f32 %v217, %v217
  %v221 = vmul.f32 %v218, %v218
  %v222 = vsel %vm145, %v219, 0.0
  %223 = vadd.xlane.f32.xlu0 %v222
  %v224 = vpop.xlane.xlu0 %223
  %v225 = vsel %vm145, %v220, 0.0
  %226 = vadd.xlane.f32.xlu0 %v225
  %v227 = vpop.xlane.xlu0 %226
  %v228 = vsel %vm152, %v221, 0.0
  %229 = vadd.xlane.f32.xlu0 %v228
  %v230 = vpop.xlane.xlu0 %229
  %v231 = vmul.f32 %v224, %v156
  %v232 = vmul.f32 %v227, %v156
  %v233 = vmul.f32 %v230, %v156
  %v234 = vadd.f32 %v231, 1e-05
  %v235 = vadd.f32 %v232, 1e-05
  %v236 = vadd.f32 %v233, 1e-05
  %v237 = vrsqrt.pop %v234
  %v238 = vrsqrt.pop %v235
  %v239 = vrsqrt.pop %v236
  %v240 = vmul.f32 %v216, %v237
  %v241 = vmul.f32 %v217, %v238
  %v242 = vmul.f32 %v218, %v239
  %v243 = vlaneseq
  %v244 = vshrl.u32 %v243, 7
  %v245 = vsub.s32 6, %v244
  %v246 = vrot.slane %v38, %v245
  %v247 = vmul.f32 %v240, %v246
  %v248 = vmul.f32 %v241, %v246
  %v249 = vmul.f32 %v242, %v246
  %v250 = vlaneseq
  %v251 = vshrl.u32 %v250, 7
  %v252 = vsub.s32 7, %v251
  %v253 = vrot.slane %v38, %v252
  %v254 = vadd.f32 %v247, %v253
  %v255 = vadd.f32 %v248, %v253
  %v256 = vadd.f32 %v249, %v253
  %v257 = vld [vmem:[%s5] sm:$0xff]
  %v258 = vld [vmem:[%s5 + $0x8] sm:$0xff]
  %v259 = vld [vmem:[%s5 + $0x10] sm:$0xff]
  %v260 = vld [vmem:[%s5 + $0x18] sm:$0xff]
  %v261 = vld [vmem:[%s5 + $0x20] sm:$0xff]
  %v262 = vld [vmem:[%s5 + $0x28] sm:$0xff]
  %v263 = vld [vmem:[%s5 + $0x30] sm:$0xff]
  %v264 = vld [vmem:[%s5 + $0x38] sm:$0xff]
  %v265 = vlaneseq
  %v266 = vshrl.u32 %v265, 7
  %v267 = vsub.s32 0, %v266
  %v268 = vrot.slane %v39, %v267
  %v270 = vsel %vm145, %v254, 0
  %v273 = vsel %vm145, %v255, 0
  %v276 = vsel %vm145, %v256, 0
  %278 = vmatprep.subr.mxu0 0.0
  %279 = vmatpush1.msra.mxu0 %v257
  %280 = vmatprep.subr.mxu0 0.0
  %281 = vmatpush1.msra.mxu0 %v258
  %282 = vmatprep.subr.mxu0 0.0
  %283 = vmatpush1.msra.mxu0 %v259
  %284 = vmatprep.subr.mxu0 0.0
  %285 = vmatpush1.msra.mxu0 %v260
  %286 = vmatprep.subr.mxu0 0.0
  %287 = vmatpush1.msra.mxu0 %v261
  %288 = vmatprep.subr.mxu0 0.0
  %289 = vmatpush1.msra.mxu0 %v262
  %290 = vmatprep.subr.mxu0 0.0
  %291 = vmatpush1.msra.mxu0 %v263
  %292 = vmatprep.subr.mxu0 0.0
  %293 = vmatpush1.msra.mxu0 %v264
  %294 = vmatprep.subr.mxu0 0.0
  %295 = vmatpush1.msra.mxu0 0.0
  %296 = vmatprep.subr.mxu0 0.0
  %297 = vmatpush1.msra.mxu0 0.0
  %298 = vmatprep.subr.mxu0 0.0
  %299 = vmatpush1.msra.mxu0 0.0
  %300 = vmatprep.subr.mxu0 0.0
  %301 = vmatpush1.msra.mxu0 0.0
  %302 = vmatprep.subr.mxu0 0.0
  %303 = vmatpush1.msra.mxu0 0.0
  %304 = vmatprep.subr.mxu0 0.0
  %305 = vmatpush1.msra.mxu0 0.0
  %306 = vmatprep.subr.mxu0 0.0
  %307 = vmatpush1.msra.mxu0 0.0
  %308 = vmatprep.subr.mxu0 0.0
  %309 = vmatpush1.msra.mxu0 0.0
  %310 = vmatprep.subr.mxu0 0.0
  %311 = vmatpush1.msra.mxu0 0.0
  %312 = vmatprep.subr.mxu0 0.0
  %313 = vmatpush1.msra.mxu0 0.0
  %314 = vmatprep.subr.mxu0 0.0
  %315 = vmatpush1.msra.mxu0 0.0
  %316 = vmatprep.subr.mxu0 0.0
  %317 = vmatpush1.msra.mxu0 0.0
  %318 = vmatprep.subr.mxu0 0.0
  %319 = vmatpush1.msra.mxu0 0.0
  %320 = vmatprep.subr.mxu0 0.0
  %321 = vmatpush1.msra.mxu0 0.0
  %322 = vmatprep.subr.mxu0 0.0
  %323 = vmatpush1.msra.mxu0 0.0
  %324 = vmatprep.subr.mxu0 0.0
  %325 = vmatpush1.msra.mxu0 0.0
  %326 = vmatprep.subr.mxu0 0.0
  %327 = vmatpush1.msra.mxu0 0.0
  %328 = vmatprep.subr.mxu0 0.0
  %329 = vmatpush1.msra.mxu0 0.0
  %330 = vmatprep.subr.mxu0 0.0
  %331 = vmatpush1.msra.mxu0 0.0
  %332 = vmatprep.subr.mxu0 0.0
  %333 = vmatpush1.msra.mxu0 0.0
  %334 = vmatprep.subr.mxu0 0.0
  %335 = vmatpush1.msra.mxu0 0.0
  %336 = vmatprep.subr.mxu0 0.0
  %337 = vmatpush1.msra.mxu0 0.0
  %338 = vmatprep.subr.mxu0 0.0
  %339 = vmatpush1.msra.mxu0 0.0
  %340 = vmatprep.subr.mxu0 0.0
  %341 = vmatpush1.msra.mxu0 0.0
  %342 = vmatprep.mubr.f32.mxu0 0.0
  %343 = vmatmul.mubr.f32.gmra.mrb[0].mxu0 %v270
  %v344 = vpop.f32.mrb[0].mxu0
  %v345 = vadd.f32 %v268, %v344
  %v346 = vpop.f32.mrb[0].mxu0
  %347 = vmatprep.mubr.f32.mxu0 0.0
  %348 = vmatmul.mubr.f32.gmra.mrb[0].mxu0 %v273
  %v349 = vpop.f32.mrb[0].mxu0
  %v350 = vadd.f32 %v268, %v349
  %v351 = vpop.f32.mrb[0].mxu0
  %352 = vmatprep.mubr.f32.mxu0 0.0
  %353 = vmatmul.mubr.f32.gmra.mrb[0].mxu0 %v276
  %v354 = vpop.f32.mrb[0].mxu0
  %v355 = vadd.f32 %v268, %v354
  %v356 = vpop.f32.mrb[0].mxu0
  %357 = vdwg.mxu0
  %s358 = scalar_lea.vmem %s5, 64
  %v359 = vld [vmem:[%s358] sm:$0xff]
  %v360 = vld [vmem:[%s358 + $0x8] sm:$0xff]
  %v361 = vld [vmem:[%s358 + $0x10] sm:$0xff]
  %v362 = vld [vmem:[%s358 + $0x18] sm:$0xff]
  %v363 = vld [vmem:[%s358 + $0x20] sm:$0xff]
  %v364 = vld [vmem:[%s358 + $0x28] sm:$0xff]
  %v365 = vld [vmem:[%s358 + $0x30] sm:$0xff]
  %v366 = vld [vmem:[%s358 + $0x38] sm:$0xff]
  %v367 = vlaneseq
  %v368 = vshrl.u32 %v367, 7
  %v369 = vsub.s32 1, %v368
  %v370 = vrot.slane %v39, %v369
  %371 = vmatprep.subr.mxu0 0.0
  %372 = vmatpush1.msra.mxu0 %v359
  %373 = vmatprep.subr.mxu0 0.0
  %374 = vmatpush1.msra.mxu0 %v360
  %375 = vmatprep.subr.mxu0 0.0
  %376 = vmatpush1.msra.mxu0 %v361
  %377 = vmatprep.subr.mxu0 0.0
  %378 = vmatpush1.msra.mxu0 %v362
  %379 = vmatprep.subr.mxu0 0.0
  %380 = vmatpush1.msra.mxu0 %v363
  %381 = vmatprep.subr.mxu0 0.0
  %382 = vmatpush1.msra.mxu0 %v364
  %383 = vmatprep.subr.mxu0 0.0
  %384 = vmatpush1.msra.mxu0 %v365
  %385 = vmatprep.subr.mxu0 0.0
  %386 = vmatpush1.msra.mxu0 %v366
  %387 = vmatprep.subr.mxu0 0.0
  %388 = vmatpush1.msra.mxu0 0.0
  %389 = vmatprep.subr.mxu0 0.0
  %390 = vmatpush1.msra.mxu0 0.0
  %391 = vmatprep.subr.mxu0 0.0
  %392 = vmatpush1.msra.mxu0 0.0
  %393 = vmatprep.subr.mxu0 0.0
  %394 = vmatpush1.msra.mxu0 0.0
  %395 = vmatprep.subr.mxu0 0.0
  %396 = vmatpush1.msra.mxu0 0.0
  %397 = vmatprep.subr.mxu0 0.0
  %398 = vmatpush1.msra.mxu0 0.0
  %399 = vmatprep.subr.mxu0 0.0
  %400 = vmatpush1.msra.mxu0 0.0
  %401 = vmatprep.subr.mxu0 0.0
  %402 = vmatpush1.msra.mxu0 0.0
  %403 = vmatprep.subr.mxu0 0.0
  %404 = vmatpush1.msra.mxu0 0.0
  %405 = vmatprep.subr.mxu0 0.0
  %406 = vmatpush1.msra.mxu0 0.0
  %407 = vmatprep.subr.mxu0 0.0
  %408 = vmatpush1.msra.mxu0 0.0
  %409 = vmatprep.subr.mxu0 0.0
  %410 = vmatpush1.msra.mxu0 0.0
  %411 = vmatprep.subr.mxu0 0.0
  %412 = vmatpush1.msra.mxu0 0.0
  %413 = vmatprep.subr.mxu0 0.0
  %414 = vmatpush1.msra.mxu0 0.0
  %415 = vmatprep.subr.mxu0 0.0
  %416 = vmatpush1.msra.mxu0 0.0
  %417 = vmatprep.subr.mxu0 0.0
  %418 = vmatpush1.msra.mxu0 0.0
  %419 = vmatprep.subr.mxu0 0.0
  %420 = vmatpush1.msra.mxu0 0.0
  %421 = vmatprep.subr.mxu0 0.0
  %422 = vmatpush1.msra.mxu0 0.0
  %423 = vmatprep.subr.mxu0 0.0
  %424 = vmatpush1.msra.mxu0 0.0
  %425 = vmatprep.subr.mxu0 0.0
  %426 = vmatpush1.msra.mxu0 0.0
  %427 = vmatprep.subr.mxu0 0.0
  %428 = vmatpush1.msra.mxu0 0.0
  %429 = vmatprep.subr.mxu0 0.0
  %430 = vmatpush1.msra.mxu0 0.0
  %431 = vmatprep.subr.mxu0 0.0
  %432 = vmatpush1.msra.mxu0 0.0
  %433 = vmatprep.subr.mxu0 0.0
  %434 = vmatpush1.msra.mxu0 0.0
  %435 = vmatprep.mubr.f32.mxu0 0.0
  %436 = vmatmul.mubr.f32.gmra.mrb[0].mxu0 %v270
  %v437 = vpop.f32.mrb[0].mxu0
  %v438 = vadd.f32 %v370, %v437
  %v439 = vpop.f32.mrb[0].mxu0
  %440 = vmatprep.mubr.f32.mxu0 0.0
  %441 = vmatmul.mubr.f32.gmra.mrb[0].mxu0 %v273
  %v442 = vpop.f32.mrb[0].mxu0
  %v443 = vadd.f32 %v370, %v442
  %v444 = vpop.f32.mrb[0].mxu0
  %445 = vmatprep.mubr.f32.mxu0 0.0
  %446 = vmatmul.mubr.f32.gmra.mrb[0].mxu0 %v276
  %v447 = vpop.f32.mrb[0].mxu0
  %v448 = vadd.f32 %v370, %v447
  %v449 = vpop.f32.mrb[0].mxu0
  %450 = vdwg.mxu0
  %s451 = scalar_lea.vmem %s5, 128
  %v452 = vld [vmem:[%s451] sm:$0xff]
  %v453 = vld [vmem:[%s451 + $0x8] sm:$0xff]
  %v454 = vld [vmem:[%s451 + $0x10] sm:$0xff]
  %v455 = vld [vmem:[%s451 + $0x18] sm:$0xff]
  %v456 = vld [vmem:[%s451 + $0x20] sm:$0xff]
  %v457 = vld [vmem:[%s451 + $0x28] sm:$0xff]
  %v458 = vld [vmem:[%s451 + $0x30] sm:$0xff]
  %v459 = vld [vmem:[%s451 + $0x38] sm:$0xff]
  %v460 = vlaneseq
  %v461 = vshrl.u32 %v460, 7
  %v462 = vsub.s32 2, %v461
  %v463 = vrot.slane %v39, %v462
  %464 = vmatprep.subr.mxu0 0.0
  %465 = vmatpush1.msra.mxu0 %v452
  %466 = vmatprep.subr.mxu0 0.0
  %467 = vmatpush1.msra.mxu0 %v453
  %468 = vmatprep.subr.mxu0 0.0
  %469 = vmatpush1.msra.mxu0 %v454
  %470 = vmatprep.subr.mxu0 0.0
  %471 = vmatpush1.msra.mxu0 %v455
  %472 = vmatprep.subr.mxu0 0.0
  %473 = vmatpush1.msra.mxu0 %v456
  %474 = vmatprep.subr.mxu0 0.0
  %475 = vmatpush1.msra.mxu0 %v457
  %476 = vmatprep.subr.mxu0 0.0
  %477 = vmatpush1.msra.mxu0 %v458
  %478 = vmatprep.subr.mxu0 0.0
  %479 = vmatpush1.msra.mxu0 %v459
  %480 = vmatprep.subr.mxu0 0.0
  %481 = vmatpush1.msra.mxu0 0.0
  %482 = vmatprep.subr.mxu0 0.0
  %483 = vmatpush1.msra.mxu0 0.0
  %484 = vmatprep.subr.mxu0 0.0
  %485 = vmatpush1.msra.mxu0 0.0
  %486 = vmatprep.subr.mxu0 0.0
  %487 = vmatpush1.msra.mxu0 0.0
  %488 = vmatprep.subr.mxu0 0.0
  %489 = vmatpush1.msra.mxu0 0.0
  %490 = vmatprep.subr.mxu0 0.0
  %491 = vmatpush1.msra.mxu0 0.0
  %492 = vmatprep.subr.mxu0 0.0
  %493 = vmatpush1.msra.mxu0 0.0
  %494 = vmatprep.subr.mxu0 0.0
  %495 = vmatpush1.msra.mxu0 0.0
  %496 = vmatprep.subr.mxu0 0.0
  %497 = vmatpush1.msra.mxu0 0.0
  %498 = vmatprep.subr.mxu0 0.0
  %499 = vmatpush1.msra.mxu0 0.0
  %500 = vmatprep.subr.mxu0 0.0
  %501 = vmatpush1.msra.mxu0 0.0
  %502 = vmatprep.subr.mxu0 0.0
  %503 = vmatpush1.msra.mxu0 0.0
  %504 = vmatprep.subr.mxu0 0.0
  %505 = vmatpush1.msra.mxu0 0.0
  %506 = vmatprep.subr.mxu0 0.0
  %507 = vmatpush1.msra.mxu0 0.0
  %508 = vmatprep.subr.mxu0 0.0
  %509 = vmatpush1.msra.mxu0 0.0
  %510 = vmatprep.subr.mxu0 0.0
  %511 = vmatpush1.msra.mxu0 0.0
  %512 = vmatprep.subr.mxu0 0.0
  %513 = vmatpush1.msra.mxu0 0.0
  %514 = vmatprep.subr.mxu0 0.0
  %515 = vmatpush1.msra.mxu0 0.0
  %516 = vmatprep.subr.mxu0 0.0
  %517 = vmatpush1.msra.mxu0 0.0
  %518 = vmatprep.subr.mxu0 0.0
  %519 = vmatpush1.msra.mxu0 0.0
  %520 = vmatprep.subr.mxu0 0.0
  %521 = vmatpush1.msra.mxu0 0.0
  %522 = vmatprep.subr.mxu0 0.0
  %523 = vmatpush1.msra.mxu0 0.0
  %524 = vmatprep.subr.mxu0 0.0
  %525 = vmatpush1.msra.mxu0 0.0
  %526 = vmatprep.subr.mxu0 0.0
  %527 = vmatpush1.msra.mxu0 0.0
  %528 = vmatprep.mubr.f32.mxu0 0.0
  %529 = vmatmul.mubr.f32.gmra.mrb[0].mxu0 %v270
  %v530 = vpop.f32.mrb[0].mxu0
  %v531 = vadd.f32 %v463, %v530
  %v532 = vpop.f32.mrb[0].mxu0
  %533 = vmatprep.mubr.f32.mxu0 0.0
  %534 = vmatmul.mubr.f32.gmra.mrb[0].mxu0 %v273
  %v535 = vpop.f32.mrb[0].mxu0
  %v536 = vadd.f32 %v463, %v535
  %v537 = vpop.f32.mrb[0].mxu0
  %538 = vmatprep.mubr.f32.mxu0 0.0
  %539 = vmatmul.mubr.f32.gmra.mrb[0].mxu0 %v276
  %v540 = vpop.f32.mrb[0].mxu0
  %v541 = vadd.f32 %v463, %v540
  %v542 = vpop.f32.mrb[0].mxu0
  %543 = vdwg.mxu0
  %v544 = vlaneseq
  %v545 = vand.u32 %v544, 127
  %vm546 = vcmp.ge.s32.totalorder %v545, 0
  %vm547 = vcmp.lt.s32.totalorder %v545, 32
  %vm548 = vmand %vm546, %vm547
  %v549 = vsel %vm548, 1, 0
  %v550 = vcvt.s32.f32 %v549
  %v551 = vmul.f32 %v438, %v550
  %v552 = vmul.f32 %v443, %v550
  %v553 = vmul.f32 %v448, %v550
  %v554 = vmul.f32 %v531, %v550
  %v555 = vmul.f32 %v536, %v550
  %v556 = vmul.f32 %v541, %v550
  %v558 = vsel %vm145, %v345, 0
  %v561 = vsel %vm145, %v350, 0
  %v564 = vsel %vm145, %v355, 0
  %v567 = vsel %vm145, %v551, 0
  %v570 = vsel %vm145, %v552, 0
  %v573 = vsel %vm145, %v553, 0
  %575 = vmatprep.subr.mxu0 0.0
  %576 = vmatpush1.xpose.msra.mxu0 %v567
  %577 = vmatprep.subr.mxu0 0.0
  %578 = vmatpush1.xpose.msra.mxu0 %v570
  %579 = vmatprep.subr.mxu0 0.0
  %580 = vmatpush1.xpose.msra.mxu0 %v573
  %581 = vmatprep.subr.mxu0 0.0
  %582 = vmatpush1.xpose.msra.mxu0 0.0
  %583 = vmatprep.subr.mxu0 0.0
  %584 = vmatpush1.xpose.msra.mxu0 0.0
  %585 = vmatprep.subr.mxu0 0.0
  %586 = vmatpush1.xpose.msra.mxu0 0.0
  %587 = vmatprep.subr.mxu0 0.0
  %588 = vmatpush1.xpose.msra.mxu0 0.0
  %589 = vmatprep.subr.mxu0 0.0
  %590 = vmatpush1.xpose.msra.mxu0 0.0
  %591 = vmatprep.subr.mxu0 0.0
  %592 = vmatpush1.xpose.msra.mxu0 0.0
  %593 = vmatprep.subr.mxu0 0.0
  %594 = vmatpush1.xpose.msra.mxu0 0.0
  %595 = vmatprep.subr.mxu0 0.0
  %596 = vmatpush1.xpose.msra.mxu0 0.0
  %597 = vmatprep.subr.mxu0 0.0
  %598 = vmatpush1.xpose.msra.mxu0 0.0
  %599 = vmatprep.subr.mxu0 0.0
  %600 = vmatpush1.xpose.msra.mxu0 0.0
  %601 = vmatprep.subr.mxu0 0.0
  %602 = vmatpush1.xpose.msra.mxu0 0.0
  %603 = vmatprep.subr.mxu0 0.0
  %604 = vmatpush1.xpose.msra.mxu0 0.0
  %605 = vmatprep.subr.mxu0 0.0
  %606 = vmatpush1.xpose.msra.mxu0 0.0
  %607 = vmatprep.subr.mxu0 0.0
  %608 = vmatpush1.xpose.msra.mxu0 0.0
  %609 = vmatprep.subr.mxu0 0.0
  %610 = vmatpush1.xpose.msra.mxu0 0.0
  %611 = vmatprep.subr.mxu0 0.0
  %612 = vmatpush1.xpose.msra.mxu0 0.0
  %613 = vmatprep.subr.mxu0 0.0
  %614 = vmatpush1.xpose.msra.mxu0 0.0
  %615 = vmatprep.subr.mxu0 0.0
  %616 = vmatpush1.xpose.msra.mxu0 0.0
  %617 = vmatprep.subr.mxu0 0.0
  %618 = vmatpush1.xpose.msra.mxu0 0.0
  %619 = vmatprep.subr.mxu0 0.0
  %620 = vmatpush1.xpose.msra.mxu0 0.0
  %621 = vmatprep.subr.mxu0 0.0
  %622 = vmatpush1.xpose.msra.mxu0 0.0
  %623 = vmatprep.subr.mxu0 0.0
  %624 = vmatpush1.xpose.msra.mxu0 0.0
  %625 = vmatprep.subr.mxu0 0.0
  %626 = vmatpush1.xpose.msra.mxu0 0.0
  %627 = vmatprep.subr.mxu0 0.0
  %628 = vmatpush1.xpose.msra.mxu0 0.0
  %629 = vmatprep.subr.mxu0 0.0
  %630 = vmatpush1.xpose.msra.mxu0 0.0
  %631 = vmatprep.subr.mxu0 0.0
  %632 = vmatpush1.xpose.msra.mxu0 0.0
  %633 = vmatprep.subr.mxu0 0.0
  %634 = vmatpush1.xpose.msra.mxu0 0.0
  %635 = vmatprep.subr.mxu0 0.0
  %636 = vmatpush1.xpose.msra.mxu0 0.0
  %637 = vmatprep.subr.mxu0 0.0
  %638 = vmatpush1.xpose.msra.mxu0 0.0
  %639 = vmatprep.mubr.f32.mxu0 0.0
  %640 = vmatmul.mubr.f32.gmra.mrb[0].mxu0 %v558
  %v641 = vpop.f32.mrb[0].mxu0
  %v642 = vadd.f32 %v201, %v641
  %v643 = vpop.f32.mrb[0].mxu0
  %644 = vmatprep.mubr.f32.mxu0 0.0
  %645 = vmatmul.mubr.f32.gmra.mrb[0].mxu0 %v561
  %v646 = vpop.f32.mrb[0].mxu0
  %v647 = vadd.f32 %v202, %v646
  %v648 = vpop.f32.mrb[0].mxu0
  %649 = vmatprep.mubr.f32.mxu0 0.0
  %650 = vmatmul.mubr.f32.gmra.mrb[0].mxu0 %v564
  %v651 = vpop.f32.mrb[0].mxu0
  %v652 = vadd.f32 %v203, %v651
  %v653 = vpop.f32.mrb[0].mxu0
  %654 = vdwg.mxu0
  %v655 = vsel %vm49, %v642, -inf
  %656 = vmax.xlane.f32.xlu0 %v655
  %v657 = vpop.xlane.xlu0 %656
  %v658 = vsel %vm49, %v647, -inf
  %659 = vmax.xlane.f32.xlu0 %v658
  %v660 = vpop.xlane.xlu0 %659
  %vm661 = vcmask 158720
  %v662 = vsel %vm661, %v652, -inf
  %663 = vmax.xlane.f32.xlu0 %v662
  %v664 = vpop.xlane.xlu0 %663
  %v665 = vsub.f32 %v642, %v657
  %v666 = vsub.f32 %v647, %v660
  %v667 = vsub.f32 %v652, %v664
  %v668 = vmul.f32 %v665, 1.442695
  %v669 = vpow.pop %v668
  %v670 = vmul.f32 %v666, 1.442695
  %v671 = vpow.pop %v670
  %v672 = vmul.f32 %v667, 1.442695
  %v673 = vpow.pop %v672
  %v674 = vsel %vm49, %v669, 0.0
  %675 = vadd.xlane.f32.xlu0 %v674
  %v676 = vpop.xlane.xlu0 %675
  %v677 = vsel %vm49, %v671, 0.0
  %678 = vadd.xlane.f32.xlu0 %v677
  %v679 = vpop.xlane.xlu0 %678
  %v680 = vsel %vm661, %v673, 0.0
  %681 = vadd.xlane.f32.xlu0 %v680
  %v682 = vpop.xlane.xlu0 %681
  %v683 = vrcp.pop %v676
  %v684 = vrcp.pop %v679
  %v685 = vrcp.pop %v682
  %v686 = vmul.f32 %v669, %v683
  %v687 = vmul.f32 %v671, %v684
  %v688 = vmul.f32 %v673, %v685
  %vm689 = vcmp.ge.s32.totalorder %v545, 32
  %vm690 = vcmp.lt.s32.totalorder %v545, 64
  %vm691 = vmand %vm689, %vm690
  %v692 = vsel %vm691, 1, 0
  %v693 = vcvt.s32.f32 %v692
  %v694 = vmul.f32 %v438, %v693
  %v695 = vmul.f32 %v443, %v693
  %v696 = vmul.f32 %v448, %v693
  %v697 = vmul.f32 %v531, %v693
  %v698 = vmul.f32 %v536, %v693
  %v699 = vmul.f32 %v541, %v693
  %v701 = vsel %vm145, %v694, 0
  %v704 = vsel %vm145, %v695, 0
  %v707 = vsel %vm145, %v696, 0
  %709 = vmatprep.subr.mxu0 0.0
  %710 = vmatpush1.xpose.msra.mxu0 %v701
  %711 = vmatprep.subr.mxu0 0.0
  %712 = vmatpush1.xpose.msra.mxu0 %v704
  %713 = vmatprep.subr.mxu0 0.0
  %714 = vmatpush1.xpose.msra.mxu0 %v707
  %715 = vmatprep.subr.mxu0 0.0
  %716 = vmatpush1.xpose.msra.mxu0 0.0
  %717 = vmatprep.subr.mxu0 0.0
  %718 = vmatpush1.xpose.msra.mxu0 0.0
  %719 = vmatprep.subr.mxu0 0.0
  %720 = vmatpush1.xpose.msra.mxu0 0.0
  %721 = vmatprep.subr.mxu0 0.0
  %722 = vmatpush1.xpose.msra.mxu0 0.0
  %723 = vmatprep.subr.mxu0 0.0
  %724 = vmatpush1.xpose.msra.mxu0 0.0
  %725 = vmatprep.subr.mxu0 0.0
  %726 = vmatpush1.xpose.msra.mxu0 0.0
  %727 = vmatprep.subr.mxu0 0.0
  %728 = vmatpush1.xpose.msra.mxu0 0.0
  %729 = vmatprep.subr.mxu0 0.0
  %730 = vmatpush1.xpose.msra.mxu0 0.0
  %731 = vmatprep.subr.mxu0 0.0
  %732 = vmatpush1.xpose.msra.mxu0 0.0
  %733 = vmatprep.subr.mxu0 0.0
  %734 = vmatpush1.xpose.msra.mxu0 0.0
  %735 = vmatprep.subr.mxu0 0.0
  %736 = vmatpush1.xpose.msra.mxu0 0.0
  %737 = vmatprep.subr.mxu0 0.0
  %738 = vmatpush1.xpose.msra.mxu0 0.0
  %739 = vmatprep.subr.mxu0 0.0
  %740 = vmatpush1.xpose.msra.mxu0 0.0
  %741 = vmatprep.subr.mxu0 0.0
  %742 = vmatpush1.xpose.msra.mxu0 0.0
  %743 = vmatprep.subr.mxu0 0.0
  %744 = vmatpush1.xpose.msra.mxu0 0.0
  %745 = vmatprep.subr.mxu0 0.0
  %746 = vmatpush1.xpose.msra.mxu0 0.0
  %747 = vmatprep.subr.mxu0 0.0
  %748 = vmatpush1.xpose.msra.mxu0 0.0
  %749 = vmatprep.subr.mxu0 0.0
  %750 = vmatpush1.xpose.msra.mxu0 0.0
  %751 = vmatprep.subr.mxu0 0.0
  %752 = vmatpush1.xpose.msra.mxu0 0.0
  %753 = vmatprep.subr.mxu0 0.0
  %754 = vmatpush1.xpose.msra.mxu0 0.0
  %755 = vmatprep.subr.mxu0 0.0
  %756 = vmatpush1.xpose.msra.mxu0 0.0
  %757 = vmatprep.subr.mxu0 0.0
  %758 = vmatpush1.xpose.msra.mxu0 0.0
  %759 = vmatprep.subr.mxu0 0.0
  %760 = vmatpush1.xpose.msra.mxu0 0.0
  %761 = vmatprep.subr.mxu0 0.0
  %762 = vmatpush1.xpose.msra.mxu0 0.0
  %763 = vmatprep.subr.mxu0 0.0
  %764 = vmatpush1.xpose.msra.mxu0 0.0
  %765 = vmatprep.subr.mxu0 0.0
  %766 = vmatpush1.xpose.msra.mxu0 0.0
  %767 = vmatprep.subr.mxu0 0.0
  %768 = vmatpush1.xpose.msra.mxu0 0.0
  %769 = vmatprep.subr.mxu0 0.0
  %770 = vmatpush1.xpose.msra.mxu0 0.0
  %771 = vmatprep.subr.mxu0 0.0
  %772 = vmatpush1.xpose.msra.mxu0 0.0
  %773 = vmatprep.mubr.f32.mxu0 0.0
  %774 = vmatmul.mubr.f32.gmra.mrb[0].mxu0 %v558
  %v775 = vpop.f32.mrb[0].mxu0
  %v776 = vadd.f32 %v201, %v775
  %v777 = vpop.f32.mrb[0].mxu0
  %778 = vmatprep.mubr.f32.mxu0 0.0
  %779 = vmatmul.mubr.f32.gmra.mrb[0].mxu0 %v561
  %v780 = vpop.f32.mrb[0].mxu0
  %v781 = vadd.f32 %v202, %v780
  %v782 = vpop.f32.mrb[0].mxu0
  %783 = vmatprep.mubr.f32.mxu0 0.0
  %784 = vmatmul.mubr.f32.gmra.mrb[0].mxu0 %v564
  %v785 = vpop.f32.mrb[0].mxu0
  %v786 = vadd.f32 %v203, %v785
  %v787 = vpop.f32.mrb[0].mxu0
  %788 = vdwg.mxu0
  %v789 = vsel %vm49, %v776, -inf
  %790 = vmax.xlane.f32.xlu0 %v789
  %v791 = vpop.xlane.xlu0 %790
  %v792 = vsel %vm49, %v781, -inf
  %793 = vmax.xlane.f32.xlu0 %v792
  %v794 = vpop.xlane.xlu0 %793
  %v795 = vsel %vm661, %v786, -inf
  %796 = vmax.xlane.f32.xlu0 %v795
  %v797 = vpop.xlane.xlu0 %796
  %v798 = vsub.f32 %v776, %v791
  %v799 = vsub.f32 %v781, %v794
  %v800 = vsub.f32 %v786, %v797
  %v801 = vmul.f32 %v798, 1.442695
  %v802 = vpow.pop %v801
  %v803 = vmul.f32 %v799, 1.442695
  %v804 = vpow.pop %v803
  %v805 = vmul.f32 %v800, 1.442695
  %v806 = vpow.pop %v805
  %v807 = vsel %vm49, %v802, 0.0
  %808 = vadd.xlane.f32.xlu0 %v807
  %v809 = vpop.xlane.xlu0 %808
  %v810 = vsel %vm49, %v804, 0.0
  %811 = vadd.xlane.f32.xlu0 %v810
  %v812 = vpop.xlane.xlu0 %811
  %v813 = vsel %vm661, %v806, 0.0
  %814 = vadd.xlane.f32.xlu0 %v813
  %v815 = vpop.xlane.xlu0 %814
  %v816 = vrcp.pop %v809
  %v817 = vrcp.pop %v812
  %v818 = vrcp.pop %v815
  %v819 = vmul.f32 %v802, %v816
  %v820 = vmul.f32 %v804, %v817
  %v821 = vmul.f32 %v806, %v818
  %v823 = vsel %vm49, %v819, 0
  %v826 = vsel %vm49, %v820, 0
  %v829 = vsel %vm49, %v821, 0
  %v832 = vsel %vm53, %v699, 0
  %834 = vmatprep.subr.mxu0 0.0
  %835 = vmatpush1.msra.mxu0 %v697
  %836 = vmatprep.subr.mxu0 0.0
  %837 = vmatpush1.msra.mxu0 %v698
  %838 = vmatprep.subr.mxu0 0.0
  %839 = vmatpush1.msra.mxu0 %v832
  %840 = vmatprep.subr.mxu0 0.0
  %841 = vmatpush1.msra.mxu0 0.0
  %842 = vmatprep.subr.mxu0 0.0
  %843 = vmatpush1.msra.mxu0 0.0
  %844 = vmatprep.subr.mxu0 0.0
  %845 = vmatpush1.msra.mxu0 0.0
  %846 = vmatprep.subr.mxu0 0.0
  %847 = vmatpush1.msra.mxu0 0.0
  %848 = vmatprep.subr.mxu0 0.0
  %849 = vmatpush1.msra.mxu0 0.0
  %850 = vmatprep.subr.mxu0 0.0
  %851 = vmatpush1.msra.mxu0 0.0
  %852 = vmatprep.subr.mxu0 0.0
  %853 = vmatpush1.msra.mxu0 0.0
  %854 = vmatprep.subr.mxu0 0.0
  %855 = vmatpush1.msra.mxu0 0.0
  %856 = vmatprep.subr.mxu0 0.0
  %857 = vmatpush1.msra.mxu0 0.0
  %858 = vmatprep.subr.mxu0 0.0
  %859 = vmatpush1.msra.mxu0 0.0
  %860 = vmatprep.subr.mxu0 0.0
  %861 = vmatpush1.msra.mxu0 0.0
  %862 = vmatprep.subr.mxu0 0.0
  %863 = vmatpush1.msra.mxu0 0.0
  %864 = vmatprep.subr.mxu0 0.0
  %865 = vmatpush1.msra.mxu0 0.0
  %866 = vmatprep.subr.mxu0 0.0
  %867 = vmatpush1.msra.mxu0 0.0
  %868 = vmatprep.subr.mxu0 0.0
  %869 = vmatpush1.msra.mxu0 0.0
  %870 = vmatprep.subr.mxu0 0.0
  %871 = vmatpush1.msra.mxu0 0.0
  %872 = vmatprep.subr.mxu0 0.0
  %873 = vmatpush1.msra.mxu0 0.0
  %874 = vmatprep.subr.mxu0 0.0
  %875 = vmatpush1.msra.mxu0 0.0
  %876 = vmatprep.subr.mxu0 0.0
  %877 = vmatpush1.msra.mxu0 0.0
  %878 = vmatprep.subr.mxu0 0.0
  %879 = vmatpush1.msra.mxu0 0.0
  %880 = vmatprep.subr.mxu0 0.0
  %881 = vmatpush1.msra.mxu0 0.0
  %882 = vmatprep.subr.mxu0 0.0
  %883 = vmatpush1.msra.mxu0 0.0
  %884 = vmatprep.subr.mxu0 0.0
  %885 = vmatpush1.msra.mxu0 0.0
  %886 = vmatprep.subr.mxu0 0.0
  %887 = vmatpush1.msra.mxu0 0.0
  %888 = vmatprep.subr.mxu0 0.0
  %889 = vmatpush1.msra.mxu0 0.0
  %890 = vmatprep.subr.mxu0 0.0
  %891 = vmatpush1.msra.mxu0 0.0
  %892 = vmatprep.subr.mxu0 0.0
  %893 = vmatpush1.msra.mxu0 0.0
  %894 = vmatprep.subr.mxu0 0.0
  %895 = vmatpush1.msra.mxu0 0.0
  %896 = vmatprep.subr.mxu0 0.0
  %897 = vmatpush1.msra.mxu0 0.0
  %898 = vmatprep.mubr.f32.mxu0 0.0
  %899 = vmatmul.mubr.f32.gmra.mrb[0].mxu0 %v823
  %v900 = vpop.f32.mrb[0].mxu0
  %v901 = vadd.f32 0.0, %v900
  %v902 = vpop.f32.mrb[0].mxu0
  %903 = vmatprep.mubr.f32.mxu0 0.0
  %904 = vmatmul.mubr.f32.gmra.mrb[0].mxu0 %v826
  %v905 = vpop.f32.mrb[0].mxu0
  %v906 = vadd.f32 0.0, %v905
  %v907 = vpop.f32.mrb[0].mxu0
  %908 = vmatprep.mubr.f32.mxu0 0.0
  %909 = vmatmul.mubr.f32.gmra.mrb[0].mxu0 %v829
  %v910 = vpop.f32.mrb[0].mxu0
  %v911 = vadd.f32 0.0, %v910
  %v912 = vpop.f32.mrb[0].mxu0
  %913 = vdwg.mxu0
  %v915 = vsel %vm49, %v686, 0
  %v918 = vsel %vm49, %v687, 0
  %v921 = vsel %vm49, %v688, 0
  %v924 = vsel %vm53, %v556, 0
  %926 = vmatprep.subr.mxu0 0.0
  %927 = vmatpush1.msra.mxu0 %v554
  %928 = vmatprep.subr.mxu0 0.0
  %929 = vmatpush1.msra.mxu0 %v555
  %930 = vmatprep.subr.mxu0 0.0
  %931 = vmatpush1.msra.mxu0 %v924
  %932 = vmatprep.subr.mxu0 0.0
  %933 = vmatpush1.msra.mxu0 0.0
  %934 = vmatprep.subr.mxu0 0.0
  %935 = vmatpush1.msra.mxu0 0.0
  %936 = vmatprep.subr.mxu0 0.0
  %937 = vmatpush1.msra.mxu0 0.0
  %938 = vmatprep.subr.mxu0 0.0
  %939 = vmatpush1.msra.mxu0 0.0
  %940 = vmatprep.subr.mxu0 0.0
  %941 = vmatpush1.msra.mxu0 0.0
  %942 = vmatprep.subr.mxu0 0.0
  %943 = vmatpush1.msra.mxu0 0.0
  %944 = vmatprep.subr.mxu0 0.0
  %945 = vmatpush1.msra.mxu0 0.0
  %946 = vmatprep.subr.mxu0 0.0
  %947 = vmatpush1.msra.mxu0 0.0
  %948 = vmatprep.subr.mxu0 0.0
  %949 = vmatpush1.msra.mxu0 0.0
  %950 = vmatprep.subr.mxu0 0.0
  %951 = vmatpush1.msra.mxu0 0.0
  %952 = vmatprep.subr.mxu0 0.0
  %953 = vmatpush1.msra.mxu0 0.0
  %954 = vmatprep.subr.mxu0 0.0
  %955 = vmatpush1.msra.mxu0 0.0
  %956 = vmatprep.subr.mxu0 0.0
  %957 = vmatpush1.msra.mxu0 0.0
  %958 = vmatprep.subr.mxu0 0.0
  %959 = vmatpush1.msra.mxu0 0.0
  %960 = vmatprep.subr.mxu0 0.0
  %961 = vmatpush1.msra.mxu0 0.0
  %962 = vmatprep.subr.mxu0 0.0
  %963 = vmatpush1.msra.mxu0 0.0
  %964 = vmatprep.subr.mxu0 0.0
  %965 = vmatpush1.msra.mxu0 0.0
  %966 = vmatprep.subr.mxu0 0.0
  %967 = vmatpush1.msra.mxu0 0.0
  %968 = vmatprep.subr.mxu0 0.0
  %969 = vmatpush1.msra.mxu0 0.0
  %970 = vmatprep.subr.mxu0 0.0
  %971 = vmatpush1.msra.mxu0 0.0
  %972 = vmatprep.subr.mxu0 0.0
  %973 = vmatpush1.msra.mxu0 0.0
  %974 = vmatprep.subr.mxu0 0.0
  %975 = vmatpush1.msra.mxu0 0.0
  %976 = vmatprep.subr.mxu0 0.0
  %977 = vmatpush1.msra.mxu0 0.0
  %978 = vmatprep.subr.mxu0 0.0
  %979 = vmatpush1.msra.mxu0 0.0
  %980 = vmatprep.subr.mxu0 0.0
  %981 = vmatpush1.msra.mxu0 0.0
  %982 = vmatprep.subr.mxu0 0.0
  %983 = vmatpush1.msra.mxu0 0.0
  %984 = vmatprep.subr.mxu0 0.0
  %985 = vmatpush1.msra.mxu0 0.0
  %986 = vmatprep.subr.mxu0 0.0
  %987 = vmatpush1.msra.mxu0 0.0
  %988 = vmatprep.subr.mxu0 0.0
  %989 = vmatpush1.msra.mxu0 0.0
  %990 = vmatprep.mubr.f32.mxu0 0.0
  %991 = vmatmul.mubr.f32.gmra.mrb[0].mxu0 %v915
  %v992 = vpop.f32.mrb[0].mxu0
  %v993 = vadd.f32 %v901, %v992
  %v994 = vpop.f32.mrb[0].mxu0
  %995 = vmatprep.mubr.f32.mxu0 0.0
  %996 = vmatmul.mubr.f32.gmra.mrb[0].mxu0 %v918
  %v997 = vpop.f32.mrb[0].mxu0
  %v998 = vadd.f32 %v906, %v997
  %v999 = vpop.f32.mrb[0].mxu0
  %1000 = vmatprep.mubr.f32.mxu0 0.0
  %1001 = vmatmul.mubr.f32.gmra.mrb[0].mxu0 %v921
  %v1002 = vpop.f32.mrb[0].mxu0
  %v1003 = vadd.f32 %v911, %v1002
  %v1004 = vpop.f32.mrb[0].mxu0
  %1005 = vdwg.mxu0
  %s1006 = scalar_lea.vmem %s5, 192
  %v1007 = vld [vmem:[%s1006] sm:$0xff]
  %v1008 = vld [vmem:[%s1006 + $0x8] sm:$0xff]
  %v1009 = vld [vmem:[%s1006 + $0x10] sm:$0xff]
  %v1010 = vld [vmem:[%s1006 + $0x18] sm:$0xff]
  %v1011 = vld [vmem:[%s1006 + $0x20] sm:$0xff]
  %v1012 = vld [vmem:[%s1006 + $0x28] sm:$0xff]
  %v1013 = vld [vmem:[%s1006 + $0x30] sm:$0xff]
  %v1014 = vld [vmem:[%s1006 + $0x38] sm:$0xff]
  %v1015 = vlaneseq
  %v1016 = vshrl.u32 %v1015, 7
  %v1017 = vsub.s32 3, %v1016
  %v1018 = vrot.slane %v39, %v1017
  %v1020 = vsel %vm145, %v993, 0
  %v1023 = vsel %vm145, %v998, 0
  %v1026 = vsel %vm145, %v1003, 0
  %1028 = vmatprep.subr.mxu0 0.0
  %1029 = vmatpush1.msra.mxu0 %v1007
  %1030 = vmatprep.subr.mxu0 0.0
  %1031 = vmatpush1.msra.mxu0 %v1008
  %1032 = vmatprep.subr.mxu0 0.0
  %1033 = vmatpush1.msra.mxu0 %v1009
  %1034 = vmatprep.subr.mxu0 0.0
  %1035 = vmatpush1.msra.mxu0 %v1010
  %1036 = vmatprep.subr.mxu0 0.0
  %1037 = vmatpush1.msra.mxu0 %v1011
  %1038 = vmatprep.subr.mxu0 0.0
  %1039 = vmatpush1.msra.mxu0 %v1012
  %1040 = vmatprep.subr.mxu0 0.0
  %1041 = vmatpush1.msra.mxu0 %v1013
  %1042 = vmatprep.subr.mxu0 0.0
  %1043 = vmatpush1.msra.mxu0 %v1014
  %1044 = vmatprep.subr.mxu0 0.0
  %1045 = vmatpush1.msra.mxu0 0.0
  %1046 = vmatprep.subr.mxu0 0.0
  %1047 = vmatpush1.msra.mxu0 0.0
  %1048 = vmatprep.subr.mxu0 0.0
  %1049 = vmatpush1.msra.mxu0 0.0
  %1050 = vmatprep.subr.mxu0 0.0
  %1051 = vmatpush1.msra.mxu0 0.0
  %1052 = vmatprep.subr.mxu0 0.0
  %1053 = vmatpush1.msra.mxu0 0.0
  %1054 = vmatprep.subr.mxu0 0.0
  %1055 = vmatpush1.msra.mxu0 0.0
  %1056 = vmatprep.subr.mxu0 0.0
  %1057 = vmatpush1.msra.mxu0 0.0
  %1058 = vmatprep.subr.mxu0 0.0
  %1059 = vmatpush1.msra.mxu0 0.0
  %1060 = vmatprep.subr.mxu0 0.0
  %1061 = vmatpush1.msra.mxu0 0.0
  %1062 = vmatprep.subr.mxu0 0.0
  %1063 = vmatpush1.msra.mxu0 0.0
  %1064 = vmatprep.subr.mxu0 0.0
  %1065 = vmatpush1.msra.mxu0 0.0
  %1066 = vmatprep.subr.mxu0 0.0
  %1067 = vmatpush1.msra.mxu0 0.0
  %1068 = vmatprep.subr.mxu0 0.0
  %1069 = vmatpush1.msra.mxu0 0.0
  %1070 = vmatprep.subr.mxu0 0.0
  %1071 = vmatpush1.msra.mxu0 0.0
  %1072 = vmatprep.subr.mxu0 0.0
  %1073 = vmatpush1.msra.mxu0 0.0
  %1074 = vmatprep.subr.mxu0 0.0
  %1075 = vmatpush1.msra.mxu0 0.0
  %1076 = vmatprep.subr.mxu0 0.0
  %1077 = vmatpush1.msra.mxu0 0.0
  %1078 = vmatprep.subr.mxu0 0.0
  %1079 = vmatpush1.msra.mxu0 0.0
  %1080 = vmatprep.subr.mxu0 0.0
  %1081 = vmatpush1.msra.mxu0 0.0
  %1082 = vmatprep.subr.mxu0 0.0
  %1083 = vmatpush1.msra.mxu0 0.0
  %1084 = vmatprep.subr.mxu0 0.0
  %1085 = vmatpush1.msra.mxu0 0.0
  %1086 = vmatprep.subr.mxu0 0.0
  %1087 = vmatpush1.msra.mxu0 0.0
  %1088 = vmatprep.subr.mxu0 0.0
  %1089 = vmatpush1.msra.mxu0 0.0
  %1090 = vmatprep.subr.mxu0 0.0
  %1091 = vmatpush1.msra.mxu0 0.0
  %1092 = vmatprep.mubr.f32.mxu0 0.0
  %1093 = vmatmul.mubr.f32.gmra.mrb[0].mxu0 %v1020
  %v1094 = vpop.f32.mrb[0].mxu0
  %v1095 = vadd.f32 %v1018, %v1094
  %v1096 = vpop.f32.mrb[0].mxu0
  %1097 = vmatprep.mubr.f32.mxu0 0.0
  %1098 = vmatmul.mubr.f32.gmra.mrb[0].mxu0 %v1023
  %v1099 = vpop.f32.mrb[0].mxu0
  %v1100 = vadd.f32 %v1018, %v1099
  %v1101 = vpop.f32.mrb[0].mxu0
  %1102 = vmatprep.mubr.f32.mxu0 0.0
  %1103 = vmatmul.mubr.f32.gmra.mrb[0].mxu0 %v1026
  %v1104 = vpop.f32.mrb[0].mxu0
  %v1105 = vadd.f32 %v1018, %v1104
  %v1106 = vpop.f32.mrb[0].mxu0
  %1107 = vdwg.mxu0
  %v1108 = vadd.f32 %v198, %v1095
  %v1109 = vadd.f32 %v199, %v1100
  %v1110 = vadd.f32 %v200, %v1105
  %v1111 = vsel %vm145, %v1108, 0.0
  %1112 = vadd.xlane.f32.xlu0 %v1111
  %v1113 = vpop.xlane.xlu0 %1112
  %v1114 = vsel %vm145, %v1109, 0.0
  %1115 = vadd.xlane.f32.xlu0 %v1114
  %v1116 = vpop.xlane.xlu0 %1115
  %v1117 = vsel %vm152, %v1110, 0.0
  %1118 = vadd.xlane.f32.xlu0 %v1117
  %v1119 = vpop.xlane.xlu0 %1118
  %v1120 = vmul.f32 %v1113, %v156
  %v1121 = vmul.f32 %v1116, %v156
  %v1122 = vmul.f32 %v1119, %v156
  %v1123 = vsub.f32 %v1108, %v1120
  %v1124 = vsub.f32 %v1109, %v1121
  %v1125 = vsub.f32 %v1110, %v1122
  %v1126 = vmul.f32 %v1123, %v1123
  %v1127 = vmul.f32 %v1124, %v1124
  %v1128 = vmul.f32 %v1125, %v1125
  %v1129 = vsel %vm145, %v1126, 0.0
  %1130 = vadd.xlane.f32.xlu0 %v1129
  %v1131 = vpop.xlane.xlu0 %1130
  %v1132 = vsel %vm145, %v1127, 0.0
  %1133 = vadd.xlane.f32.xlu0 %v1132
  %v1134 = vpop.xlane.xlu0 %1133
  %v1135 = vsel %vm152, %v1128, 0.0
  %1136 = vadd.xlane.f32.xlu0 %v1135
  %v1137 = vpop.xlane.xlu0 %1136
  %v1138 = vmul.f32 %v1131, %v156
  %v1139 = vmul.f32 %v1134, %v156
  %v1140 = vmul.f32 %v1137, %v156
  %v1141 = vadd.f32 %v1138, 1e-05
  %v1142 = vadd.f32 %v1139, 1e-05
  %v1143 = vadd.f32 %v1140, 1e-05
  %v1144 = vrsqrt.pop %v1141
  %v1145 = vrsqrt.pop %v1142
  %v1146 = vrsqrt.pop %v1143
  %v1147 = vmul.f32 %v1123, %v1144
  %v1148 = vmul.f32 %v1124, %v1145
  %v1149 = vmul.f32 %v1125, %v1146
  %v1150 = vlaneseq
  %v1151 = vshrl.u32 %v1150, 7
  %v1152 = vsub.s32 4, %v1151
  %v1153 = vrot.slane %v39, %v1152
  %v1154 = vmul.f32 %v1147, %v1153
  %v1155 = vmul.f32 %v1148, %v1153
  %v1156 = vmul.f32 %v1149, %v1153
  %v1157 = vlaneseq
  %v1158 = vshrl.u32 %v1157, 7
  %v1159 = vsub.s32 5, %v1158
  %v1160 = vrot.slane %v39, %v1159
  %v1161 = vadd.f32 %v1154, %v1160
  %v1162 = vadd.f32 %v1155, %v1160
  %v1163 = vadd.f32 %v1156, %v1160
  %v1164 = vld [vmem:[%s6] sm:$0xff]
  %v1165 = vld [vmem:[%s6 + $0x8] sm:$0xff]
  %v1166 = vld [vmem:[%s6 + $0x10] sm:$0xff]
  %v1167 = vld [vmem:[%s6 + $0x18] sm:$0xff]
  %v1168 = vld [vmem:[%s6 + $0x20] sm:$0xff]
  %v1169 = vld [vmem:[%s6 + $0x28] sm:$0xff]
  %v1170 = vld [vmem:[%s6 + $0x30] sm:$0xff]
  %v1171 = vld [vmem:[%s6 + $0x38] sm:$0xff]
  %v1172 = vld [vmem:[%s6 + $0x40] sm:$0xff]
  %v1173 = vld [vmem:[%s6 + $0x48] sm:$0xff]
  %v1174 = vld [vmem:[%s6 + $0x50] sm:$0xff]
  %v1175 = vld [vmem:[%s6 + $0x58] sm:$0xff]
  %v1176 = vld [vmem:[%s6 + $0x60] sm:$0xff]
  %v1177 = vld [vmem:[%s6 + $0x68] sm:$0xff]
  %v1178 = vld [vmem:[%s6 + $0x70] sm:$0xff]
  %v1179 = vld [vmem:[%s6 + $0x78] sm:$0xff]
  %v1180 = vld [vmem:[%s8] sm:$0x3]
  %v1182 = vlaneseq
  %v1183 = vshrl.u32 %v1182, 7
  %v1184 = vsub.s32 0, %v1183
  %v1185 = vrot.slane %v1180, %v1184
  %v1186 = vlaneseq
  %v1187 = vshrl.u32 %v1186, 7
  %v1188 = vsub.s32 1, %v1187
  %v1189 = vrot.slane %v1180, %v1188
  %v1193 = vsel %vm145, %v1161, 0
  %v1196 = vsel %vm145, %v1162, 0
  %v1199 = vsel %vm145, %v1163, 0
  %1201 = vmatprep.subr.mxu0 %v1165
  %1202 = vmatpush1.msra.mxu0 %v1164
  %1203 = vmatprep.subr.mxu0 %v1167
  %1204 = vmatpush1.msra.mxu0 %v1166
  %1205 = vmatprep.subr.mxu0 %v1169
  %1206 = vmatpush1.msra.mxu0 %v1168
  %1207 = vmatprep.subr.mxu0 %v1171
  %1208 = vmatpush1.msra.mxu0 %v1170
  %1209 = vmatprep.subr.mxu0 %v1173
  %1210 = vmatpush1.msra.mxu0 %v1172
  %1211 = vmatprep.subr.mxu0 %v1175
  %1212 = vmatpush1.msra.mxu0 %v1174
  %1213 = vmatprep.subr.mxu0 %v1177
  %1214 = vmatpush1.msra.mxu0 %v1176
  %1215 = vmatprep.subr.mxu0 %v1179
  %1216 = vmatpush1.msra.mxu0 %v1178
  %1217 = vmatprep.subr.mxu0 0.0
  %1218 = vmatpush1.msra.mxu0 0.0
  %1219 = vmatprep.subr.mxu0 0.0
  %1220 = vmatpush1.msra.mxu0 0.0
  %1221 = vmatprep.subr.mxu0 0.0
  %1222 = vmatpush1.msra.mxu0 0.0
  %1223 = vmatprep.subr.mxu0 0.0
  %1224 = vmatpush1.msra.mxu0 0.0
  %1225 = vmatprep.subr.mxu0 0.0
  %1226 = vmatpush1.msra.mxu0 0.0
  %1227 = vmatprep.subr.mxu0 0.0
  %1228 = vmatpush1.msra.mxu0 0.0
  %1229 = vmatprep.subr.mxu0 0.0
  %1230 = vmatpush1.msra.mxu0 0.0
  %1231 = vmatprep.subr.mxu0 0.0
  %1232 = vmatpush1.msra.mxu0 0.0
  %1233 = vmatprep.subr.mxu0 0.0
  %1234 = vmatpush1.msra.mxu0 0.0
  %1235 = vmatprep.subr.mxu0 0.0
  %1236 = vmatpush1.msra.mxu0 0.0
  %1237 = vmatprep.subr.mxu0 0.0
  %1238 = vmatpush1.msra.mxu0 0.0
  %1239 = vmatprep.subr.mxu0 0.0
  %1240 = vmatpush1.msra.mxu0 0.0
  %1241 = vmatprep.subr.mxu0 0.0
  %1242 = vmatpush1.msra.mxu0 0.0
  %1243 = vmatprep.subr.mxu0 0.0
  %1244 = vmatpush1.msra.mxu0 0.0
  %1245 = vmatprep.subr.mxu0 0.0
  %1246 = vmatpush1.msra.mxu0 0.0
  %1247 = vmatprep.subr.mxu0 0.0
  %1248 = vmatpush1.msra.mxu0 0.0
  %1249 = vmatprep.subr.mxu0 0.0
  %1250 = vmatpush1.msra.mxu0 0.0
  %1251 = vmatprep.subr.mxu0 0.0
  %1252 = vmatpush1.msra.mxu0 0.0
  %1253 = vmatprep.subr.mxu0 0.0
  %1254 = vmatpush1.msra.mxu0 0.0
  %1255 = vmatprep.subr.mxu0 0.0
  %1256 = vmatpush1.msra.mxu0 0.0
  %1257 = vmatprep.subr.mxu0 0.0
  %1258 = vmatpush1.msra.mxu0 0.0
  %1259 = vmatprep.subr.mxu0 0.0
  %1260 = vmatpush1.msra.mxu0 0.0
  %1261 = vmatprep.subr.mxu0 0.0
  %1262 = vmatpush1.msra.mxu0 0.0
  %1263 = vmatprep.subr.mxu0 0.0
  %1264 = vmatpush1.msra.mxu0 0.0
  %1265 = vmatprep.mubr.f32.mxu0 0.0
  %1266 = vmatmul.mubr.f32.gmra.mrb[0].mxu0 %v1193
  %v1267 = vpop.f32.mrb[0].mxu0
  %v1268 = vadd.f32 %v1185, %v1267
  %v1269 = vpop.f32.mrb[0].mxu0
  %v1270 = vadd.f32 %v1189, %v1269
  %1271 = vmatprep.mubr.f32.mxu0 0.0
  %1272 = vmatmul.mubr.f32.gmra.mrb[0].mxu0 %v1196
  %v1273 = vpop.f32.mrb[0].mxu0
  %v1274 = vadd.f32 %v1185, %v1273
  %v1275 = vpop.f32.mrb[0].mxu0
  %v1276 = vadd.f32 %v1189, %v1275
  %1277 = vmatprep.mubr.f32.mxu0 0.0
  %1278 = vmatmul.mubr.f32.gmra.mrb[0].mxu0 %v1199
  %v1279 = vpop.f32.mrb[0].mxu0
  %v1280 = vadd.f32 %v1185, %v1279
  %v1281 = vpop.f32.mrb[0].mxu0
  %v1282 = vadd.f32 %v1189, %v1281
  %1283 = vdwg.mxu0
  %v1284 = vmul.f32 %v1268, 0.5
  %v1285 = vmul.f32 %v1270, 0.5
  %v1286 = vmul.f32 %v1274, 0.5
  %v1287 = vmul.f32 %v1276, 0.5
  %v1288 = vmul.f32 %v1280, 0.5
  %v1289 = vmul.f32 %v1282, 0.5
  %v1290 = vmul.f32 %v1268, 0.044715
  %v1291 = vmul.f32 %v1270, 0.044715
  %v1292 = vmul.f32 %v1274, 0.044715
  %v1293 = vmul.f32 %v1276, 0.044715
  %v1294 = vmul.f32 %v1280, 0.044715
  %v1295 = vmul.f32 %v1282, 0.044715
  %v1296 = vmul.f32 %v1290, %v1268
  %v1297 = vmul.f32 %v1291, %v1270
  %v1298 = vmul.f32 %v1292, %v1274
  %v1299 = vmul.f32 %v1293, %v1276
  %v1300 = vmul.f32 %v1294, %v1280
  %v1301 = vmul.f32 %v1295, %v1282
  %v1302 = vmul.f32 %v1296, %v1268
  %v1303 = vmul.f32 %v1297, %v1270
  %v1304 = vmul.f32 %v1298, %v1274
  %v1305 = vmul.f32 %v1299, %v1276
  %v1306 = vmul.f32 %v1300, %v1280
  %v1307 = vmul.f32 %v1301, %v1282
  %v1308 = vadd.f32 %v1268, %v1302
  %v1309 = vadd.f32 %v1270, %v1303
  %v1310 = vadd.f32 %v1274, %v1304
  %v1311 = vadd.f32 %v1276, %v1305
  %v1312 = vadd.f32 %v1280, %v1306
  %v1313 = vadd.f32 %v1282, %v1307
  %v1314 = vmul.f32 %v1308, 0.7978846
  %v1315 = vmul.f32 %v1309, 0.7978846
  %v1316 = vmul.f32 %v1310, 0.7978846
  %v1317 = vmul.f32 %v1311, 0.7978846
  %v1318 = vmul.f32 %v1312, 0.7978846
  %v1319 = vmul.f32 %v1313, 0.7978846
  %v1320 = vtanh.pop %v1314
  %v1321 = vtanh.pop %v1315
  %v1322 = vtanh.pop %v1316
  %v1323 = vtanh.pop %v1317
  %v1324 = vtanh.pop %v1318
  %v1325 = vtanh.pop %v1319
  %v1326 = vadd.f32 %v1320, 1.0
  %v1327 = vadd.f32 %v1321, 1.0
  %v1328 = vadd.f32 %v1322, 1.0
  %v1329 = vadd.f32 %v1323, 1.0
  %v1330 = vadd.f32 %v1324, 1.0
  %v1331 = vadd.f32 %v1325, 1.0
  %v1332 = vmul.f32 %v1284, %v1326
  %v1333 = vmul.f32 %v1285, %v1327
  %v1334 = vmul.f32 %v1286, %v1328
  %v1335 = vmul.f32 %v1287, %v1329
  %v1336 = vmul.f32 %v1288, %v1330
  %v1337 = vmul.f32 %v1289, %v1331
  %v1338 = vld [vmem:[%s7] sm:$0xff]
  %v1339 = vld [vmem:[%s7 + $0x8] sm:$0xff]
  %v1340 = vld [vmem:[%s7 + $0x10] sm:$0xff]
  %v1341 = vld [vmem:[%s7 + $0x18] sm:$0xff]
  %v1342 = vld [vmem:[%s7 + $0x20] sm:$0xff]
  %v1343 = vld [vmem:[%s7 + $0x28] sm:$0xff]
  %v1344 = vld [vmem:[%s7 + $0x30] sm:$0xff]
  %v1345 = vld [vmem:[%s7 + $0x38] sm:$0xff]
  %v1346 = vld [vmem:[%s7 + $0x40] sm:$0xff]
  %v1347 = vld [vmem:[%s7 + $0x48] sm:$0xff]
  %v1348 = vld [vmem:[%s7 + $0x50] sm:$0xff]
  %v1349 = vld [vmem:[%s7 + $0x58] sm:$0xff]
  %v1350 = vld [vmem:[%s7 + $0x60] sm:$0xff]
  %v1351 = vld [vmem:[%s7 + $0x68] sm:$0xff]
  %v1352 = vld [vmem:[%s7 + $0x70] sm:$0xff]
  %v1353 = vld [vmem:[%s7 + $0x78] sm:$0xff]
  %v1354 = vld [vmem:[%s7 + $0x80] sm:$0xff]
  %v1355 = vld [vmem:[%s7 + $0x88] sm:$0xff]
  %v1356 = vld [vmem:[%s7 + $0x90] sm:$0xff]
  %v1357 = vld [vmem:[%s7 + $0x98] sm:$0xff]
  %v1358 = vld [vmem:[%s7 + $0xa0] sm:$0xff]
  %v1359 = vld [vmem:[%s7 + $0xa8] sm:$0xff]
  %v1360 = vld [vmem:[%s7 + $0xb0] sm:$0xff]
  %v1361 = vld [vmem:[%s7 + $0xb8] sm:$0xff]
  %v1362 = vld [vmem:[%s7 + $0xc0] sm:$0xff]
  %v1363 = vld [vmem:[%s7 + $0xc8] sm:$0xff]
  %v1364 = vld [vmem:[%s7 + $0xd0] sm:$0xff]
  %v1365 = vld [vmem:[%s7 + $0xd8] sm:$0xff]
  %v1366 = vld [vmem:[%s7 + $0xe0] sm:$0xff]
  %v1367 = vld [vmem:[%s7 + $0xe8] sm:$0xff]
  %v1368 = vld [vmem:[%s7 + $0xf0] sm:$0xff]
  %v1369 = vld [vmem:[%s7 + $0xf8] sm:$0xff]
  %v1370 = vlaneseq
  %v1371 = vshrl.u32 %v1370, 7
  %v1372 = vsub.s32 6, %v1371
  %v1373 = vrot.slane %v39, %v1372
  %1374 = vmatprep.subr.mxu0 0.0
  %1375 = vmatpush1.msra.mxu0 %v1338
  %1376 = vmatprep.subr.mxu0 0.0
  %1377 = vmatpush1.msra.mxu0 %v1339
  %1378 = vmatprep.subr.mxu0 0.0
  %1379 = vmatpush1.msra.mxu0 %v1340
  %1380 = vmatprep.subr.mxu0 0.0
  %1381 = vmatpush1.msra.mxu0 %v1341
  %1382 = vmatprep.subr.mxu0 0.0
  %1383 = vmatpush1.msra.mxu0 %v1342
  %1384 = vmatprep.subr.mxu0 0.0
  %1385 = vmatpush1.msra.mxu0 %v1343
  %1386 = vmatprep.subr.mxu0 0.0
  %1387 = vmatpush1.msra.mxu0 %v1344
  %1388 = vmatprep.subr.mxu0 0.0
  %1389 = vmatpush1.msra.mxu0 %v1345
  %1390 = vmatprep.subr.mxu0 0.0
  %1391 = vmatpush1.msra.mxu0 %v1346
  %1392 = vmatprep.subr.mxu0 0.0
  %1393 = vmatpush1.msra.mxu0 %v1347
  %1394 = vmatprep.subr.mxu0 0.0
  %1395 = vmatpush1.msra.mxu0 %v1348
  %1396 = vmatprep.subr.mxu0 0.0
  %1397 = vmatpush1.msra.mxu0 %v1349
  %1398 = vmatprep.subr.mxu0 0.0
  %1399 = vmatpush1.msra.mxu0 %v1350
  %1400 = vmatprep.subr.mxu0 0.0
  %1401 = vmatpush1.msra.mxu0 %v1351
  %1402 = vmatprep.subr.mxu0 0.0
  %1403 = vmatpush1.msra.mxu0 %v1352
  %1404 = vmatprep.subr.mxu0 0.0
  %1405 = vmatpush1.msra.mxu0 %v1353
  %1406 = vmatprep.subr.mxu0 0.0
  %1407 = vmatpush1.msra.mxu0 %v1354
  %1408 = vmatprep.subr.mxu0 0.0
  %1409 = vmatpush1.msra.mxu0 %v1355
  %1410 = vmatprep.subr.mxu0 0.0
  %1411 = vmatpush1.msra.mxu0 %v1356
  %1412 = vmatprep.subr.mxu0 0.0
  %1413 = vmatpush1.msra.mxu0 %v1357
  %1414 = vmatprep.subr.mxu0 0.0
  %1415 = vmatpush1.msra.mxu0 %v1358
  %1416 = vmatprep.subr.mxu0 0.0
  %1417 = vmatpush1.msra.mxu0 %v1359
  %1418 = vmatprep.subr.mxu0 0.0
  %1419 = vmatpush1.msra.mxu0 %v1360
  %1420 = vmatprep.subr.mxu0 0.0
  %1421 = vmatpush1.msra.mxu0 %v1361
  %1422 = vmatprep.subr.mxu0 0.0
  %1423 = vmatpush1.msra.mxu0 %v1362
  %1424 = vmatprep.subr.mxu0 0.0
  %1425 = vmatpush1.msra.mxu0 %v1363
  %1426 = vmatprep.subr.mxu0 0.0
  %1427 = vmatpush1.msra.mxu0 %v1364
  %1428 = vmatprep.subr.mxu0 0.0
  %1429 = vmatpush1.msra.mxu0 %v1365
  %1430 = vmatprep.subr.mxu0 0.0
  %1431 = vmatpush1.msra.mxu0 %v1366
  %1432 = vmatprep.subr.mxu0 0.0
  %1433 = vmatpush1.msra.mxu0 %v1367
  %1434 = vmatprep.subr.mxu0 0.0
  %1435 = vmatpush1.msra.mxu0 %v1368
  %1436 = vmatprep.subr.mxu0 0.0
  %1437 = vmatpush1.msra.mxu0 %v1369
  %1438 = vmatprep.mubr.f32.mxu0 %v1333
  %1439 = vmatmul.mubr.f32.gmra.mrb[0].mxu0 %v1332
  %v1440 = vpop.f32.mrb[0].mxu0
  %v1441 = vadd.f32 %v1373, %v1440
  %v1442 = vpop.f32.mrb[0].mxu0
  %1443 = vmatprep.mubr.f32.mxu0 %v1335
  %1444 = vmatmul.mubr.f32.gmra.mrb[0].mxu0 %v1334
  %v1445 = vpop.f32.mrb[0].mxu0
  %v1446 = vadd.f32 %v1373, %v1445
  %v1447 = vpop.f32.mrb[0].mxu0
  %1448 = vmatprep.mubr.f32.mxu0 %v1337
  %1449 = vmatmul.mubr.f32.gmra.mrb[0].mxu0 %v1336
  %v1450 = vpop.f32.mrb[0].mxu0
  %v1451 = vadd.f32 %v1373, %v1450
  %v1452 = vpop.f32.mrb[0].mxu0
  %1453 = vdwg.mxu0
  %v1454 = vadd.f32 %v1108, %v1441
  %v1455 = vadd.f32 %v1109, %v1446
  %v1456 = vadd.f32 %v1110, %v1451
  %v1457 = vsel %vm145, %v1454, 0.0
  %1458 = vadd.xlane.f32.xlu0 %v1457
  %v1459 = vpop.xlane.xlu0 %1458
  %v1460 = vsel %vm145, %v1455, 0.0
  %1461 = vadd.xlane.f32.xlu0 %v1460
  %v1462 = vpop.xlane.xlu0 %1461
  %v1463 = vsel %vm152, %v1456, 0.0
  %1464 = vadd.xlane.f32.xlu0 %v1463
  %v1465 = vpop.xlane.xlu0 %1464
  %v1466 = vmul.f32 %v1459, %v156
  %v1467 = vmul.f32 %v1462, %v156
  %v1468 = vmul.f32 %v1465, %v156
  %v1469 = vsub.f32 %v1454, %v1466
  %v1470 = vsub.f32 %v1455, %v1467
  %v1471 = vsub.f32 %v1456, %v1468
  %v1472 = vmul.f32 %v1469, %v1469
  %v1473 = vmul.f32 %v1470, %v1470
  %v1474 = vmul.f32 %v1471, %v1471
  %v1475 = vsel %vm145, %v1472, 0.0
  %1476 = vadd.xlane.f32.xlu0 %v1475
  %v1477 = vpop.xlane.xlu0 %1476
  %v1478 = vsel %vm145, %v1473, 0.0
  %1479 = vadd.xlane.f32.xlu0 %v1478
  %v1480 = vpop.xlane.xlu0 %1479
  %v1481 = vsel %vm152, %v1474, 0.0
  %1482 = vadd.xlane.f32.xlu0 %v1481
  %v1483 = vpop.xlane.xlu0 %1482
  %v1484 = vmul.f32 %v1477, %v156
  %v1485 = vmul.f32 %v1480, %v156
  %v1486 = vmul.f32 %v1483, %v156
  %v1487 = vadd.f32 %v1484, 1e-05
  %v1488 = vadd.f32 %v1485, 1e-05
  %v1489 = vadd.f32 %v1486, 1e-05
  %v1490 = vrsqrt.pop %v1487
  %v1491 = vrsqrt.pop %v1488
  %v1492 = vrsqrt.pop %v1489
  %v1493 = vmul.f32 %v1469, %v1490
  %v1494 = vmul.f32 %v1470, %v1491
  %v1495 = vmul.f32 %v1471, %v1492
  %v1496 = vlaneseq
  %v1497 = vshrl.u32 %v1496, 7
  %v1498 = vsub.s32 7, %v1497
  %v1499 = vrot.slane %v39, %v1498
  %v1500 = vmul.f32 %v1493, %v1499
  %v1501 = vmul.f32 %v1494, %v1499
  %v1502 = vmul.f32 %v1495, %v1499
  %v1503 = vlaneseq
  %v1504 = vshrl.u32 %v1503, 7
  %v1505 = vsub.s32 0, %v1504
  %v1506 = vrot.slane %v40, %v1505
  %v1507 = vadd.f32 %v1500, %v1506
  %v1508 = vadd.f32 %v1501, %v1506
  %v1509 = vadd.f32 %v1502, %v1506
  %s1510 = scalar_lea.vmem %s5, 256
  %v1511 = vld [vmem:[%s1510] sm:$0xff]
  %v1512 = vld [vmem:[%s1510 + $0x8] sm:$0xff]
  %v1513 = vld [vmem:[%s1510 + $0x10] sm:$0xff]
  %v1514 = vld [vmem:[%s1510 + $0x18] sm:$0xff]
  %v1515 = vld [vmem:[%s1510 + $0x20] sm:$0xff]
  %v1516 = vld [vmem:[%s1510 + $0x28] sm:$0xff]
  %v1517 = vld [vmem:[%s1510 + $0x30] sm:$0xff]
  %v1518 = vld [vmem:[%s1510 + $0x38] sm:$0xff]
  %v1519 = vlaneseq
  %v1520 = vshrl.u32 %v1519, 7
  %v1521 = vsub.s32 1, %v1520
  %v1522 = vrot.slane %v40, %v1521
  %v1524 = vsel %vm145, %v1507, 0
  %v1527 = vsel %vm145, %v1508, 0
  %v1530 = vsel %vm145, %v1509, 0
  %1532 = vmatprep.subr.mxu0 0.0
  %1533 = vmatpush1.msra.mxu0 %v1511
  %1534 = vmatprep.subr.mxu0 0.0
  %1535 = vmatpush1.msra.mxu0 %v1512
  %1536 = vmatprep.subr.mxu0 0.0
  %1537 = vmatpush1.msra.mxu0 %v1513
  %1538 = vmatprep.subr.mxu0 0.0
  %1539 = vmatpush1.msra.mxu0 %v1514
  %1540 = vmatprep.subr.mxu0 0.0
  %1541 = vmatpush1.msra.mxu0 %v1515
  %1542 = vmatprep.subr.mxu0 0.0
  %1543 = vmatpush1.msra.mxu0 %v1516
  %1544 = vmatprep.subr.mxu0 0.0
  %1545 = vmatpush1.msra.mxu0 %v1517
  %1546 = vmatprep.subr.mxu0 0.0
  %1547 = vmatpush1.msra.mxu0 %v1518
  %1548 = vmatprep.subr.mxu0 0.0
  %1549 = vmatpush1.msra.mxu0 0.0
  %1550 = vmatprep.subr.mxu0 0.0
  %1551 = vmatpush1.msra.mxu0 0.0
  %1552 = vmatprep.subr.mxu0 0.0
  %1553 = vmatpush1.msra.mxu0 0.0
  %1554 = vmatprep.subr.mxu0 0.0
  %1555 = vmatpush1.msra.mxu0 0.0
  %1556 = vmatprep.subr.mxu0 0.0
  %1557 = vmatpush1.msra.mxu0 0.0
  %1558 = vmatprep.subr.mxu0 0.0
  %1559 = vmatpush1.msra.mxu0 0.0
  %1560 = vmatprep.subr.mxu0 0.0
  %1561 = vmatpush1.msra.mxu0 0.0
  %1562 = vmatprep.subr.mxu0 0.0
  %1563 = vmatpush1.msra.mxu0 0.0
  %1564 = vmatprep.subr.mxu0 0.0
  %1565 = vmatpush1.msra.mxu0 0.0
  %1566 = vmatprep.subr.mxu0 0.0
  %1567 = vmatpush1.msra.mxu0 0.0
  %1568 = vmatprep.subr.mxu0 0.0
  %1569 = vmatpush1.msra.mxu0 0.0
  %1570 = vmatprep.subr.mxu0 0.0
  %1571 = vmatpush1.msra.mxu0 0.0
  %1572 = vmatprep.subr.mxu0 0.0
  %1573 = vmatpush1.msra.mxu0 0.0
  %1574 = vmatprep.subr.mxu0 0.0
  %1575 = vmatpush1.msra.mxu0 0.0
  %1576 = vmatprep.subr.mxu0 0.0
  %1577 = vmatpush1.msra.mxu0 0.0
  %1578 = vmatprep.subr.mxu0 0.0
  %1579 = vmatpush1.msra.mxu0 0.0
  %1580 = vmatprep.subr.mxu0 0.0
  %1581 = vmatpush1.msra.mxu0 0.0
  %1582 = vmatprep.subr.mxu0 0.0
  %1583 = vmatpush1.msra.mxu0 0.0
  %1584 = vmatprep.subr.mxu0 0.0
  %1585 = vmatpush1.msra.mxu0 0.0
  %1586 = vmatprep.subr.mxu0 0.0
  %1587 = vmatpush1.msra.mxu0 0.0
  %1588 = vmatprep.subr.mxu0 0.0
  %1589 = vmatpush1.msra.mxu0 0.0
  %1590 = vmatprep.subr.mxu0 0.0
  %1591 = vmatpush1.msra.mxu0 0.0
  %1592 = vmatprep.subr.mxu0 0.0
  %1593 = vmatpush1.msra.mxu0 0.0
  %1594 = vmatprep.subr.mxu0 0.0
  %1595 = vmatpush1.msra.mxu0 0.0
  %1596 = vmatprep.mubr.f32.mxu0 0.0
  %1597 = vmatmul.mubr.f32.gmra.mrb[0].mxu0 %v1524
  %v1598 = vpop.f32.mrb[0].mxu0
  %v1599 = vadd.f32 %v1522, %v1598
  %v1600 = vpop.f32.mrb[0].mxu0
  %1601 = vmatprep.mubr.f32.mxu0 0.0
  %1602 = vmatmul.mubr.f32.gmra.mrb[0].mxu0 %v1527
  %v1603 = vpop.f32.mrb[0].mxu0
  %v1604 = vadd.f32 %v1522, %v1603
  %v1605 = vpop.f32.mrb[0].mxu0
  %1606 = vmatprep.mubr.f32.mxu0 0.0
  %1607 = vmatmul.mubr.f32.gmra.mrb[0].mxu0 %v1530
  %v1608 = vpop.f32.mrb[0].mxu0
  %v1609 = vadd.f32 %v1522, %v1608
  %v1610 = vpop.f32.mrb[0].mxu0
  %1611 = vdwg.mxu0
  %s1612 = scalar_lea.vmem %s5, 320
  %v1613 = vld [vmem:[%s1612] sm:$0xff]
  %v1614 = vld [vmem:[%s1612 + $0x8] sm:$0xff]
  %v1615 = vld [vmem:[%s1612 + $0x10] sm:$0xff]
  %v1616 = vld [vmem:[%s1612 + $0x18] sm:$0xff]
  %v1617 = vld [vmem:[%s1612 + $0x20] sm:$0xff]
  %v1618 = vld [vmem:[%s1612 + $0x28] sm:$0xff]
  %v1619 = vld [vmem:[%s1612 + $0x30] sm:$0xff]
  %v1620 = vld [vmem:[%s1612 + $0x38] sm:$0xff]
  %v1621 = vlaneseq
  %v1622 = vshrl.u32 %v1621, 7
  %v1623 = vsub.s32 2, %v1622
  %v1624 = vrot.slane %v40, %v1623
  %1625 = vmatprep.subr.mxu0 0.0
  %1626 = vmatpush1.msra.mxu0 %v1613
  %1627 = vmatprep.subr.mxu0 0.0
  %1628 = vmatpush1.msra.mxu0 %v1614
  %1629 = vmatprep.subr.mxu0 0.0
  %1630 = vmatpush1.msra.mxu0 %v1615
  %1631 = vmatprep.subr.mxu0 0.0
  %1632 = vmatpush1.msra.mxu0 %v1616
  %1633 = vmatprep.subr.mxu0 0.0
  %1634 = vmatpush1.msra.mxu0 %v1617
  %1635 = vmatprep.subr.mxu0 0.0
  %1636 = vmatpush1.msra.mxu0 %v1618
  %1637 = vmatprep.subr.mxu0 0.0
  %1638 = vmatpush1.msra.mxu0 %v1619
  %1639 = vmatprep.subr.mxu0 0.0
  %1640 = vmatpush1.msra.mxu0 %v1620
  %1641 = vmatprep.subr.mxu0 0.0
  %1642 = vmatpush1.msra.mxu0 0.0
  %1643 = vmatprep.subr.mxu0 0.0
  %1644 = vmatpush1.msra.mxu0 0.0
  %1645 = vmatprep.subr.mxu0 0.0
  %1646 = vmatpush1.msra.mxu0 0.0
  %1647 = vmatprep.subr.mxu0 0.0
  %1648 = vmatpush1.msra.mxu0 0.0
  %1649 = vmatprep.subr.mxu0 0.0
  %1650 = vmatpush1.msra.mxu0 0.0
  %1651 = vmatprep.subr.mxu0 0.0
  %1652 = vmatpush1.msra.mxu0 0.0
  %1653 = vmatprep.subr.mxu0 0.0
  %1654 = vmatpush1.msra.mxu0 0.0
  %1655 = vmatprep.subr.mxu0 0.0
  %1656 = vmatpush1.msra.mxu0 0.0
  %1657 = vmatprep.subr.mxu0 0.0
  %1658 = vmatpush1.msra.mxu0 0.0
  %1659 = vmatprep.subr.mxu0 0.0
  %1660 = vmatpush1.msra.mxu0 0.0
  %1661 = vmatprep.subr.mxu0 0.0
  %1662 = vmatpush1.msra.mxu0 0.0
  %1663 = vmatprep.subr.mxu0 0.0
  %1664 = vmatpush1.msra.mxu0 0.0
  %1665 = vmatprep.subr.mxu0 0.0
  %1666 = vmatpush1.msra.mxu0 0.0
  %1667 = vmatprep.subr.mxu0 0.0
  %1668 = vmatpush1.msra.mxu0 0.0
  %1669 = vmatprep.subr.mxu0 0.0
  %1670 = vmatpush1.msra.mxu0 0.0
  %1671 = vmatprep.subr.mxu0 0.0
  %1672 = vmatpush1.msra.mxu0 0.0
  %1673 = vmatprep.subr.mxu0 0.0
  %1674 = vmatpush1.msra.mxu0 0.0
  %1675 = vmatprep.subr.mxu0 0.0
  %1676 = vmatpush1.msra.mxu0 0.0
  %1677 = vmatprep.subr.mxu0 0.0
  %1678 = vmatpush1.msra.mxu0 0.0
  %1679 = vmatprep.subr.mxu0 0.0
  %1680 = vmatpush1.msra.mxu0 0.0
  %1681 = vmatprep.subr.mxu0 0.0
  %1682 = vmatpush1.msra.mxu0 0.0
  %1683 = vmatprep.subr.mxu0 0.0
  %1684 = vmatpush1.msra.mxu0 0.0
  %1685 = vmatprep.subr.mxu0 0.0
  %1686 = vmatpush1.msra.mxu0 0.0
  %1687 = vmatprep.subr.mxu0 0.0
  %1688 = vmatpush1.msra.mxu0 0.0
  %1689 = vmatprep.mubr.f32.mxu0 0.0
  %1690 = vmatmul.mubr.f32.gmra.mrb[0].mxu0 %v1524
  %v1691 = vpop.f32.mrb[0].mxu0
  %v1692 = vadd.f32 %v1624, %v1691
  %v1693 = vpop.f32.mrb[0].mxu0
  %1694 = vmatprep.mubr.f32.mxu0 0.0
  %1695 = vmatmul.mubr.f32.gmra.mrb[0].mxu0 %v1527
  %v1696 = vpop.f32.mrb[0].mxu0
  %v1697 = vadd.f32 %v1624, %v1696
  %v1698 = vpop.f32.mrb[0].mxu0
  %1699 = vmatprep.mubr.f32.mxu0 0.0
  %1700 = vmatmul.mubr.f32.gmra.mrb[0].mxu0 %v1530
  %v1701 = vpop.f32.mrb[0].mxu0
  %v1702 = vadd.f32 %v1624, %v1701
  %v1703 = vpop.f32.mrb[0].mxu0
  %1704 = vdwg.mxu0
  %s1705 = scalar_lea.vmem %s5, 384
  %v1706 = vld [vmem:[%s1705] sm:$0xff]
  %v1707 = vld [vmem:[%s1705 + $0x8] sm:$0xff]
  %v1708 = vld [vmem:[%s1705 + $0x10] sm:$0xff]
  %v1709 = vld [vmem:[%s1705 + $0x18] sm:$0xff]
  %v1710 = vld [vmem:[%s1705 + $0x20] sm:$0xff]
  %v1711 = vld [vmem:[%s1705 + $0x28] sm:$0xff]
  %v1712 = vld [vmem:[%s1705 + $0x30] sm:$0xff]
  %v1713 = vld [vmem:[%s1705 + $0x38] sm:$0xff]
  %v1714 = vlaneseq
  %v1715 = vshrl.u32 %v1714, 7
  %v1716 = vsub.s32 3, %v1715
  %v1717 = vrot.slane %v40, %v1716
  %1718 = vmatprep.subr.mxu0 0.0
  %1719 = vmatpush1.msra.mxu0 %v1706
  %1720 = vmatprep.subr.mxu0 0.0
  %1721 = vmatpush1.msra.mxu0 %v1707
  %1722 = vmatprep.subr.mxu0 0.0
  %1723 = vmatpush1.msra.mxu0 %v1708
  %1724 = vmatprep.subr.mxu0 0.0
  %1725 = vmatpush1.msra.mxu0 %v1709
  %1726 = vmatprep.subr.mxu0 0.0
  %1727 = vmatpush1.msra.mxu0 %v1710
  %1728 = vmatprep.subr.mxu0 0.0
  %1729 = vmatpush1.msra.mxu0 %v1711
  %1730 = vmatprep.subr.mxu0 0.0
  %1731 = vmatpush1.msra.mxu0 %v1712
  %1732 = vmatprep.subr.mxu0 0.0
  %1733 = vmatpush1.msra.mxu0 %v1713
  %1734 = vmatprep.subr.mxu0 0.0
  %1735 = vmatpush1.msra.mxu0 0.0
  %1736 = vmatprep.subr.mxu0 0.0
  %1737 = vmatpush1.msra.mxu0 0.0
  %1738 = vmatprep.subr.mxu0 0.0
  %1739 = vmatpush1.msra.mxu0 0.0
  %1740 = vmatprep.subr.mxu0 0.0
  %1741 = vmatpush1.msra.mxu0 0.0
  %1742 = vmatprep.subr.mxu0 0.0
  %1743 = vmatpush1.msra.mxu0 0.0
  %1744 = vmatprep.subr.mxu0 0.0
  %1745 = vmatpush1.msra.mxu0 0.0
  %1746 = vmatprep.subr.mxu0 0.0
  %1747 = vmatpush1.msra.mxu0 0.0
  %1748 = vmatprep.subr.mxu0 0.0
  %1749 = vmatpush1.msra.mxu0 0.0
  %1750 = vmatprep.subr.mxu0 0.0
  %1751 = vmatpush1.msra.mxu0 0.0
  %1752 = vmatprep.subr.mxu0 0.0
  %1753 = vmatpush1.msra.mxu0 0.0
  %1754 = vmatprep.subr.mxu0 0.0
  %1755 = vmatpush1.msra.mxu0 0.0
  %1756 = vmatprep.subr.mxu0 0.0
  %1757 = vmatpush1.msra.mxu0 0.0
  %1758 = vmatprep.subr.mxu0 0.0
  %1759 = vmatpush1.msra.mxu0 0.0
  %1760 = vmatprep.subr.mxu0 0.0
  %1761 = vmatpush1.msra.mxu0 0.0
  %1762 = vmatprep.subr.mxu0 0.0
  %1763 = vmatpush1.msra.mxu0 0.0
  %1764 = vmatprep.subr.mxu0 0.0
  %1765 = vmatpush1.msra.mxu0 0.0
  %1766 = vmatprep.subr.mxu0 0.0
  %1767 = vmatpush1.msra.mxu0 0.0
  %1768 = vmatprep.subr.mxu0 0.0
  %1769 = vmatpush1.msra.mxu0 0.0
  %1770 = vmatprep.subr.mxu0 0.0
  %1771 = vmatpush1.msra.mxu0 0.0
  %1772 = vmatprep.subr.mxu0 0.0
  %1773 = vmatpush1.msra.mxu0 0.0
  %1774 = vmatprep.subr.mxu0 0.0
  %1775 = vmatpush1.msra.mxu0 0.0
  %1776 = vmatprep.subr.mxu0 0.0
  %1777 = vmatpush1.msra.mxu0 0.0
  %1778 = vmatprep.subr.mxu0 0.0
  %1779 = vmatpush1.msra.mxu0 0.0
  %1780 = vmatprep.subr.mxu0 0.0
  %1781 = vmatpush1.msra.mxu0 0.0
  %1782 = vmatprep.mubr.f32.mxu0 0.0
  %1783 = vmatmul.mubr.f32.gmra.mrb[0].mxu0 %v1524
  %v1784 = vpop.f32.mrb[0].mxu0
  %v1785 = vadd.f32 %v1717, %v1784
  %v1786 = vpop.f32.mrb[0].mxu0
  %1787 = vmatprep.mubr.f32.mxu0 0.0
  %1788 = vmatmul.mubr.f32.gmra.mrb[0].mxu0 %v1527
  %v1789 = vpop.f32.mrb[0].mxu0
  %v1790 = vadd.f32 %v1717, %v1789
  %v1791 = vpop.f32.mrb[0].mxu0
  %1792 = vmatprep.mubr.f32.mxu0 0.0
  %1793 = vmatmul.mubr.f32.gmra.mrb[0].mxu0 %v1530
  %v1794 = vpop.f32.mrb[0].mxu0
  %v1795 = vadd.f32 %v1717, %v1794
  %v1796 = vpop.f32.mrb[0].mxu0
  %1797 = vdwg.mxu0
  %v1798 = vmul.f32 %v1692, %v550
  %v1799 = vmul.f32 %v1697, %v550
  %v1800 = vmul.f32 %v1702, %v550
  %v1801 = vmul.f32 %v1785, %v550
  %v1802 = vmul.f32 %v1790, %v550
  %v1803 = vmul.f32 %v1795, %v550
  %v1805 = vsel %vm145, %v1599, 0
  %v1808 = vsel %vm145, %v1604, 0
  %v1811 = vsel %vm145, %v1609, 0
  %v1814 = vsel %vm145, %v1798, 0
  %v1817 = vsel %vm145, %v1799, 0
  %v1820 = vsel %vm145, %v1800, 0
  %1822 = vmatprep.subr.mxu0 0.0
  %1823 = vmatpush1.xpose.msra.mxu0 %v1814
  %1824 = vmatprep.subr.mxu0 0.0
  %1825 = vmatpush1.xpose.msra.mxu0 %v1817
  %1826 = vmatprep.subr.mxu0 0.0
  %1827 = vmatpush1.xpose.msra.mxu0 %v1820
  %1828 = vmatprep.subr.mxu0 0.0
  %1829 = vmatpush1.xpose.msra.mxu0 0.0
  %1830 = vmatprep.subr.mxu0 0.0
  %1831 = vmatpush1.xpose.msra.mxu0 0.0
  %1832 = vmatprep.subr.mxu0 0.0
  %1833 = vmatpush1.xpose.msra.mxu0 0.0
  %1834 = vmatprep.subr.mxu0 0.0
  %1835 = vmatpush1.xpose.msra.mxu0 0.0
  %1836 = vmatprep.subr.mxu0 0.0
  %1837 = vmatpush1.xpose.msra.mxu0 0.0
  %1838 = vmatprep.subr.mxu0 0.0
  %1839 = vmatpush1.xpose.msra.mxu0 0.0
  %1840 = vmatprep.subr.mxu0 0.0
  %1841 = vmatpush1.xpose.msra.mxu0 0.0
  %1842 = vmatprep.subr.mxu0 0.0
  %1843 = vmatpush1.xpose.msra.mxu0 0.0
  %1844 = vmatprep.subr.mxu0 0.0
  %1845 = vmatpush1.xpose.msra.mxu0 0.0
  %1846 = vmatprep.subr.mxu0 0.0
  %1847 = vmatpush1.xpose.msra.mxu0 0.0
  %1848 = vmatprep.subr.mxu0 0.0
  %1849 = vmatpush1.xpose.msra.mxu0 0.0
  %1850 = vmatprep.subr.mxu0 0.0
  %1851 = vmatpush1.xpose.msra.mxu0 0.0
  %1852 = vmatprep.subr.mxu0 0.0
  %1853 = vmatpush1.xpose.msra.mxu0 0.0
  %1854 = vmatprep.subr.mxu0 0.0
  %1855 = vmatpush1.xpose.msra.mxu0 0.0
  %1856 = vmatprep.subr.mxu0 0.0
  %1857 = vmatpush1.xpose.msra.mxu0 0.0
  %1858 = vmatprep.subr.mxu0 0.0
  %1859 = vmatpush1.xpose.msra.mxu0 0.0
  %1860 = vmatprep.subr.mxu0 0.0
  %1861 = vmatpush1.xpose.msra.mxu0 0.0
  %1862 = vmatprep.subr.mxu0 0.0
  %1863 = vmatpush1.xpose.msra.mxu0 0.0
  %1864 = vmatprep.subr.mxu0 0.0
  %1865 = vmatpush1.xpose.msra.mxu0 0.0
  %1866 = vmatprep.subr.mxu0 0.0
  %1867 = vmatpush1.xpose.msra.mxu0 0.0
  %1868 = vmatprep.subr.mxu0 0.0
  %1869 = vmatpush1.xpose.msra.mxu0 0.0
  %1870 = vmatprep.subr.mxu0 0.0
  %1871 = vmatpush1.xpose.msra.mxu0 0.0
  %1872 = vmatprep.subr.mxu0 0.0
  %1873 = vmatpush1.xpose.msra.mxu0 0.0
  %1874 = vmatprep.subr.mxu0 0.0
  %1875 = vmatpush1.xpose.msra.mxu0 0.0
  %1876 = vmatprep.subr.mxu0 0.0
  %1877 = vmatpush1.xpose.msra.mxu0 0.0
  %1878 = vmatprep.subr.mxu0 0.0
  %1879 = vmatpush1.xpose.msra.mxu0 0.0
  %1880 = vmatprep.subr.mxu0 0.0
  %1881 = vmatpush1.xpose.msra.mxu0 0.0
  %1882 = vmatprep.subr.mxu0 0.0
  %1883 = vmatpush1.xpose.msra.mxu0 0.0
  %1884 = vmatprep.subr.mxu0 0.0
  %1885 = vmatpush1.xpose.msra.mxu0 0.0
  %1886 = vmatprep.mubr.f32.mxu0 0.0
  %1887 = vmatmul.mubr.f32.gmra.mrb[0].mxu0 %v1805
  %v1888 = vpop.f32.mrb[0].mxu0
  %v1889 = vadd.f32 %v201, %v1888
  %v1890 = vpop.f32.mrb[0].mxu0
  %1891 = vmatprep.mubr.f32.mxu0 0.0
  %1892 = vmatmul.mubr.f32.gmra.mrb[0].mxu0 %v1808
  %v1893 = vpop.f32.mrb[0].mxu0
  %v1894 = vadd.f32 %v202, %v1893
  %v1895 = vpop.f32.mrb[0].mxu0
  %1896 = vmatprep.mubr.f32.mxu0 0.0
  %1897 = vmatmul.mubr.f32.gmra.mrb[0].mxu0 %v1811
  %v1898 = vpop.f32.mrb[0].mxu0
  %v1899 = vadd.f32 %v203, %v1898
  %v1900 = vpop.f32.mrb[0].mxu0
  %1901 = vdwg.mxu0
  %v1902 = vsel %vm49, %v1889, -inf
  %1903 = vmax.xlane.f32.xlu0 %v1902
  %v1904 = vpop.xlane.xlu0 %1903
  %v1905 = vsel %vm49, %v1894, -inf
  %1906 = vmax.xlane.f32.xlu0 %v1905
  %v1907 = vpop.xlane.xlu0 %1906
  %v1908 = vsel %vm661, %v1899, -inf
  %1909 = vmax.xlane.f32.xlu0 %v1908
  %v1910 = vpop.xlane.xlu0 %1909
  %v1911 = vsub.f32 %v1889, %v1904
  %v1912 = vsub.f32 %v1894, %v1907
  %v1913 = vsub.f32 %v1899, %v1910
  %v1914 = vmul.f32 %v1911, 1.442695
  %v1915 = vpow.pop %v1914
  %v1916 = vmul.f32 %v1912, 1.442695
  %v1917 = vpow.pop %v1916
  %v1918 = vmul.f32 %v1913, 1.442695
  %v1919 = vpow.pop %v1918
  %v1920 = vsel %vm49, %v1915, 0.0
  %1921 = vadd.xlane.f32.xlu0 %v1920
  %v1922 = vpop.xlane.xlu0 %1921
  %v1923 = vsel %vm49, %v1917, 0.0
  %1924 = vadd.xlane.f32.xlu0 %v1923
  %v1925 = vpop.xlane.xlu0 %1924
  %v1926 = vsel %vm661, %v1919, 0.0
  %1927 = vadd.xlane.f32.xlu0 %v1926
  %v1928 = vpop.xlane.xlu0 %1927
  %v1929 = vrcp.pop %v1922
  %v1930 = vrcp.pop %v1925
  %v1931 = vrcp.pop %v1928
  %v1932 = vmul.f32 %v1915, %v1929
  %v1933 = vmul.f32 %v1917, %v1930
  %v1934 = vmul.f32 %v1919, %v1931
  %v1935 = vmul.f32 %v1692, %v693
  %v1936 = vmul.f32 %v1697, %v693
  %v1937 = vmul.f32 %v1702, %v693
  %v1938 = vmul.f32 %v1785, %v693
  %v1939 = vmul.f32 %v1790, %v693
  %v1940 = vmul.f32 %v1795, %v693
  %v1942 = vsel %vm145, %v1935, 0
  %v1945 = vsel %vm145, %v1936, 0
  %v1948 = vsel %vm145, %v1937, 0
  %1950 = vmatprep.subr.mxu0 0.0
  %1951 = vmatpush1.xpose.msra.mxu0 %v1942
  %1952 = vmatprep.subr.mxu0 0.0
  %1953 = vmatpush1.xpose.msra.mxu0 %v1945
  %1954 = vmatprep.subr.mxu0 0.0
  %1955 = vmatpush1.xpose.msra.mxu0 %v1948
  %1956 = vmatprep.subr.mxu0 0.0
  %1957 = vmatpush1.xpose.msra.mxu0 0.0
  %1958 = vmatprep.subr.mxu0 0.0
  %1959 = vmatpush1.xpose.msra.mxu0 0.0
  %1960 = vmatprep.subr.mxu0 0.0
  %1961 = vmatpush1.xpose.msra.mxu0 0.0
  %1962 = vmatprep.subr.mxu0 0.0
  %1963 = vmatpush1.xpose.msra.mxu0 0.0
  %1964 = vmatprep.subr.mxu0 0.0
  %1965 = vmatpush1.xpose.msra.mxu0 0.0
  %1966 = vmatprep.subr.mxu0 0.0
  %1967 = vmatpush1.xpose.msra.mxu0 0.0
  %1968 = vmatprep.subr.mxu0 0.0
  %1969 = vmatpush1.xpose.msra.mxu0 0.0
  %1970 = vmatprep.subr.mxu0 0.0
  %1971 = vmatpush1.xpose.msra.mxu0 0.0
  %1972 = vmatprep.subr.mxu0 0.0
  %1973 = vmatpush1.xpose.msra.mxu0 0.0
  %1974 = vmatprep.subr.mxu0 0.0
  %1975 = vmatpush1.xpose.msra.mxu0 0.0
  %1976 = vmatprep.subr.mxu0 0.0
  %1977 = vmatpush1.xpose.msra.mxu0 0.0
  %1978 = vmatprep.subr.mxu0 0.0
  %1979 = vmatpush1.xpose.msra.mxu0 0.0
  %1980 = vmatprep.subr.mxu0 0.0
  %1981 = vmatpush1.xpose.msra.mxu0 0.0
  %1982 = vmatprep.subr.mxu0 0.0
  %1983 = vmatpush1.xpose.msra.mxu0 0.0
  %1984 = vmatprep.subr.mxu0 0.0
  %1985 = vmatpush1.xpose.msra.mxu0 0.0
  %1986 = vmatprep.subr.mxu0 0.0
  %1987 = vmatpush1.xpose.msra.mxu0 0.0
  %1988 = vmatprep.subr.mxu0 0.0
  %1989 = vmatpush1.xpose.msra.mxu0 0.0
  %1990 = vmatprep.subr.mxu0 0.0
  %1991 = vmatpush1.xpose.msra.mxu0 0.0
  %1992 = vmatprep.subr.mxu0 0.0
  %1993 = vmatpush1.xpose.msra.mxu0 0.0
  %1994 = vmatprep.subr.mxu0 0.0
  %1995 = vmatpush1.xpose.msra.mxu0 0.0
  %1996 = vmatprep.subr.mxu0 0.0
  %1997 = vmatpush1.xpose.msra.mxu0 0.0
  %1998 = vmatprep.subr.mxu0 0.0
  %1999 = vmatpush1.xpose.msra.mxu0 0.0
  %2000 = vmatprep.subr.mxu0 0.0
  %2001 = vmatpush1.xpose.msra.mxu0 0.0
  %2002 = vmatprep.subr.mxu0 0.0
  %2003 = vmatpush1.xpose.msra.mxu0 0.0
  %2004 = vmatprep.subr.mxu0 0.0
  %2005 = vmatpush1.xpose.msra.mxu0 0.0
  %2006 = vmatprep.subr.mxu0 0.0
  %2007 = vmatpush1.xpose.msra.mxu0 0.0
  %2008 = vmatprep.subr.mxu0 0.0
  %2009 = vmatpush1.xpose.msra.mxu0 0.0
  %2010 = vmatprep.subr.mxu0 0.0
  %2011 = vmatpush1.xpose.msra.mxu0 0.0
  %2012 = vmatprep.subr.mxu0 0.0
  %2013 = vmatpush1.xpose.msra.mxu0 0.0
  %2014 = vmatprep.mubr.f32.mxu0 0.0
  %2015 = vmatmul.mubr.f32.gmra.mrb[0].mxu0 %v1805
  %v2016 = vpop.f32.mrb[0].mxu0
  %v2017 = vadd.f32 %v201, %v2016
  %v2018 = vpop.f32.mrb[0].mxu0
  %2019 = vmatprep.mubr.f32.mxu0 0.0
  %2020 = vmatmul.mubr.f32.gmra.mrb[0].mxu0 %v1808
  %v2021 = vpop.f32.mrb[0].mxu0
  %v2022 = vadd.f32 %v202, %v2021
  %v2023 = vpop.f32.mrb[0].mxu0
  %2024 = vmatprep.mubr.f32.mxu0 0.0
  %2025 = vmatmul.mubr.f32.gmra.mrb[0].mxu0 %v1811
  %v2026 = vpop.f32.mrb[0].mxu0
  %v2027 = vadd.f32 %v203, %v2026
  %v2028 = vpop.f32.mrb[0].mxu0
  %2029 = vdwg.mxu0
  %v2030 = vsel %vm49, %v2017, -inf
  %2031 = vmax.xlane.f32.xlu0 %v2030
  %v2032 = vpop.xlane.xlu0 %2031
  %v2033 = vsel %vm49, %v2022, -inf
  %2034 = vmax.xlane.f32.xlu0 %v2033
  %v2035 = vpop.xlane.xlu0 %2034
  %v2036 = vsel %vm661, %v2027, -inf
  %2037 = vmax.xlane.f32.xlu0 %v2036
  %v2038 = vpop.xlane.xlu0 %2037
  %v2039 = vsub.f32 %v2017, %v2032
  %v2040 = vsub.f32 %v2022, %v2035
  %v2041 = vsub.f32 %v2027, %v2038
  %v2042 = vmul.f32 %v2039, 1.442695
  %v2043 = vpow.pop %v2042
  %v2044 = vmul.f32 %v2040, 1.442695
  %v2045 = vpow.pop %v2044
  %v2046 = vmul.f32 %v2041, 1.442695
  %v2047 = vpow.pop %v2046
  %v2048 = vsel %vm49, %v2043, 0.0
  %2049 = vadd.xlane.f32.xlu0 %v2048
  %v2050 = vpop.xlane.xlu0 %2049
  %v2051 = vsel %vm49, %v2045, 0.0
  %2052 = vadd.xlane.f32.xlu0 %v2051
  %v2053 = vpop.xlane.xlu0 %2052
  %v2054 = vsel %vm661, %v2047, 0.0
  %2055 = vadd.xlane.f32.xlu0 %v2054
  %v2056 = vpop.xlane.xlu0 %2055
  %v2057 = vrcp.pop %v2050
  %v2058 = vrcp.pop %v2053
  %v2059 = vrcp.pop %v2056
  %v2060 = vmul.f32 %v2043, %v2057
  %v2061 = vmul.f32 %v2045, %v2058
  %v2062 = vmul.f32 %v2047, %v2059
  %v2064 = vsel %vm49, %v2060, 0
  %v2067 = vsel %vm49, %v2061, 0
  %v2070 = vsel %vm49, %v2062, 0
  %v2073 = vsel %vm53, %v1940, 0
  %2075 = vmatprep.subr.mxu0 0.0
  %2076 = vmatpush1.msra.mxu0 %v1938
  %2077 = vmatprep.subr.mxu0 0.0
  %2078 = vmatpush1.msra.mxu0 %v1939
  %2079 = vmatprep.subr.mxu0 0.0
  %2080 = vmatpush1.msra.mxu0 %v2073
  %2081 = vmatprep.subr.mxu0 0.0
  %2082 = vmatpush1.msra.mxu0 0.0
  %2083 = vmatprep.subr.mxu0 0.0
  %2084 = vmatpush1.msra.mxu0 0.0
  %2085 = vmatprep.subr.mxu0 0.0
  %2086 = vmatpush1.msra.mxu0 0.0
  %2087 = vmatprep.subr.mxu0 0.0
  %2088 = vmatpush1.msra.mxu0 0.0
  %2089 = vmatprep.subr.mxu0 0.0
  %2090 = vmatpush1.msra.mxu0 0.0
  %2091 = vmatprep.subr.mxu0 0.0
  %2092 = vmatpush1.msra.mxu0 0.0
  %2093 = vmatprep.subr.mxu0 0.0
  %2094 = vmatpush1.msra.mxu0 0.0
  %2095 = vmatprep.subr.mxu0 0.0
  %2096 = vmatpush1.msra.mxu0 0.0
  %2097 = vmatprep.subr.mxu0 0.0
  %2098 = vmatpush1.msra.mxu0 0.0
  %2099 = vmatprep.subr.mxu0 0.0
  %2100 = vmatpush1.msra.mxu0 0.0
  %2101 = vmatprep.subr.mxu0 0.0
  %2102 = vmatpush1.msra.mxu0 0.0
  %2103 = vmatprep.subr.mxu0 0.0
  %2104 = vmatpush1.msra.mxu0 0.0
  %2105 = vmatprep.subr.mxu0 0.0
  %2106 = vmatpush1.msra.mxu0 0.0
  %2107 = vmatprep.subr.mxu0 0.0
  %2108 = vmatpush1.msra.mxu0 0.0
  %2109 = vmatprep.subr.mxu0 0.0
  %2110 = vmatpush1.msra.mxu0 0.0
  %2111 = vmatprep.subr.mxu0 0.0
  %2112 = vmatpush1.msra.mxu0 0.0
  %2113 = vmatprep.subr.mxu0 0.0
  %2114 = vmatpush1.msra.mxu0 0.0
  %2115 = vmatprep.subr.mxu0 0.0
  %2116 = vmatpush1.msra.mxu0 0.0
  %2117 = vmatprep.subr.mxu0 0.0
  %2118 = vmatpush1.msra.mxu0 0.0
  %2119 = vmatprep.subr.mxu0 0.0
  %2120 = vmatpush1.msra.mxu0 0.0
  %2121 = vmatprep.subr.mxu0 0.0
  %2122 = vmatpush1.msra.mxu0 0.0
  %2123 = vmatprep.subr.mxu0 0.0
  %2124 = vmatpush1.msra.mxu0 0.0
  %2125 = vmatprep.subr.mxu0 0.0
  %2126 = vmatpush1.msra.mxu0 0.0
  %2127 = vmatprep.subr.mxu0 0.0
  %2128 = vmatpush1.msra.mxu0 0.0
  %2129 = vmatprep.subr.mxu0 0.0
  %2130 = vmatpush1.msra.mxu0 0.0
  %2131 = vmatprep.subr.mxu0 0.0
  %2132 = vmatpush1.msra.mxu0 0.0
  %2133 = vmatprep.subr.mxu0 0.0
  %2134 = vmatpush1.msra.mxu0 0.0
  %2135 = vmatprep.subr.mxu0 0.0
  %2136 = vmatpush1.msra.mxu0 0.0
  %2137 = vmatprep.subr.mxu0 0.0
  %2138 = vmatpush1.msra.mxu0 0.0
  %2139 = vmatprep.mubr.f32.mxu0 0.0
  %2140 = vmatmul.mubr.f32.gmra.mrb[0].mxu0 %v2064
  %v2141 = vpop.f32.mrb[0].mxu0
  %v2142 = vadd.f32 0.0, %v2141
  %v2143 = vpop.f32.mrb[0].mxu0
  %2144 = vmatprep.mubr.f32.mxu0 0.0
  %2145 = vmatmul.mubr.f32.gmra.mrb[0].mxu0 %v2067
  %v2146 = vpop.f32.mrb[0].mxu0
  %v2147 = vadd.f32 0.0, %v2146
  %v2148 = vpop.f32.mrb[0].mxu0
  %2149 = vmatprep.mubr.f32.mxu0 0.0
  %2150 = vmatmul.mubr.f32.gmra.mrb[0].mxu0 %v2070
  %v2151 = vpop.f32.mrb[0].mxu0
  %v2152 = vadd.f32 0.0, %v2151
  %v2153 = vpop.f32.mrb[0].mxu0
  %2154 = vdwg.mxu0
  %v2156 = vsel %vm49, %v1932, 0
  %v2159 = vsel %vm49, %v1933, 0
  %v2162 = vsel %vm49, %v1934, 0
  %v2165 = vsel %vm53, %v1803, 0
  %2167 = vmatprep.subr.mxu0 0.0
  %2168 = vmatpush1.msra.mxu0 %v1801
  %2169 = vmatprep.subr.mxu0 0.0
  %2170 = vmatpush1.msra.mxu0 %v1802
  %2171 = vmatprep.subr.mxu0 0.0
  %2172 = vmatpush1.msra.mxu0 %v2165
  %2173 = vmatprep.subr.mxu0 0.0
  %2174 = vmatpush1.msra.mxu0 0.0
  %2175 = vmatprep.subr.mxu0 0.0
  %2176 = vmatpush1.msra.mxu0 0.0
  %2177 = vmatprep.subr.mxu0 0.0
  %2178 = vmatpush1.msra.mxu0 0.0
  %2179 = vmatprep.subr.mxu0 0.0
  %2180 = vmatpush1.msra.mxu0 0.0
  %2181 = vmatprep.subr.mxu0 0.0
  %2182 = vmatpush1.msra.mxu0 0.0
  %2183 = vmatprep.subr.mxu0 0.0
  %2184 = vmatpush1.msra.mxu0 0.0
  %2185 = vmatprep.subr.mxu0 0.0
  %2186 = vmatpush1.msra.mxu0 0.0
  %2187 = vmatprep.subr.mxu0 0.0
  %2188 = vmatpush1.msra.mxu0 0.0
  %2189 = vmatprep.subr.mxu0 0.0
  %2190 = vmatpush1.msra.mxu0 0.0
  %2191 = vmatprep.subr.mxu0 0.0
  %2192 = vmatpush1.msra.mxu0 0.0
  %2193 = vmatprep.subr.mxu0 0.0
  %2194 = vmatpush1.msra.mxu0 0.0
  %2195 = vmatprep.subr.mxu0 0.0
  %2196 = vmatpush1.msra.mxu0 0.0
  %2197 = vmatprep.subr.mxu0 0.0
  %2198 = vmatpush1.msra.mxu0 0.0
  %2199 = vmatprep.subr.mxu0 0.0
  %2200 = vmatpush1.msra.mxu0 0.0
  %2201 = vmatprep.subr.mxu0 0.0
  %2202 = vmatpush1.msra.mxu0 0.0
  %2203 = vmatprep.subr.mxu0 0.0
  %2204 = vmatpush1.msra.mxu0 0.0
  %2205 = vmatprep.subr.mxu0 0.0
  %2206 = vmatpush1.msra.mxu0 0.0
  %2207 = vmatprep.subr.mxu0 0.0
  %2208 = vmatpush1.msra.mxu0 0.0
  %2209 = vmatprep.subr.mxu0 0.0
  %2210 = vmatpush1.msra.mxu0 0.0
  %2211 = vmatprep.subr.mxu0 0.0
  %2212 = vmatpush1.msra.mxu0 0.0
  %2213 = vmatprep.subr.mxu0 0.0
  %2214 = vmatpush1.msra.mxu0 0.0
  %2215 = vmatprep.subr.mxu0 0.0
  %2216 = vmatpush1.msra.mxu0 0.0
  %2217 = vmatprep.subr.mxu0 0.0
  %2218 = vmatpush1.msra.mxu0 0.0
  %2219 = vmatprep.subr.mxu0 0.0
  %2220 = vmatpush1.msra.mxu0 0.0
  %2221 = vmatprep.subr.mxu0 0.0
  %2222 = vmatpush1.msra.mxu0 0.0
  %2223 = vmatprep.subr.mxu0 0.0
  %2224 = vmatpush1.msra.mxu0 0.0
  %2225 = vmatprep.subr.mxu0 0.0
  %2226 = vmatpush1.msra.mxu0 0.0
  %2227 = vmatprep.subr.mxu0 0.0
  %2228 = vmatpush1.msra.mxu0 0.0
  %2229 = vmatprep.subr.mxu0 0.0
  %2230 = vmatpush1.msra.mxu0 0.0
  %2231 = vmatprep.mubr.f32.mxu0 0.0
  %2232 = vmatmul.mubr.f32.gmra.mrb[0].mxu0 %v2156
  %v2233 = vpop.f32.mrb[0].mxu0
  %v2234 = vadd.f32 %v2142, %v2233
  %v2235 = vpop.f32.mrb[0].mxu0
  %2236 = vmatprep.mubr.f32.mxu0 0.0
  %2237 = vmatmul.mubr.f32.gmra.mrb[0].mxu0 %v2159
  %v2238 = vpop.f32.mrb[0].mxu0
  %v2239 = vadd.f32 %v2147, %v2238
  %v2240 = vpop.f32.mrb[0].mxu0
  %2241 = vmatprep.mubr.f32.mxu0 0.0
  %2242 = vmatmul.mubr.f32.gmra.mrb[0].mxu0 %v2162
  %v2243 = vpop.f32.mrb[0].mxu0
  %v2244 = vadd.f32 %v2152, %v2243
  %v2245 = vpop.f32.mrb[0].mxu0
  %2246 = vdwg.mxu0
  %s2247 = scalar_lea.vmem %s5, 448
  %v2248 = vld [vmem:[%s2247] sm:$0xff]
  %v2249 = vld [vmem:[%s2247 + $0x8] sm:$0xff]
  %v2250 = vld [vmem:[%s2247 + $0x10] sm:$0xff]
  %v2251 = vld [vmem:[%s2247 + $0x18] sm:$0xff]
  %v2252 = vld [vmem:[%s2247 + $0x20] sm:$0xff]
  %v2253 = vld [vmem:[%s2247 + $0x28] sm:$0xff]
  %v2254 = vld [vmem:[%s2247 + $0x30] sm:$0xff]
  %v2255 = vld [vmem:[%s2247 + $0x38] sm:$0xff]
  %v2256 = vlaneseq
  %v2257 = vshrl.u32 %v2256, 7
  %v2258 = vsub.s32 4, %v2257
  %v2259 = vrot.slane %v40, %v2258
  %v2261 = vsel %vm145, %v2234, 0
  %v2264 = vsel %vm145, %v2239, 0
  %v2267 = vsel %vm145, %v2244, 0
  %2269 = vmatprep.subr.mxu0 0.0
  %2270 = vmatpush1.msra.mxu0 %v2248
  %2271 = vmatprep.subr.mxu0 0.0
  %2272 = vmatpush1.msra.mxu0 %v2249
  %2273 = vmatprep.subr.mxu0 0.0
  %2274 = vmatpush1.msra.mxu0 %v2250
  %2275 = vmatprep.subr.mxu0 0.0
  %2276 = vmatpush1.msra.mxu0 %v2251
  %2277 = vmatprep.subr.mxu0 0.0
  %2278 = vmatpush1.msra.mxu0 %v2252
  %2279 = vmatprep.subr.mxu0 0.0
  %2280 = vmatpush1.msra.mxu0 %v2253
  %2281 = vmatprep.subr.mxu0 0.0
  %2282 = vmatpush1.msra.mxu0 %v2254
  %2283 = vmatprep.subr.mxu0 0.0
  %2284 = vmatpush1.msra.mxu0 %v2255
  %2285 = vmatprep.subr.mxu0 0.0
  %2286 = vmatpush1.msra.mxu0 0.0
  %2287 = vmatprep.subr.mxu0 0.0
  %2288 = vmatpush1.msra.mxu0 0.0
  %2289 = vmatprep.subr.mxu0 0.0
  %2290 = vmatpush1.msra.mxu0 0.0
  %2291 = vmatprep.subr.mxu0 0.0
  %2292 = vmatpush1.msra.mxu0 0.0
  %2293 = vmatprep.subr.mxu0 0.0
  %2294 = vmatpush1.msra.mxu0 0.0
  %2295 = vmatprep.subr.mxu0 0.0
  %2296 = vmatpush1.msra.mxu0 0.0
  %2297 = vmatprep.subr.mxu0 0.0
  %2298 = vmatpush1.msra.mxu0 0.0
  %2299 = vmatprep.subr.mxu0 0.0
  %2300 = vmatpush1.msra.mxu0 0.0
  %2301 = vmatprep.subr.mxu0 0.0
  %2302 = vmatpush1.msra.mxu0 0.0
  %2303 = vmatprep.subr.mxu0 0.0
  %2304 = vmatpush1.msra.mxu0 0.0
  %2305 = vmatprep.subr.mxu0 0.0
  %2306 = vmatpush1.msra.mxu0 0.0
  %2307 = vmatprep.subr.mxu0 0.0
  %2308 = vmatpush1.msra.mxu0 0.0
  %2309 = vmatprep.subr.mxu0 0.0
  %2310 = vmatpush1.msra.mxu0 0.0
  %2311 = vmatprep.subr.mxu0 0.0
  %2312 = vmatpush1.msra.mxu0 0.0
  %2313 = vmatprep.subr.mxu0 0.0
  %2314 = vmatpush1.msra.mxu0 0.0
  %2315 = vmatprep.subr.mxu0 0.0
  %2316 = vmatpush1.msra.mxu0 0.0
  %2317 = vmatprep.subr.mxu0 0.0
  %2318 = vmatpush1.msra.mxu0 0.0
  %2319 = vmatprep.subr.mxu0 0.0
  %2320 = vmatpush1.msra.mxu0 0.0
  %2321 = vmatprep.subr.mxu0 0.0
  %2322 = vmatpush1.msra.mxu0 0.0
  %2323 = vmatprep.subr.mxu0 0.0
  %2324 = vmatpush1.msra.mxu0 0.0
  %2325 = vmatprep.subr.mxu0 0.0
  %2326 = vmatpush1.msra.mxu0 0.0
  %2327 = vmatprep.subr.mxu0 0.0
  %2328 = vmatpush1.msra.mxu0 0.0
  %2329 = vmatprep.subr.mxu0 0.0
  %2330 = vmatpush1.msra.mxu0 0.0
  %2331 = vmatprep.subr.mxu0 0.0
  %2332 = vmatpush1.msra.mxu0 0.0
  %2333 = vmatprep.mubr.f32.mxu0 0.0
  %2334 = vmatmul.mubr.f32.gmra.mrb[0].mxu0 %v2261
  %v2335 = vpop.f32.mrb[0].mxu0
  %v2336 = vadd.f32 %v2259, %v2335
  %v2337 = vpop.f32.mrb[0].mxu0
  %2338 = vmatprep.mubr.f32.mxu0 0.0
  %2339 = vmatmul.mubr.f32.gmra.mrb[0].mxu0 %v2264
  %v2340 = vpop.f32.mrb[0].mxu0
  %v2341 = vadd.f32 %v2259, %v2340
  %v2342 = vpop.f32.mrb[0].mxu0
  %2343 = vmatprep.mubr.f32.mxu0 0.0
  %2344 = vmatmul.mubr.f32.gmra.mrb[0].mxu0 %v2267
  %v2345 = vpop.f32.mrb[0].mxu0
  %v2346 = vadd.f32 %v2259, %v2345
  %v2347 = vpop.f32.mrb[0].mxu0
  %2348 = vdwg.mxu0
  %v2349 = vadd.f32 %v1454, %v2336
  %v2350 = vadd.f32 %v1455, %v2341
  %v2351 = vadd.f32 %v1456, %v2346
  %v2352 = vsel %vm145, %v2349, 0.0
  %2353 = vadd.xlane.f32.xlu0 %v2352
  %v2354 = vpop.xlane.xlu0 %2353
  %v2355 = vsel %vm145, %v2350, 0.0
  %2356 = vadd.xlane.f32.xlu0 %v2355
  %v2357 = vpop.xlane.xlu0 %2356
  %v2358 = vsel %vm152, %v2351, 0.0
  %2359 = vadd.xlane.f32.xlu0 %v2358
  %v2360 = vpop.xlane.xlu0 %2359
  %v2361 = vmul.f32 %v2354, %v156
  %v2362 = vmul.f32 %v2357, %v156
  %v2363 = vmul.f32 %v2360, %v156
  %v2364 = vsub.f32 %v2349, %v2361
  %v2365 = vsub.f32 %v2350, %v2362
  %v2366 = vsub.f32 %v2351, %v2363
  %v2367 = vmul.f32 %v2364, %v2364
  %v2368 = vmul.f32 %v2365, %v2365
  %v2369 = vmul.f32 %v2366, %v2366
  %v2370 = vsel %vm145, %v2367, 0.0
  %2371 = vadd.xlane.f32.xlu0 %v2370
  %v2372 = vpop.xlane.xlu0 %2371
  %v2373 = vsel %vm145, %v2368, 0.0
  %2374 = vadd.xlane.f32.xlu0 %v2373
  %v2375 = vpop.xlane.xlu0 %2374
  %v2376 = vsel %vm152, %v2369, 0.0
  %2377 = vadd.xlane.f32.xlu0 %v2376
  %v2378 = vpop.xlane.xlu0 %2377
  %v2379 = vmul.f32 %v2372, %v156
  %v2380 = vmul.f32 %v2375, %v156
  %v2381 = vmul.f32 %v2378, %v156
  %v2382 = vadd.f32 %v2379, 1e-05
  %v2383 = vadd.f32 %v2380, 1e-05
  %v2384 = vadd.f32 %v2381, 1e-05
  %v2385 = vrsqrt.pop %v2382
  %v2386 = vrsqrt.pop %v2383
  %v2387 = vrsqrt.pop %v2384
  %v2388 = vmul.f32 %v2364, %v2385
  %v2389 = vmul.f32 %v2365, %v2386
  %v2390 = vmul.f32 %v2366, %v2387
  %v2391 = vlaneseq
  %v2392 = vshrl.u32 %v2391, 7
  %v2393 = vsub.s32 5, %v2392
  %v2394 = vrot.slane %v40, %v2393
  %v2395 = vmul.f32 %v2388, %v2394
  %v2396 = vmul.f32 %v2389, %v2394
  %v2397 = vmul.f32 %v2390, %v2394
  %v2398 = vlaneseq
  %v2399 = vshrl.u32 %v2398, 7
  %v2400 = vsub.s32 6, %v2399
  %v2401 = vrot.slane %v40, %v2400
  %v2402 = vadd.f32 %v2395, %v2401
  %v2403 = vadd.f32 %v2396, %v2401
  %v2404 = vadd.f32 %v2397, %v2401
  %s2405 = scalar_lea.vmem %s6, 128
  %v2406 = vld [vmem:[%s2405] sm:$0xff]
  %v2407 = vld [vmem:[%s2405 + $0x8] sm:$0xff]
  %v2408 = vld [vmem:[%s2405 + $0x10] sm:$0xff]
  %v2409 = vld [vmem:[%s2405 + $0x18] sm:$0xff]
  %v2410 = vld [vmem:[%s2405 + $0x20] sm:$0xff]
  %v2411 = vld [vmem:[%s2405 + $0x28] sm:$0xff]
  %v2412 = vld [vmem:[%s2405 + $0x30] sm:$0xff]
  %v2413 = vld [vmem:[%s2405 + $0x38] sm:$0xff]
  %v2414 = vld [vmem:[%s2405 + $0x40] sm:$0xff]
  %v2415 = vld [vmem:[%s2405 + $0x48] sm:$0xff]
  %v2416 = vld [vmem:[%s2405 + $0x50] sm:$0xff]
  %v2417 = vld [vmem:[%s2405 + $0x58] sm:$0xff]
  %v2418 = vld [vmem:[%s2405 + $0x60] sm:$0xff]
  %v2419 = vld [vmem:[%s2405 + $0x68] sm:$0xff]
  %v2420 = vld [vmem:[%s2405 + $0x70] sm:$0xff]
  %v2421 = vld [vmem:[%s2405 + $0x78] sm:$0xff]
  %s2422 = scalar_lea.vmem %s8, 2
  %v2423 = vld [vmem:[%s2422] sm:$0x3]
  %v2425 = vlaneseq
  %v2426 = vshrl.u32 %v2425, 7
  %v2427 = vsub.s32 0, %v2426
  %v2428 = vrot.slane %v2423, %v2427
  %v2429 = vlaneseq
  %v2430 = vshrl.u32 %v2429, 7
  %v2431 = vsub.s32 1, %v2430
  %v2432 = vrot.slane %v2423, %v2431
  %v2436 = vsel %vm145, %v2402, 0
  %v2439 = vsel %vm145, %v2403, 0
  %v2442 = vsel %vm145, %v2404, 0
  %2444 = vmatprep.subr.mxu0 %v2407
  %2445 = vmatpush1.msra.mxu0 %v2406
  %2446 = vmatprep.subr.mxu0 %v2409
  %2447 = vmatpush1.msra.mxu0 %v2408
  %2448 = vmatprep.subr.mxu0 %v2411
  %2449 = vmatpush1.msra.mxu0 %v2410
  %2450 = vmatprep.subr.mxu0 %v2413
  %2451 = vmatpush1.msra.mxu0 %v2412
  %2452 = vmatprep.subr.mxu0 %v2415
  %2453 = vmatpush1.msra.mxu0 %v2414
  %2454 = vmatprep.subr.mxu0 %v2417
  %2455 = vmatpush1.msra.mxu0 %v2416
  %2456 = vmatprep.subr.mxu0 %v2419
  %2457 = vmatpush1.msra.mxu0 %v2418
  %2458 = vmatprep.subr.mxu0 %v2421
  %2459 = vmatpush1.msra.mxu0 %v2420
  %2460 = vmatprep.subr.mxu0 0.0
  %2461 = vmatpush1.msra.mxu0 0.0
  %2462 = vmatprep.subr.mxu0 0.0
  %2463 = vmatpush1.msra.mxu0 0.0
  %2464 = vmatprep.subr.mxu0 0.0
  %2465 = vmatpush1.msra.mxu0 0.0
  %2466 = vmatprep.subr.mxu0 0.0
  %2467 = vmatpush1.msra.mxu0 0.0
  %2468 = vmatprep.subr.mxu0 0.0
  %2469 = vmatpush1.msra.mxu0 0.0
  %2470 = vmatprep.subr.mxu0 0.0
  %2471 = vmatpush1.msra.mxu0 0.0
  %2472 = vmatprep.subr.mxu0 0.0
  %2473 = vmatpush1.msra.mxu0 0.0
  %2474 = vmatprep.subr.mxu0 0.0
  %2475 = vmatpush1.msra.mxu0 0.0
  %2476 = vmatprep.subr.mxu0 0.0
  %2477 = vmatpush1.msra.mxu0 0.0
  %2478 = vmatprep.subr.mxu0 0.0
  %2479 = vmatpush1.msra.mxu0 0.0
  %2480 = vmatprep.subr.mxu0 0.0
  %2481 = vmatpush1.msra.mxu0 0.0
  %2482 = vmatprep.subr.mxu0 0.0
  %2483 = vmatpush1.msra.mxu0 0.0
  %2484 = vmatprep.subr.mxu0 0.0
  %2485 = vmatpush1.msra.mxu0 0.0
  %2486 = vmatprep.subr.mxu0 0.0
  %2487 = vmatpush1.msra.mxu0 0.0
  %2488 = vmatprep.subr.mxu0 0.0
  %2489 = vmatpush1.msra.mxu0 0.0
  %2490 = vmatprep.subr.mxu0 0.0
  %2491 = vmatpush1.msra.mxu0 0.0
  %2492 = vmatprep.subr.mxu0 0.0
  %2493 = vmatpush1.msra.mxu0 0.0
  %2494 = vmatprep.subr.mxu0 0.0
  %2495 = vmatpush1.msra.mxu0 0.0
  %2496 = vmatprep.subr.mxu0 0.0
  %2497 = vmatpush1.msra.mxu0 0.0
  %2498 = vmatprep.subr.mxu0 0.0
  %2499 = vmatpush1.msra.mxu0 0.0
  %2500 = vmatprep.subr.mxu0 0.0
  %2501 = vmatpush1.msra.mxu0 0.0
  %2502 = vmatprep.subr.mxu0 0.0
  %2503 = vmatpush1.msra.mxu0 0.0
  %2504 = vmatprep.subr.mxu0 0.0
  %2505 = vmatpush1.msra.mxu0 0.0
  %2506 = vmatprep.subr.mxu0 0.0
  %2507 = vmatpush1.msra.mxu0 0.0
  %2508 = vmatprep.mubr.f32.mxu0 0.0
  %2509 = vmatmul.mubr.f32.gmra.mrb[0].mxu0 %v2436
  %v2510 = vpop.f32.mrb[0].mxu0
  %v2511 = vadd.f32 %v2428, %v2510
  %v2512 = vpop.f32.mrb[0].mxu0
  %v2513 = vadd.f32 %v2432, %v2512
  %2514 = vmatprep.mubr.f32.mxu0 0.0
  %2515 = vmatmul.mubr.f32.gmra.mrb[0].mxu0 %v2439
  %v2516 = vpop.f32.mrb[0].mxu0
  %v2517 = vadd.f32 %v2428, %v2516
  %v2518 = vpop.f32.mrb[0].mxu0
  %v2519 = vadd.f32 %v2432, %v2518
  %2520 = vmatprep.mubr.f32.mxu0 0.0
  %2521 = vmatmul.mubr.f32.gmra.mrb[0].mxu0 %v2442
  %v2522 = vpop.f32.mrb[0].mxu0
  %v2523 = vadd.f32 %v2428, %v2522
  %v2524 = vpop.f32.mrb[0].mxu0
  %v2525 = vadd.f32 %v2432, %v2524
  %2526 = vdwg.mxu0
  %v2527 = vmul.f32 %v2511, 0.5
  %v2528 = vmul.f32 %v2513, 0.5
  %v2529 = vmul.f32 %v2517, 0.5
  %v2530 = vmul.f32 %v2519, 0.5
  %v2531 = vmul.f32 %v2523, 0.5
  %v2532 = vmul.f32 %v2525, 0.5
  %v2533 = vmul.f32 %v2511, 0.044715
  %v2534 = vmul.f32 %v2513, 0.044715
  %v2535 = vmul.f32 %v2517, 0.044715
  %v2536 = vmul.f32 %v2519, 0.044715
  %v2537 = vmul.f32 %v2523, 0.044715
  %v2538 = vmul.f32 %v2525, 0.044715
  %v2539 = vmul.f32 %v2533, %v2511
  %v2540 = vmul.f32 %v2534, %v2513
  %v2541 = vmul.f32 %v2535, %v2517
  %v2542 = vmul.f32 %v2536, %v2519
  %v2543 = vmul.f32 %v2537, %v2523
  %v2544 = vmul.f32 %v2538, %v2525
  %v2545 = vmul.f32 %v2539, %v2511
  %v2546 = vmul.f32 %v2540, %v2513
  %v2547 = vmul.f32 %v2541, %v2517
  %v2548 = vmul.f32 %v2542, %v2519
  %v2549 = vmul.f32 %v2543, %v2523
  %v2550 = vmul.f32 %v2544, %v2525
  %v2551 = vadd.f32 %v2511, %v2545
  %v2552 = vadd.f32 %v2513, %v2546
  %v2553 = vadd.f32 %v2517, %v2547
  %v2554 = vadd.f32 %v2519, %v2548
  %v2555 = vadd.f32 %v2523, %v2549
  %v2556 = vadd.f32 %v2525, %v2550
  %v2557 = vmul.f32 %v2551, 0.7978846
  %v2558 = vmul.f32 %v2552, 0.7978846
  %v2559 = vmul.f32 %v2553, 0.7978846
  %v2560 = vmul.f32 %v2554, 0.7978846
  %v2561 = vmul.f32 %v2555, 0.7978846
  %v2562 = vmul.f32 %v2556, 0.7978846
  %v2563 = vtanh.pop %v2557
  %v2564 = vtanh.pop %v2558
  %v2565 = vtanh.pop %v2559
  %v2566 = vtanh.pop %v2560
  %v2567 = vtanh.pop %v2561
  %v2568 = vtanh.pop %v2562
  %v2569 = vadd.f32 %v2563, 1.0
  %v2570 = vadd.f32 %v2564, 1.0
  %v2571 = vadd.f32 %v2565, 1.0
  %v2572 = vadd.f32 %v2566, 1.0
  %v2573 = vadd.f32 %v2567, 1.0
  %v2574 = vadd.f32 %v2568, 1.0
  %v2575 = vmul.f32 %v2527, %v2569
  %v2576 = vmul.f32 %v2528, %v2570
  %v2577 = vmul.f32 %v2529, %v2571
  %v2578 = vmul.f32 %v2530, %v2572
  %v2579 = vmul.f32 %v2531, %v2573
  %v2580 = vmul.f32 %v2532, %v2574
  %s2581 = scalar_lea.vmem %s7, 256
  %v2582 = vld [vmem:[%s2581] sm:$0xff]
  %v2583 = vld [vmem:[%s2581 + $0x8] sm:$0xff]
  %v2584 = vld [vmem:[%s2581 + $0x10] sm:$0xff]
  %v2585 = vld [vmem:[%s2581 + $0x18] sm:$0xff]
  %v2586 = vld [vmem:[%s2581 + $0x20] sm:$0xff]
  %v2587 = vld [vmem:[%s2581 + $0x28] sm:$0xff]
  %v2588 = vld [vmem:[%s2581 + $0x30] sm:$0xff]
  %v2589 = vld [vmem:[%s2581 + $0x38] sm:$0xff]
  %v2590 = vld [vmem:[%s2581 + $0x40] sm:$0xff]
  %v2591 = vld [vmem:[%s2581 + $0x48] sm:$0xff]
  %v2592 = vld [vmem:[%s2581 + $0x50] sm:$0xff]
  %v2593 = vld [vmem:[%s2581 + $0x58] sm:$0xff]
  %v2594 = vld [vmem:[%s2581 + $0x60] sm:$0xff]
  %v2595 = vld [vmem:[%s2581 + $0x68] sm:$0xff]
  %v2596 = vld [vmem:[%s2581 + $0x70] sm:$0xff]
  %v2597 = vld [vmem:[%s2581 + $0x78] sm:$0xff]
  %v2598 = vld [vmem:[%s2581 + $0x80] sm:$0xff]
  %v2599 = vld [vmem:[%s2581 + $0x88] sm:$0xff]
  %v2600 = vld [vmem:[%s2581 + $0x90] sm:$0xff]
  %v2601 = vld [vmem:[%s2581 + $0x98] sm:$0xff]
  %v2602 = vld [vmem:[%s2581 + $0xa0] sm:$0xff]
  %v2603 = vld [vmem:[%s2581 + $0xa8] sm:$0xff]
  %v2604 = vld [vmem:[%s2581 + $0xb0] sm:$0xff]
  %v2605 = vld [vmem:[%s2581 + $0xb8] sm:$0xff]
  %v2606 = vld [vmem:[%s2581 + $0xc0] sm:$0xff]
  %v2607 = vld [vmem:[%s2581 + $0xc8] sm:$0xff]
  %v2608 = vld [vmem:[%s2581 + $0xd0] sm:$0xff]
  %v2609 = vld [vmem:[%s2581 + $0xd8] sm:$0xff]
  %v2610 = vld [vmem:[%s2581 + $0xe0] sm:$0xff]
  %v2611 = vld [vmem:[%s2581 + $0xe8] sm:$0xff]
  %v2612 = vld [vmem:[%s2581 + $0xf0] sm:$0xff]
  %v2613 = vld [vmem:[%s2581 + $0xf8] sm:$0xff]
  %v2614 = vlaneseq
  %v2615 = vshrl.u32 %v2614, 7
  %v2616 = vsub.s32 7, %v2615
  %v2617 = vrot.slane %v40, %v2616
  %2618 = vmatprep.subr.mxu0 0.0
  %2619 = vmatpush1.msra.mxu0 %v2582
  %2620 = vmatprep.subr.mxu0 0.0
  %2621 = vmatpush1.msra.mxu0 %v2583
  %2622 = vmatprep.subr.mxu0 0.0
  %2623 = vmatpush1.msra.mxu0 %v2584
  %2624 = vmatprep.subr.mxu0 0.0
  %2625 = vmatpush1.msra.mxu0 %v2585
  %2626 = vmatprep.subr.mxu0 0.0
  %2627 = vmatpush1.msra.mxu0 %v2586
  %2628 = vmatprep.subr.mxu0 0.0
  %2629 = vmatpush1.msra.mxu0 %v2587
  %2630 = vmatprep.subr.mxu0 0.0
  %2631 = vmatpush1.msra.mxu0 %v2588
  %2632 = vmatprep.subr.mxu0 0.0
  %2633 = vmatpush1.msra.mxu0 %v2589
  %2634 = vmatprep.subr.mxu0 0.0
  %2635 = vmatpush1.msra.mxu0 %v2590
  %2636 = vmatprep.subr.mxu0 0.0
  %2637 = vmatpush1.msra.mxu0 %v2591
  %2638 = vmatprep.subr.mxu0 0.0
  %2639 = vmatpush1.msra.mxu0 %v2592
  %2640 = vmatprep.subr.mxu0 0.0
  %2641 = vmatpush1.msra.mxu0 %v2593
  %2642 = vmatprep.subr.mxu0 0.0
  %2643 = vmatpush1.msra.mxu0 %v2594
  %2644 = vmatprep.subr.mxu0 0.0
  %2645 = vmatpush1.msra.mxu0 %v2595
  %2646 = vmatprep.subr.mxu0 0.0
  %2647 = vmatpush1.msra.mxu0 %v2596
  %2648 = vmatprep.subr.mxu0 0.0
  %2649 = vmatpush1.msra.mxu0 %v2597
  %2650 = vmatprep.subr.mxu0 0.0
  %2651 = vmatpush1.msra.mxu0 %v2598
  %2652 = vmatprep.subr.mxu0 0.0
  %2653 = vmatpush1.msra.mxu0 %v2599
  %2654 = vmatprep.subr.mxu0 0.0
  %2655 = vmatpush1.msra.mxu0 %v2600
  %2656 = vmatprep.subr.mxu0 0.0
  %2657 = vmatpush1.msra.mxu0 %v2601
  %2658 = vmatprep.subr.mxu0 0.0
  %2659 = vmatpush1.msra.mxu0 %v2602
  %2660 = vmatprep.subr.mxu0 0.0
  %2661 = vmatpush1.msra.mxu0 %v2603
  %2662 = vmatprep.subr.mxu0 0.0
  %2663 = vmatpush1.msra.mxu0 %v2604
  %2664 = vmatprep.subr.mxu0 0.0
  %2665 = vmatpush1.msra.mxu0 %v2605
  %2666 = vmatprep.subr.mxu0 0.0
  %2667 = vmatpush1.msra.mxu0 %v2606
  %2668 = vmatprep.subr.mxu0 0.0
  %2669 = vmatpush1.msra.mxu0 %v2607
  %2670 = vmatprep.subr.mxu0 0.0
  %2671 = vmatpush1.msra.mxu0 %v2608
  %2672 = vmatprep.subr.mxu0 0.0
  %2673 = vmatpush1.msra.mxu0 %v2609
  %2674 = vmatprep.subr.mxu0 0.0
  %2675 = vmatpush1.msra.mxu0 %v2610
  %2676 = vmatprep.subr.mxu0 0.0
  %2677 = vmatpush1.msra.mxu0 %v2611
  %2678 = vmatprep.subr.mxu0 0.0
  %2679 = vmatpush1.msra.mxu0 %v2612
  %2680 = vmatprep.subr.mxu0 0.0
  %2681 = vmatpush1.msra.mxu0 %v2613
  %2682 = vmatprep.mubr.f32.mxu0 %v2576
  %2683 = vmatmul.mubr.f32.gmra.mrb[0].mxu0 %v2575
  %v2684 = vpop.f32.mrb[0].mxu0
  %v2685 = vadd.f32 %v2617, %v2684
  %v2686 = vpop.f32.mrb[0].mxu0
  %2687 = vmatprep.mubr.f32.mxu0 %v2578
  %2688 = vmatmul.mubr.f32.gmra.mrb[0].mxu0 %v2577
  %v2689 = vpop.f32.mrb[0].mxu0
  %v2690 = vadd.f32 %v2617, %v2689
  %v2691 = vpop.f32.mrb[0].mxu0
  %2692 = vmatprep.mubr.f32.mxu0 %v2580
  %2693 = vmatmul.mubr.f32.gmra.mrb[0].mxu0 %v2579
  %v2694 = vpop.f32.mrb[0].mxu0
  %v2695 = vadd.f32 %v2617, %v2694
  %v2696 = vpop.f32.mrb[0].mxu0
  %2697 = vdwg.mxu0
  %v2698 = vadd.f32 %v2349, %v2685
  %v2699 = vadd.f32 %v2350, %v2690
  %v2700 = vadd.f32 %v2351, %v2695
  %v2701 = vsel %vm145, %v2698, 0.0
  %2702 = vadd.xlane.f32.xlu0 %v2701
  %v2703 = vpop.xlane.xlu0 %2702
  %v2704 = vsel %vm145, %v2699, 0.0
  %2705 = vadd.xlane.f32.xlu0 %v2704
  %v2706 = vpop.xlane.xlu0 %2705
  %v2707 = vsel %vm152, %v2700, 0.0
  %2708 = vadd.xlane.f32.xlu0 %v2707
  %v2709 = vpop.xlane.xlu0 %2708
  %v2710 = vmul.f32 %v2703, %v156
  %v2711 = vmul.f32 %v2706, %v156
  %v2712 = vmul.f32 %v2709, %v156
  %v2713 = vsub.f32 %v2698, %v2710
  %v2714 = vsub.f32 %v2699, %v2711
  %v2715 = vsub.f32 %v2700, %v2712
  %v2716 = vmul.f32 %v2713, %v2713
  %v2717 = vmul.f32 %v2714, %v2714
  %v2718 = vmul.f32 %v2715, %v2715
  %v2719 = vsel %vm145, %v2716, 0.0
  %2720 = vadd.xlane.f32.xlu0 %v2719
  %v2721 = vpop.xlane.xlu0 %2720
  %v2722 = vsel %vm145, %v2717, 0.0
  %2723 = vadd.xlane.f32.xlu0 %v2722
  %v2724 = vpop.xlane.xlu0 %2723
  %v2725 = vsel %vm152, %v2718, 0.0
  %2726 = vadd.xlane.f32.xlu0 %v2725
  %v2727 = vpop.xlane.xlu0 %2726
  %v2728 = vmul.f32 %v2721, %v156
  %v2729 = vmul.f32 %v2724, %v156
  %v2730 = vmul.f32 %v2727, %v156
  %v2731 = vadd.f32 %v2728, 1e-05
  %v2732 = vadd.f32 %v2729, 1e-05
  %v2733 = vadd.f32 %v2730, 1e-05
  %v2734 = vrsqrt.pop %v2731
  %v2735 = vrsqrt.pop %v2732
  %v2736 = vrsqrt.pop %v2733
  %v2737 = vmul.f32 %v2713, %v2734
  %v2738 = vmul.f32 %v2714, %v2735
  %v2739 = vmul.f32 %v2715, %v2736
  %v2740 = vlaneseq
  %v2741 = vshrl.u32 %v2740, 7
  %v2742 = vsub.s32 3, %v2741
  %v2743 = vrot.slane %v38, %v2742
  %v2744 = vmul.f32 %v2737, %v2743
  %v2745 = vmul.f32 %v2738, %v2743
  %v2746 = vmul.f32 %v2739, %v2743
  %v2747 = vlaneseq
  %v2748 = vshrl.u32 %v2747, 7
  %v2749 = vsub.s32 4, %v2748
  %v2750 = vrot.slane %v38, %v2749
  %v2751 = vadd.f32 %v2744, %v2750
  %v2752 = vadd.f32 %v2745, %v2750
  %v2753 = vadd.f32 %v2746, %v2750
  %v2754 = vld [vmem:[%s10] sm:$0xff]
  %v2755 = vld [vmem:[%s10 + $0x8] sm:$0xff]
  %v2756 = vld [vmem:[%s10 + $0x10] sm:$0xff]
  %v2757 = vld [vmem:[%s10 + $0x18] sm:$0xff]
  %v2758 = vld [vmem:[%s10 + $0x20] sm:$0xff]
  %v2759 = vld [vmem:[%s10 + $0x28] sm:$0xff]
  %v2760 = vld [vmem:[%s10 + $0x30] sm:$0xff]
  %v2761 = vld [vmem:[%s10 + $0x38] sm:$0xff]
  %v2762 = vlaneseq
  %v2763 = vshrl.u32 %v2762, 7
  %v2764 = vsub.s32 5, %v2763
  %v2765 = vrot.slane %v38, %v2764
  %v2767 = vsel %vm145, %v2751, 0
  %v2770 = vsel %vm145, %v2752, 0
  %v2773 = vsel %vm145, %v2753, 0
  %2775 = vmatprep.subr.mxu0 0.0
  %2776 = vmatpush1.msra.mxu0 %v2754
  %2777 = vmatprep.subr.mxu0 0.0
  %2778 = vmatpush1.msra.mxu0 %v2755
  %2779 = vmatprep.subr.mxu0 0.0
  %2780 = vmatpush1.msra.mxu0 %v2756
  %2781 = vmatprep.subr.mxu0 0.0
  %2782 = vmatpush1.msra.mxu0 %v2757
  %2783 = vmatprep.subr.mxu0 0.0
  %2784 = vmatpush1.msra.mxu0 %v2758
  %2785 = vmatprep.subr.mxu0 0.0
  %2786 = vmatpush1.msra.mxu0 %v2759
  %2787 = vmatprep.subr.mxu0 0.0
  %2788 = vmatpush1.msra.mxu0 %v2760
  %2789 = vmatprep.subr.mxu0 0.0
  %2790 = vmatpush1.msra.mxu0 %v2761
  %2791 = vmatprep.subr.mxu0 0.0
  %2792 = vmatpush1.msra.mxu0 0.0
  %2793 = vmatprep.subr.mxu0 0.0
  %2794 = vmatpush1.msra.mxu0 0.0
  %2795 = vmatprep.subr.mxu0 0.0
  %2796 = vmatpush1.msra.mxu0 0.0
  %2797 = vmatprep.subr.mxu0 0.0
  %2798 = vmatpush1.msra.mxu0 0.0
  %2799 = vmatprep.subr.mxu0 0.0
  %2800 = vmatpush1.msra.mxu0 0.0
  %2801 = vmatprep.subr.mxu0 0.0
  %2802 = vmatpush1.msra.mxu0 0.0
  %2803 = vmatprep.subr.mxu0 0.0
  %2804 = vmatpush1.msra.mxu0 0.0
  %2805 = vmatprep.subr.mxu0 0.0
  %2806 = vmatpush1.msra.mxu0 0.0
  %2807 = vmatprep.subr.mxu0 0.0
  %2808 = vmatpush1.msra.mxu0 0.0
  %2809 = vmatprep.subr.mxu0 0.0
  %2810 = vmatpush1.msra.mxu0 0.0
  %2811 = vmatprep.subr.mxu0 0.0
  %2812 = vmatpush1.msra.mxu0 0.0
  %2813 = vmatprep.subr.mxu0 0.0
  %2814 = vmatpush1.msra.mxu0 0.0
  %2815 = vmatprep.subr.mxu0 0.0
  %2816 = vmatpush1.msra.mxu0 0.0
  %2817 = vmatprep.subr.mxu0 0.0
  %2818 = vmatpush1.msra.mxu0 0.0
  %2819 = vmatprep.subr.mxu0 0.0
  %2820 = vmatpush1.msra.mxu0 0.0
  %2821 = vmatprep.subr.mxu0 0.0
  %2822 = vmatpush1.msra.mxu0 0.0
  %2823 = vmatprep.subr.mxu0 0.0
  %2824 = vmatpush1.msra.mxu0 0.0
  %2825 = vmatprep.subr.mxu0 0.0
  %2826 = vmatpush1.msra.mxu0 0.0
  %2827 = vmatprep.subr.mxu0 0.0
  %2828 = vmatpush1.msra.mxu0 0.0
  %2829 = vmatprep.subr.mxu0 0.0
  %2830 = vmatpush1.msra.mxu0 0.0
  %2831 = vmatprep.subr.mxu0 0.0
  %2832 = vmatpush1.msra.mxu0 0.0
  %2833 = vmatprep.subr.mxu0 0.0
  %2834 = vmatpush1.msra.mxu0 0.0
  %2835 = vmatprep.subr.mxu0 0.0
  %2836 = vmatpush1.msra.mxu0 0.0
  %2837 = vmatprep.subr.mxu0 0.0
  %2838 = vmatpush1.msra.mxu0 0.0
  %2839 = vmatprep.mubr.f32.mxu0 0.0
  %2840 = vmatmul.mubr.f32.gmra.mrb[0].mxu0 %v2767
  %v2841 = vpop.f32.mrb[0].mxu0
  %v2842 = vadd.f32 %v2765, %v2841
  %v2843 = vpop.f32.mrb[0].mxu0
  %2844 = vmatprep.mubr.f32.mxu0 0.0
  %2845 = vmatmul.mubr.f32.gmra.mrb[0].mxu0 %v2770
  %v2846 = vpop.f32.mrb[0].mxu0
  %v2847 = vadd.f32 %v2765, %v2846
  %v2848 = vpop.f32.mrb[0].mxu0
  %2849 = vmatprep.mubr.f32.mxu0 0.0
  %2850 = vmatmul.mubr.f32.gmra.mrb[0].mxu0 %v2773
  %v2851 = vpop.f32.mrb[0].mxu0
  %v2852 = vadd.f32 %v2765, %v2851
  %v2853 = vpop.f32.mrb[0].mxu0
  %2854 = vdwg.mxu0
  %2855 = vst.msk [vmem:[%s11] sm:$0xff] %vm145, %v2842
  %2856 = vst.msk [vmem:[%s11 + $0x8] sm:$0xff] %vm145, %v2847
  %2857 = vst.msk [vmem:[%s11 + $0x10] sm:$0xf] %vm152, %v2852
  // Predicated region
  $region46: #{cpgg_forward.5} parent=0 // pred_check
    _
  $region47: #{cpgg_forward.5} parent=0 // pred_check_branch
    %2859 = sbr.rel (0) target = $region49
  $region48: #{cpgg_forward.5} parent=0 // pred_region
    _
  $region49: #{cpgg_forward.5} parent=0 // pred_fallthru
    _
  // Predicated region
  $region50: #{cpgg_forward.5} parent=0 // pred_check
    _
  $region51: #{cpgg_forward.5} parent=0 // pred_check_branch
    %2861 = sbr.rel (0) target = $region53
  $region52: #{cpgg_forward.5} parent=0 // pred_region
    _
  $region53: #{cpgg_forward.5} parent=0 // pred_fallthru
    _

// kernel: cpgg_forward.6
$region0: #{cpgg_forward.6}
  #allocation0 [shape = 'u32[]', space=smem, size = 0x4, offset = 0x4, fixed_abs, tag = 'smem constant byte address 0x4 - core index']
  #allocation1 [shape = 'u32[144,128]{1,0:T(1,128)}', space=vmem, size = 0x12000, scoped, tag = 'internal scratch']
  %s0 = inlined_call_operand.vmem [shape: f32[48,64], index: 0, kind: input, shape index: {}]
  %s1 = inlined_call_operand.vmem [shape: f32[48,48], index: 1, kind: input, shape index: {}]
  %s2 = inlined_call_operand.vmem [shape: f32[8,64,64], index: 2, kind: input, shape index: {}]
  %s3 = inlined_call_operand.vmem [shape: f32[2,64,256], index: 3, kind: input, shape index: {}]
  %s4 = inlined_call_operand.vmem [shape: f32[2,256,64], index: 4, kind: input, shape index: {}]
  %s5 = inlined_call_operand.vmem [shape: f32[2,1,256], index: 5, kind: input, shape index: {}]
  %s6 = inlined_call_operand.vmem [shape: f32[20,64], index: 6, kind: input, shape index: {}]
  %s7 = inlined_call_operand.vmem [shape: f32[16,64], index: 7, kind: input, shape index: {}]
  %s8 = inlined_call_operand.vmem [shape: f32[32,64], index: 8, kind: output, shape index: {}]
  %s9 = sld [smem:[#allocation0]]
  $region42: #{cpgg_forward.6} parent=0
    _
  %s11 = ssub.s32 1, %s9
  %s12 = scalar_select 0, %s11, %s9
  // Predicated region
  $region2: #{cpgg_forward.6} parent=0 // pred_check
    _
  $region3: #{cpgg_forward.6} parent=0 // pred_check_branch
    %14 = sbr.rel (0) target = $region5
  $region4: #{cpgg_forward.6} parent=0 // pred_region
    _
  $region5: #{cpgg_forward.6} parent=0 // pred_fallthru
    _
  // Predicated region
  $region6: #{cpgg_forward.6} parent=0 // pred_check
    _
  $region7: #{cpgg_forward.6} parent=0 // pred_check_branch
    %16 = sbr.rel (0) target = $region9
  $region8: #{cpgg_forward.6} parent=0 // pred_region
    _
  $region9: #{cpgg_forward.6} parent=0 // pred_fallthru
    _
  // Predicated region
  $region10: #{cpgg_forward.6} parent=0 // pred_check
    _
  $region11: #{cpgg_forward.6} parent=0 // pred_check_branch
    %18 = sbr.rel (0) target = $region13
  $region12: #{cpgg_forward.6} parent=0 // pred_region
    _
  $region13: #{cpgg_forward.6} parent=0 // pred_fallthru
    _
  // Predicated region
  $region14: #{cpgg_forward.6} parent=0 // pred_check
    _
  $region15: #{cpgg_forward.6} parent=0 // pred_check_branch
    %20 = sbr.rel (0) target = $region17
  $region16: #{cpgg_forward.6} parent=0 // pred_region
    _
  $region17: #{cpgg_forward.6} parent=0 // pred_fallthru
    _
  // Predicated region
  $region18: #{cpgg_forward.6} parent=0 // pred_check
    _
  $region19: #{cpgg_forward.6} parent=0 // pred_check_branch
    %22 = sbr.rel (0) target = $region21
  $region20: #{cpgg_forward.6} parent=0 // pred_region
    _
  $region21: #{cpgg_forward.6} parent=0 // pred_fallthru
    _
  // Predicated region
  $region22: #{cpgg_forward.6} parent=0 // pred_check
    _
  $region23: #{cpgg_forward.6} parent=0 // pred_check_branch
    %24 = sbr.rel (0) target = $region25
  $region24: #{cpgg_forward.6} parent=0 // pred_region
    _
  $region25: #{cpgg_forward.6} parent=0 // pred_fallthru
    _
  // Predicated region
  $region26: #{cpgg_forward.6} parent=0 // pred_check
    _
  $region27: #{cpgg_forward.6} parent=0 // pred_check_branch
    %26 = sbr.rel (0) target = $region29
  $region28: #{cpgg_forward.6} parent=0 // pred_region
    _
  $region29: #{cpgg_forward.6} parent=0 // pred_fallthru
    _
  // Predicated region
  $region30: #{cpgg_forward.6} parent=0 // pred_check
    _
  $region31: #{cpgg_forward.6} parent=0 // pred_check_branch
    %28 = sbr.rel (0) target = $region33
  $region32: #{cpgg_forward.6} parent=0 // pred_region
    _
  $region33: #{cpgg_forward.6} parent=0 // pred_fallthru
    _
  %v29 = vld [vmem:[%s6] sm:$0xff]
  %v30 = vld [vmem:[%s6 + $0x8] sm:$0xff]
  %v31 = vld [vmem:[%s6 + $0x10] sm:$0xf]
  %v32 = vld [vmem:[%s1] sm:$0xff]
  %v33 = vld [vmem:[%s1 + $0x8] sm:$0xff]
  %v34 = vld [vmem:[%s1 + $0x10] sm:$0xff]
  %v35 = vld [vmem:[%s1 + $0x18] sm:$0xff]
  %v36 = vld [vmem:[%s1 + $0x20] sm:$0xff]
  %v37 = vld [vmem:[%s1 + $0x28] sm:$0xff]
  %v38 = vld [vmem:[%s0] sm:$0xff]
  %v39 = vld [vmem:[%s0 + $0x8] sm:$0xff]
  %v40 = vld [vmem:[%s0 + $0x10] sm:$0xff]
  %v41 = vld [vmem:[%s0 + $0x18] sm:$0xff]
  %v42 = vld [vmem:[%s0 + $0x20] sm:$0xff]
  %v43 = vld [vmem:[%s0 + $0x28] sm:$0xff]
  %vm44 = vcmask 523264
  %v45 = vsel %vm44, %v38, 0.0
  %46 = vadd.xlane.f32.xlu0 %v45
  %v47 = vpop.xlane.xlu0 %46
  %v48 = vsel %vm44, %v39, 0.0
  %49 = vadd.xlane.f32.xlu0 %v48
  %v50 = vpop.xlane.xlu0 %49
  %v51 = vsel %vm44, %v40, 0.0
  %52 = vadd.xlane.f32.xlu0 %v51
  %v53 = vpop.xlane.xlu0 %52
  %v54 = vsel %vm44, %v41, 0.0
  %55 = vadd.xlane.f32.xlu0 %v54
  %v56 = vpop.xlane.xlu0 %55
  %v57 = vsel %vm44, %v42, 0.0
  %58 = vadd.xlane.f32.xlu0 %v57
  %v59 = vpop.xlane.xlu0 %58
  %v60 = vsel %vm44, %v43, 0.0
  %61 = vadd.xlane.f32.xlu0 %v60
  %v62 = vpop.xlane.xlu0 %61
  %v63 = vrcp.pop 64.0
  %v64 = vmul.f32 %v47, %v63
  %v65 = vmul.f32 %v50, %v63
  %v66 = vmul.f32 %v53, %v63
  %v67 = vmul.f32 %v56, %v63
  %v68 = vmul.f32 %v59, %v63
  %v69 = vmul.f32 %v62, %v63
  %v70 = vsub.f32 %v38, %v64
  %v71 = vsub.f32 %v39, %v65
  %v72 = vsub.f32 %v40, %v66
  %v73 = vsub.f32 %v41, %v67
  %v74 = vsub.f32 %v42, %v68
  %v75 = vsub.f32 %v43, %v69
  %v76 = vmul.f32 %v70, %v70
  %v77 = vmul.f32 %v71, %v71
  %v78 = vmul.f32 %v72, %v72
  %v79 = vmul.f32 %v73, %v73
  %v80 = vmul.f32 %v74, %v74
  %v81 = vmul.f32 %v75, %v75
  %v82 = vsel %vm44, %v76, 0.0
  %83 = vadd.xlane.f32.xlu0 %v82
  %v84 = vpop.xlane.xlu0 %83
  %v85 = vsel %vm44, %v77, 0.0
  %86 = vadd.xlane.f32.xlu0 %v85
  %v87 = vpop.xlane.xlu0 %86
  %v88 = vsel %vm44, %v78, 0.0
  %89 = vadd.xlane.f32.xlu0 %v88
  %v90 = vpop.xlane.xlu0 %89
  %v91 = vsel %vm44, %v79, 0.0
  %92 = vadd.xlane.f32.xlu0 %v91
  %v93 = vpop.xlane.xlu0 %92
  %v94 = vsel %vm44, %v80, 0.0
  %95 = vadd.xlane.f32.xlu0 %v94
  %v96 = vpop.xlane.xlu0 %95
  %v97 = vsel %vm44, %v81, 0.0
  %98 = vadd.xlane.f32.xlu0 %v97
  %v99 = vpop.xlane.xlu0 %98
  %v100 = vmul.f32 %v84, %v63
  %v101 = vmul.f32 %v87, %v63
  %v102 = vmul.f32 %v90, %v63
  %v103 = vmul.f32 %v93, %v63
  %v104 = vmul.f32 %v96, %v63
  %v105 = vmul.f32 %v99, %v63
  %v106 = vadd.f32 %v100, 1e-05
  %v107 = vadd.f32 %v101, 1e-05
  %v108 = vadd.f32 %v102, 1e-05
  %v109 = vadd.f32 %v103, 1e-05
  %v110 = vadd.f32 %v104, 1e-05
  %v111 = vadd.f32 %v105, 1e-05
  %v112 = vrsqrt.pop %v106
  %v113 = vrsqrt.pop %v107
  %v114 = vrsqrt.pop %v108
  %v115 = vrsqrt.pop %v109
  %v116 = vrsqrt.pop %v110
  %v117 = vrsqrt.pop %v111
  %v118 = vmul.f32 %v70, %v112
  %v119 = vmul.f32 %v71, %v113
  %v120 = vmul.f32 %v72, %v114
  %v121 = vmul.f32 %v73, %v115
  %v122 = vmul.f32 %v74, %v116
  %v123 = vmul.f32 %v75, %v117
  %v124 = vlaneseq
  %v125 = vshrl.u32 %v124, 7
  %v126 = vsub.s32 2, %v125
  %v127 = vrot.slane %v29, %v126
  %v128 = vmul.f32 %v118, %v127
  %v129 = vmul.f32 %v119, %v127
  %v130 = vmul.f32 %v120, %v127
  %v131 = vmul.f32 %v121, %v127
  %v132 = vmul.f32 %v122, %v127
  %v133 = vmul.f32 %v123, %v127
  %v134 = vlaneseq
  %v135 = vshrl.u32 %v134, 7
  %v136 = vsub.s32 3, %v135
  %v137 = vrot.slane %v29, %v136
  %v138 = vadd.f32 %v128, %v137
  %v139 = vadd.f32 %v129, %v137
  %v140 = vadd.f32 %v130, %v137
  %v141 = vadd.f32 %v131, %v137
  %v142 = vadd.f32 %v132, %v137
  %v143 = vadd.f32 %v133, %v137
  %v144 = vld [vmem:[%s2] sm:$0xff]
  %v145 = vld [vmem:[%s2 + $0x8] sm:$0xff]
  %v146 = vld [vmem:[%s2 + $0x10] sm:$0xff]
  %v147 = vld [vmem:[%s2 + $0x18] sm:$0xff]
  %v148 = vld [vmem:[%s2 + $0x20] sm:$0xff]
  %v149 = vld [vmem:[%s2 + $0x28] sm:$0xff]
  %v150 = vld [vmem:[%s2 + $0x30] sm:$0xff]
  %v151 = vld [vmem:[%s2 + $0x38] sm:$0xff]
  %v152 = vlaneseq
  %v153 = vshrl.u32 %v152, 7
  %v154 = vsub.s32 4, %v153
  %v155 = vrot.slane %v29, %v154
  %v157 = vsel %vm44, %v138, 0
  %v160 = vsel %vm44, %v139, 0
  %v163 = vsel %vm44, %v140, 0
  %v166 = vsel %vm44, %v141, 0
  %v169 = vsel %vm44, %v142, 0
  %v172 = vsel %vm44, %v143, 0
  %174 = vmatprep.subr.mxu0 0.0
  %175 = vmatpush1.msra.mxu0 %v144
  %176 = vmatprep.subr.mxu0 0.0
  %177 = vmatpush1.msra.mxu0 %v145
  %178 = vmatprep.subr.mxu0 0.0
  %179 = vmatpush1.msra.mxu0 %v146
  %180 = vmatprep.subr.mxu0 0.0
  %181 = vmatpush1.msra.mxu0 %v147
  %182 = vmatprep.subr.mxu0 0.0
  %183 = vmatpush1.msra.mxu0 %v148
  %184 = vmatprep.subr.mxu0 0.0
  %185 = vmatpush1.msra.mxu0 %v149
  %186 = vmatprep.subr.mxu0 0.0
  %187 = vmatpush1.msra.mxu0 %v150
  %188 = vmatprep.subr.mxu0 0.0
  %189 = vmatpush1.msra.mxu0 %v151
  %190 = vmatprep.subr.mxu0 0.0
  %191 = vmatpush1.msra.mxu0 0.0
  %192 = vmatprep.subr.mxu0 0.0
  %193 = vmatpush1.msra.mxu0 0.0
  %194 = vmatprep.subr.mxu0 0.0
  %195 = vmatpush1.msra.mxu0 0.0
  %196 = vmatprep.subr.mxu0 0.0
  %197 = vmatpush1.msra.mxu0 0.0
  %198 = vmatprep.subr.mxu0 0.0
  %199 = vmatpush1.msra.mxu0 0.0
  %200 = vmatprep.subr.mxu0 0.0
  %201 = vmatpush1.msra.mxu0 0.0
  %202 = vmatprep.subr.mxu0 0.0
  %203 = vmatpush1.msra.mxu0 0.0
  %204 = vmatprep.subr.mxu0 0.0
  %205 = vmatpush1.msra.mxu0 0.0
  %206 = vmatprep.subr.mxu0 0.0
  %207 = vmatpush1.msra.mxu0 0.0
  %208 = vmatprep.subr.mxu0 0.0
  %209 = vmatpush1.msra.mxu0 0.0
  %210 = vmatprep.subr.mxu0 0.0
  %211 = vmatpush1.msra.mxu0 0.0
  %212 = vmatprep.subr.mxu0 0.0
  %213 = vmatpush1.msra.mxu0 0.0
  %214 = vmatprep.subr.mxu0 0.0
  %215 = vmatpush1.msra.mxu0 0.0
  %216 = vmatprep.subr.mxu0 0.0
  %217 = vmatpush1.msra.mxu0 0.0
  %218 = vmatprep.subr.mxu0 0.0
  %219 = vmatpush1.msra.mxu0 0.0
  %220 = vmatprep.subr.mxu0 0.0
  %221 = vmatpush1.msra.mxu0 0.0
  %222 = vmatprep.subr.mxu0 0.0
  %223 = vmatpush1.msra.mxu0 0.0
  %224 = vmatprep.subr.mxu0 0.0
  %225 = vmatpush1.msra.mxu0 0.0
  %226 = vmatprep.subr.mxu0 0.0
  %227 = vmatpush1.msra.mxu0 0.0
  %228 = vmatprep.subr.mxu0 0.0
  %229 = vmatpush1.msra.mxu0 0.0
  %230 = vmatprep.subr.mxu0 0.0
  %231 = vmatpush1.msra.mxu0 0.0
  %232 = vmatprep.subr.mxu0 0.0
  %233 = vmatpush1.msra.mxu0 0.0
  %234 = vmatprep.subr.mxu0 0.0
  %235 = vmatpush1.msra.mxu0 0.0
  %236 = vmatprep.subr.mxu0 0.0
  %237 = vmatpush1.msra.mxu0 0.0
  %238 = vmatprep.mubr.f32.mxu0 0.0
  %239 = vmatmul.mubr.f32.gmra.mrb[0].mxu0 %v157
  %v240 = vpop.f32.mrb[0].mxu0
  %v241 = vadd.f32 %v155, %v240
  %v242 = vpop.f32.mrb[0].mxu0
  %243 = vmatprep.mubr.f32.mxu0 0.0
  %244 = vmatmul.mubr.f32.gmra.mrb[0].mxu0 %v160
  %v245 = vpop.f32.mrb[0].mxu0
  %v246 = vadd.f32 %v155, %v245
  %v247 = vpop.f32.mrb[0].mxu0
  %248 = vmatprep.mubr.f32.mxu0 0.0
  %249 = vmatmul.mubr.f32.gmra.mrb[0].mxu0 %v163
  %v250 = vpop.f32.mrb[0].mxu0
  %v251 = vadd.f32 %v155, %v250
  %v252 = vpop.f32.mrb[0].mxu0
  %253 = vmatprep.mubr.f32.mxu0 0.0
  %254 = vmatmul.mubr.f32.gmra.mrb[0].mxu0 %v166
  %v255 = vpop.f32.mrb[0].mxu0
  %v256 = vadd.f32 %v155, %v255
  %v257 = vpop.f32.mrb[0].mxu0
  %258 = vmatprep.mubr.f32.mxu0 0.0
  %259 = vmatmul.mubr.f32.gmra.mrb[0].mxu0 %v169
  %v260 = vpop.f32.mrb[0].mxu0
  %v261 = vadd.f32 %v155, %v260
  %v262 = vpop.f32.mrb[0].mxu0
  %263 = vmatprep.mubr.f32.mxu0 0.0
  %264 = vmatmul.mubr.f32.gmra.mrb[0].mxu0 %v172
  %v265 = vpop.f32.mrb[0].mxu0
  %v266 = vadd.f32 %v155, %v265
  %v267 = vpop.f32.mrb[0].mxu0
  %268 = vdwg.mxu0
  %s269 = scalar_lea.vmem %s2, 64
  %v270 = vld [vmem:[%s269] sm:$0xff]
  %v271 = vld [vmem:[%s269 + $0x8] sm:$0xff]
  %v272 = vld [vmem:[%s269 + $0x10] sm:$0xff]
  %v273 = vld [vmem:[%s269 + $0x18] sm:$0xff]
  %v274 = vld [vmem:[%s269 + $0x20] sm:$0xff]
  %v275 = vld [vmem:[%s269 + $0x28] sm:$0xff]
  %v276 = vld [vmem:[%s269 + $0x30] sm:$0xff]
  %v277 = vld [vmem:[%s269 + $0x38] sm:$0xff]
  %v278 = vlaneseq
  %v279 = vshrl.u32 %v278, 7
  %v280 = vsub.s32 5, %v279
  %v281 = vrot.slane %v29, %v280
  %282 = vmatprep.subr.mxu0 0.0
  %283 = vmatpush1.msra.mxu0 %v270
  %284 = vmatprep.subr.mxu0 0.0
  %285 = vmatpush1.msra.mxu0 %v271
  %286 = vmatprep.subr.mxu0 0.0
  %287 = vmatpush1.msra.mxu0 %v272
  %288 = vmatprep.subr.mxu0 0.0
  %289 = vmatpush1.msra.mxu0 %v273
  %290 = vmatprep.subr.mxu0 0.0
  %291 = vmatpush1.msra.mxu0 %v274
  %292 = vmatprep.subr.mxu0 0.0
  %293 = vmatpush1.msra.mxu0 %v275
  %294 = vmatprep.subr.mxu0 0.0
  %295 = vmatpush1.msra.mxu0 %v276
  %296 = vmatprep.subr.mxu0 0.0
  %297 = vmatpush1.msra.mxu0 %v277
  %298 = vmatprep.subr.mxu0 0.0
  %299 = vmatpush1.msra.mxu0 0.0
  %300 = vmatprep.subr.mxu0 0.0
  %301 = vmatpush1.msra.mxu0 0.0
  %302 = vmatprep.subr.mxu0 0.0
  %303 = vmatpush1.msra.mxu0 0.0
  %304 = vmatprep.subr.mxu0 0.0
  %305 = vmatpush1.msra.mxu0 0.0
  %306 = vmatprep.subr.mxu0 0.0
  %307 = vmatpush1.msra.mxu0 0.0
  %308 = vmatprep.subr.mxu0 0.0
  %309 = vmatpush1.msra.mxu0 0.0
  %310 = vmatprep.subr.mxu0 0.0
  %311 = vmatpush1.msra.mxu0 0.0
  %312 = vmatprep.subr.mxu0 0.0
  %313 = vmatpush1.msra.mxu0 0.0
  %314 = vmatprep.subr.mxu0 0.0
  %315 = vmatpush1.msra.mxu0 0.0
  %316 = vmatprep.subr.mxu0 0.0
  %317 = vmatpush1.msra.mxu0 0.0
  %318 = vmatprep.subr.mxu0 0.0
  %319 = vmatpush1.msra.mxu0 0.0
  %320 = vmatprep.subr.mxu0 0.0
  %321 = vmatpush1.msra.mxu0 0.0
  %322 = vmatprep.subr.mxu0 0.0
  %323 = vmatpush1.msra.mxu0 0.0
  %324 = vmatprep.subr.mxu0 0.0
  %325 = vmatpush1.msra.mxu0 0.0
  %326 = vmatprep.subr.mxu0 0.0
  %327 = vmatpush1.msra.mxu0 0.0
  %328 = vmatprep.subr.mxu0 0.0
  %329 = vmatpush1.msra.mxu0 0.0
  %330 = vmatprep.subr.mxu0 0.0
  %331 = vmatpush1.msra.mxu0 0.0
  %332 = vmatprep.subr.mxu0 0.0
  %333 = vmatpush1.msra.mxu0 0.0
  %334 = vmatprep.subr.mxu0 0.0
  %335 = vmatpush1.msra.mxu0 0.0
  %336 = vmatprep.subr.mxu0 0.0
  %337 = vmatpush1.msra.mxu0 0.0
  %338 = vmatprep.subr.mxu0 0.0
  %339 = vmatpush1.msra.mxu0 0.0
  %340 = vmatprep.subr.mxu0 0.0
  %341 = vmatpush1.msra.mxu0 0.0
  %342 = vmatprep.subr.mxu0 0.0
  %343 = vmatpush1.msra.mxu0 0.0
  %344 = vmatprep.subr.mxu0 0.0
  %345 = vmatpush1.msra.mxu0 0.0
  %346 = vmatprep.mubr.f32.mxu0 0.0
  %347 = vmatmul.mubr.f32.gmra.mrb[0].mxu0 %v157
  %v348 = vpop.f32.mrb[0].mxu0
  %v349 = vadd.f32 %v281, %v348
  %v350 = vpop.f32.mrb[0].mxu0
  %351 = vmatprep.mubr.f32.mxu0 0.0
  %352 = vmatmul.mubr.f32.gmra.mrb[0].mxu0 %v160
  %v353 = vpop.f32.mrb[0].mxu0
  %v354 = vadd.f32 %v281, %v353
  %v355 = vpop.f32.mrb[0].mxu0
  %356 = vmatprep.mubr.f32.mxu0 0.0
  %357 = vmatmul.mubr.f32.gmra.mrb[0].mxu0 %v163
  %v358 = vpop.f32.mrb[0].mxu0
  %v359 = vadd.f32 %v281, %v358
  %v360 = vpop.f32.mrb[0].mxu0
  %361 = vmatprep.mubr.f32.mxu0 0.0
  %362 = vmatmul.mubr.f32.gmra.mrb[0].mxu0 %v166
  %v363 = vpop.f32.mrb[0].mxu0
  %v364 = vadd.f32 %v281, %v363
  %v365 = vpop.f32.mrb[0].mxu0
  %366 = vmatprep.mubr.f32.mxu0 0.0
  %367 = vmatmul.mubr.f32.gmra.mrb[0].mxu0 %v169
  %v368 = vpop.f32.mrb[0].mxu0
  %v369 = vadd.f32 %v281, %v368
  %v370 = vpop.f32.mrb[0].mxu0
  %371 = vmatprep.mubr.f32.mxu0 0.0
  %372 = vmatmul.mubr.f32.gmra.mrb[0].mxu0 %v172
  %v373 = vpop.f32.mrb[0].mxu0
  %v374 = vadd.f32 %v281, %v373
  %v375 = vpop.f32.mrb[0].mxu0
  %376 = vdwg.mxu0
  %s377 = scalar_lea.vmem %s2, 128
  %v378 = vld [vmem:[%s377] sm:$0xff]
  %v379 = vld [vmem:[%s377 + $0x8] sm:$0xff]
  %v380 = vld [vmem:[%s377 + $0x10] sm:$0xff]
  %v381 = vld [vmem:[%s377 + $0x18] sm:$0xff]
  %v382 = vld [vmem:[%s377 + $0x20] sm:$0xff]
  %v383 = vld [vmem:[%s377 + $0x28] sm:$0xff]
  %v384 = vld [vmem:[%s377 + $0x30] sm:$0xff]
  %v385 = vld [vmem:[%s377 + $0x38] sm:$0xff]
  %v386 = vlaneseq
  %v387 = vshrl.u32 %v386, 7
  %v388 = vsub.s32 6, %v387
  %v389 = vrot.slane %v29, %v388
  %390 = vmatprep.subr.mxu0 0.0
  %391 = vmatpush1.msra.mxu0 %v378
  %392 = vmatprep.subr.mxu0 0.0
  %393 = vmatpush1.msra.mxu0 %v379
  %394 = vmatprep.subr.mxu0 0.0
  %395 = vmatpush1.msra.mxu0 %v380
  %396 = vmatprep.subr.mxu0 0.0
  %397 = vmatpush1.msra.mxu0 %v381
  %398 = vmatprep.subr.mxu0 0.0
  %399 = vmatpush1.msra.mxu0 %v382
  %400 = vmatprep.subr.mxu0 0.0
  %401 = vmatpush1.msra.mxu0 %v383
  %402 = vmatprep.subr.mxu0 0.0
  %403 = vmatpush1.msra.mxu0 %v384
  %404 = vmatprep.subr.mxu0 0.0
  %405 = vmatpush1.msra.mxu0 %v385
  %406 = vmatprep.subr.mxu0 0.0
  %407 = vmatpush1.msra.mxu0 0.0
  %408 = vmatprep.subr.mxu0 0.0
  %409 = vmatpush1.msra.mxu0 0.0
  %410 = vmatprep.subr.mxu0 0.0
  %411 = vmatpush1.msra.mxu0 0.0
  %412 = vmatprep.subr.mxu0 0.0
  %413 = vmatpush1.msra.mxu0 0.0
  %414 = vmatprep.subr.mxu0 0.0
  %415 = vmatpush1.msra.mxu0 0.0
  %416 = vmatprep.subr.mxu0 0.0
  %417 = vmatpush1.msra.mxu0 0.0
  %418 = vmatprep.subr.mxu0 0.0
  %419 = vmatpush1.msra.mxu0 0.0
  %420 = vmatprep.subr.mxu0 0.0
  %421 = vmatpush1.msra.mxu0 0.0
  %422 = vmatprep.subr.mxu0 0.0
  %423 = vmatpush1.msra.mxu0 0.0
  %424 = vmatprep.subr.mxu0 0.0
  %425 = vmatpush1.msra.mxu0 0.0
  %426 = vmatprep.subr.mxu0 0.0
  %427 = vmatpush1.msra.mxu0 0.0
  %428 = vmatprep.subr.mxu0 0.0
  %429 = vmatpush1.msra.mxu0 0.0
  %430 = vmatprep.subr.mxu0 0.0
  %431 = vmatpush1.msra.mxu0 0.0
  %432 = vmatprep.subr.mxu0 0.0
  %433 = vmatpush1.msra.mxu0 0.0
  %434 = vmatprep.subr.mxu0 0.0
  %435 = vmatpush1.msra.mxu0 0.0
  %436 = vmatprep.subr.mxu0 0.0
  %437 = vmatpush1.msra.mxu0 0.0
  %438 = vmatprep.subr.mxu0 0.0
  %439 = vmatpush1.msra.mxu0 0.0
  %440 = vmatprep.subr.mxu0 0.0
  %441 = vmatpush1.msra.mxu0 0.0
  %442 = vmatprep.subr.mxu0 0.0
  %443 = vmatpush1.msra.mxu0 0.0
  %444 = vmatprep.subr.mxu0 0.0
  %445 = vmatpush1.msra.mxu0 0.0
  %446 = vmatprep.subr.mxu0 0.0
  %447 = vmatpush1.msra.mxu0 0.0
  %448 = vmatprep.subr.mxu0 0.0
  %449 = vmatpush1.msra.mxu0 0.0
  %450 = vmatprep.subr.mxu0 0.0
  %451 = vmatpush1.msra.mxu0 0.0
  %452 = vmatprep.subr.mxu0 0.0
  %453 = vmatpush1.msra.mxu0 0.0
  %454 = vmatprep.mubr.f32.mxu0 0.0
  %455 = vmatmul.mubr.f32.gmra.mrb[0].mxu0 %v157
  %v456 = vpop.f32.mrb[0].mxu0
  %v457 = vadd.f32 %v389, %v456
  %v458 = vpop.f32.mrb[0].mxu0
  %459 = vmatprep.mubr.f32.mxu0 0.0
  %460 = vmatmul.mubr.f32.gmra.mrb[0].mxu0 %v160
  %v461 = vpop.f32.mrb[0].mxu0
  %v462 = vadd.f32 %v389, %v461
  %v463 = vpop.f32.mrb[0].mxu0
  %464 = vmatprep.mubr.f32.mxu0 0.0
  %465 = vmatmul.mubr.f32.gmra.mrb[0].mxu0 %v163
  %v466 = vpop.f32.mrb[0].mxu0
  %v467 = vadd.f32 %v389, %v466
  %v468 = vpop.f32.mrb[0].mxu0
  %469 = vmatprep.mubr.f32.mxu0 0.0
  %470 = vmatmul.mubr.f32.gmra.mrb[0].mxu0 %v166
  %v471 = vpop.f32.mrb[0].mxu0
  %v472 = vadd.f32 %v389, %v471
  %v473 = vpop.f32.mrb[0].mxu0
  %474 = vmatprep.mubr.f32.mxu0 0.0
  %475 = vmatmul.mubr.f32.gmra.mrb[0].mxu0 %v169
  %v476 = vpop.f32.mrb[0].mxu0
  %v477 = vadd.f32 %v389, %v476
  %v478 = vpop.f32.mrb[0].mxu0
  %479 = vmatprep.mubr.f32.mxu0 0.0
  %480 = vmatmul.mubr.f32.gmra.mrb[0].mxu0 %v172
  %v481 = vpop.f32.mrb[0].mxu0
  %v482 = vadd.f32 %v389, %v481
  %v483 = vpop.f32.mrb[0].mxu0
  %484 = vdwg.mxu0
  %v485 = vlaneseq
  %v486 = vand.u32 %v485, 127
  %vm487 = vcmp.ge.s32.totalorder %v486, 0
  %vm488 = vcmp.lt.s32.totalorder %v486, 32
  %vm489 = vmand %vm487, %vm488
  %v490 = vsel %vm489, 1, 0
  %v491 = vcvt.s32.f32 %v490
  %v492 = vmul.f32 %v349, %v491
  %v493 = vmul.f32 %v354, %v491
  %v494 = vmul.f32 %v359, %v491
  %v495 = vmul.f32 %v364, %v491
  %v496 = vmul.f32 %v369, %v491
  %v497 = vmul.f32 %v374, %v491
  %v498 = vmul.f32 %v457, %v491
  %v499 = vmul.f32 %v462, %v491
  %v500 = vmul.f32 %v467, %v491
  %v501 = vmul.f32 %v472, %v491
  %v502 = vmul.f32 %v477, %v491
  %v503 = vmul.f32 %v482, %v491
  %v505 = vsel %vm44, %v241, 0
  %v508 = vsel %vm44, %v246, 0
  %v511 = vsel %vm44, %v251, 0
  %v514 = vsel %vm44, %v256, 0
  %v517 = vsel %vm44, %v261, 0
  %v520 = vsel %vm44, %v266, 0
  %v523 = vsel %vm44, %v492, 0
  %v526 = vsel %vm44, %v493, 0
  %v529 = vsel %vm44, %v494, 0
  %v532 = vsel %vm44, %v495, 0
  %v535 = vsel %vm44, %v496, 0
  %v538 = vsel %vm44, %v497, 0
  %540 = vmatprep.subr.mxu0 0.0
  %541 = vmatpush1.xpose.msra.mxu0 %v523
  %542 = vmatprep.subr.mxu0 0.0
  %543 = vmatpush1.xpose.msra.mxu0 %v526
  %544 = vmatprep.subr.mxu0 0.0
  %545 = vmatpush1.xpose.msra.mxu0 %v529
  %546 = vmatprep.subr.mxu0 0.0
  %547 = vmatpush1.xpose.msra.mxu0 %v532
  %548 = vmatprep.subr.mxu0 0.0
  %549 = vmatpush1.xpose.msra.mxu0 %v535
  %550 = vmatprep.subr.mxu0 0.0
  %551 = vmatpush1.xpose.msra.mxu0 %v538
  %552 = vmatprep.subr.mxu0 0.0
  %553 = vmatpush1.xpose.msra.mxu0 0.0
  %554 = vmatprep.subr.mxu0 0.0
  %555 = vmatpush1.xpose.msra.mxu0 0.0
  %556 = vmatprep.subr.mxu0 0.0
  %557 = vmatpush1.xpose.msra.mxu0 0.0
  %558 = vmatprep.subr.mxu0 0.0
  %559 = vmatpush1.xpose.msra.mxu0 0.0
  %560 = vmatprep.subr.mxu0 0.0
  %561 = vmatpush1.xpose.msra.mxu0 0.0
  %562 = vmatprep.subr.mxu0 0.0
  %563 = vmatpush1.xpose.msra.mxu0 0.0
  %564 = vmatprep.subr.mxu0 0.0
  %565 = vmatpush1.xpose.msra.mxu0 0.0
  %566 = vmatprep.subr.mxu0 0.0
  %567 = vmatpush1.xpose.msra.mxu0 0.0
  %568 = vmatprep.subr.mxu0 0.0
  %569 = vmatpush1.xpose.msra.mxu0 0.0
  %570 = vmatprep.subr.mxu0 0.0
  %571 = vmatpush1.xpose.msra.mxu0 0.0
  %572 = vmatprep.subr.mxu0 0.0
  %573 = vmatpush1.xpose.msra.mxu0 0.0
  %574 = vmatprep.subr.mxu0 0.0
  %575 = vmatpush1.xpose.msra.mxu0 0.0
  %576 = vmatprep.subr.mxu0 0.0
  %577 = vmatpush1.xpose.msra.mxu0 0.0
  %578 = vmatprep.subr.mxu0 0.0
  %579 = vmatpush1.xpose.msra.mxu0 0.0
  %580 = vmatprep.subr.mxu0 0.0
  %581 = vmatpush1.xpose.msra.mxu0 0.0
  %582 = vmatprep.subr.mxu0 0.0
  %583 = vmatpush1.xpose.msra.mxu0 0.0
  %584 = vmatprep.subr.mxu0 0.0
  %585 = vmatpush1.xpose.msra.mxu0 0.0
  %586 = vmatprep.subr.mxu0 0.0
  %587 = vmatpush1.xpose.msra.mxu0 0.0
  %588 = vmatprep.subr.mxu0 0.0
  %589 = vmatpush1.xpose.msra.mxu0 0.0
  %590 = vmatprep.subr.mxu0 0.0
  %591 = vmatpush1.xpose.msra.mxu0 0.0
  %592 = vmatprep.subr.mxu0 0.0
  %593 = vmatpush1.xpose.msra.mxu0 0.0
  %594 = vmatprep.subr.mxu0 0.0
  %595 = vmatpush1.xpose.msra.mxu0 0.0
  %596 = vmatprep.subr.mxu0 0.0
  %597 = vmatpush1.xpose.msra.mxu0 0.0
  %598 = vmatprep.subr.mxu0 0.0
  %599 = vmatpush1.xpose.msra.mxu0 0.0
  %600 = vmatprep.subr.mxu0 0.0
  %601 = vmatpush1.xpose.msra.mxu0 0.0
  %602 = vmatprep.subr.mxu0 0.0
  %603 = vmatpush1.xpose.msra.mxu0 0.0
  %604 = vmatprep.mubr.f32.mxu0 0.0
  %605 = vmatmul.mubr.f32.gmra.mrb[0].mxu0 %v505
  %v606 = vpop.f32.mrb[0].mxu0
  %v607 = vadd.f32 %v32, %v606
  %v608 = vpop.f32.mrb[0].mxu0
  %609 = vmatprep.mubr.f32.mxu0 0.0
  %610 = vmatmul.mubr.f32.gmra.mrb[0].mxu0 %v508
  %v611 = vpop.f32.mrb[0].mxu0
  %v612 = vadd.f32 %v33, %v611
  %v613 = vpop.f32.mrb[0].mxu0
  %614 = vmatprep.mubr.f32.mxu0 0.0
  %615 = vmatmul.mubr.f32.gmra.mrb[0].mxu0 %v511
  %v616 = vpop.f32.mrb[0].mxu0
  %v617 = vadd.f32 %v34, %v616
  %v618 = vpop.f32.mrb[0].mxu0
  %619 = vmatprep.mubr.f32.mxu0 0.0
  %620 = vmatmul.mubr.f32.gmra.mrb[0].mxu0 %v514
  %v621 = vpop.f32.mrb[0].mxu0
  %v622 = vadd.f32 %v35, %v621
  %v623 = vpop.f32.mrb[0].mxu0
  %624 = vmatprep.mubr.f32.mxu0 0.0
  %625 = vmatmul.mubr.f32.gmra.mrb[0].mxu0 %v517
  %v626 = vpop.f32.mrb[0].mxu0
  %v627 = vadd.f32 %v36, %v626
  %v628 = vpop.f32.mrb[0].mxu0
  %629 = vmatprep.mubr.f32.mxu0 0.0
  %630 = vmatmul.mubr.f32.gmra.mrb[0].mxu0 %v520
  %v631 = vpop.f32.mrb[0].mxu0
  %v632 = vadd.f32 %v37, %v631
  %v633 = vpop.f32.mrb[0].mxu0
  %634 = vdwg.mxu0
  %vm635 = vcmask 392192
  %v636 = vsel %vm635, %v607, -inf
  %637 = vmax.xlane.f32.xlu0 %v636
  %v638 = vpop.xlane.xlu0 %637
  %v639 = vsel %vm635, %v612, -inf
  %640 = vmax.xlane.f32.xlu0 %v639
  %v641 = vpop.xlane.xlu0 %640
  %v642 = vsel %vm635, %v617, -inf
  %643 = vmax.xlane.f32.xlu0 %v642
  %v644 = vpop.xlane.xlu0 %643
  %v645 = vsel %vm635, %v622, -inf
  %646 = vmax.xlane.f32.xlu0 %v645
  %v647 = vpop.xlane.xlu0 %646
  %v648 = vsel %vm635, %v627, -inf
  %649 = vmax.xlane.f32.xlu0 %v648
  %v650 = vpop.xlane.xlu0 %649
  %v651 = vsel %vm635, %v632, -inf
  %652 = vmax.xlane.f32.xlu0 %v651
  %v653 = vpop.xlane.xlu0 %652
  %v654 = vsub.f32 %v607, %v638
  %v655 = vsub.f32 %v612, %v641
  %v656 = vsub.f32 %v617, %v644
  %v657 = vsub.f32 %v622, %v647
  %v658 = vsub.f32 %v627, %v650
  %v659 = vsub.f32 %v632, %v653
  %v660 = vmul.f32 %v654, 1.442695
  %v661 = vpow.pop %v660
  %v662 = vmul.f32 %v655, 1.442695
  %v663 = vpow.pop %v662
  %v664 = vmul.f32 %v656, 1.442695
  %v665 = vpow.pop %v664
  %v666 = vmul.f32 %v657, 1.442695
  %v667 = vpow.pop %v666
  %v668 = vmul.f32 %v658, 1.442695
  %v669 = vpow.pop %v668
  %v670 = vmul.f32 %v659, 1.442695
  %v671 = vpow.pop %v670
  %v672 = vsel %vm635, %v661, 0.0
  %673 = vadd.xlane.f32.xlu0 %v672
  %v674 = vpop.xlane.xlu0 %673
  %v675 = vsel %vm635, %v663, 0.0
  %676 = vadd.xlane.f32.xlu0 %v675
  %v677 = vpop.xlane.xlu0 %676
  %v678 = vsel %vm635, %v665, 0.0
  %679 = vadd.xlane.f32.xlu0 %v678
  %v680 = vpop.xlane.xlu0 %679
  %v681 = vsel %vm635, %v667, 0.0
  %682 = vadd.xlane.f32.xlu0 %v681
  %v683 = vpop.xlane.xlu0 %682
  %v684 = vsel %vm635, %v669, 0.0
  %685 = vadd.xlane.f32.xlu0 %v684
  %v686 = vpop.xlane.xlu0 %685
  %v687 = vsel %vm635, %v671, 0.0
  %688 = vadd.xlane.f32.xlu0 %v687
  %v689 = vpop.xlane.xlu0 %688
  %v690 = vrcp.pop %v674
  %v691 = vrcp.pop %v677
  %v692 = vrcp.pop %v680
  %v693 = vrcp.pop %v683
  %v694 = vrcp.pop %v686
  %v695 = vrcp.pop %v689
  %v696 = vmul.f32 %v661, %v690
  %v697 = vmul.f32 %v663, %v691
  %v698 = vmul.f32 %v665, %v692
  %v699 = vmul.f32 %v667, %v693
  %v700 = vmul.f32 %v669, %v694
  %v701 = vmul.f32 %v671, %v695
  %vm702 = vcmp.ge.s32.totalorder %v486, 32
  %vm703 = vcmp.lt.s32.totalorder %v486, 64
  %vm704 = vmand %vm702, %vm703
  %v705 = vsel %vm704, 1, 0
  %v706 = vcvt.s32.f32 %v705
  %v707 = vmul.f32 %v349, %v706
  %v708 = vmul.f32 %v354, %v706
  %v709 = vmul.f32 %v359, %v706
  %v710 = vmul.f32 %v364, %v706
  %v711 = vmul.f32 %v369, %v706
  %v712 = vmul.f32 %v374, %v706
  %v713 = vmul.f32 %v457, %v706
  %v714 = vmul.f32 %v462, %v706
  %v715 = vmul.f32 %v467, %v706
  %v716 = vmul.f32 %v472, %v706
  %v717 = vmul.f32 %v477, %v706
  %v718 = vmul.f32 %v482, %v706
  %v720 = vsel %vm44, %v707, 0
  %v723 = vsel %vm44, %v708, 0
  %v726 = vsel %vm44, %v709, 0
  %v729 = vsel %vm44, %v710, 0
  %v732 = vsel %vm44, %v711, 0
  %v735 = vsel %vm44, %v712, 0
  %737 = vmatprep.subr.mxu0 0.0
  %738 = vmatpush1.xpose.msra.mxu0 %v720
  %739 = vmatprep.subr.mxu0 0.0
  %740 = vmatpush1.xpose.msra.mxu0 %v723
  %741 = vmatprep.subr.mxu0 0.0
  %742 = vmatpush1.xpose.msra.mxu0 %v726
  %743 = vmatprep.subr.mxu0 0.0
  %744 = vmatpush1.xpose.msra.mxu0 %v729
  %745 = vmatprep.subr.mxu0 0.0
  %746 = vmatpush1.xpose.msra.mxu0 %v732
  %747 = vmatprep.subr.mxu0 0.0
  %748 = vmatpush1.xpose.msra.mxu0 %v735
  %749 = vmatprep.subr.mxu0 0.0
  %750 = vmatpush1.xpose.msra.mxu0 0.0
  %751 = vmatprep.subr.mxu0 0.0
  %752 = vmatpush1.xpose.msra.mxu0 0.0
  %753 = vmatprep.subr.mxu0 0.0
  %754 = vmatpush1.xpose.msra.mxu0 0.0
  %755 = vmatprep.subr.mxu0 0.0
  %756 = vmatpush1.xpose.msra.mxu0 0.0
  %757 = vmatprep.subr.mxu0 0.0
  %758 = vmatpush1.xpose.msra.mxu0 0.0
  %759 = vmatprep.subr.mxu0 0.0
  %760 = vmatpush1.xpose.msra.mxu0 0.0
  %761 = vmatprep.subr.mxu0 0.0
  %762 = vmatpush1.xpose.msra.mxu0 0.0
  %763 = vmatprep.subr.mxu0 0.0
  %764 = vmatpush1.xpose.msra.mxu0 0.0
  %765 = vmatprep.subr.mxu0 0.0
  %766 = vmatpush1.xpose.msra.mxu0 0.0
  %767 = vmatprep.subr.mxu0 0.0
  %768 = vmatpush1.xpose.msra.mxu0 0.0
  %769 = vmatprep.subr.mxu0 0.0
  %770 = vmatpush1.xpose.msra.mxu0 0.0
  %771 = vmatprep.subr.mxu0 0.0
  %772 = vmatpush1.xpose.msra.mxu0 0.0
  %773 = vmatprep.subr.mxu0 0.0
  %774 = vmatpush1.xpose.msra.mxu0 0.0
  %775 = vmatprep.subr.mxu0 0.0
  %776 = vmatpush1.xpose.msra.mxu0 0.0
  %777 = vmatprep.subr.mxu0 0.0
  %778 = vmatpush1.xpose.msra.mxu0 0.0
  %779 = vmatprep.subr.mxu0 0.0
  %780 = vmatpush1.xpose.msra.mxu0 0.0
  %781 = vmatprep.subr.mxu0 0.0
  %782 = vmatpush1.xpose.msra.mxu0 0.0
  %783 = vmatprep.subr.mxu0 0.0
  %784 = vmatpush1.xpose.msra.mxu0 0.0
  %785 = vmatprep.subr.mxu0 0.0
  %786 = vmatpush1.xpose.msra.mxu0 0.0
  %787 = vmatprep.subr.mxu0 0.0
  %788 = vmatpush1.xpose.msra.mxu0 0.0
  %789 = vmatprep.subr.mxu0 0.0
  %790 = vmatpush1.xpose.msra.mxu0 0.0
  %791 = vmatprep.subr.mxu0 0.0
  %792 = vmatpush1.xpose.msra.mxu0 0.0
  %793 = vmatprep.subr.mxu0 0.0
  %794 = vmatpush1.xpose.msra.mxu0 0.0
  %795 = vmatprep.subr.mxu0 0.0
  %796 = vmatpush1.xpose.msra.mxu0 0.0
  %797 = vmatprep.subr.mxu0 0.0
  %798 = vmatpush1.xpose.msra.mxu0 0.0
  %799 = vmatprep.subr.mxu0 0.0
  %800 = vmatpush1.xpose.msra.mxu0 0.0
  %801 = vmatprep.mubr.f32.mxu0 0.0
  %802 = vmatmul.mubr.f32.gmra.mrb[0].mxu0 %v505
  %v803 = vpop.f32.mrb[0].mxu0
  %v804 = vadd.f32 %v32, %v803
  %v805 = vpop.f32.mrb[0].mxu0
  %806 = vmatprep.mubr.f32.mxu0 0.0
  %807 = vmatmul.mubr.f32.gmra.mrb[0].mxu0 %v508
  %v808 = vpop.f32.mrb[0].mxu0
  %v809 = vadd.f32 %v33, %v808
  %v810 = vpop.f32.mrb[0].mxu0
  %811 = vmatprep.mubr.f32.mxu0 0.0
  %812 = vmatmul.mubr.f32.gmra.mrb[0].mxu0 %v511
  %v813 = vpop.f32.mrb[0].mxu0
  %v814 = vadd.f32 %v34, %v813
  %v815 = vpop.f32.mrb[0].mxu0
  %816 = vmatprep.mubr.f32.mxu0 0.0
  %817 = vmatmul.mubr.f32.gmra.mrb[0].mxu0 %v514
  %v818 = vpop.f32.mrb[0].mxu0
  %v819 = vadd.f32 %v35, %v818
  %v820 = vpop.f32.mrb[0].mxu0
  %821 = vmatprep.mubr.f32.mxu0 0.0
  %822 = vmatmul.mubr.f32.gmra.mrb[0].mxu0 %v517
  %v823 = vpop.f32.mrb[0].mxu0
  %v824 = vadd.f32 %v36, %v823
  %v825 = vpop.f32.mrb[0].mxu0
  %826 = vmatprep.mubr.f32.mxu0 0.0
  %827 = vmatmul.mubr.f32.gmra.mrb[0].mxu0 %v520
  %v828 = vpop.f32.mrb[0].mxu0
  %v829 = vadd.f32 %v37, %v828
  %v830 = vpop.f32.mrb[0].mxu0
  %831 = vdwg.mxu0
  %v832 = vsel %vm635, %v804, -inf
  %833 = vmax.xlane.f32.xlu0 %v832
  %v834 = vpop.xlane.xlu0 %833
  %v835 = vsel %vm635, %v809, -inf
  %836 = vmax.xlane.f32.xlu0 %v835
  %v837 = vpop.xlane.xlu0 %836
  %v838 = vsel %vm635, %v814, -inf
  %839 = vmax.xlane.f32.xlu0 %v838
  %v840 = vpop.xlane.xlu0 %839
  %v841 = vsel %vm635, %v819, -inf
  %842 = vmax.xlane.f32.xlu0 %v841
  %v843 = vpop.xlane.xlu0 %842
  %v844 = vsel %vm635, %v824, -inf
  %845 = vmax.xlane.f32.xlu0 %v844
  %v846 = vpop.xlane.xlu0 %845
  %v847 = vsel %vm635, %v829, -inf
  %848 = vmax.xlane.f32.xlu0 %v847
  %v849 = vpop.xlane.xlu0 %848
  %v850 = vsub.f32 %v804, %v834
  %v851 = vsub.f32 %v809, %v837
  %v852 = vsub.f32 %v814, %v840
  %v853 = vsub.f32 %v819, %v843
  %v854 = vsub.f32 %v824, %v846
  %v855 = vsub.f32 %v829, %v849
  %v856 = vmul.f32 %v850, 1.442695
  %v857 = vpow.pop %v856
  %v858 = vmul.f32 %v851, 1.442695
  %v859 = vpow.pop %v858
  %v860 = vmul.f32 %v852, 1.442695
  %v861 = vpow.pop %v860
  %v862 = vmul.f32 %v853, 1.442695
  %v863 = vpow.pop %v862
  %v864 = vmul.f32 %v854, 1.442695
  %v865 = vpow.pop %v864
  %v866 = vmul.f32 %v855, 1.442695
  %v867 = vpow.pop %v866
  %v868 = vsel %vm635, %v857, 0.0
  %869 = vadd.xlane.f32.xlu0 %v868
  %v870 = vpop.xlane.xlu0 %869
  %v871 = vsel %vm635, %v859, 0.0
  %872 = vadd.xlane.f32.xlu0 %v871
  %v873 = vpop.xlane.xlu0 %872
  %v874 = vsel %vm635, %v861, 0.0
  %875 = vadd.xlane.f32.xlu0 %v874
  %v876 = vpop.xlane.xlu0 %875
  %v877 = vsel %vm635, %v863, 0.0
  %878 = vadd.xlane.f32.xlu0 %v877
  %v879 = vpop.xlane.xlu0 %878
  %v880 = vsel %vm635, %v865, 0.0
  %881 = vadd.xlane.f32.xlu0 %v880
  %v882 = vpop.xlane.xlu0 %881
  %v883 = vsel %vm635, %v867, 0.0
  %884 = vadd.xlane.f32.xlu0 %v883
  %v885 = vpop.xlane.xlu0 %884
  %v886 = vrcp.pop %v870
  %v887 = vrcp.pop %v873
  %v888 = vrcp.pop %v876
  %v889 = vrcp.pop %v879
  %v890 = vrcp.pop %v882
  %v891 = vrcp.pop %v885
  %v892 = vmul.f32 %v857, %v886
  %v893 = vmul.f32 %v859, %v887
  %v894 = vmul.f32 %v861, %v888
  %v895 = vmul.f32 %v863, %v889
  %v896 = vmul.f32 %v865, %v890
  %v897 = vmul.f32 %v867, %v891
  %v899 = vsel %vm635, %v892, 0
  %v902 = vsel %vm635, %v893, 0
  %v905 = vsel %vm635, %v894, 0
  %v908 = vsel %vm635, %v895, 0
  %v911 = vsel %vm635, %v896, 0
  %v914 = vsel %vm635, %v897, 0
  %916 = vmatprep.subr.mxu0 0.0
  %917 = vmatpush1.msra.mxu0 %v713
  %918 = vmatprep.subr.mxu0 0.0
  %919 = vmatpush1.msra.mxu0 %v714
  %920 = vmatprep.subr.mxu0 0.0
  %921 = vmatpush1.msra.mxu0 %v715
  %922 = vmatprep.subr.mxu0 0.0
  %923 = vmatpush1.msra.mxu0 %v716
  %924 = vmatprep.subr.mxu0 0.0
  %925 = vmatpush1.msra.mxu0 %v717
  %926 = vmatprep.subr.mxu0 0.0
  %927 = vmatpush1.msra.mxu0 %v718
  %928 = vmatprep.subr.mxu0 0.0
  %929 = vmatpush1.msra.mxu0 0.0
  %930 = vmatprep.subr.mxu0 0.0
  %931 = vmatpush1.msra.mxu0 0.0
  %932 = vmatprep.subr.mxu0 0.0
  %933 = vmatpush1.msra.mxu0 0.0
  %934 = vmatprep.subr.mxu0 0.0
  %935 = vmatpush1.msra.mxu0 0.0
  %936 = vmatprep.subr.mxu0 0.0
  %937 = vmatpush1.msra.mxu0 0.0
  %938 = vmatprep.subr.mxu0 0.0
  %939 = vmatpush1.msra.mxu0 0.0
  %940 = vmatprep.subr.mxu0 0.0
  %941 = vmatpush1.msra.mxu0 0.0
  %942 = vmatprep.subr.mxu0 0.0
  %943 = vmatpush1.msra.mxu0 0.0
  %944 = vmatprep.subr.mxu0 0.0
  %945 = vmatpush1.msra.mxu0 0.0
  %946 = vmatprep.subr.mxu0 0.0
  %947 = vmatpush1.msra.mxu0 0.0
  %948 = vmatprep.subr.mxu0 0.0
  %949 = vmatpush1.msra.mxu0 0.0
  %950 = vmatprep.subr.mxu0 0.0
  %951 = vmatpush1.msra.mxu0 0.0
  %952 = vmatprep.subr.mxu0 0.0
  %953 = vmatpush1.msra.mxu0 0.0
  %954 = vmatprep.subr.mxu0 0.0
  %955 = vmatpush1.msra.mxu0 0.0
  %956 = vmatprep.subr.mxu0 0.0
  %957 = vmatpush1.msra.mxu0 0.0
  %958 = vmatprep.subr.mxu0 0.0
  %959 = vmatpush1.msra.mxu0 0.0
  %960 = vmatprep.subr.mxu0 0.0
  %961 = vmatpush1.msra.mxu0 0.0
  %962 = vmatprep.subr.mxu0 0.0
  %963 = vmatpush1.msra.mxu0 0.0
  %964 = vmatprep.subr.mxu0 0.0
  %965 = vmatpush1.msra.mxu0 0.0
  %966 = vmatprep.subr.mxu0 0.0
  %967 = vmatpush1.msra.mxu0 0.0
  %968 = vmatprep.subr.mxu0 0.0
  %969 = vmatpush1.msra.mxu0 0.0
  %970 = vmatprep.subr.mxu0 0.0
  %971 = vmatpush1.msra.mxu0 0.0
  %972 = vmatprep.subr.mxu0 0.0
  %973 = vmatpush1.msra.mxu0 0.0
  %974 = vmatprep.subr.mxu0 0.0
  %975 = vmatpush1.msra.mxu0 0.0
  %976 = vmatprep.subr.mxu0 0.0
  %977 = vmatpush1.msra.mxu0 0.0
  %978 = vmatprep.subr.mxu0 0.0
  %979 = vmatpush1.msra.mxu0 0.0
  %980 = vmatprep.mubr.f32.mxu0 0.0
  %981 = vmatmul.mubr.f32.gmra.mrb[0].mxu0 %v899
  %v982 = vpop.f32.mrb[0].mxu0
  %v983 = vadd.f32 0.0, %v982
  %v984 = vpop.f32.mrb[0].mxu0
  %985 = vmatprep.mubr.f32.mxu0 0.0
  %986 = vmatmul.mubr.f32.gmra.mrb[0].mxu0 %v902
  %v987 = vpop.f32.mrb[0].mxu0
  %v988 = vadd.f32 0.0, %v987
  %v989 = vpop.f32.mrb[0].mxu0
  %990 = vmatprep.mubr.f32.mxu0 0.0
  %991 = vmatmul.mubr.f32.gmra.mrb[0].mxu0 %v905
  %v992 = vpop.f32.mrb[0].mxu0
  %v993 = vadd.f32 0.0, %v992
  %v994 = vpop.f32.mrb[0].mxu0
  %995 = vmatprep.mubr.f32.mxu0 0.0
  %996 = vmatmul.mubr.f32.gmra.mrb[0].mxu0 %v908
  %v997 = vpop.f32.mrb[0].mxu0
  %v998 = vadd.f32 0.0, %v997
  %v999 = vpop.f32.mrb[0].mxu0
  %1000 = vmatprep.mubr.f32.mxu0 0.0
  %1001 = vmatmul.mubr.f32.gmra.mrb[0].mxu0 %v911
  %v1002 = vpop.f32.mrb[0].mxu0
  %v1003 = vadd.f32 0.0, %v1002
  %v1004 = vpop.f32.mrb[0].mxu0
  %1005 = vmatprep.mubr.f32.mxu0 0.0
  %1006 = vmatmul.mubr.f32.gmra.mrb[0].mxu0 %v914
  %v1007 = vpop.f32.mrb[0].mxu0
  %v1008 = vadd.f32 0.0, %v1007
  %v1009 = vpop.f32.mrb[0].mxu0
  %1010 = vdwg.mxu0
  %v1012 = vsel %vm635, %v696, 0
  %v1015 = vsel %vm635, %v697, 0
  %v1018 = vsel %vm635, %v698, 0
  %v1021 = vsel %vm635, %v699, 0
  %v1024 = vsel %vm635, %v700, 0
  %v1027 = vsel %vm635, %v701, 0
  %1029 = vmatprep.subr.mxu0 0.0
  %1030 = vmatpush1.msra.mxu0 %v498
  %1031 = vmatprep.subr.mxu0 0.0
  %1032 = vmatpush1.msra.mxu0 %v499
  %1033 = vmatprep.subr.mxu0 0.0
  %1034 = vmatpush1.msra.mxu0 %v500
  %1035 = vmatprep.subr.mxu0 0.0
  %1036 = vmatpush1.msra.mxu0 %v501
  %1037 = vmatprep.subr.mxu0 0.0
  %1038 = vmatpush1.msra.mxu0 %v502
  %1039 = vmatprep.subr.mxu0 0.0
  %1040 = vmatpush1.msra.mxu0 %v503
  %1041 = vmatprep.subr.mxu0 0.0
  %1042 = vmatpush1.msra.mxu0 0.0
  %1043 = vmatprep.subr.mxu0 0.0
  %1044 = vmatpush1.msra.mxu0 0.0
  %1045 = vmatprep.subr.mxu0 0.0
  %1046 = vmatpush1.msra.mxu0 0.0
  %1047 = vmatprep.subr.mxu0 0.0
  %1048 = vmatpush1.msra.mxu0 0.0
  %1049 = vmatprep.subr.mxu0 0.0
  %1050 = vmatpush1.msra.mxu0 0.0
  %1051 = vmatprep.subr.mxu0 0.0
  %1052 = vmatpush1.msra.mxu0 0.0
  %1053 = vmatprep.subr.mxu0 0.0
  %1054 = vmatpush1.msra.mxu0 0.0
  %1055 = vmatprep.subr.mxu0 0.0
  %1056 = vmatpush1.msra.mxu0 0.0
  %1057 = vmatprep.subr.mxu0 0.0
  %1058 = vmatpush1.msra.mxu0 0.0
  %1059 = vmatprep.subr.mxu0 0.0
  %1060 = vmatpush1.msra.mxu0 0.0
  %1061 = vmatprep.subr.mxu0 0.0
  %1062 = vmatpush1.msra.mxu0 0.0
  %1063 = vmatprep.subr.mxu0 0.0
  %1064 = vmatpush1.msra.mxu0 0.0
  %1065 = vmatprep.subr.mxu0 0.0
  %1066 = vmatpush1.msra.mxu0 0.0
  %1067 = vmatprep.subr.mxu0 0.0
  %1068 = vmatpush1.msra.mxu0 0.0
  %1069 = vmatprep.subr.mxu0 0.0
  %1070 = vmatpush1.msra.mxu0 0.0
  %1071 = vmatprep.subr.mxu0 0.0
  %1072 = vmatpush1.msra.mxu0 0.0
  %1073 = vmatprep.subr.mxu0 0.0
  %1074 = vmatpush1.msra.mxu0 0.0
  %1075 = vmatprep.subr.mxu0 0.0
  %1076 = vmatpush1.msra.mxu0 0.0
  %1077 = vmatprep.subr.mxu0 0.0
  %1078 = vmatpush1.msra.mxu0 0.0
  %1079 = vmatprep.subr.mxu0 0.0
  %1080 = vmatpush1.msra.mxu0 0.0
  %1081 = vmatprep.subr.mxu0 0.0
  %1082 = vmatpush1.msra.mxu0 0.0
  %1083 = vmatprep.subr.mxu0 0.0
  %1084 = vmatpush1.msra.mxu0 0.0
  %1085 = vmatprep.subr.mxu0 0.0
  %1086 = vmatpush1.msra.mxu0 0.0
  %1087 = vmatprep.subr.mxu0 0.0
  %1088 = vmatpush1.msra.mxu0 0.0
  %1089 = vmatprep.subr.mxu0 0.0
  %1090 = vmatpush1.msra.mxu0 0.0
  %1091 = vmatprep.subr.mxu0 0.0
  %1092 = vmatpush1.msra.mxu0 0.0
  %1093 = vmatprep.mubr.f32.mxu0 0.0
  %1094 = vmatmul.mubr.f32.gmra.mrb[0].mxu0 %v1012
  %v1095 = vpop.f32.mrb[0].mxu0
  %v1096 = vadd.f32 %v983, %v1095
  %v1097 = vpop.f32.mrb[0].mxu0
  %1098 = vmatprep.mubr.f32.mxu0 0.0
  %1099 = vmatmul.mubr.f32.gmra.mrb[0].mxu0 %v1015
  %v1100 = vpop.f32.mrb[0].mxu0
  %v1101 = vadd.f32 %v988, %v1100
  %v1102 = vpop.f32.mrb[0].mxu0
  %1103 = vmatprep.mubr.f32.mxu0 0.0
  %1104 = vmatmul.mubr.f32.gmra.mrb[0].mxu0 %v1018
  %v1105 = vpop.f32.mrb[0].mxu0
  %v1106 = vadd.f32 %v993, %v1105
  %v1107 = vpop.f32.mrb[0].mxu0
  %1108 = vmatprep.mubr.f32.mxu0 0.0
  %1109 = vmatmul.mubr.f32.gmra.mrb[0].mxu0 %v1021
  %v1110 = vpop.f32.mrb[0].mxu0
  %v1111 = vadd.f32 %v998, %v1110
  %v1112 = vpop.f32.mrb[0].mxu0
  %1113 = vmatprep.mubr.f32.mxu0 0.0
  %1114 = vmatmul.mubr.f32.gmra.mrb[0].mxu0 %v1024
  %v1115 = vpop.f32.mrb[0].mxu0
  %v1116 = vadd.f32 %v1003, %v1115
  %v1117 = vpop.f32.mrb[0].mxu0
  %1118 = vmatprep.mubr.f32.mxu0 0.0
  %1119 = vmatmul.mubr.f32.gmra.mrb[0].mxu0 %v1027
  %v1120 = vpop.f32.mrb[0].mxu0
  %v1121 = vadd.f32 %v1008, %v1120
  %v1122 = vpop.f32.mrb[0].mxu0
  %1123 = vdwg.mxu0
  %s1124 = scalar_lea.vmem %s2, 192
  %v1125 = vld [vmem:[%s1124] sm:$0xff]
  %v1126 = vld [vmem:[%s1124 + $0x8] sm:$0xff]
  %v1127 = vld [vmem:[%s1124 + $0x10] sm:$0xff]
  %v1128 = vld [vmem:[%s1124 + $0x18] sm:$0xff]
  %v1129 = vld [vmem:[%s1124 + $0x20] sm:$0xff]
  %v1130 = vld [vmem:[%s1124 + $0x28] sm:$0xff]
  %v1131 = vld [vmem:[%s1124 + $0x30] sm:$0xff]
  %v1132 = vld [vmem:[%s1124 + $0x38] sm:$0xff]
  %v1133 = vlaneseq
  %v1134 = vshrl.u32 %v1133, 7
  %v1135 = vsub.s32 7, %v1134
  %v1136 = vrot.slane %v29, %v1135
  %v1138 = vsel %vm44, %v1096, 0
  %v1141 = vsel %vm44, %v1101, 0
  %v1144 = vsel %vm44, %v1106, 0
  %v1147 = vsel %vm44, %v1111, 0
  %v1150 = vsel %vm44, %v1116, 0
  %v1153 = vsel %vm44, %v1121, 0
  %1155 = vmatprep.subr.mxu0 0.0
  %1156 = vmatpush1.msra.mxu0 %v1125
  %1157 = vmatprep.subr.mxu0 0.0
  %1158 = vmatpush1.msra.mxu0 %v1126
  %1159 = vmatprep.subr.mxu0 0.0
  %1160 = vmatpush1.msra.mxu0 %v1127
  %1161 = vmatprep.subr.mxu0 0.0
  %1162 = vmatpush1.msra.mxu0 %v1128
  %1163 = vmatprep.subr.mxu0 0.0
  %1164 = vmatpush1.msra.mxu0 %v1129
  %1165 = vmatprep.subr.mxu0 0.0
  %1166 = vmatpush1.msra.mxu0 %v1130
  %1167 = vmatprep.subr.mxu0 0.0
  %1168 = vmatpush1.msra.mxu0 %v1131
  %1169 = vmatprep.subr.mxu0 0.0
  %1170 = vmatpush1.msra.mxu0 %v1132
  %1171 = vmatprep.subr.mxu0 0.0
  %1172 = vmatpush1.msra.mxu0 0.0
  %1173 = vmatprep.subr.mxu0 0.0
  %1174 = vmatpush1.msra.mxu0 0.0
  %1175 = vmatprep.subr.mxu0 0.0
  %1176 = vmatpush1.msra.mxu0 0.0
  %1177 = vmatprep.subr.mxu0 0.0
  %1178 = vmatpush1.msra.mxu0 0.0
  %1179 = vmatprep.subr.mxu0 0.0
  %1180 = vmatpush1.msra.mxu0 0.0
  %1181 = vmatprep.subr.mxu0 0.0
  %1182 = vmatpush1.msra.mxu0 0.0
  %1183 = vmatprep.subr.mxu0 0.0
  %1184 = vmatpush1.msra.mxu0 0.0
  %1185 = vmatprep.subr.mxu0 0.0
  %1186 = vmatpush1.msra.mxu0 0.0
  %1187 = vmatprep.subr.mxu0 0.0
  %1188 = vmatpush1.msra.mxu0 0.0
  %1189 = vmatprep.subr.mxu0 0.0
  %1190 = vmatpush1.msra.mxu0 0.0
  %1191 = vmatprep.subr.mxu0 0.0
  %1192 = vmatpush1.msra.mxu0 0.0
  %1193 = vmatprep.subr.mxu0 0.0
  %1194 = vmatpush1.msra.mxu0 0.0
  %1195 = vmatprep.subr.mxu0 0.0
  %1196 = vmatpush1.msra.mxu0 0.0
  %1197 = vmatprep.subr.mxu0 0.0
  %1198 = vmatpush1.msra.mxu0 0.0
  %1199 = vmatprep.subr.mxu0 0.0
  %1200 = vmatpush1.msra.mxu0 0.0
  %1201 = vmatprep.subr.mxu0 0.0
  %1202 = vmatpush1.msra.mxu0 0.0
  %1203 = vmatprep.subr.mxu0 0.0
  %1204 = vmatpush1.msra.mxu0 0.0
  %1205 = vmatprep.subr.mxu0 0.0
  %1206 = vmatpush1.msra.mxu0 0.0
  %1207 = vmatprep.subr.mxu0 0.0
  %1208 = vmatpush1.msra.mxu0 0.0
  %1209 = vmatprep.subr.mxu0 0.0
  %1210 = vmatpush1.msra.mxu0 0.0
  %1211 = vmatprep.subr.mxu0 0.0
  %1212 = vmatpush1.msra.mxu0 0.0
  %1213 = vmatprep.subr.mxu0 0.0
  %1214 = vmatpush1.msra.mxu0 0.0
  %1215 = vmatprep.subr.mxu0 0.0
  %1216 = vmatpush1.msra.mxu0 0.0
  %1217 = vmatprep.subr.mxu0 0.0
  %1218 = vmatpush1.msra.mxu0 0.0
  %1219 = vmatprep.mubr.f32.mxu0 0.0
  %1220 = vmatmul.mubr.f32.gmra.mrb[0].mxu0 %v1138
  %v1221 = vpop.f32.mrb[0].mxu0
  %v1222 = vadd.f32 %v1136, %v1221
  %v1223 = vpop.f32.mrb[0].mxu0
  %1224 = vmatprep.mubr.f32.mxu0 0.0
  %1225 = vmatmul.mubr.f32.gmra.mrb[0].mxu0 %v1141
  %v1226 = vpop.f32.mrb[0].mxu0
  %v1227 = vadd.f32 %v1136, %v1226
  %v1228 = vpop.f32.mrb[0].mxu0
  %1229 = vmatprep.mubr.f32.mxu0 0.0
  %1230 = vmatmul.mubr.f32.gmra.mrb[0].mxu0 %v1144
  %v1231 = vpop.f32.mrb[0].mxu0
  %v1232 = vadd.f32 %v1136, %v1231
  %v1233 = vpop.f32.mrb[0].mxu0
  %1234 = vmatprep.mubr.f32.mxu0 0.0
  %1235 = vmatmul.mubr.f32.gmra.mrb[0].mxu0 %v1147
  %v1236 = vpop.f32.mrb[0].mxu0
  %v1237 = vadd.f32 %v1136, %v1236
  %v1238 = vpop.f32.mrb[0].mxu0
  %1239 = vmatprep.mubr.f32.mxu0 0.0
  %1240 = vmatmul.mubr.f32.gmra.mrb[0].mxu0 %v1150
  %v1241 = vpop.f32.mrb[0].mxu0
  %v1242 = vadd.f32 %v1136, %v1241
  %v1243 = vpop.f32.mrb[0].mxu0
  %1244 = vmatprep.mubr.f32.mxu0 0.0
  %1245 = vmatmul.mubr.f32.gmra.mrb[0].mxu0 %v1153
  %v1246 = vpop.f32.mrb[0].mxu0
  %v1247 = vadd.f32 %v1136, %v1246
  %v1248 = vpop.f32.mrb[0].mxu0
  %1249 = vdwg.mxu0
  %v1250 = vadd.f32 %v38, %v1222
  %v1251 = vadd.f32 %v39, %v1227
  %v1252 = vadd.f32 %v40, %v1232
  %v1253 = vadd.f32 %v41, %v1237
  %v1254 = vadd.f32 %v42, %v1242
  %v1255 = vadd.f32 %v43, %v1247
  %v1256 = vsel %vm44, %v1250, 0.0
  %1257 = vadd.xlane.f32.xlu0 %v1256
  %v1258 = vpop.xlane.xlu0 %1257
  %v1259 = vsel %vm44, %v1251, 0.0
  %1260 = vadd.xlane.f32.xlu0 %v1259
  %v1261 = vpop.xlane.xlu0 %1260
  %v1262 = vsel %vm44, %v1252, 0.0
  %1263 = vadd.xlane.f32.xlu0 %v1262
  %v1264 = vpop.xlane.xlu0 %1263
  %v1265 = vsel %vm44, %v1253, 0.0
  %1266 = vadd.xlane.f32.xlu0 %v1265
  %v1267 = vpop.xlane.xlu0 %1266
  %v1268 = vsel %vm44, %v1254, 0.0
  %1269 = vadd.xlane.f32.xlu0 %v1268
  %v1270 = vpop.xlane.xlu0 %1269
  %v1271 = vsel %vm44, %v1255, 0.0
  %1272 = vadd.xlane.f32.xlu0 %v1271
  %v1273 = vpop.xlane.xlu0 %1272
  %v1274 = vmul.f32 %v1258, %v63
  %v1275 = vmul.f32 %v1261, %v63
  %v1276 = vmul.f32 %v1264, %v63
  %v1277 = vmul.f32 %v1267, %v63
  %v1278 = vmul.f32 %v1270, %v63
  %v1279 = vmul.f32 %v1273, %v63
  %v1280 = vsub.f32 %v1250, %v1274
  %v1281 = vsub.f32 %v1251, %v1275
  %v1282 = vsub.f32 %v1252, %v1276
  %v1283 = vsub.f32 %v1253, %v1277
  %v1284 = vsub.f32 %v1254, %v1278
  %v1285 = vsub.f32 %v1255, %v1279
  %v1286 = vmul.f32 %v1280, %v1280
  %v1287 = vmul.f32 %v1281, %v1281
  %v1288 = vmul.f32 %v1282, %v1282
  %v1289 = vmul.f32 %v1283, %v1283
  %v1290 = vmul.f32 %v1284, %v1284
  %v1291 = vmul.f32 %v1285, %v1285
  %v1292 = vsel %vm44, %v1286, 0.0
  %1293 = vadd.xlane.f32.xlu0 %v1292
  %v1294 = vpop.xlane.xlu0 %1293
  %v1295 = vsel %vm44, %v1287, 0.0
  %1296 = vadd.xlane.f32.xlu0 %v1295
  %v1297 = vpop.xlane.xlu0 %1296
  %v1298 = vsel %vm44, %v1288, 0.0
  %1299 = vadd.xlane.f32.xlu0 %v1298
  %v1300 = vpop.xlane.xlu0 %1299
  %v1301 = vsel %vm44, %v1289, 0.0
  %1302 = vadd.xlane.f32.xlu0 %v1301
  %v1303 = vpop.xlane.xlu0 %1302
  %v1304 = vsel %vm44, %v1290, 0.0
  %1305 = vadd.xlane.f32.xlu0 %v1304
  %v1306 = vpop.xlane.xlu0 %1305
  %v1307 = vsel %vm44, %v1291, 0.0
  %1308 = vadd.xlane.f32.xlu0 %v1307
  %v1309 = vpop.xlane.xlu0 %1308
  %v1310 = vmul.f32 %v1294, %v63
  %v1311 = vmul.f32 %v1297, %v63
  %v1312 = vmul.f32 %v1300, %v63
  %v1313 = vmul.f32 %v1303, %v63
  %v1314 = vmul.f32 %v1306, %v63
  %v1315 = vmul.f32 %v1309, %v63
  %v1316 = vadd.f32 %v1310, 1e-05
  %v1317 = vadd.f32 %v1311, 1e-05
  %v1318 = vadd.f32 %v1312, 1e-05
  %v1319 = vadd.f32 %v1313, 1e-05
  %v1320 = vadd.f32 %v1314, 1e-05
  %v1321 = vadd.f32 %v1315, 1e-05
  %v1322 = vrsqrt.pop %v1316
  %v1323 = vrsqrt.pop %v1317
  %v1324 = vrsqrt.pop %v1318
  %v1325 = vrsqrt.pop %v1319
  %v1326 = vrsqrt.pop %v1320
  %v1327 = vrsqrt.pop %v1321
  %v1328 = vmul.f32 %v1280, %v1322
  %v1329 = vmul.f32 %v1281, %v1323
  %v1330 = vmul.f32 %v1282, %v1324
  %v1331 = vmul.f32 %v1283, %v1325
  %v1332 = vmul.f32 %v1284, %v1326
  %v1333 = vmul.f32 %v1285, %v1327
  %v1334 = vlaneseq
  %v1335 = vshrl.u32 %v1334, 7
  %v1336 = vsub.s32 0, %v1335
  %v1337 = vrot.slane %v30, %v1336
  %v1338 = vmul.f32 %v1328, %v1337
  %v1339 = vmul.f32 %v1329, %v1337
  %v1340 = vmul.f32 %v1330, %v1337
  %v1341 = vmul.f32 %v1331, %v1337
  %v1342 = vmul.f32 %v1332, %v1337
  %v1343 = vmul.f32 %v1333, %v1337
  %v1344 = vlaneseq
  %v1345 = vshrl.u32 %v1344, 7
  %v1346 = vsub.s32 1, %v1345
  %v1347 = vrot.slane %v30, %v1346
  %v1348 = vadd.f32 %v1338, %v1347
  %v1349 = vadd.f32 %v1339, %v1347
  %v1350 = vadd.f32 %v1340, %v1347
  %v1351 = vadd.f32 %v1341, %v1347
  %v1352 = vadd.f32 %v1342, %v1347
  %v1353 = vadd.f32 %v1343, %v1347
  %v1354 = vld [vmem:[%s3] sm:$0xff]
  %v1355 = vld [vmem:[%s3 + $0x8] sm:$0xff]
  %v1356 = vld [vmem:[%s3 + $0x10] sm:$0xff]
  %v1357 = vld [vmem:[%s3 + $0x18] sm:$0xff]
  %v1358 = vld [vmem:[%s3 + $0x20] sm:$0xff]
  %v1359 = vld [vmem:[%s3 + $0x28] sm:$0xff]
  %v1360 = vld [vmem:[%s3 + $0x30] sm:$0xff]
  %v1361 = vld [vmem:[%s3 + $0x38] sm:$0xff]
  %v1362 = vld [vmem:[%s3 + $0x40] sm:$0xff]
  %v1363 = vld [vmem:[%s3 + $0x48] sm:$0xff]
  %v1364 = vld [vmem:[%s3 + $0x50] sm:$0xff]
  %v1365 = vld [vmem:[%s3 + $0x58] sm:$0xff]
  %v1366 = vld [vmem:[%s3 + $0x60] sm:$0xff]
  %v1367 = vld [vmem:[%s3 + $0x68] sm:$0xff]
  %v1368 = vld [vmem:[%s3 + $0x70] sm:$0xff]
  %v1369 = vld [vmem:[%s3 + $0x78] sm:$0xff]
  %v1370 = vld [vmem:[%s5] sm:$0x3]
  %v1372 = vlaneseq
  %v1373 = vshrl.u32 %v1372, 7
  %v1374 = vsub.s32 0, %v1373
  %v1375 = vrot.slane %v1370, %v1374
  %v1376 = vlaneseq
  %v1377 = vshrl.u32 %v1376, 7
  %v1378 = vsub.s32 1, %v1377
  %v1379 = vrot.slane %v1370, %v1378
  %v1383 = vsel %vm44, %v1348, 0
  %v1386 = vsel %vm44, %v1349, 0
  %v1389 = vsel %vm44, %v1350, 0
  %v1392 = vsel %vm44, %v1351, 0
  %v1395 = vsel %vm44, %v1352, 0
  %v1398 = vsel %vm44, %v1353, 0
  %1400 = vmatprep.subr.mxu0 %v1355
  %1401 = vmatpush1.msra.mxu0 %v1354
  %1402 = vmatprep.subr.mxu0 %v1357
  %1403 = vmatpush1.msra.mxu0 %v1356
  %1404 = vmatprep.subr.mxu0 %v1359
  %1405 = vmatpush1.msra.mxu0 %v1358
  %1406 = vmatprep.subr.mxu0 %v1361
  %1407 = vmatpush1.msra.mxu0 %v1360
  %1408 = vmatprep.subr.mxu0 %v1363
  %1409 = vmatpush1.msra.mxu0 %v1362
  %1410 = vmatprep.subr.mxu0 %v1365
  %1411 = vmatpush1.msra.mxu0 %v1364
  %1412 = vmatprep.subr.mxu0 %v1367
  %1413 = vmatpush1.msra.mxu0 %v1366
  %1414 = vmatprep.subr.mxu0 %v1369
  %1415 = vmatpush1.msra.mxu0 %v1368
  %1416 = vmatprep.subr.mxu0 0.0
  %1417 = vmatpush1.msra.mxu0 0.0
  %1418 = vmatprep.subr.mxu0 0.0
  %1419 = vmatpush1.msra.mxu0 0.0
  %1420 = vmatprep.subr.mxu0 0.0
  %1421 = vmatpush1.msra.mxu0 0.0
  %1422 = vmatprep.subr.mxu0 0.0
  %1423 = vmatpush1.msra.mxu0 0.0
  %1424 = vmatprep.subr.mxu0 0.0
  %1425 = vmatpush1.msra.mxu0 0.0
  %1426 = vmatprep.subr.mxu0 0.0
  %1427 = vmatpush1.msra.mxu0 0.0
  %1428 = vmatprep.subr.mxu0 0.0
  %1429 = vmatpush1.msra.mxu0 0.0
  %1430 = vmatprep.subr.mxu0 0.0
  %1431 = vmatpush1.msra.mxu0 0.0
  %1432 = vmatprep.subr.mxu0 0.0
  %1433 = vmatpush1.msra.mxu0 0.0
  %1434 = vmatprep.subr.mxu0 0.0
  %1435 = vmatpush1.msra.mxu0 0.0
  %1436 = vmatprep.subr.mxu0 0.0
  %1437 = vmatpush1.msra.mxu0 0.0
  %1438 = vmatprep.subr.mxu0 0.0
  %1439 = vmatpush1.msra.mxu0 0.0
  %1440 = vmatprep.subr.mxu0 0.0
  %1441 = vmatpush1.msra.mxu0 0.0
  %1442 = vmatprep.subr.mxu0 0.0
  %1443 = vmatpush1.msra.mxu0 0.0
  %1444 = vmatprep.subr.mxu0 0.0
  %1445 = vmatpush1.msra.mxu0 0.0
  %1446 = vmatprep.subr.mxu0 0.0
  %1447 = vmatpush1.msra.mxu0 0.0
  %1448 = vmatprep.subr.mxu0 0.0
  %1449 = vmatpush1.msra.mxu0 0.0
  %1450 = vmatprep.subr.mxu0 0.0
  %1451 = vmatpush1.msra.mxu0 0.0
  %1452 = vmatprep.subr.mxu0 0.0
  %1453 = vmatpush1.msra.mxu0 0.0
  %1454 = vmatprep.subr.mxu0 0.0
  %1455 = vmatpush1.msra.mxu0 0.0
  %1456 = vmatprep.subr.mxu0 0.0
  %1457 = vmatpush1.msra.mxu0 0.0
  %1458 = vmatprep.subr.mxu0 0.0
  %1459 = vmatpush1.msra.mxu0 0.0
  %1460 = vmatprep.subr.mxu0 0.0
  %1461 = vmatpush1.msra.mxu0 0.0
  %1462 = vmatprep.subr.mxu0 0.0
  %1463 = vmatpush1.msra.mxu0 0.0
  %1464 = vmatprep.mubr.f32.mxu0 0.0
  %1465 = vmatmul.mubr.f32.gmra.mrb[0].mxu0 %v1383
  %v1466 = vpop.f32.mrb[0].mxu0
  %v1467 = vadd.f32 %v1375, %v1466
  %v1468 = vpop.f32.mrb[0].mxu0
  %v1469 = vadd.f32 %v1379, %v1468
  %1470 = vmatprep.mubr.f32.mxu0 0.0
  %1471 = vmatmul.mubr.f32.gmra.mrb[0].mxu0 %v1386
  %v1472 = vpop.f32.mrb[0].mxu0
  %v1473 = vadd.f32 %v1375, %v1472
  %v1474 = vpop.f32.mrb[0].mxu0
  %v1475 = vadd.f32 %v1379, %v1474
  %1476 = vmatprep.mubr.f32.mxu0 0.0
  %1477 = vmatmul.mubr.f32.gmra.mrb[0].mxu0 %v1389
  %v1478 = vpop.f32.mrb[0].mxu0
  %v1479 = vadd.f32 %v1375, %v1478
  %v1480 = vpop.f32.mrb[0].mxu0
  %v1481 = vadd.f32 %v1379, %v1480
  %1482 = vmatprep.mubr.f32.mxu0 0.0
  %1483 = vmatmul.mubr.f32.gmra.mrb[0].mxu0 %v1392
  %v1484 = vpop.f32.mrb[0].mxu0
  %v1485 = vadd.f32 %v1375, %v1484
  %v1486 = vpop.f32.mrb[0].mxu0
  %v1487 = vadd.f32 %v1379, %v1486
  %1488 = vmatprep.mubr.f32.mxu0 0.0
  %1489 = vmatmul.mubr.f32.gmra.mrb[0].mxu0 %v1395
  %v1490 = vpop.f32.mrb[0].mxu0
  %v1491 = vadd.f32 %v1375, %v1490
  %v1492 = vpop.f32.mrb[0].mxu0
  %v1493 = vadd.f32 %v1379, %v1492
  %1494 = vmatprep.mubr.f32.mxu0 0.0
  %1495 = vmatmul.mubr.f32.gmra.mrb[0].mxu0 %v1398
  %v1496 = vpop.f32.mrb[0].mxu0
  %v1497 = vadd.f32 %v1375, %v1496
  %v1498 = vpop.f32.mrb[0].mxu0
  %v1499 = vadd.f32 %v1379, %v1498
  %1500 = vdwg.mxu0
  %v1501 = vmul.f32 %v1467, 0.5
  %v1502 = vmul.f32 %v1469, 0.5
  %v1503 = vmul.f32 %v1473, 0.5
  %v1504 = vmul.f32 %v1475, 0.5
  %v1505 = vmul.f32 %v1479, 0.5
  %v1506 = vmul.f32 %v1481, 0.5
  %v1507 = vmul.f32 %v1485, 0.5
  %v1508 = vmul.f32 %v1487, 0.5
  %v1509 = vmul.f32 %v1491, 0.5
  %v1510 = vmul.f32 %v1493, 0.5
  %v1511 = vmul.f32 %v1497, 0.5
  %v1512 = vmul.f32 %v1499, 0.5
  %v1513 = vmul.f32 %v1467, 0.044715
  %v1514 = vmul.f32 %v1469, 0.044715
  %v1515 = vmul.f32 %v1473, 0.044715
  %v1516 = vmul.f32 %v1475, 0.044715
  %v1517 = vmul.f32 %v1479, 0.044715
  %v1518 = vmul.f32 %v1481, 0.044715
  %v1519 = vmul.f32 %v1485, 0.044715
  %v1520 = vmul.f32 %v1487, 0.044715
  %v1521 = vmul.f32 %v1491, 0.044715
  %v1522 = vmul.f32 %v1493, 0.044715
  %v1523 = vmul.f32 %v1497, 0.044715
  %v1524 = vmul.f32 %v1499, 0.044715
  %v1525 = vmul.f32 %v1513, %v1467
  %v1526 = vmul.f32 %v1514, %v1469
  %v1527 = vmul.f32 %v1515, %v1473
  %v1528 = vmul.f32 %v1516, %v1475
  %v1529 = vmul.f32 %v1517, %v1479
  %v1530 = vmul.f32 %v1518, %v1481
  %v1531 = vmul.f32 %v1519, %v1485
  %v1532 = vmul.f32 %v1520, %v1487
  %v1533 = vmul.f32 %v1521, %v1491
  %v1534 = vmul.f32 %v1522, %v1493
  %v1535 = vmul.f32 %v1523, %v1497
  %v1536 = vmul.f32 %v1524, %v1499
  %v1537 = vmul.f32 %v1525, %v1467
  %v1538 = vmul.f32 %v1526, %v1469
  %v1539 = vmul.f32 %v1527, %v1473
  %v1540 = vmul.f32 %v1528, %v1475
  %v1541 = vmul.f32 %v1529, %v1479
  %v1542 = vmul.f32 %v1530, %v1481
  %v1543 = vmul.f32 %v1531, %v1485
  %v1544 = vmul.f32 %v1532, %v1487
  %v1545 = vmul.f32 %v1533, %v1491
  %v1546 = vmul.f32 %v1534, %v1493
  %v1547 = vmul.f32 %v1535, %v1497
  %v1548 = vmul.f32 %v1536, %v1499
  %v1549 = vadd.f32 %v1467, %v1537
  %v1550 = vadd.f32 %v1469, %v1538
  %v1551 = vadd.f32 %v1473, %v1539
  %v1552 = vadd.f32 %v1475, %v1540
  %v1553 = vadd.f32 %v1479, %v1541
  %v1554 = vadd.f32 %v1481, %v1542
  %v1555 = vadd.f32 %v1485, %v1543
  %v1556 = vadd.f32 %v1487, %v1544
  %v1557 = vadd.f32 %v1491, %v1545
  %v1558 = vadd.f32 %v1493, %v1546
  %v1559 = vadd.f32 %v1497, %v1547
  %v1560 = vadd.f32 %v1499, %v1548
  %v1561 = vmul.f32 %v1549, 0.7978846
  %v1562 = vmul.f32 %v1550, 0.7978846
  %v1563 = vmul.f32 %v1551, 0.7978846
  %v1564 = vmul.f32 %v1552, 0.7978846
  %v1565 = vmul.f32 %v1553, 0.7978846
  %v1566 = vmul.f32 %v1554, 0.7978846
  %v1567 = vmul.f32 %v1555, 0.7978846
  %v1568 = vmul.f32 %v1556, 0.7978846
  %v1569 = vmul.f32 %v1557, 0.7978846
  %v1570 = vmul.f32 %v1558, 0.7978846
  %v1571 = vmul.f32 %v1559, 0.7978846
  %v1572 = vmul.f32 %v1560, 0.7978846
  %v1573 = vtanh.pop %v1561
  %v1574 = vtanh.pop %v1562
  %v1575 = vtanh.pop %v1563
  %v1576 = vtanh.pop %v1564
  %v1577 = vtanh.pop %v1565
  %v1578 = vtanh.pop %v1566
  %v1579 = vtanh.pop %v1567
  %v1580 = vtanh.pop %v1568
  %v1581 = vtanh.pop %v1569
  %v1582 = vtanh.pop %v1570
  %v1583 = vtanh.pop %v1571
  %v1584 = vtanh.pop %v1572
  %v1585 = vadd.f32 %v1573, 1.0
  %v1586 = vadd.f32 %v1574, 1.0
  %v1587 = vadd.f32 %v1575, 1.0
  %v1588 = vadd.f32 %v1576, 1.0
  %v1589 = vadd.f32 %v1577, 1.0
  %v1590 = vadd.f32 %v1578, 1.0
  %v1591 = vadd.f32 %v1579, 1.0
  %v1592 = vadd.f32 %v1580, 1.0
  %v1593 = vadd.f32 %v1581, 1.0
  %v1594 = vadd.f32 %v1582, 1.0
  %v1595 = vadd.f32 %v1583, 1.0
  %v1596 = vadd.f32 %v1584, 1.0
  %v1597 = vmul.f32 %v1501, %v1585
  %v1598 = vmul.f32 %v1502, %v1586
  %v1599 = vmul.f32 %v1503, %v1587
  %v1600 = vmul.f32 %v1504, %v1588
  %v1601 = vmul.f32 %v1505, %v1589
  %v1602 = vmul.f32 %v1506, %v1590
  %v1603 = vmul.f32 %v1507, %v1591
  %v1604 = vmul.f32 %v1508, %v1592
  %v1605 = vmul.f32 %v1509, %v1593
  %v1606 = vmul.f32 %v1510, %v1594
  %v1607 = vmul.f32 %v1511, %v1595
  %v1608 = vmul.f32 %v1512, %v1596
  %v1609 = vld [vmem:[%s4] sm:$0xff]
  %v1610 = vld [vmem:[%s4 + $0x8] sm:$0xff]
  %v1611 = vld [vmem:[%s4 + $0x10] sm:$0xff]
  %v1612 = vld [vmem:[%s4 + $0x18] sm:$0xff]
  %v1613 = vld [vmem:[%s4 + $0x20] sm:$0xff]
  %v1614 = vld [vmem:[%s4 + $0x28] sm:$0xff]
  %v1615 = vld [vmem:[%s4 + $0x30] sm:$0xff]
  %v1616 = vld [vmem:[%s4 + $0x38] sm:$0xff]
  %v1617 = vld [vmem:[%s4 + $0x40] sm:$0xff]
  %v1618 = vld [vmem:[%s4 + $0x48] sm:$0xff]
  %v1619 = vld [vmem:[%s4 + $0x50] sm:$0xff]
  %v1620 = vld [vmem:[%s4 + $0x58] sm:$0xff]
  %v1621 = vld [vmem:[%s4 + $0x60] sm:$0xff]
  %v1622 = vld [vmem:[%s4 + $0x68] sm:$0xff]
  %v1623 = vld [vmem:[%s4 + $0x70] sm:$0xff]
  %v1624 = vld [vmem:[%s4 + $0x78] sm:$0xff]
  %v1625 = vld [vmem:[%s4 + $0x80] sm:$0xff]
  %v1626 = vld [vmem:[%s4 + $0x88] sm:$0xff]
  %v1627 = vld [vmem:[%s4 + $0x90] sm:$0xff]
  %v1628 = vld [vmem:[%s4 + $0x98] sm:$0xff]
  %v1629 = vld [vmem:[%s4 + $0xa0] sm:$0xff]
  %v1630 = vld [vmem:[%s4 + $0xa8] sm:$0xff]
  %v1631 = vld [vmem:[%s4 + $0xb0] sm:$0xff]
  %v1632 = vld [vmem:[%s4 + $0xb8] sm:$0xff]
  %v1633 = vld [vmem:[%s4 + $0xc0] sm:$0xff]
  %v1634 = vld [vmem:[%s4 + $0xc8] sm:$0xff]
  %v1635 = vld [vmem:[%s4 + $0xd0] sm:$0xff]
  %v1636 = vld [vmem:[%s4 + $0xd8] sm:$0xff]
  %v1637 = vld [vmem:[%s4 + $0xe0] sm:$0xff]
  %v1638 = vld [vmem:[%s4 + $0xe8] sm:$0xff]
  %v1639 = vld [vmem:[%s4 + $0xf0] sm:$0xff]
  %v1640 = vld [vmem:[%s4 + $0xf8] sm:$0xff]
  %v1641 = vlaneseq
  %v1642 = vshrl.u32 %v1641, 7
  %v1643 = vsub.s32 2, %v1642
  %v1644 = vrot.slane %v30, %v1643
  %1645 = vmatprep.subr.mxu0 0.0
  %1646 = vmatpush1.msra.mxu0 %v1609
  %1647 = vmatprep.subr.mxu0 0.0
  %1648 = vmatpush1.msra.mxu0 %v1610
  %1649 = vmatprep.subr.mxu0 0.0
  %1650 = vmatpush1.msra.mxu0 %v1611
  %1651 = vmatprep.subr.mxu0 0.0
  %1652 = vmatpush1.msra.mxu0 %v1612
  %1653 = vmatprep.subr.mxu0 0.0
  %1654 = vmatpush1.msra.mxu0 %v1613
  %1655 = vmatprep.subr.mxu0 0.0
  %1656 = vmatpush1.msra.mxu0 %v1614
  %1657 = vmatprep.subr.mxu0 0.0
  %1658 = vmatpush1.msra.mxu0 %v1615
  %1659 = vmatprep.subr.mxu0 0.0
  %1660 = vmatpush1.msra.mxu0 %v1616
  %1661 = vmatprep.subr.mxu0 0.0
  %1662 = vmatpush1.msra.mxu0 %v1617
  %1663 = vmatprep.subr.mxu0 0.0
  %1664 = vmatpush1.msra.mxu0 %v1618
  %1665 = vmatprep.subr.mxu0 0.0
  %1666 = vmatpush1.msra.mxu0 %v1619
  %1667 = vmatprep.subr.mxu0 0.0
  %1668 = vmatpush1.msra.mxu0 %v1620
  %1669 = vmatprep.subr.mxu0 0.0
  %1670 = vmatpush1.msra.mxu0 %v1621
  %1671 = vmatprep.subr.mxu0 0.0
  %1672 = vmatpush1.msra.mxu0 %v1622
  %1673 = vmatprep.subr.mxu0 0.0
  %1674 = vmatpush1.msra.mxu0 %v1623
  %1675 = vmatprep.subr.mxu0 0.0
  %1676 = vmatpush1.msra.mxu0 %v1624
  %1677 = vmatprep.subr.mxu0 0.0
  %1678 = vmatpush1.msra.mxu0 %v1625
  %1679 = vmatprep.subr.mxu0 0.0
  %1680 = vmatpush1.msra.mxu0 %v1626
  %1681 = vmatprep.subr.mxu0 0.0
  %1682 = vmatpush1.msra.mxu0 %v1627
  %1683 = vmatprep.subr.mxu0 0.0
  %1684 = vmatpush1.msra.mxu0 %v1628
  %1685 = vmatprep.subr.mxu0 0.0
  %1686 = vmatpush1.msra.mxu0 %v1629
  %1687 = vmatprep.subr.mxu0 0.0
  %1688 = vmatpush1.msra.mxu0 %v1630
  %1689 = vmatprep.subr.mxu0 0.0
  %1690 = vmatpush1.msra.mxu0 %v1631
  %1691 = vmatprep.subr.mxu0 0.0
  %1692 = vmatpush1.msra.mxu0 %v1632
  %1693 = vmatprep.subr.mxu0 0.0
  %1694 = vmatpush1.msra.mxu0 %v1633
  %1695 = vmatprep.subr.mxu0 0.0
  %1696 = vmatpush1.msra.mxu0 %v1634
  %1697 = vmatprep.subr.mxu0 0.0
  %1698 = vmatpush1.msra.mxu0 %v1635
  %1699 = vmatprep.subr.mxu0 0.0
  %1700 = vmatpush1.msra.mxu0 %v1636
  %1701 = vmatprep.subr.mxu0 0.0
  %1702 = vmatpush1.msra.mxu0 %v1637
  %1703 = vmatprep.subr.mxu0 0.0
  %1704 = vmatpush1.msra.mxu0 %v1638
  %1705 = vmatprep.subr.mxu0 0.0
  %1706 = vmatpush1.msra.mxu0 %v1639
  %1707 = vmatprep.subr.mxu0 0.0
  %1708 = vmatpush1.msra.mxu0 %v1640
  %1709 = vmatprep.mubr.f32.mxu0 %v1598
  %1710 = vmatmul.mubr.f32.gmra.mrb[0].mxu0 %v1597
  %v1711 = vpop.f32.mrb[0].mxu0
  %v1712 = vadd.f32 %v1644, %v1711
  %v1713 = vpop.f32.mrb[0].mxu0
  %1714 = vmatprep.mubr.f32.mxu0 %v1600
  %1715 = vmatmul.mubr.f32.gmra.mrb[0].mxu0 %v1599
  %v1716 = vpop.f32.mrb[0].mxu0
  %v1717 = vadd.f32 %v1644, %v1716
  %v1718 = vpop.f32.mrb[0].mxu0
  %1719 = vmatprep.mubr.f32.mxu0 %v1602
  %1720 = vmatmul.mubr.f32.gmra.mrb[0].mxu0 %v1601
  %v1721 = vpop.f32.mrb[0].mxu0
  %v1722 = vadd.f32 %v1644, %v1721
  %v1723 = vpop.f32.mrb[0].mxu0
  %1724 = vmatprep.mubr.f32.mxu0 %v1604
  %1725 = vmatmul.mubr.f32.gmra.mrb[0].mxu0 %v1603
  %v1726 = vpop.f32.mrb[0].mxu0
  %v1727 = vadd.f32 %v1644, %v1726
  %v1728 = vpop.f32.mrb[0].mxu0
  %1729 = vmatprep.mubr.f32.mxu0 %v1606
  %1730 = vmatmul.mubr.f32.gmra.mrb[0].mxu0 %v1605
  %v1731 = vpop.f32.mrb[0].mxu0
  %v1732 = vadd.f32 %v1644, %v1731
  %v1733 = vpop.f32.mrb[0].mxu0
  %1734 = vmatprep.mubr.f32.mxu0 %v1608
  %1735 = vmatmul.mubr.f32.gmra.mrb[0].mxu0 %v1607
  %v1736 = vpop.f32.mrb[0].mxu0
  %v1737 = vadd.f32 %v1644, %v1736
  %v1738 = vpop.f32.mrb[0].mxu0
  %1739 = vdwg.mxu0
  %v1740 = vadd.f32 %v1250, %v1712
  %v1741 = vadd.f32 %v1251, %v1717
  %v1742 = vadd.f32 %v1252, %v1722
  %v1743 = vadd.f32 %v1253, %v1727
  %v1744 = vadd.f32 %v1254, %v1732
  %v1745 = vadd.f32 %v1255, %v1737
  %v1746 = vsel %vm44, %v1740, 0.0
  %1747 = vadd.xlane.f32.xlu0 %v1746
  %v1748 = vpop.xlane.xlu0 %1747
  %v1749 = vsel %vm44, %v1741, 0.0
  %1750 = vadd.xlane.f32.xlu0 %v1749
  %v1751 = vpop.xlane.xlu0 %1750
  %v1752 = vsel %vm44, %v1742, 0.0
  %1753 = vadd.xlane.f32.xlu0 %v1752
  %v1754 = vpop.xlane.xlu0 %1753
  %v1755 = vsel %vm44, %v1743, 0.0
  %1756 = vadd.xlane.f32.xlu0 %v1755
  %v1757 = vpop.xlane.xlu0 %1756
  %v1758 = vsel %vm44, %v1744, 0.0
  %1759 = vadd.xlane.f32.xlu0 %v1758
  %v1760 = vpop.xlane.xlu0 %1759
  %v1761 = vsel %vm44, %v1745, 0.0
  %1762 = vadd.xlane.f32.xlu0 %v1761
  %v1763 = vpop.xlane.xlu0 %1762
  %v1764 = vmul.f32 %v1748, %v63
  %v1765 = vmul.f32 %v1751, %v63
  %v1766 = vmul.f32 %v1754, %v63
  %v1767 = vmul.f32 %v1757, %v63
  %v1768 = vmul.f32 %v1760, %v63
  %v1769 = vmul.f32 %v1763, %v63
  %v1770 = vsub.f32 %v1740, %v1764
  %v1771 = vsub.f32 %v1741, %v1765
  %v1772 = vsub.f32 %v1742, %v1766
  %v1773 = vsub.f32 %v1743, %v1767
  %v1774 = vsub.f32 %v1744, %v1768
  %v1775 = vsub.f32 %v1745, %v1769
  %v1776 = vmul.f32 %v1770, %v1770
  %v1777 = vmul.f32 %v1771, %v1771
  %v1778 = vmul.f32 %v1772, %v1772
  %v1779 = vmul.f32 %v1773, %v1773
  %v1780 = vmul.f32 %v1774, %v1774
  %v1781 = vmul.f32 %v1775, %v1775
  %v1782 = vsel %vm44, %v1776, 0.0
  %1783 = vadd.xlane.f32.xlu0 %v1782
  %v1784 = vpop.xlane.xlu0 %1783
  %v1785 = vsel %vm44, %v1777, 0.0
  %1786 = vadd.xlane.f32.xlu0 %v1785
  %v1787 = vpop.xlane.xlu0 %1786
  %v1788 = vsel %vm44, %v1778, 0.0
  %1789 = vadd.xlane.f32.xlu0 %v1788
  %v1790 = vpop.xlane.xlu0 %1789
  %v1791 = vsel %vm44, %v1779, 0.0
  %1792 = vadd.xlane.f32.xlu0 %v1791
  %v1793 = vpop.xlane.xlu0 %1792
  %v1794 = vsel %vm44, %v1780, 0.0
  %1795 = vadd.xlane.f32.xlu0 %v1794
  %v1796 = vpop.xlane.xlu0 %1795
  %v1797 = vsel %vm44, %v1781, 0.0
  %1798 = vadd.xlane.f32.xlu0 %v1797
  %v1799 = vpop.xlane.xlu0 %1798
  %v1800 = vmul.f32 %v1784, %v63
  %v1801 = vmul.f32 %v1787, %v63
  %v1802 = vmul.f32 %v1790, %v63
  %v1803 = vmul.f32 %v1793, %v63
  %v1804 = vmul.f32 %v1796, %v63
  %v1805 = vmul.f32 %v1799, %v63
  %v1806 = vadd.f32 %v1800, 1e-05
  %v1807 = vadd.f32 %v1801, 1e-05
  %v1808 = vadd.f32 %v1802, 1e-05
  %v1809 = vadd.f32 %v1803, 1e-05
  %v1810 = vadd.f32 %v1804, 1e-05
  %v1811 = vadd.f32 %v1805, 1e-05
  %v1812 = vrsqrt.pop %v1806
  %v1813 = vrsqrt.pop %v1807
  %v1814 = vrsqrt.pop %v1808
  %v1815 = vrsqrt.pop %v1809
  %v1816 = vrsqrt.pop %v1810
  %v1817 = vrsqrt.pop %v1811
  %v1818 = vmul.f32 %v1770, %v1812
  %v1819 = vmul.f32 %v1771, %v1813
  %v1820 = vmul.f32 %v1772, %v1814
  %v1821 = vmul.f32 %v1773, %v1815
  %v1822 = vmul.f32 %v1774, %v1816
  %v1823 = vmul.f32 %v1775, %v1817
  %v1824 = vlaneseq
  %v1825 = vshrl.u32 %v1824, 7
  %v1826 = vsub.s32 3, %v1825
  %v1827 = vrot.slane %v30, %v1826
  %v1828 = vmul.f32 %v1818, %v1827
  %v1829 = vmul.f32 %v1819, %v1827
  %v1830 = vmul.f32 %v1820, %v1827
  %v1831 = vmul.f32 %v1821, %v1827
  %v1832 = vmul.f32 %v1822, %v1827
  %v1833 = vmul.f32 %v1823, %v1827
  %v1834 = vlaneseq
  %v1835 = vshrl.u32 %v1834, 7
  %v1836 = vsub.s32 4, %v1835
  %v1837 = vrot.slane %v30, %v1836
  %v1838 = vadd.f32 %v1828, %v1837
  %v1839 = vadd.f32 %v1829, %v1837
  %v1840 = vadd.f32 %v1830, %v1837
  %v1841 = vadd.f32 %v1831, %v1837
  %v1842 = vadd.f32 %v1832, %v1837
  %v1843 = vadd.f32 %v1833, %v1837
  %s1844 = scalar_lea.vmem %s2, 256
  %v1845 = vld [vmem:[%s1844] sm:$0xff]
  %v1846 = vld [vmem:[%s1844 + $0x8] sm:$0xff]
  %v1847 = vld [vmem:[%s1844 + $0x10] sm:$0xff]
  %v1848 = vld [vmem:[%s1844 + $0x18] sm:$0xff]
  %v1849 = vld [vmem:[%s1844 + $0x20] sm:$0xff]
  %v1850 = vld [vmem:[%s1844 + $0x28] sm:$0xff]
  %v1851 = vld [vmem:[%s1844 + $0x30] sm:$0xff]
  %v1852 = vld [vmem:[%s1844 + $0x38] sm:$0xff]
  %v1853 = vlaneseq
  %v1854 = vshrl.u32 %v1853, 7
  %v1855 = vsub.s32 5, %v1854
  %v1856 = vrot.slane %v30, %v1855
  %v1858 = vsel %vm44, %v1838, 0
  %v1861 = vsel %vm44, %v1839, 0
  %v1864 = vsel %vm44, %v1840, 0
  %v1867 = vsel %vm44, %v1841, 0
  %v1870 = vsel %vm44, %v1842, 0
  %v1873 = vsel %vm44, %v1843, 0
  %1875 = vmatprep.subr.mxu0 0.0
  %1876 = vmatpush1.msra.mxu0 %v1845
  %1877 = vmatprep.subr.mxu0 0.0
  %1878 = vmatpush1.msra.mxu0 %v1846
  %1879 = vmatprep.subr.mxu0 0.0
  %1880 = vmatpush1.msra.mxu0 %v1847
  %1881 = vmatprep.subr.mxu0 0.0
  %1882 = vmatpush1.msra.mxu0 %v1848
  %1883 = vmatprep.subr.mxu0 0.0
  %1884 = vmatpush1.msra.mxu0 %v1849
  %1885 = vmatprep.subr.mxu0 0.0
  %1886 = vmatpush1.msra.mxu0 %v1850
  %1887 = vmatprep.subr.mxu0 0.0
  %1888 = vmatpush1.msra.mxu0 %v1851
  %1889 = vmatprep.subr.mxu0 0.0
  %1890 = vmatpush1.msra.mxu0 %v1852
  %1891 = vmatprep.subr.mxu0 0.0
  %1892 = vmatpush1.msra.mxu0 0.0
  %1893 = vmatprep.subr.mxu0 0.0
  %1894 = vmatpush1.msra.mxu0 0.0
  %1895 = vmatprep.subr.mxu0 0.0
  %1896 = vmatpush1.msra.mxu0 0.0
  %1897 = vmatprep.subr.mxu0 0.0
  %1898 = vmatpush1.msra.mxu0 0.0
  %1899 = vmatprep.subr.mxu0 0.0
  %1900 = vmatpush1.msra.mxu0 0.0
  %1901 = vmatprep.subr.mxu0 0.0
  %1902 = vmatpush1.msra.mxu0 0.0
  %1903 = vmatprep.subr.mxu0 0.0
  %1904 = vmatpush1.msra.mxu0 0.0
  %1905 = vmatprep.subr.mxu0 0.0
  %1906 = vmatpush1.msra.mxu0 0.0
  %1907 = vmatprep.subr.mxu0 0.0
  %1908 = vmatpush1.msra.mxu0 0.0
  %1909 = vmatprep.subr.mxu0 0.0
  %1910 = vmatpush1.msra.mxu0 0.0
  %1911 = vmatprep.subr.mxu0 0.0
  %1912 = vmatpush1.msra.mxu0 0.0
  %1913 = vmatprep.subr.mxu0 0.0
  %1914 = vmatpush1.msra.mxu0 0.0
  %1915 = vmatprep.subr.mxu0 0.0
  %1916 = vmatpush1.msra.mxu0 0.0
  %1917 = vmatprep.subr.mxu0 0.0
  %1918 = vmatpush1.msra.mxu0 0.0
  %1919 = vmatprep.subr.mxu0 0.0
  %1920 = vmatpush1.msra.mxu0 0.0
  %1921 = vmatprep.subr.mxu0 0.0
  %1922 = vmatpush1.msra.mxu0 0.0
  %1923 = vmatprep.subr.mxu0 0.0
  %1924 = vmatpush1.msra.mxu0 0.0
  %1925 = vmatprep.subr.mxu0 0.0
  %1926 = vmatpush1.msra.mxu0 0.0
  %1927 = vmatprep.subr.mxu0 0.0
  %1928 = vmatpush1.msra.mxu0 0.0
  %1929 = vmatprep.subr.mxu0 0.0
  %1930 = vmatpush1.msra.mxu0 0.0
  %1931 = vmatprep.subr.mxu0 0.0
  %1932 = vmatpush1.msra.mxu0 0.0
  %1933 = vmatprep.subr.mxu0 0.0
  %1934 = vmatpush1.msra.mxu0 0.0
  %1935 = vmatprep.subr.mxu0 0.0
  %1936 = vmatpush1.msra.mxu0 0.0
  %1937 = vmatprep.subr.mxu0 0.0
  %1938 = vmatpush1.msra.mxu0 0.0
  %1939 = vmatprep.mubr.f32.mxu0 0.0
  %1940 = vmatmul.mubr.f32.gmra.mrb[0].mxu0 %v1858
  %v1941 = vpop.f32.mrb[0].mxu0
  %v1942 = vadd.f32 %v1856, %v1941
  %v1943 = vpop.f32.mrb[0].mxu0
  %1944 = vmatprep.mubr.f32.mxu0 0.0
  %1945 = vmatmul.mubr.f32.gmra.mrb[0].mxu0 %v1861
  %v1946 = vpop.f32.mrb[0].mxu0
  %v1947 = vadd.f32 %v1856, %v1946
  %v1948 = vpop.f32.mrb[0].mxu0
  %1949 = vmatprep.mubr.f32.mxu0 0.0
  %1950 = vmatmul.mubr.f32.gmra.mrb[0].mxu0 %v1864
  %v1951 = vpop.f32.mrb[0].mxu0
  %v1952 = vadd.f32 %v1856, %v1951
  %v1953 = vpop.f32.mrb[0].mxu0
  %1954 = vmatprep.mubr.f32.mxu0 0.0
  %1955 = vmatmul.mubr.f32.gmra.mrb[0].mxu0 %v1867
  %v1956 = vpop.f32.mrb[0].mxu0
  %v1957 = vadd.f32 %v1856, %v1956
  %v1958 = vpop.f32.mrb[0].mxu0
  %1959 = vmatprep.mubr.f32.mxu0 0.0
  %1960 = vmatmul.mubr.f32.gmra.mrb[0].mxu0 %v1870
  %v1961 = vpop.f32.mrb[0].mxu0
  %v1962 = vadd.f32 %v1856, %v1961
  %v1963 = vpop.f32.mrb[0].mxu0
  %1964 = vmatprep.mubr.f32.mxu0 0.0
  %1965 = vmatmul.mubr.f32.gmra.mrb[0].mxu0 %v1873
  %v1966 = vpop.f32.mrb[0].mxu0
  %v1967 = vadd.f32 %v1856, %v1966
  %v1968 = vpop.f32.mrb[0].mxu0
  %1969 = vdwg.mxu0
  %s1970 = scalar_lea.vmem %s2, 320
  %v1971 = vld [vmem:[%s1970] sm:$0xff]
  %v1972 = vld [vmem:[%s1970 + $0x8] sm:$0xff]
  %v1973 = vld [vmem:[%s1970 + $0x10] sm:$0xff]
  %v1974 = vld [vmem:[%s1970 + $0x18] sm:$0xff]
  %v1975 = vld [vmem:[%s1970 + $0x20] sm:$0xff]
  %v1976 = vld [vmem:[%s1970 + $0x28] sm:$0xff]
  %v1977 = vld [vmem:[%s1970 + $0x30] sm:$0xff]
  %v1978 = vld [vmem:[%s1970 + $0x38] sm:$0xff]
  %v1979 = vlaneseq
  %v1980 = vshrl.u32 %v1979, 7
  %v1981 = vsub.s32 6, %v1980
  %v1982 = vrot.slane %v30, %v1981
  %1983 = vmatprep.subr.mxu0 0.0
  %1984 = vmatpush1.msra.mxu0 %v1971
  %1985 = vmatprep.subr.mxu0 0.0
  %1986 = vmatpush1.msra.mxu0 %v1972
  %1987 = vmatprep.subr.mxu0 0.0
  %1988 = vmatpush1.msra.mxu0 %v1973
  %1989 = vmatprep.subr.mxu0 0.0
  %1990 = vmatpush1.msra.mxu0 %v1974
  %1991 = vmatprep.subr.mxu0 0.0
  %1992 = vmatpush1.msra.mxu0 %v1975
  %1993 = vmatprep.subr.mxu0 0.0
  %1994 = vmatpush1.msra.mxu0 %v1976
  %1995 = vmatprep.subr.mxu0 0.0
  %1996 = vmatpush1.msra.mxu0 %v1977
  %1997 = vmatprep.subr.mxu0 0.0
  %1998 = vmatpush1.msra.mxu0 %v1978
  %1999 = vmatprep.subr.mxu0 0.0
  %2000 = vmatpush1.msra.mxu0 0.0
  %2001 = vmatprep.subr.mxu0 0.0
  %2002 = vmatpush1.msra.mxu0 0.0
  %2003 = vmatprep.subr.mxu0 0.0
  %2004 = vmatpush1.msra.mxu0 0.0
  %2005 = vmatprep.subr.mxu0 0.0
  %2006 = vmatpush1.msra.mxu0 0.0
  %2007 = vmatprep.subr.mxu0 0.0
  %2008 = vmatpush1.msra.mxu0 0.0
  %2009 = vmatprep.subr.mxu0 0.0
  %2010 = vmatpush1.msra.mxu0 0.0
  %2011 = vmatprep.subr.mxu0 0.0
  %2012 = vmatpush1.msra.mxu0 0.0
  %2013 = vmatprep.subr.mxu0 0.0
  %2014 = vmatpush1.msra.mxu0 0.0
  %2015 = vmatprep.subr.mxu0 0.0
  %2016 = vmatpush1.msra.mxu0 0.0
  %2017 = vmatprep.subr.mxu0 0.0
  %2018 = vmatpush1.msra.mxu0 0.0
  %2019 = vmatprep.subr.mxu0 0.0
  %2020 = vmatpush1.msra.mxu0 0.0
  %2021 = vmatprep.subr.mxu0 0.0
  %2022 = vmatpush1.msra.mxu0 0.0
  %2023 = vmatprep.subr.mxu0 0.0
  %2024 = vmatpush1.msra.mxu0 0.0
  %2025 = vmatprep.subr.mxu0 0.0
  %2026 = vmatpush1.msra.mxu0 0.0
  %2027 = vmatprep.subr.mxu0 0.0
  %2028 = vmatpush1.msra.mxu0 0.0
  %2029 = vmatprep.subr.mxu0 0.0
  %2030 = vmatpush1.msra.mxu0 0.0
  %2031 = vmatprep.subr.mxu0 0.0
  %2032 = vmatpush1.msra.mxu0 0.0
  %2033 = vmatprep.subr.mxu0 0.0
  %2034 = vmatpush1.msra.mxu0 0.0
  %2035 = vmatprep.subr.mxu0 0.0
  %2036 = vmatpush1.msra.mxu0 0.0
  %2037 = vmatprep.subr.mxu0 0.0
  %2038 = vmatpush1.msra.mxu0 0.0
  %2039 = vmatprep.subr.mxu0 0.0
  %2040 = vmatpush1.msra.mxu0 0.0
  %2041 = vmatprep.subr.mxu0 0.0
  %2042 = vmatpush1.msra.mxu0 0.0
  %2043 = vmatprep.subr.mxu0 0.0
  %2044 = vmatpush1.msra.mxu0 0.0
  %2045 = vmatprep.subr.mxu0 0.0
  %2046 = vmatpush1.msra.mxu0 0.0
  %2047 = vmatprep.mubr.f32.mxu0 0.0
  %2048 = vmatmul.mubr.f32.gmra.mrb[0].mxu0 %v1858
  %v2049 = vpop.f32.mrb[0].mxu0
  %v2050 = vadd.f32 %v1982, %v2049
  %v2051 = vpop.f32.mrb[0].mxu0
  %2052 = vmatprep.mubr.f32.mxu0 0.0
  %2053 = vmatmul.mubr.f32.gmra.mrb[0].mxu0 %v1861
  %v2054 = vpop.f32.mrb[0].mxu0
  %v2055 = vadd.f32 %v1982, %v2054
  %v2056 = vpop.f32.mrb[0].mxu0
  %2057 = vmatprep.mubr.f32.mxu0 0.0
  %2058 = vmatmul.mubr.f32.gmra.mrb[0].mxu0 %v1864
  %v2059 = vpop.f32.mrb[0].mxu0
  %v2060 = vadd.f32 %v1982, %v2059
  %v2061 = vpop.f32.mrb[0].mxu0
  %2062 = vmatprep.mubr.f32.mxu0 0.0
  %2063 = vmatmul.mubr.f32.gmra.mrb[0].mxu0 %v1867
  %v2064 = vpop.f32.mrb[0].mxu0
  %v2065 = vadd.f32 %v1982, %v2064
  %v2066 = vpop.f32.mrb[0].mxu0
  %2067 = vmatprep.mubr.f32.mxu0 0.0
  %2068 = vmatmul.mubr.f32.gmra.mrb[0].mxu0 %v1870
  %v2069 = vpop.f32.mrb[0].mxu0
  %v2070 = vadd.f32 %v1982, %v2069
  %v2071 = vpop.f32.mrb[0].mxu0
  %2072 = vmatprep.mubr.f32.mxu0 0.0
  %2073 = vmatmul.mubr.f32.gmra.mrb[0].mxu0 %v1873
  %v2074 = vpop.f32.mrb[0].mxu0
  %v2075 = vadd.f32 %v1982, %v2074
  %v2076 = vpop.f32.mrb[0].mxu0
  %2077 = vdwg.mxu0
  %s2078 = scalar_lea.vmem %s2, 384
  %v2079 = vld [vmem:[%s2078] sm:$0xff]
  %v2080 = vld [vmem:[%s2078 + $0x8] sm:$0xff]
  %v2081 = vld [vmem:[%s2078 + $0x10] sm:$0xff]
  %v2082 = vld [vmem:[%s2078 + $0x18] sm:$0xff]
  %v2083 = vld [vmem:[%s2078 + $0x20] sm:$0xff]
  %v2084 = vld [vmem:[%s2078 + $0x28] sm:$0xff]
  %v2085 = vld [vmem:[%s2078 + $0x30] sm:$0xff]
  %v2086 = vld [vmem:[%s2078 + $0x38] sm:$0xff]
  %v2087 = vlaneseq
  %v2088 = vshrl.u32 %v2087, 7
  %v2089 = vsub.s32 7, %v2088
  %v2090 = vrot.slane %v30, %v2089
  %2091 = vmatprep.subr.mxu0 0.0
  %2092 = vmatpush1.msra.mxu0 %v2079
  %2093 = vmatprep.subr.mxu0 0.0
  %2094 = vmatpush1.msra.mxu0 %v2080
  %2095 = vmatprep.subr.mxu0 0.0
  %2096 = vmatpush1.msra.mxu0 %v2081
  %2097 = vmatprep.subr.mxu0 0.0
  %2098 = vmatpush1.msra.mxu0 %v2082
  %2099 = vmatprep.subr.mxu0 0.0
  %2100 = vmatpush1.msra.mxu0 %v2083
  %2101 = vmatprep.subr.mxu0 0.0
  %2102 = vmatpush1.msra.mxu0 %v2084
  %2103 = vmatprep.subr.mxu0 0.0
  %2104 = vmatpush1.msra.mxu0 %v2085
  %2105 = vmatprep.subr.mxu0 0.0
  %2106 = vmatpush1.msra.mxu0 %v2086
  %2107 = vmatprep.subr.mxu0 0.0
  %2108 = vmatpush1.msra.mxu0 0.0
  %2109 = vmatprep.subr.mxu0 0.0
  %2110 = vmatpush1.msra.mxu0 0.0
  %2111 = vmatprep.subr.mxu0 0.0
  %2112 = vmatpush1.msra.mxu0 0.0
  %2113 = vmatprep.subr.mxu0 0.0
  %2114 = vmatpush1.msra.mxu0 0.0
  %2115 = vmatprep.subr.mxu0 0.0
  %2116 = vmatpush1.msra.mxu0 0.0
  %2117 = vmatprep.subr.mxu0 0.0
  %2118 = vmatpush1.msra.mxu0 0.0
  %2119 = vmatprep.subr.mxu0 0.0
  %2120 = vmatpush1.msra.mxu0 0.0
  %2121 = vmatprep.subr.mxu0 0.0
  %2122 = vmatpush1.msra.mxu0 0.0
  %2123 = vmatprep.subr.mxu0 0.0
  %2124 = vmatpush1.msra.mxu0 0.0
  %2125 = vmatprep.subr.mxu0 0.0
  %2126 = vmatpush1.msra.mxu0 0.0
  %2127 = vmatprep.subr.mxu0 0.0
  %2128 = vmatpush1.msra.mxu0 0.0
  %2129 = vmatprep.subr.mxu0 0.0
  %2130 = vmatpush1.msra.mxu0 0.0
  %2131 = vmatprep.subr.mxu0 0.0
  %2132 = vmatpush1.msra.mxu0 0.0
  %2133 = vmatprep.subr.mxu0 0.0
  %2134 = vmatpush1.msra.mxu0 0.0
  %2135 = vmatprep.subr.mxu0 0.0
  %2136 = vmatpush1.msra.mxu0 0.0
  %2137 = vmatprep.subr.mxu0 0.0
  %2138 = vmatpush1.msra.mxu0 0.0
  %2139 = vmatprep.subr.mxu0 0.0
  %2140 = vmatpush1.msra.mxu0 0.0
  %2141 = vmatprep.subr.mxu0 0.0
  %2142 = vmatpush1.msra.mxu0 0.0
  %2143 = vmatprep.subr.mxu0 0.0
  %2144 = vmatpush1.msra.mxu0 0.0
  %2145 = vmatprep.subr.mxu0 0.0
  %2146 = vmatpush1.msra.mxu0 0.0
  %2147 = vmatprep.subr.mxu0 0.0
  %2148 = vmatpush1.msra.mxu0 0.0
  %2149 = vmatprep.subr.mxu0 0.0
  %2150 = vmatpush1.msra.mxu0 0.0
  %2151 = vmatprep.subr.mxu0 0.0
  %2152 = vmatpush1.msra.mxu0 0.0
  %2153 = vmatprep.subr.mxu0 0.0
  %2154 = vmatpush1.msra.mxu0 0.0
  %2155 = vmatprep.mubr.f32.mxu0 0.0
  %2156 = vmatmul.mubr.f32.gmra.mrb[0].mxu0 %v1858
  %v2157 = vpop.f32.mrb[0].mxu0
  %v2158 = vadd.f32 %v2090, %v2157
  %v2159 = vpop.f32.mrb[0].mxu0
  %2160 = vmatprep.mubr.f32.mxu0 0.0
  %2161 = vmatmul.mubr.f32.gmra.mrb[0].mxu0 %v1861
  %v2162 = vpop.f32.mrb[0].mxu0
  %v2163 = vadd.f32 %v2090, %v2162
  %v2164 = vpop.f32.mrb[0].mxu0
  %2165 = vmatprep.mubr.f32.mxu0 0.0
  %2166 = vmatmul.mubr.f32.gmra.mrb[0].mxu0 %v1864
  %v2167 = vpop.f32.mrb[0].mxu0
  %v2168 = vadd.f32 %v2090, %v2167
  %v2169 = vpop.f32.mrb[0].mxu0
  %2170 = vmatprep.mubr.f32.mxu0 0.0
  %2171 = vmatmul.mubr.f32.gmra.mrb[0].mxu0 %v1867
  %v2172 = vpop.f32.mrb[0].mxu0
  %v2173 = vadd.f32 %v2090, %v2172
  %v2174 = vpop.f32.mrb[0].mxu0
  %2175 = vmatprep.mubr.f32.mxu0 0.0
  %2176 = vmatmul.mubr.f32.gmra.mrb[0].mxu0 %v1870
  %v2177 = vpop.f32.mrb[0].mxu0
  %v2178 = vadd.f32 %v2090, %v2177
  %v2179 = vpop.f32.mrb[0].mxu0
  %2180 = vmatprep.mubr.f32.mxu0 0.0
  %2181 = vmatmul.mubr.f32.gmra.mrb[0].mxu0 %v1873
  %v2182 = vpop.f32.mrb[0].mxu0
  %v2183 = vadd.f32 %v2090, %v2182
  %v2184 = vpop.f32.mrb[0].mxu0
  %2185 = vdwg.mxu0
  %v2186 = vmul.f32 %v2050, %v491
  %v2187 = vmul.f32 %v2055, %v491
  %v2188 = vmul.f32 %v2060, %v491
  %v2189 = vmul.f32 %v2065, %v491
  %v2190 = vmul.f32 %v2070, %v491
  %v2191 = vmul.f32 %v2075, %v491
  %v2192 = vmul.f32 %v2158, %v491
  %v2193 = vmul.f32 %v2163, %v491
  %v2194 = vmul.f32 %v2168, %v491
  %v2195 = vmul.f32 %v2173, %v491
  %v2196 = vmul.f32 %v2178, %v491
  %v2197 = vmul.f32 %v2183, %v491
  %v2199 = vsel %vm44, %v1942, 0
  %v2202 = vsel %vm44, %v1947, 0
  %v2205 = vsel %vm44, %v1952, 0
  %v2208 = vsel %vm44, %v1957, 0
  %v2211 = vsel %vm44, %v1962, 0
  %v2214 = vsel %vm44, %v1967, 0
  %v2217 = vsel %vm44, %v2186, 0
  %v2220 = vsel %vm44, %v2187, 0
  %v2223 = vsel %vm44, %v2188, 0
  %v2226 = vsel %vm44, %v2189, 0
  %v2229 = vsel %vm44, %v2190, 0
  %v2232 = vsel %vm44, %v2191, 0
  %2234 = vmatprep.subr.mxu0 0.0
  %2235 = vmatpush1.xpose.msra.mxu0 %v2217
  %2236 = vmatprep.subr.mxu0 0.0
  %2237 = vmatpush1.xpose.msra.mxu0 %v2220
  %2238 = vmatprep.subr.mxu0 0.0
  %2239 = vmatpush1.xpose.msra.mxu0 %v2223
  %2240 = vmatprep.subr.mxu0 0.0
  %2241 = vmatpush1.xpose.msra.mxu0 %v2226
  %2242 = vmatprep.subr.mxu0 0.0
  %2243 = vmatpush1.xpose.msra.mxu0 %v2229
  %2244 = vmatprep.subr.mxu0 0.0
  %2245 = vmatpush1.xpose.msra.mxu0 %v2232
  %2246 = vmatprep.subr.mxu0 0.0
  %2247 = vmatpush1.xpose.msra.mxu0 0.0
  %2248 = vmatprep.subr.mxu0 0.0
  %2249 = vmatpush1.xpose.msra.mxu0 0.0
  %2250 = vmatprep.subr.mxu0 0.0
  %2251 = vmatpush1.xpose.msra.mxu0 0.0
  %2252 = vmatprep.subr.mxu0 0.0
  %2253 = vmatpush1.xpose.msra.mxu0 0.0
  %2254 = vmatprep.subr.mxu0 0.0
  %2255 = vmatpush1.xpose.msra.mxu0 0.0
  %2256 = vmatprep.subr.mxu0 0.0
  %2257 = vmatpush1.xpose.msra.mxu0 0.0
  %2258 = vmatprep.subr.mxu0 0.0
  %2259 = vmatpush1.xpose.msra.mxu0 0.0
  %2260 = vmatprep.subr.mxu0 0.0
  %2261 = vmatpush1.xpose.msra.mxu0 0.0
  %2262 = vmatprep.subr.mxu0 0.0
  %2263 = vmatpush1.xpose.msra.mxu0 0.0
  %2264 = vmatprep.subr.mxu0 0.0
  %2265 = vmatpush1.xpose.msra.mxu0 0.0
  %2266 = vmatprep.subr.mxu0 0.0
  %2267 = vmatpush1.xpose.msra.mxu0 0.0
  %2268 = vmatprep.subr.mxu0 0.0
  %2269 = vmatpush1.xpose.msra.mxu0 0.0
  %2270 = vmatprep.subr.mxu0 0.0
  %2271 = vmatpush1.xpose.msra.mxu0 0.0
  %2272 = vmatprep.subr.mxu0 0.0
  %2273 = vmatpush1.xpose.msra.mxu0 0.0
  %2274 = vmatprep.subr.mxu0 0.0
  %2275 = vmatpush1.xpose.msra.mxu0 0.0
  %2276 = vmatprep.subr.mxu0 0.0
  %2277 = vmatpush1.xpose.msra.mxu0 0.0
  %2278 = vmatprep.subr.mxu0 0.0
  %2279 = vmatpush1.xpose.msra.mxu0 0.0
  %2280 = vmatprep.subr.mxu0 0.0
  %2281 = vmatpush1.xpose.msra.mxu0 0.0
  %2282 = vmatprep.subr.mxu0 0.0
  %2283 = vmatpush1.xpose.msra.mxu0 0.0
  %2284 = vmatprep.subr.mxu0 0.0
  %2285 = vmatpush1.xpose.msra.mxu0 0.0
  %2286 = vmatprep.subr.mxu0 0.0
  %2287 = vmatpush1.xpose.msra.mxu0 0.0
  %2288 = vmatprep.subr.mxu0 0.0
  %2289 = vmatpush1.xpose.msra.mxu0 0.0
  %2290 = vmatprep.subr.mxu0 0.0
  %2291 = vmatpush1.xpose.msra.mxu0 0.0
  %2292 = vmatprep.subr.mxu0 0.0
  %2293 = vmatpush1.xpose.msra.mxu0 0.0
  %2294 = vmatprep.subr.mxu0 0.0
  %2295 = vmatpush1.xpose.msra.mxu0 0.0
  %2296 = vmatprep.subr.mxu0 0.0
  %2297 = vmatpush1.xpose.msra.mxu0 0.0
  %2298 = vmatprep.mubr.f32.mxu0 0.0
  %2299 = vmatmul.mubr.f32.gmra.mrb[0].mxu0 %v2199
  %v2300 = vpop.f32.mrb[0].mxu0
  %v2301 = vadd.f32 %v32, %v2300
  %v2302 = vpop.f32.mrb[0].mxu0
  %2303 = vmatprep.mubr.f32.mxu0 0.0
  %2304 = vmatmul.mubr.f32.gmra.mrb[0].mxu0 %v2202
  %v2305 = vpop.f32.mrb[0].mxu0
  %v2306 = vadd.f32 %v33, %v2305
  %v2307 = vpop.f32.mrb[0].mxu0
  %2308 = vmatprep.mubr.f32.mxu0 0.0
  %2309 = vmatmul.mubr.f32.gmra.mrb[0].mxu0 %v2205
  %v2310 = vpop.f32.mrb[0].mxu0
  %v2311 = vadd.f32 %v34, %v2310
  %v2312 = vpop.f32.mrb[0].mxu0
  %2313 = vmatprep.mubr.f32.mxu0 0.0
  %2314 = vmatmul.mubr.f32.gmra.mrb[0].mxu0 %v2208
  %v2315 = vpop.f32.mrb[0].mxu0
  %v2316 = vadd.f32 %v35, %v2315
  %v2317 = vpop.f32.mrb[0].mxu0
  %2318 = vmatprep.mubr.f32.mxu0 0.0
  %2319 = vmatmul.mubr.f32.gmra.mrb[0].mxu0 %v2211
  %v2320 = vpop.f32.mrb[0].mxu0
  %v2321 = vadd.f32 %v36, %v2320
  %v2322 = vpop.f32.mrb[0].mxu0
  %2323 = vmatprep.mubr.f32.mxu0 0.0
  %2324 = vmatmul.mubr.f32.gmra.mrb[0].mxu0 %v2214
  %v2325 = vpop.f32.mrb[0].mxu0
  %v2326 = vadd.f32 %v37, %v2325
  %v2327 = vpop.f32.mrb[0].mxu0
  %2328 = vdwg.mxu0
  %v2329 = vsel %vm635, %v2301, -inf
  %2330 = vmax.xlane.f32.xlu0 %v2329
  %v2331 = vpop.xlane.xlu0 %2330
  %v2332 = vsel %vm635, %v2306, -inf
  %2333 = vmax.xlane.f32.xlu0 %v2332
  %v2334 = vpop.xlane.xlu0 %2333
  %v2335 = vsel %vm635, %v2311, -inf
  %2336 = vmax.xlane.f32.xlu0 %v2335
  %v2337 = vpop.xlane.xlu0 %2336
  %v2338 = vsel %vm635, %v2316, -inf
  %2339 = vmax.xlane.f32.xlu0 %v2338
  %v2340 = vpop.xlane.xlu0 %2339
  %v2341 = vsel %vm635, %v2321, -inf
  %2342 = vmax.xlane.f32.xlu0 %v2341
  %v2343 = vpop.xlane.xlu0 %2342
  %v2344 = vsel %vm635, %v2326, -inf
  %2345 = vmax.xlane.f32.xlu0 %v2344
  %v2346 = vpop.xlane.xlu0 %2345
  %v2347 = vsub.f32 %v2301, %v2331
  %v2348 = vsub.f32 %v2306, %v2334
  %v2349 = vsub.f32 %v2311, %v2337
  %v2350 = vsub.f32 %v2316, %v2340
  %v2351 = vsub.f32 %v2321, %v2343
  %v2352 = vsub.f32 %v2326, %v2346
  %v2353 = vmul.f32 %v2347, 1.442695
  %v2354 = vpow.pop %v2353
  %v2355 = vmul.f32 %v2348, 1.442695
  %v2356 = vpow.pop %v2355
  %v2357 = vmul.f32 %v2349, 1.442695
  %v2358 = vpow.pop %v2357
  %v2359 = vmul.f32 %v2350, 1.442695
  %v2360 = vpow.pop %v2359
  %v2361 = vmul.f32 %v2351, 1.442695
  %v2362 = vpow.pop %v2361
  %v2363 = vmul.f32 %v2352, 1.442695
  %v2364 = vpow.pop %v2363
  %v2365 = vsel %vm635, %v2354, 0.0
  %2366 = vadd.xlane.f32.xlu0 %v2365
  %v2367 = vpop.xlane.xlu0 %2366
  %v2368 = vsel %vm635, %v2356, 0.0
  %2369 = vadd.xlane.f32.xlu0 %v2368
  %v2370 = vpop.xlane.xlu0 %2369
  %v2371 = vsel %vm635, %v2358, 0.0
  %2372 = vadd.xlane.f32.xlu0 %v2371
  %v2373 = vpop.xlane.xlu0 %2372
  %v2374 = vsel %vm635, %v2360, 0.0
  %2375 = vadd.xlane.f32.xlu0 %v2374
  %v2376 = vpop.xlane.xlu0 %2375
  %v2377 = vsel %vm635, %v2362, 0.0
  %2378 = vadd.xlane.f32.xlu0 %v2377
  %v2379 = vpop.xlane.xlu0 %2378
  %v2380 = vsel %vm635, %v2364, 0.0
  %2381 = vadd.xlane.f32.xlu0 %v2380
  %v2382 = vpop.xlane.xlu0 %2381
  %v2383 = vrcp.pop %v2367
  %v2384 = vrcp.pop %v2370
  %v2385 = vrcp.pop %v2373
  %v2386 = vrcp.pop %v2376
  %v2387 = vrcp.pop %v2379
  %v2388 = vrcp.pop %v2382
  %v2389 = vmul.f32 %v2354, %v2383
  %v2390 = vmul.f32 %v2356, %v2384
  %v2391 = vmul.f32 %v2358, %v2385
  %v2392 = vmul.f32 %v2360, %v2386
  %v2393 = vmul.f32 %v2362, %v2387
  %v2394 = vmul.f32 %v2364, %v2388
  %v2395 = vmul.f32 %v2050, %v706
  %v2396 = vmul.f32 %v2055, %v706
  %v2397 = vmul.f32 %v2060, %v706
  %v2398 = vmul.f32 %v2065, %v706
  %v2399 = vmul.f32 %v2070, %v706
  %v2400 = vmul.f32 %v2075, %v706
  %v2401 = vmul.f32 %v2158, %v706
  %v2402 = vmul.f32 %v2163, %v706
  %v2403 = vmul.f32 %v2168, %v706
  %v2404 = vmul.f32 %v2173, %v706
  %v2405 = vmul.f32 %v2178, %v706
  %v2406 = vmul.f32 %v2183, %v706
  %v2408 = vsel %vm44, %v2395, 0
  %v2411 = vsel %vm44, %v2396, 0
  %v2414 = vsel %vm44, %v2397, 0
  %v2417 = vsel %vm44, %v2398, 0
  %v2420 = vsel %vm44, %v2399, 0
  %v2423 = vsel %vm44, %v2400, 0
  %2425 = vmatprep.subr.mxu0 0.0
  %2426 = vmatpush1.xpose.msra.mxu0 %v2408
  %2427 = vmatprep.subr.mxu0 0.0
  %2428 = vmatpush1.xpose.msra.mxu0 %v2411
  %2429 = vmatprep.subr.mxu0 0.0
  %2430 = vmatpush1.xpose.msra.mxu0 %v2414
  %2431 = vmatprep.subr.mxu0 0.0
  %2432 = vmatpush1.xpose.msra.mxu0 %v2417
  %2433 = vmatprep.subr.mxu0 0.0
  %2434 = vmatpush1.xpose.msra.mxu0 %v2420
  %2435 = vmatprep.subr.mxu0 0.0
  %2436 = vmatpush1.xpose.msra.mxu0 %v2423
  %2437 = vmatprep.subr.mxu0 0.0
  %2438 = vmatpush1.xpose.msra.mxu0 0.0
  %2439 = vmatprep.subr.mxu0 0.0
  %2440 = vmatpush1.xpose.msra.mxu0 0.0
  %2441 = vmatprep.subr.mxu0 0.0
  %2442 = vmatpush1.xpose.msra.mxu0 0.0
  %2443 = vmatprep.subr.mxu0 0.0
  %2444 = vmatpush1.xpose.msra.mxu0 0.0
  %2445 = vmatprep.subr.mxu0 0.0
  %2446 = vmatpush1.xpose.msra.mxu0 0.0
  %2447 = vmatprep.subr.mxu0 0.0
  %2448 = vmatpush1.xpose.msra.mxu0 0.0
  %2449 = vmatprep.subr.mxu0 0.0
  %2450 = vmatpush1.xpose.msra.mxu0 0.0
  %2451 = vmatprep.subr.mxu0 0.0
  %2452 = vmatpush1.xpose.msra.mxu0 0.0
  %2453 = vmatprep.subr.mxu0 0.0
  %2454 = vmatpush1.xpose.msra.mxu0 0.0
  %2455 = vmatprep.subr.mxu0 0.0
  %2456 = vmatpush1.xpose.msra.mxu0 0.0
  %2457 = vmatprep.subr.mxu0 0.0
  %2458 = vmatpush1.xpose.msra.mxu0 0.0
  %2459 = vmatprep.subr.mxu0 0.0
  %2460 = vmatpush1.xpose.msra.mxu0 0.0
  %2461 = vmatprep.subr.mxu0 0.0
  %2462 = vmatpush1.xpose.msra.mxu0 0.0
  %2463 = vmatprep.subr.mxu0 0.0
  %2464 = vmatpush1.xpose.msra.mxu0 0.0
  %2465 = vmatprep.subr.mxu0 0.0
  %2466 = vmatpush1.xpose.msra.mxu0 0.0
  %2467 = vmatprep.subr.mxu0 0.0
  %2468 = vmatpush1.xpose.msra.mxu0 0.0
  %2469 = vmatprep.subr.mxu0 0.0
  %2470 = vmatpush1.xpose.msra.mxu0 0.0
  %2471 = vmatprep.subr.mxu0 0.0
  %2472 = vmatpush1.xpose.msra.mxu0 0.0
  %2473 = vmatprep.subr.mxu0 0.0
  %2474 = vmatpush1.xpose.msra.mxu0 0.0
  %2475 = vmatprep.subr.mxu0 0.0
  %2476 = vmatpush1.xpose.msra.mxu0 0.0
  %2477 = vmatprep.subr.mxu0 0.0
  %2478 = vmatpush1.xpose.msra.mxu0 0.0
  %2479 = vmatprep.subr.mxu0 0.0
  %2480 = vmatpush1.xpose.msra.mxu0 0.0
  %2481 = vmatprep.subr.mxu0 0.0
  %2482 = vmatpush1.xpose.msra.mxu0 0.0
  %2483 = vmatprep.subr.mxu0 0.0
  %2484 = vmatpush1.xpose.msra.mxu0 0.0
  %2485 = vmatprep.subr.mxu0 0.0
  %2486 = vmatpush1.xpose.msra.mxu0 0.0
  %2487 = vmatprep.subr.mxu0 0.0
  %2488 = vmatpush1.xpose.msra.mxu0 0.0
  %2489 = vmatprep.mubr.f32.mxu0 0.0
  %2490 = vmatmul.mubr.f32.gmra.mrb[0].mxu0 %v2199
  %v2491 = vpop.f32.mrb[0].mxu0
  %v2492 = vadd.f32 %v32, %v2491
  %v2493 = vpop.f32.mrb[0].mxu0
  %2494 = vmatprep.mubr.f32.mxu0 0.0
  %2495 = vmatmul.mubr.f32.gmra.mrb[0].mxu0 %v2202
  %v2496 = vpop.f32.mrb[0].mxu0
  %v2497 = vadd.f32 %v33, %v2496
  %v2498 = vpop.f32.mrb[0].mxu0
  %2499 = vmatprep.mubr.f32.mxu0 0.0
  %2500 = vmatmul.mubr.f32.gmra.mrb[0].mxu0 %v2205
  %v2501 = vpop.f32.mrb[0].mxu0
  %v2502 = vadd.f32 %v34, %v2501
  %v2503 = vpop.f32.mrb[0].mxu0
  %2504 = vmatprep.mubr.f32.mxu0 0.0
  %2505 = vmatmul.mubr.f32.gmra.mrb[0].mxu0 %v2208
  %v2506 = vpop.f32.mrb[0].mxu0
  %v2507 = vadd.f32 %v35, %v2506
  %v2508 = vpop.f32.mrb[0].mxu0
  %2509 = vmatprep.mubr.f32.mxu0 0.0
  %2510 = vmatmul.mubr.f32.gmra.mrb[0].mxu0 %v2211
  %v2511 = vpop.f32.mrb[0].mxu0
  %v2512 = vadd.f32 %v36, %v2511
  %v2513 = vpop.f32.mrb[0].mxu0
  %2514 = vmatprep.mubr.f32.mxu0 0.0
  %2515 = vmatmul.mubr.f32.gmra.mrb[0].mxu0 %v2214
  %v2516 = vpop.f32.mrb[0].mxu0
  %v2517 = vadd.f32 %v37, %v2516
  %v2518 = vpop.f32.mrb[0].mxu0
  %2519 = vdwg.mxu0
  %v2520 = vsel %vm635, %v2492, -inf
  %2521 = vmax.xlane.f32.xlu0 %v2520
  %v2522 = vpop.xlane.xlu0 %2521
  %v2523 = vsel %vm635, %v2497, -inf
  %2524 = vmax.xlane.f32.xlu0 %v2523
  %v2525 = vpop.xlane.xlu0 %2524
  %v2526 = vsel %vm635, %v2502, -inf
  %2527 = vmax.xlane.f32.xlu0 %v2526
  %v2528 = vpop.xlane.xlu0 %2527
  %v2529 = vsel %vm635, %v2507, -inf
  %2530 = vmax.xlane.f32.xlu0 %v2529
  %v2531 = vpop.xlane.xlu0 %2530
  %v2532 = vsel %vm635, %v2512, -inf
  %2533 = vmax.xlane.f32.xlu0 %v2532
  %v2534 = vpop.xlane.xlu0 %2533
  %v2535 = vsel %vm635, %v2517, -inf
  %2536 = vmax.xlane.f32.xlu0 %v2535
  %v2537 = vpop.xlane.xlu0 %2536
  %v2538 = vsub.f32 %v2492, %v2522
  %v2539 = vsub.f32 %v2497, %v2525
  %v2540 = vsub.f32 %v2502, %v2528
  %v2541 = vsub.f32 %v2507, %v2531
  %v2542 = vsub.f32 %v2512, %v2534
  %v2543 = vsub.f32 %v2517, %v2537
  %v2544 = vmul.f32 %v2538, 1.442695
  %v2545 = vpow.pop %v2544
  %v2546 = vmul.f32 %v2539, 1.442695
  %v2547 = vpow.pop %v2546
  %v2548 = vmul.f32 %v2540, 1.442695
  %v2549 = vpow.pop %v2548
  %v2550 = vmul.f32 %v2541, 1.442695
  %v2551 = vpow.pop %v2550
  %v2552 = vmul.f32 %v2542, 1.442695
  %v2553 = vpow.pop %v2552
  %v2554 = vmul.f32 %v2543, 1.442695
  %v2555 = vpow.pop %v2554
  %v2556 = vsel %vm635, %v2545, 0.0
  %2557 = vadd.xlane.f32.xlu0 %v2556
  %v2558 = vpop.xlane.xlu0 %2557
  %v2559 = vsel %vm635, %v2547, 0.0
  %2560 = vadd.xlane.f32.xlu0 %v2559
  %v2561 = vpop.xlane.xlu0 %2560
  %v2562 = vsel %vm635, %v2549, 0.0
  %2563 = vadd.xlane.f32.xlu0 %v2562
  %v2564 = vpop.xlane.xlu0 %2563
  %v2565 = vsel %vm635, %v2551, 0.0
  %2566 = vadd.xlane.f32.xlu0 %v2565
  %v2567 = vpop.xlane.xlu0 %2566
  %v2568 = vsel %vm635, %v2553, 0.0
  %2569 = vadd.xlane.f32.xlu0 %v2568
  %v2570 = vpop.xlane.xlu0 %2569
  %v2571 = vsel %vm635, %v2555, 0.0
  %2572 = vadd.xlane.f32.xlu0 %v2571
  %v2573 = vpop.xlane.xlu0 %2572
  %v2574 = vrcp.pop %v2558
  %v2575 = vrcp.pop %v2561
  %v2576 = vrcp.pop %v2564
  %v2577 = vrcp.pop %v2567
  %v2578 = vrcp.pop %v2570
  %v2579 = vrcp.pop %v2573
  %v2580 = vmul.f32 %v2545, %v2574
  %v2581 = vmul.f32 %v2547, %v2575
  %v2582 = vmul.f32 %v2549, %v2576
  %v2583 = vmul.f32 %v2551, %v2577
  %v2584 = vmul.f32 %v2553, %v2578
  %v2585 = vmul.f32 %v2555, %v2579
  %v2587 = vsel %vm635, %v2580, 0
  %v2590 = vsel %vm635, %v2581, 0
  %v2593 = vsel %vm635, %v2582, 0
  %v2596 = vsel %vm635, %v2583, 0
  %v2599 = vsel %vm635, %v2584, 0
  %v2602 = vsel %vm635, %v2585, 0
  %2604 = vmatprep.subr.mxu0 0.0
  %2605 = vmatpush1.msra.mxu0 %v2401
  %2606 = vmatprep.subr.mxu0 0.0
  %2607 = vmatpush1.msra.mxu0 %v2402
  %2608 = vmatprep.subr.mxu0 0.0
  %2609 = vmatpush1.msra.mxu0 %v2403
  %2610 = vmatprep.subr.mxu0 0.0
  %2611 = vmatpush1.msra.mxu0 %v2404
  %2612 = vmatprep.subr.mxu0 0.0
  %2613 = vmatpush1.msra.mxu0 %v2405
  %2614 = vmatprep.subr.mxu0 0.0
  %2615 = vmatpush1.msra.mxu0 %v2406
  %2616 = vmatprep.subr.mxu0 0.0
  %2617 = vmatpush1.msra.mxu0 0.0
  %2618 = vmatprep.subr.mxu0 0.0
  %2619 = vmatpush1.msra.mxu0 0.0
  %2620 = vmatprep.subr.mxu0 0.0
  %2621 = vmatpush1.msra.mxu0 0.0
  %2622 = vmatprep.subr.mxu0 0.0
  %2623 = vmatpush1.msra.mxu0 0.0
  %2624 = vmatprep.subr.mxu0 0.0
  %2625 = vmatpush1.msra.mxu0 0.0
  %2626 = vmatprep.subr.mxu0 0.0
  %2627 = vmatpush1.msra.mxu0 0.0
  %2628 = vmatprep.subr.mxu0 0.0
  %2629 = vmatpush1.msra.mxu0 0.0
  %2630 = vmatprep.subr.mxu0 0.0
  %2631 = vmatpush1.msra.mxu0 0.0
  %2632 = vmatprep.subr.mxu0 0.0
  %2633 = vmatpush1.msra.mxu0 0.0
  %2634 = vmatprep.subr.mxu0 0.0
  %2635 = vmatpush1.msra.mxu0 0.0
  %2636 = vmatprep.subr.mxu0 0.0
  %2637 = vmatpush1.msra.mxu0 0.0
  %2638 = vmatprep.subr.mxu0 0.0
  %2639 = vmatpush1.msra.mxu0 0.0
  %2640 = vmatprep.subr.mxu0 0.0
  %2641 = vmatpush1.msra.mxu0 0.0
  %2642 = vmatprep.subr.mxu0 0.0
  %2643 = vmatpush1.msra.mxu0 0.0
  %2644 = vmatprep.subr.mxu0 0.0
  %2645 = vmatpush1.msra.mxu0 0.0
  %2646 = vmatprep.subr.mxu0 0.0
  %2647 = vmatpush1.msra.mxu0 0.0
  %2648 = vmatprep.subr.mxu0 0.0
  %2649 = vmatpush1.msra.mxu0 0.0
  %2650 = vmatprep.subr.mxu0 0.0
  %2651 = vmatpush1.msra.mxu0 0.0
  %2652 = vmatprep.subr.mxu0 0.0
  %2653 = vmatpush1.msra.mxu0 0.0
  %2654 = vmatprep.subr.mxu0 0.0
  %2655 = vmatpush1.msra.mxu0 0.0
  %2656 = vmatprep.subr.mxu0 0.0
  %2657 = vmatpush1.msra.mxu0 0.0
  %2658 = vmatprep.subr.mxu0 0.0
  %2659 = vmatpush1.msra.mxu0 0.0
  %2660 = vmatprep.subr.mxu0 0.0
  %2661 = vmatpush1.msra.mxu0 0.0
  %2662 = vmatprep.subr.mxu0 0.0
  %2663 = vmatpush1.msra.mxu0 0.0
  %2664 = vmatprep.subr.mxu0 0.0
  %2665 = vmatpush1.msra.mxu0 0.0
  %2666 = vmatprep.subr.mxu0 0.0
  %2667 = vmatpush1.msra.mxu0 0.0
  %2668 = vmatprep.mubr.f32.mxu0 0.0
  %2669 = vmatmul.mubr.f32.gmra.mrb[0].mxu0 %v2587
  %v2670 = vpop.f32.mrb[0].mxu0
  %v2671 = vadd.f32 0.0, %v2670
  %v2672 = vpop.f32.mrb[0].mxu0
  %2673 = vmatprep.mubr.f32.mxu0 0.0
  %2674 = vmatmul.mubr.f32.gmra.mrb[0].mxu0 %v2590
  %v2675 = vpop.f32.mrb[0].mxu0
  %v2676 = vadd.f32 0.0, %v2675
  %v2677 = vpop.f32.mrb[0].mxu0
  %2678 = vmatprep.mubr.f32.mxu0 0.0
  %2679 = vmatmul.mubr.f32.gmra.mrb[0].mxu0 %v2593
  %v2680 = vpop.f32.mrb[0].mxu0
  %v2681 = vadd.f32 0.0, %v2680
  %v2682 = vpop.f32.mrb[0].mxu0
  %2683 = vmatprep.mubr.f32.mxu0 0.0
  %2684 = vmatmul.mubr.f32.gmra.mrb[0].mxu0 %v2596
  %v2685 = vpop.f32.mrb[0].mxu0
  %v2686 = vadd.f32 0.0, %v2685
  %v2687 = vpop.f32.mrb[0].mxu0
  %2688 = vmatprep.mubr.f32.mxu0 0.0
  %2689 = vmatmul.mubr.f32.gmra.mrb[0].mxu0 %v2599
  %v2690 = vpop.f32.mrb[0].mxu0
  %v2691 = vadd.f32 0.0, %v2690
  %v2692 = vpop.f32.mrb[0].mxu0
  %2693 = vmatprep.mubr.f32.mxu0 0.0
  %2694 = vmatmul.mubr.f32.gmra.mrb[0].mxu0 %v2602
  %v2695 = vpop.f32.mrb[0].mxu0
  %v2696 = vadd.f32 0.0, %v2695
  %v2697 = vpop.f32.mrb[0].mxu0
  %2698 = vdwg.mxu0
  %v2700 = vsel %vm635, %v2389, 0
  %v2703 = vsel %vm635, %v2390, 0
  %v2706 = vsel %vm635, %v2391, 0
  %v2709 = vsel %vm635, %v2392, 0
  %v2712 = vsel %vm635, %v2393, 0
  %v2715 = vsel %vm635, %v2394, 0
  %2717 = vmatprep.subr.mxu0 0.0
  %2718 = vmatpush1.msra.mxu0 %v2192
  %2719 = vmatprep.subr.mxu0 0.0
  %2720 = vmatpush1.msra.mxu0 %v2193
  %2721 = vmatprep.subr.mxu0 0.0
  %2722 = vmatpush1.msra.mxu0 %v2194
  %2723 = vmatprep.subr.mxu0 0.0
  %2724 = vmatpush1.msra.mxu0 %v2195
  %2725 = vmatprep.subr.mxu0 0.0
  %2726 = vmatpush1.msra.mxu0 %v2196
  %2727 = vmatprep.subr.mxu0 0.0
  %2728 = vmatpush1.msra.mxu0 %v2197
  %2729 = vmatprep.subr.mxu0 0.0
  %2730 = vmatpush1.msra.mxu0 0.0
  %2731 = vmatprep.subr.mxu0 0.0
  %2732 = vmatpush1.msra.mxu0 0.0
  %2733 = vmatprep.subr.mxu0 0.0
  %2734 = vmatpush1.msra.mxu0 0.0
  %2735 = vmatprep.subr.mxu0 0.0
  %2736 = vmatpush1.msra.mxu0 0.0
  %2737 = vmatprep.subr.mxu0 0.0
  %2738 = vmatpush1.msra.mxu0 0.0
  %2739 = vmatprep.subr.mxu0 0.0
  %2740 = vmatpush1.msra.mxu0 0.0
  %2741 = vmatprep.subr.mxu0 0.0
  %2742 = vmatpush1.msra.mxu0 0.0
  %2743 = vmatprep.subr.mxu0 0.0
  %2744 = vmatpush1.msra.mxu0 0.0
  %2745 = vmatprep.subr.mxu0 0.0
  %2746 = vmatpush1.msra.mxu0 0.0
  %2747 = vmatprep.subr.mxu0 0.0
  %2748 = vmatpush1.msra.mxu0 0.0
  %2749 = vmatprep.subr.mxu0 0.0
  %2750 = vmatpush1.msra.mxu0 0.0
  %2751 = vmatprep.subr.mxu0 0.0
  %2752 = vmatpush1.msra.mxu0 0.0
  %2753 = vmatprep.subr.mxu0 0.0
  %2754 = vmatpush1.msra.mxu0 0.0
  %2755 = vmatprep.subr.mxu0 0.0
  %2756 = vmatpush1.msra.mxu0 0.0
  %2757 = vmatprep.subr.mxu0 0.0
  %2758 = vmatpush1.msra.mxu0 0.0
  %2759 = vmatprep.subr.mxu0 0.0
  %2760 = vmatpush1.msra.mxu0 0.0
  %2761 = vmatprep.subr.mxu0 0.0
  %2762 = vmatpush1.msra.mxu0 0.0
  %2763 = vmatprep.subr.mxu0 0.0
  %2764 = vmatpush1.msra.mxu0 0.0
  %2765 = vmatprep.subr.mxu0 0.0
  %2766 = vmatpush1.msra.mxu0 0.0
  %2767 = vmatprep.subr.mxu0 0.0
  %2768 = vmatpush1.msra.mxu0 0.0
  %2769 = vmatprep.subr.mxu0 0.0
  %2770 = vmatpush1.msra.mxu0 0.0
  %2771 = vmatprep.subr.mxu0 0.0
  %2772 = vmatpush1.msra.mxu0 0.0
  %2773 = vmatprep.subr.mxu0 0.0
  %2774 = vmatpush1.msra.mxu0 0.0
  %2775 = vmatprep.subr.mxu0 0.0
  %2776 = vmatpush1.msra.mxu0 0.0
  %2777 = vmatprep.subr.mxu0 0.0
  %2778 = vmatpush1.msra.mxu0 0.0
  %2779 = vmatprep.subr.mxu0 0.0
  %2780 = vmatpush1.msra.mxu0 0.0
  %2781 = vmatprep.mubr.f32.mxu0 0.0
  %2782 = vmatmul.mubr.f32.gmra.mrb[0].mxu0 %v2700
  %v2783 = vpop.f32.mrb[0].mxu0
  %v2784 = vadd.f32 %v2671, %v2783
  %v2785 = vpop.f32.mrb[0].mxu0
  %2786 = vmatprep.mubr.f32.mxu0 0.0
  %2787 = vmatmul.mubr.f32.gmra.mrb[0].mxu0 %v2703
  %v2788 = vpop.f32.mrb[0].mxu0
  %v2789 = vadd.f32 %v2676, %v2788
  %v2790 = vpop.f32.mrb[0].mxu0
  %2791 = vmatprep.mubr.f32.mxu0 0.0
  %2792 = vmatmul.mubr.f32.gmra.mrb[0].mxu0 %v2706
  %v2793 = vpop.f32.mrb[0].mxu0
  %v2794 = vadd.f32 %v2681, %v2793
  %v2795 = vpop.f32.mrb[0].mxu0
  %2796 = vmatprep.mubr.f32.mxu0 0.0
  %2797 = vmatmul.mubr.f32.gmra.mrb[0].mxu0 %v2709
  %v2798 = vpop.f32.mrb[0].mxu0
  %v2799 = vadd.f32 %v2686, %v2798
  %v2800 = vpop.f32.mrb[0].mxu0
  %2801 = vmatprep.mubr.f32.mxu0 0.0
  %2802 = vmatmul.mubr.f32.gmra.mrb[0].mxu0 %v2712
  %v2803 = vpop.f32.mrb[0].mxu0
  %v2804 = vadd.f32 %v2691, %v2803
  %v2805 = vpop.f32.mrb[0].mxu0
  %2806 = vmatprep.mubr.f32.mxu0 0.0
  %2807 = vmatmul.mubr.f32.gmra.mrb[0].mxu0 %v2715
  %v2808 = vpop.f32.mrb[0].mxu0
  %v2809 = vadd.f32 %v2696, %v2808
  %v2810 = vpop.f32.mrb[0].mxu0
  %2811 = vdwg.mxu0
  %s2812 = scalar_lea.vmem %s2, 448
  %v2813 = vld [vmem:[%s2812] sm:$0xff]
  %v2814 = vld [vmem:[%s2812 + $0x8] sm:$0xff]
  %v2815 = vld [vmem:[%s2812 + $0x10] sm:$0xff]
  %v2816 = vld [vmem:[%s2812 + $0x18] sm:$0xff]
  %v2817 = vld [vmem:[%s2812 + $0x20] sm:$0xff]
  %v2818 = vld [vmem:[%s2812 + $0x28] sm:$0xff]
  %v2819 = vld [vmem:[%s2812 + $0x30] sm:$0xff]
  %v2820 = vld [vmem:[%s2812 + $0x38] sm:$0xff]
  %v2821 = vlaneseq
  %v2822 = vshrl.u32 %v2821, 7
  %v2823 = vsub.s32 0, %v2822
  %v2824 = vrot.slane %v31, %v2823
  %v2826 = vsel %vm44, %v2784, 0
  %v2829 = vsel %vm44, %v2789, 0
  %v2832 = vsel %vm44, %v2794, 0
  %v2835 = vsel %vm44, %v2799, 0
  %v2838 = vsel %vm44, %v2804, 0
  %v2841 = vsel %vm44, %v2809, 0
  %2843 = vmatprep.subr.mxu0 0.0
  %2844 = vmatpush1.msra.mxu0 %v2813
  %2845 = vmatprep.subr.mxu0 0.0
  %2846 = vmatpush1.msra.mxu0 %v2814
  %2847 = vmatprep.subr.mxu0 0.0
  %2848 = vmatpush1.msra.mxu0 %v2815
  %2849 = vmatprep.subr.mxu0 0.0
  %2850 = vmatpush1.msra.mxu0 %v2816
  %2851 = vmatprep.subr.mxu0 0.0
  %2852 = vmatpush1.msra.mxu0 %v2817
  %2853 = vmatprep.subr.mxu0 0.0
  %2854 = vmatpush1.msra.mxu0 %v2818
  %2855 = vmatprep.subr.mxu0 0.0
  %2856 = vmatpush1.msra.mxu0 %v2819
  %2857 = vmatprep.subr.mxu0 0.0
  %2858 = vmatpush1.msra.mxu0 %v2820
  %2859 = vmatprep.subr.mxu0 0.0
  %2860 = vmatpush1.msra.mxu0 0.0
  %2861 = vmatprep.subr.mxu0 0.0
  %2862 = vmatpush1.msra.mxu0 0.0
  %2863 = vmatprep.subr.mxu0 0.0
  %2864 = vmatpush1.msra.mxu0 0.0
  %2865 = vmatprep.subr.mxu0 0.0
  %2866 = vmatpush1.msra.mxu0 0.0
  %2867 = vmatprep.subr.mxu0 0.0
  %2868 = vmatpush1.msra.mxu0 0.0
  %2869 = vmatprep.subr.mxu0 0.0
  %2870 = vmatpush1.msra.mxu0 0.0
  %2871 = vmatprep.subr.mxu0 0.0
  %2872 = vmatpush1.msra.mxu0 0.0
  %2873 = vmatprep.subr.mxu0 0.0
  %2874 = vmatpush1.msra.mxu0 0.0
  %2875 = vmatprep.subr.mxu0 0.0
  %2876 = vmatpush1.msra.mxu0 0.0
  %2877 = vmatprep.subr.mxu0 0.0
  %2878 = vmatpush1.msra.mxu0 0.0
  %2879 = vmatprep.subr.mxu0 0.0
  %2880 = vmatpush1.msra.mxu0 0.0
  %2881 = vmatprep.subr.mxu0 0.0
  %2882 = vmatpush1.msra.mxu0 0.0
  %2883 = vmatprep.subr.mxu0 0.0
  %2884 = vmatpush1.msra.mxu0 0.0
  %2885 = vmatprep.subr.mxu0 0.0
  %2886 = vmatpush1.msra.mxu0 0.0
  %2887 = vmatprep.subr.mxu0 0.0
  %2888 = vmatpush1.msra.mxu0 0.0
  %2889 = vmatprep.subr.mxu0 0.0
  %2890 = vmatpush1.msra.mxu0 0.0
  %2891 = vmatprep.subr.mxu0 0.0
  %2892 = vmatpush1.msra.mxu0 0.0
  %2893 = vmatprep.subr.mxu0 0.0
  %2894 = vmatpush1.msra.mxu0 0.0
  %2895 = vmatprep.subr.mxu0 0.0
  %2896 = vmatpush1.msra.mxu0 0.0
  %2897 = vmatprep.subr.mxu0 0.0
  %2898 = vmatpush1.msra.mxu0 0.0
  %2899 = vmatprep.subr.mxu0 0.0
  %2900 = vmatpush1.msra.mxu0 0.0
  %2901 = vmatprep.subr.mxu0 0.0
  %2902 = vmatpush1.msra.mxu0 0.0
  %2903 = vmatprep.subr.mxu0 0.0
  %2904 = vmatpush1.msra.mxu0 0.0
  %2905 = vmatprep.subr.mxu0 0.0
  %2906 = vmatpush1.msra.mxu0 0.0
  %2907 = vmatprep.mubr.f32.mxu0 0.0
  %2908 = vmatmul.mubr.f32.gmra.mrb[0].mxu0 %v2826
  %v2909 = vpop.f32.mrb[0].mxu0
  %v2910 = vadd.f32 %v2824, %v2909
  %v2911 = vpop.f32.mrb[0].mxu0
  %2912 = vmatprep.mubr.f32.mxu0 0.0
  %2913 = vmatmul.mubr.f32.gmra.mrb[0].mxu0 %v2829
  %v2914 = vpop.f32.mrb[0].mxu0
  %v2915 = vadd.f32 %v2824, %v2914
  %v2916 = vpop.f32.mrb[0].mxu0
  %2917 = vmatprep.mubr.f32.mxu0 0.0
  %2918 = vmatmul.mubr.f32.gmra.mrb[0].mxu0 %v2832
  %v2919 = vpop.f32.mrb[0].mxu0
  %v2920 = vadd.f32 %v2824, %v2919
  %v2921 = vpop.f32.mrb[0].mxu0
  %2922 = vmatprep.mubr.f32.mxu0 0.0
  %2923 = vmatmul.mubr.f32.gmra.mrb[0].mxu0 %v2835
  %v2924 = vpop.f32.mrb[0].mxu0
  %v2925 = vadd.f32 %v2824, %v2924
  %v2926 = vpop.f32.mrb[0].mxu0
  %2927 = vmatprep.mubr.f32.mxu0 0.0
  %2928 = vmatmul.mubr.f32.gmra.mrb[0].mxu0 %v2838
  %v2929 = vpop.f32.mrb[0].mxu0
  %v2930 = vadd.f32 %v2824, %v2929
  %v2931 = vpop.f32.mrb[0].mxu0
  %2932 = vmatprep.mubr.f32.mxu0 0.0
  %2933 = vmatmul.mubr.f32.gmra.mrb[0].mxu0 %v2841
  %v2934 = vpop.f32.mrb[0].mxu0
  %v2935 = vadd.f32 %v2824, %v2934
  %v2936 = vpop.f32.mrb[0].mxu0
  %2937 = vdwg.mxu0
  %v2938 = vadd.f32 %v1740, %v2910
  %v2939 = vadd.f32 %v1741, %v2915
  %v2940 = vadd.f32 %v1742, %v2920
  %v2941 = vadd.f32 %v1743, %v2925
  %v2942 = vadd.f32 %v1744, %v2930
  %v2943 = vadd.f32 %v1745, %v2935
  %v2944 = vsel %vm44, %v2938, 0.0
  %2945 = vadd.xlane.f32.xlu0 %v2944
  %v2946 = vpop.xlane.xlu0 %2945
  %v2947 = vsel %vm44, %v2939, 0.0
  %2948 = vadd.xlane.f32.xlu0 %v2947
  %v2949 = vpop.xlane.xlu0 %2948
  %v2950 = vsel %vm44, %v2940, 0.0
  %2951 = vadd.xlane.f32.xlu0 %v2950
  %v2952 = vpop.xlane.xlu0 %2951
  %v2953 = vsel %vm44, %v2941, 0.0
  %2954 = vadd.xlane.f32.xlu0 %v2953
  %v2955 = vpop.xlane.xlu0 %2954
  %v2956 = vsel %vm44, %v2942, 0.0
  %2957 = vadd.xlane.f32.xlu0 %v2956
  %v2958 = vpop.xlane.xlu0 %2957
  %v2959 = vsel %vm44, %v2943, 0.0
  %2960 = vadd.xlane.f32.xlu0 %v2959
  %v2961 = vpop.xlane.xlu0 %2960
  %v2962 = vmul.f32 %v2946, %v63
  %v2963 = vmul.f32 %v2949, %v63
  %v2964 = vmul.f32 %v2952, %v63
  %v2965 = vmul.f32 %v2955, %v63
  %v2966 = vmul.f32 %v2958, %v63
  %v2967 = vmul.f32 %v2961, %v63
  %v2968 = vsub.f32 %v2938, %v2962
  %v2969 = vsub.f32 %v2939, %v2963
  %v2970 = vsub.f32 %v2940, %v2964
  %v2971 = vsub.f32 %v2941, %v2965
  %v2972 = vsub.f32 %v2942, %v2966
  %v2973 = vsub.f32 %v2943, %v2967
  %v2974 = vmul.f32 %v2968, %v2968
  %v2975 = vmul.f32 %v2969, %v2969
  %v2976 = vmul.f32 %v2970, %v2970
  %v2977 = vmul.f32 %v2971, %v2971
  %v2978 = vmul.f32 %v2972, %v2972
  %v2979 = vmul.f32 %v2973, %v2973
  %v2980 = vsel %vm44, %v2974, 0.0
  %2981 = vadd.xlane.f32.xlu0 %v2980
  %v2982 = vpop.xlane.xlu0 %2981
  %v2983 = vsel %vm44, %v2975, 0.0
  %2984 = vadd.xlane.f32.xlu0 %v2983
  %v2985 = vpop.xlane.xlu0 %2984
  %v2986 = vsel %vm44, %v2976, 0.0
  %2987 = vadd.xlane.f32.xlu0 %v2986
  %v2988 = vpop.xlane.xlu0 %2987
  %v2989 = vsel %vm44, %v2977, 0.0
  %2990 = vadd.xlane.f32.xlu0 %v2989
  %v2991 = vpop.xlane.xlu0 %2990
  %v2992 = vsel %vm44, %v2978, 0.0
  %2993 = vadd.xlane.f32.xlu0 %v2992
  %v2994 = vpop.xlane.xlu0 %2993
  %v2995 = vsel %vm44, %v2979, 0.0
  %2996 = vadd.xlane.f32.xlu0 %v2995
  %v2997 = vpop.xlane.xlu0 %2996
  %v2998 = vmul.f32 %v2982, %v63
  %v2999 = vmul.f32 %v2985, %v63
  %v3000 = vmul.f32 %v2988, %v63
  %v3001 = vmul.f32 %v2991, %v63
  %v3002 = vmul.f32 %v2994, %v63
  %v3003 = vmul.f32 %v2997, %v63
  %v3004 = vadd.f32 %v2998, 1e-05
  %v3005 = vadd.f32 %v2999, 1e-05
  %v3006 = vadd.f32 %v3000, 1e-05
  %v3007 = vadd.f32 %v3001, 1e-05
  %v3008 = vadd.f32 %v3002, 1e-05
  %v3009 = vadd.f32 %v3003, 1e-05
  %v3010 = vrsqrt.pop %v3004
  %v3011 = vrsqrt.pop %v3005
  %v3012 = vrsqrt.pop %v3006
  %v3013 = vrsqrt.pop %v3007
  %v3014 = vrsqrt.pop %v3008
  %v3015 = vrsqrt.pop %v3009
  %v3016 = vmul.f32 %v2968, %v3010
  %v3017 = vmul.f32 %v2969, %v3011
  %v3018 = vmul.f32 %v2970, %v3012
  %v3019 = vmul.f32 %v2971, %v3013
  %v3020 = vmul.f32 %v2972, %v3014
  %v3021 = vmul.f32 %v2973, %v3015
  %v3022 = vlaneseq
  %v3023 = vshrl.u32 %v3022, 7
  %v3024 = vsub.s32 1, %v3023
  %v3025 = vrot.slane %v31, %v3024
  %v3026 = vmul.f32 %v3016, %v3025
  %v3027 = vmul.f32 %v3017, %v3025
  %v3028 = vmul.f32 %v3018, %v3025
  %v3029 = vmul.f32 %v3019, %v3025
  %v3030 = vmul.f32 %v3020, %v3025
  %v3031 = vmul.f32 %v3021, %v3025
  %v3032 = vlaneseq
  %v3033 = vshrl.u32 %v3032, 7
  %v3034 = vsub.s32 2, %v3033
  %v3035 = vrot.slane %v31, %v3034
  %v3036 = vadd.f32 %v3026, %v3035
  %v3037 = vadd.f32 %v3027, %v3035
  %v3038 = vadd.f32 %v3028, %v3035
  %v3039 = vadd.f32 %v3029, %v3035
  %v3040 = vadd.f32 %v3030, %v3035
  %v3041 = vadd.f32 %v3031, %v3035
  %s3042 = scalar_lea.vmem %s3, 128
  %v3043 = vld [vmem:[%s3042] sm:$0xff]
  %v3044 = vld [vmem:[%s3042 + $0x8] sm:$0xff]
  %v3045 = vld [vmem:[%s3042 + $0x10] sm:$0xff]
  %v3046 = vld [vmem:[%s3042 + $0x18] sm:$0xff]
  %v3047 = vld [vmem:[%s3042 + $0x20] sm:$0xff]
  %v3048 = vld [vmem:[%s3042 + $0x28] sm:$0xff]
  %v3049 = vld [vmem:[%s3042 + $0x30] sm:$0xff]
  %v3050 = vld [vmem:[%s3042 + $0x38] sm:$0xff]
  %v3051 = vld [vmem:[%s3042 + $0x40] sm:$0xff]
  %v3052 = vld [vmem:[%s3042 + $0x48] sm:$0xff]
  %v3053 = vld [vmem:[%s3042 + $0x50] sm:$0xff]
  %v3054 = vld [vmem:[%s3042 + $0x58] sm:$0xff]
  %v3055 = vld [vmem:[%s3042 + $0x60] sm:$0xff]
  %v3056 = vld [vmem:[%s3042 + $0x68] sm:$0xff]
  %v3057 = vld [vmem:[%s3042 + $0x70] sm:$0xff]
  %v3058 = vld [vmem:[%s3042 + $0x78] sm:$0xff]
  %s3059 = scalar_lea.vmem %s5, 2
  %v3060 = vld [vmem:[%s3059] sm:$0x3]
  %v3062 = vlaneseq
  %v3063 = vshrl.u32 %v3062, 7
  %v3064 = vsub.s32 0, %v3063
  %v3065 = vrot.slane %v3060, %v3064
  %v3066 = vlaneseq
  %v3067 = vshrl.u32 %v3066, 7
  %v3068 = vsub.s32 1, %v3067
  %v3069 = vrot.slane %v3060, %v3068
  %v3073 = vsel %vm44, %v3036, 0
  %v3076 = vsel %vm44, %v3037, 0
  %v3079 = vsel %vm44, %v3038, 0
  %v3082 = vsel %vm44, %v3039, 0
  %v3085 = vsel %vm44, %v3040, 0
  %v3088 = vsel %vm44, %v3041, 0
  %3090 = vmatprep.subr.mxu0 %v3044
  %3091 = vmatpush1.msra.mxu0 %v3043
  %3092 = vmatprep.subr.mxu0 %v3046
  %3093 = vmatpush1.msra.mxu0 %v3045
  %3094 = vmatprep.subr.mxu0 %v3048
  %3095 = vmatpush1.msra.mxu0 %v3047
  %3096 = vmatprep.subr.mxu0 %v3050
  %3097 = vmatpush1.msra.mxu0 %v3049
  %3098 = vmatprep.subr.mxu0 %v3052
  %3099 = vmatpush1.msra.mxu0 %v3051
  %3100 = vmatprep.subr.mxu0 %v3054
  %3101 = vmatpush1.msra.mxu0 %v3053
  %3102 = vmatprep.subr.mxu0 %v3056
  %3103 = vmatpush1.msra.mxu0 %v3055
  %3104 = vmatprep.subr.mxu0 %v3058
  %3105 = vmatpush1.msra.mxu0 %v3057
  %3106 = vmatprep.subr.mxu0 0.0
  %3107 = vmatpush1.msra.mxu0 0.0
  %3108 = vmatprep.subr.mxu0 0.0
  %3109 = vmatpush1.msra.mxu0 0.0
  %3110 = vmatprep.subr.mxu0 0.0
  %3111 = vmatpush1.msra.mxu0 0.0
  %3112 = vmatprep.subr.mxu0 0.0
  %3113 = vmatpush1.msra.mxu0 0.0
  %3114 = vmatprep.subr.mxu0 0.0
  %3115 = vmatpush1.msra.mxu0 0.0
  %3116 = vmatprep.subr.mxu0 0.0
  %3117 = vmatpush1.msra.mxu0 0.0
  %3118 = vmatprep.subr.mxu0 0.0
  %3119 = vmatpush1.msra.mxu0 0.0
  %3120 = vmatprep.subr.mxu0 0.0
  %3121 = vmatpush1.msra.mxu0 0.0
  %3122 = vmatprep.subr.mxu0 0.0
  %3123 = vmatpush1.msra.mxu0 0.0
  %3124 = vmatprep.subr.mxu0 0.0
  %3125 = vmatpush1.msra.mxu0 0.0
  %3126 = vmatprep.subr.mxu0 0.0
  %3127 = vmatpush1.msra.mxu0 0.0
  %3128 = vmatprep.subr.mxu0 0.0
  %3129 = vmatpush1.msra.mxu0 0.0
  %3130 = vmatprep.subr.mxu0 0.0
  %3131 = vmatpush1.msra.mxu0 0.0
  %3132 = vmatprep.subr.mxu0 0.0
  %3133 = vmatpush1.msra.mxu0 0.0
  %3134 = vmatprep.subr.mxu0 0.0
  %3135 = vmatpush1.msra.mxu0 0.0
  %3136 = vmatprep.subr.mxu0 0.0
  %3137 = vmatpush1.msra.mxu0 0.0
  %3138 = vmatprep.subr.mxu0 0.0
  %3139 = vmatpush1.msra.mxu0 0.0
  %3140 = vmatprep.subr.mxu0 0.0
  %3141 = vmatpush1.msra.mxu0 0.0
  %3142 = vmatprep.subr.mxu0 0.0
  %3143 = vmatpush1.msra.mxu0 0.0
  %3144 = vmatprep.subr.mxu0 0.0
  %3145 = vmatpush1.msra.mxu0 0.0
  %3146 = vmatprep.subr.mxu0 0.0
  %3147 = vmatpush1.msra.mxu0 0.0
  %3148 = vmatprep.subr.mxu0 0.0
  %3149 = vmatpush1.msra.mxu0 0.0
  %3150 = vmatprep.subr.mxu0 0.0
  %3151 = vmatpush1.msra.mxu0 0.0
  %3152 = vmatprep.subr.mxu0 0.0
  %3153 = vmatpush1.msra.mxu0 0.0
  %3154 = vmatprep.mubr.f32.mxu0 0.0
  %3155 = vmatmul.mubr.f32.gmra.mrb[0].mxu0 %v3073
  %v3156 = vpop.f32.mrb[0].mxu0
  %v3157 = vadd.f32 %v3065, %v3156
  %v3158 = vpop.f32.mrb[0].mxu0
  %v3159 = vadd.f32 %v3069, %v3158
  %3160 = vmatprep.mubr.f32.mxu0 0.0
  %3161 = vmatmul.mubr.f32.gmra.mrb[0].mxu0 %v3076
  %v3162 = vpop.f32.mrb[0].mxu0
  %v3163 = vadd.f32 %v3065, %v3162
  %v3164 = vpop.f32.mrb[0].mxu0
  %v3165 = vadd.f32 %v3069, %v3164
  %3166 = vmatprep.mubr.f32.mxu0 0.0
  %3167 = vmatmul.mubr.f32.gmra.mrb[0].mxu0 %v3079
  %v3168 = vpop.f32.mrb[0].mxu0
  %v3169 = vadd.f32 %v3065, %v3168
  %v3170 = vpop.f32.mrb[0].mxu0
  %v3171 = vadd.f32 %v3069, %v3170
  %3172 = vmatprep.mubr.f32.mxu0 0.0
  %3173 = vmatmul.mubr.f32.gmra.mrb[0].mxu0 %v3082
  %v3174 = vpop.f32.mrb[0].mxu0
  %v3175 = vadd.f32 %v3065, %v3174
  %v3176 = vpop.f32.mrb[0].mxu0
  %v3177 = vadd.f32 %v3069, %v3176
  %3178 = vmatprep.mubr.f32.mxu0 0.0
  %3179 = vmatmul.mubr.f32.gmra.mrb[0].mxu0 %v3085
  %v3180 = vpop.f32.mrb[0].mxu0
  %v3181 = vadd.f32 %v3065, %v3180
  %v3182 = vpop.f32.mrb[0].mxu0
  %v3183 = vadd.f32 %v3069, %v3182
  %3184 = vmatprep.mubr.f32.mxu0 0.0
  %3185 = vmatmul.mubr.f32.gmra.mrb[0].mxu0 %v3088
  %v3186 = vpop.f32.mrb[0].mxu0
  %v3187 = vadd.f32 %v3065, %v3186
  %v3188 = vpop.f32.mrb[0].mxu0
  %v3189 = vadd.f32 %v3069, %v3188
  %3190 = vdwg.mxu0
  %v3191 = vmul.f32 %v3157, 0.5
  %v3192 = vmul.f32 %v3159, 0.5
  %v3193 = vmul.f32 %v3163, 0.5
  %v3194 = vmul.f32 %v3165, 0.5
  %v3195 = vmul.f32 %v3169, 0.5
  %v3196 = vmul.f32 %v3171, 0.5
  %v3197 = vmul.f32 %v3175, 0.5
  %v3198 = vmul.f32 %v3177, 0.5
  %v3199 = vmul.f32 %v3181, 0.5
  %v3200 = vmul.f32 %v3183, 0.5
  %v3201 = vmul.f32 %v3187, 0.5
  %v3202 = vmul.f32 %v3189, 0.5
  %v3203 = vmul.f32 %v3157, 0.044715
  %v3204 = vmul.f32 %v3159, 0.044715
  %v3205 = vmul.f32 %v3163, 0.044715
  %v3206 = vmul.f32 %v3165, 0.044715
  %v3207 = vmul.f32 %v3169, 0.044715
  %v3208 = vmul.f32 %v3171, 0.044715
  %v3209 = vmul.f32 %v3175, 0.044715
  %v3210 = vmul.f32 %v3177, 0.044715
  %v3211 = vmul.f32 %v3181, 0.044715
  %v3212 = vmul.f32 %v3183, 0.044715
  %v3213 = vmul.f32 %v3187, 0.044715
  %v3214 = vmul.f32 %v3189, 0.044715
  %v3215 = vmul.f32 %v3203, %v3157
  %v3216 = vmul.f32 %v3204, %v3159
  %v3217 = vmul.f32 %v3205, %v3163
  %v3218 = vmul.f32 %v3206, %v3165
  %v3219 = vmul.f32 %v3207, %v3169
  %v3220 = vmul.f32 %v3208, %v3171
  %v3221 = vmul.f32 %v3209, %v3175
  %v3222 = vmul.f32 %v3210, %v3177
  %v3223 = vmul.f32 %v3211, %v3181
  %v3224 = vmul.f32 %v3212, %v3183
  %v3225 = vmul.f32 %v3213, %v3187
  %v3226 = vmul.f32 %v3214, %v3189
  %v3227 = vmul.f32 %v3215, %v3157
  %v3228 = vmul.f32 %v3216, %v3159
  %v3229 = vmul.f32 %v3217, %v3163
  %v3230 = vmul.f32 %v3218, %v3165
  %v3231 = vmul.f32 %v3219, %v3169
  %v3232 = vmul.f32 %v3220, %v3171
  %v3233 = vmul.f32 %v3221, %v3175
  %v3234 = vmul.f32 %v3222, %v3177
  %v3235 = vmul.f32 %v3223, %v3181
  %v3236 = vmul.f32 %v3224, %v3183
  %v3237 = vmul.f32 %v3225, %v3187
  %v3238 = vmul.f32 %v3226, %v3189
  %v3239 = vadd.f32 %v3157, %v3227
  %v3240 = vadd.f32 %v3159, %v3228
  %v3241 = vadd.f32 %v3163, %v3229
  %v3242 = vadd.f32 %v3165, %v3230
  %v3243 = vadd.f32 %v3169, %v3231
  %v3244 = vadd.f32 %v3171, %v3232
  %v3245 = vadd.f32 %v3175, %v3233
  %v3246 = vadd.f32 %v3177, %v3234
  %v3247 = vadd.f32 %v3181, %v3235
  %v3248 = vadd.f32 %v3183, %v3236
  %v3249 = vadd.f32 %v3187, %v3237
  %v3250 = vadd.f32 %v3189, %v3238
  %v3251 = vmul.f32 %v3239, 0.7978846
  %v3252 = vmul.f32 %v3240, 0.7978846
  %v3253 = vmul.f32 %v3241, 0.7978846
  %v3254 = vmul.f32 %v3242, 0.7978846
  %v3255 = vmul.f32 %v3243, 0.7978846
  %v3256 = vmul.f32 %v3244, 0.7978846
  %v3257 = vmul.f32 %v3245, 0.7978846
  %v3258 = vmul.f32 %v3246, 0.7978846
  %v3259 = vmul.f32 %v3247, 0.7978846
  %v3260 = vmul.f32 %v3248, 0.7978846
  %v3261 = vmul.f32 %v3249, 0.7978846
  %v3262 = vmul.f32 %v3250, 0.7978846
  %v3263 = vtanh.pop %v3251
  %v3264 = vtanh.pop %v3252
  %v3265 = vtanh.pop %v3253
  %v3266 = vtanh.pop %v3254
  %v3267 = vtanh.pop %v3255
  %v3268 = vtanh.pop %v3256
  %v3269 = vtanh.pop %v3257
  %v3270 = vtanh.pop %v3258
  %v3271 = vtanh.pop %v3259
  %v3272 = vtanh.pop %v3260
  %v3273 = vtanh.pop %v3261
  %v3274 = vtanh.pop %v3262
  %v3275 = vadd.f32 %v3263, 1.0
  %v3276 = vadd.f32 %v3264, 1.0
  %v3277 = vadd.f32 %v3265, 1.0
  %v3278 = vadd.f32 %v3266, 1.0
  %v3279 = vadd.f32 %v3267, 1.0
  %v3280 = vadd.f32 %v3268, 1.0
  %v3281 = vadd.f32 %v3269, 1.0
  %v3282 = vadd.f32 %v3270, 1.0
  %v3283 = vadd.f32 %v3271, 1.0
  %v3284 = vadd.f32 %v3272, 1.0
  %v3285 = vadd.f32 %v3273, 1.0
  %v3286 = vadd.f32 %v3274, 1.0
  %v3287 = vmul.f32 %v3191, %v3275
  %v3288 = vmul.f32 %v3192, %v3276
  %v3289 = vmul.f32 %v3193, %v3277
  %v3290 = vmul.f32 %v3194, %v3278
  %v3291 = vmul.f32 %v3195, %v3279
  %v3292 = vmul.f32 %v3196, %v3280
  %v3293 = vmul.f32 %v3197, %v3281
  %v3294 = vmul.f32 %v3198, %v3282
  %v3295 = vmul.f32 %v3199, %v3283
  %v3296 = vmul.f32 %v3200, %v3284
  %v3297 = vmul.f32 %v3201, %v3285
  %v3298 = vmul.f32 %v3202, %v3286
  %s3299 = scalar_lea.vmem %s4, 256
  %v3300 = vld [vmem:[%s3299] sm:$0xff]
  %v3301 = vld [vmem:[%s3299 + $0x8] sm:$0xff]
  %v3302 = vld [vmem:[%s3299 + $0x10] sm:$0xff]
  %v3303 = vld [vmem:[%s3299 + $0x18] sm:$0xff]
  %v3304 = vld [vmem:[%s3299 + $0x20] sm:$0xff]
  %v3305 = vld [vmem:[%s3299 + $0x28] sm:$0xff]
  %v3306 = vld [vmem:[%s3299 + $0x30] sm:$0xff]
  %v3307 = vld [vmem:[%s3299 + $0x38] sm:$0xff]
  %v3308 = vld [vmem:[%s3299 + $0x40] sm:$0xff]
  %v3309 = vld [vmem:[%s3299 + $0x48] sm:$0xff]
  %v3310 = vld [vmem:[%s3299 + $0x50] sm:$0xff]
  %v3311 = vld [vmem:[%s3299 + $0x58] sm:$0xff]
  %v3312 = vld [vmem:[%s3299 + $0x60] sm:$0xff]
  %v3313 = vld [vmem:[%s3299 + $0x68] sm:$0xff]
  %v3314 = vld [vmem:[%s3299 + $0x70] sm:$0xff]
  %v3315 = vld [vmem:[%s3299 + $0x78] sm:$0xff]
  %v3316 = vld [vmem:[%s3299 + $0x80] sm:$0xff]
  %v3317 = vld [vmem:[%s3299 + $0x88] sm:$0xff]
  %v3318 = vld [vmem:[%s3299 + $0x90] sm:$0xff]
  %v3319 = vld [vmem:[%s3299 + $0x98] sm:$0xff]
  %v3320 = vld [vmem:[%s3299 + $0xa0] sm:$0xff]
  %v3321 = vld [vmem:[%s3299 + $0xa8] sm:$0xff]
  %v3322 = vld [vmem:[%s3299 + $0xb0] sm:$0xff]
  %v3323 = vld [vmem:[%s3299 + $0xb8] sm:$0xff]
  %v3324 = vld [vmem:[%s3299 + $0xc0] sm:$0xff]
  %v3325 = vld [vmem:[%s3299 + $0xc8] sm:$0xff]
  %v3326 = vld [vmem:[%s3299 + $0xd0] sm:$0xff]
  %v3327 = vld [vmem:[%s3299 + $0xd8] sm:$0xff]
  %v3328 = vld [vmem:[%s3299 + $0xe0] sm:$0xff]
  %v3329 = vld [vmem:[%s3299 + $0xe8] sm:$0xff]
  %v3330 = vld [vmem:[%s3299 + $0xf0] sm:$0xff]
  %v3331 = vld [vmem:[%s3299 + $0xf8] sm:$0xff]
  %v3332 = vlaneseq
  %v3333 = vshrl.u32 %v3332, 7
  %v3334 = vsub.s32 3, %v3333
  %v3335 = vrot.slane %v31, %v3334
  %3336 = vmatprep.subr.mxu0 0.0
  %3337 = vmatpush1.msra.mxu0 %v3300
  %3338 = vmatprep.subr.mxu0 0.0
  %3339 = vmatpush1.msra.mxu0 %v3301
  %3340 = vmatprep.subr.mxu0 0.0
  %3341 = vmatpush1.msra.mxu0 %v3302
  %3342 = vmatprep.subr.mxu0 0.0
  %3343 = vmatpush1.msra.mxu0 %v3303
  %3344 = vmatprep.subr.mxu0 0.0
  %3345 = vmatpush1.msra.mxu0 %v3304
  %3346 = vmatprep.subr.mxu0 0.0
  %3347 = vmatpush1.msra.mxu0 %v3305
  %3348 = vmatprep.subr.mxu0 0.0
  %3349 = vmatpush1.msra.mxu0 %v3306
  %3350 = vmatprep.subr.mxu0 0.0
  %3351 = vmatpush1.msra.mxu0 %v3307
  %3352 = vmatprep.subr.mxu0 0.0
  %3353 = vmatpush1.msra.mxu0 %v3308
  %3354 = vmatprep.subr.mxu0 0.0
  %3355 = vmatpush1.msra.mxu0 %v3309
  %3356 = vmatprep.subr.mxu0 0.0
  %3357 = vmatpush1.msra.mxu0 %v3310
  %3358 = vmatprep.subr.mxu0 0.0
  %3359 = vmatpush1.msra.mxu0 %v3311
  %3360 = vmatprep.subr.mxu0 0.0
  %3361 = vmatpush1.msra.mxu0 %v3312
  %3362 = vmatprep.subr.mxu0 0.0
  %3363 = vmatpush1.msra.mxu0 %v3313
  %3364 = vmatprep.subr.mxu0 0.0
  %3365 = vmatpush1.msra.mxu0 %v3314
  %3366 = vmatprep.subr.mxu0 0.0
  %3367 = vmatpush1.msra.mxu0 %v3315
  %3368 = vmatprep.subr.mxu0 0.0
  %3369 = vmatpush1.msra.mxu0 %v3316
  %3370 = vmatprep.subr.mxu0 0.0
  %3371 = vmatpush1.msra.mxu0 %v3317
  %3372 = vmatprep.subr.mxu0 0.0
  %3373 = vmatpush1.msra.mxu0 %v3318
  %3374 = vmatprep.subr.mxu0 0.0
  %3375 = vmatpush1.msra.mxu0 %v3319
  %3376 = vmatprep.subr.mxu0 0.0
  %3377 = vmatpush1.msra.mxu0 %v3320
  %3378 = vmatprep.subr.mxu0 0.0
  %3379 = vmatpush1.msra.mxu0 %v3321
  %3380 = vmatprep.subr.mxu0 0.0
  %3381 = vmatpush1.msra.mxu0 %v3322
  %3382 = vmatprep.subr.mxu0 0.0
  %3383 = vmatpush1.msra.mxu0 %v3323
  %3384 = vmatprep.subr.mxu0 0.0
  %3385 = vmatpush1.msra.mxu0 %v3324
  %3386 = vmatprep.subr.mxu0 0.0
  %3387 = vmatpush1.msra.mxu0 %v3325
  %3388 = vmatprep.subr.mxu0 0.0
  %3389 = vmatpush1.msra.mxu0 %v3326
  %3390 = vmatprep.subr.mxu0 0.0
  %3391 = vmatpush1.msra.mxu0 %v3327
  %3392 = vmatprep.subr.mxu0 0.0
  %3393 = vmatpush1.msra.mxu0 %v3328
  %3394 = vmatprep.subr.mxu0 0.0
  %3395 = vmatpush1.msra.mxu0 %v3329
  %3396 = vmatprep.subr.mxu0 0.0
  %3397 = vmatpush1.msra.mxu0 %v3330
  %3398 = vmatprep.subr.mxu0 0.0
  %3399 = vmatpush1.msra.mxu0 %v3331
  %3400 = vmatprep.mubr.f32.mxu0 %v3288
  %3401 = vmatmul.mubr.f32.gmra.mrb[0].mxu0 %v3287
  %v3402 = vpop.f32.mrb[0].mxu0
  %v3403 = vpop.f32.mrb[0].mxu0
  %3404 = vmatprep.mubr.f32.mxu0 %v3290
  %3405 = vmatmul.mubr.f32.gmra.mrb[0].mxu0 %v3289
  %v3406 = vpop.f32.mrb[0].mxu0
  %v3407 = vadd.f32 %v3335, %v3406
  %v3408 = vpop.f32.mrb[0].mxu0
  %3409 = vmatprep.mubr.f32.mxu0 %v3292
  %3410 = vmatmul.mubr.f32.gmra.mrb[0].mxu0 %v3291
  %v3411 = vpop.f32.mrb[0].mxu0
  %v3412 = vadd.f32 %v3335, %v3411
  %v3413 = vpop.f32.mrb[0].mxu0
  %3414 = vmatprep.mubr.f32.mxu0 %v3294
  %3415 = vmatmul.mubr.f32.gmra.mrb[0].mxu0 %v3293
  %v3416 = vpop.f32.mrb[0].mxu0
  %v3417 = vpop.f32.mrb[0].mxu0
  %3418 = vmatprep.mubr.f32.mxu0 %v3296
  %3419 = vmatmul.mubr.f32.gmra.mrb[0].mxu0 %v3295
  %v3420 = vpop.f32.mrb[0].mxu0
  %v3421 = vadd.f32 %v3335, %v3420
  %v3422 = vpop.f32.mrb[0].mxu0
  %3423 = vmatprep.mubr.f32.mxu0 %v3298
  %3424 = vmatmul.mubr.f32.gmra.mrb[0].mxu0 %v3297
  %v3425 = vpop.f32.mrb[0].mxu0
  %v3426 = vadd.f32 %v3335, %v3425
  %v3427 = vpop.f32.mrb[0].mxu0
  %3428 = vdwg.mxu0
  %v3429 = vadd.f32 %v2939, %v3407
  %v3430 = vadd.f32 %v2940, %v3412
  %v3431 = vadd.f32 %v2942, %v3421
  %v3432 = vadd.f32 %v2943, %v3426
  %v3433 = vsel %vm44, %v3429, 0.0
  %3434 = vadd.xlane.f32.xlu0 %v3433
  %v3435 = vpop.xlane.xlu0 %3434
  %v3436 = vsel %vm44, %v3430, 0.0
  %3437 = vadd.xlane.f32.xlu0 %v3436
  %v3438 = vpop.xlane.xlu0 %3437
  %v3439 = vsel %vm44, %v3431, 0.0
  %3440 = vadd.xlane.f32.xlu0 %v3439
  %v3441 = vpop.xlane.xlu0 %3440
  %v3442 = vsel %vm44, %v3432, 0.0
  %3443 = vadd.xlane.f32.xlu0 %v3442
  %v3444 = vpop.xlane.xlu0 %3443
  %v3445 = vmul.f32 %v3435, %v63
  %v3446 = vmul.f32 %v3438, %v63
  %v3447 = vmul.f32 %v3441, %v63
  %v3448 = vmul.f32 %v3444, %v63
  %v3449 = vsub.f32 %v3429, %v3445
  %v3450 = vsub.f32 %v3430, %v3446
  %v3451 = vsub.f32 %v3431, %v3447
  %v3452 = vsub.f32 %v3432, %v3448
  %v3453 = vmul.f32 %v3449, %v3449
  %v3454 = vmul.f32 %v3450, %v3450
  %v3455 = vmul.f32 %v3451, %v3451
  %v3456 = vmul.f32 %v3452, %v3452
  %v3457 = vsel %vm44, %v3453, 0.0
  %3458 = vadd.xlane.f32.xlu0 %v3457
  %v3459 = vpop.xlane.xlu0 %3458
  %v3460 = vsel %vm44, %v3454, 0.0
  %3461 = vadd.xlane.f32.xlu0 %v3460
  %v3462 = vpop.xlane.xlu0 %3461
  %v3463 = vsel %vm44, %v3455, 0.0
  %3464 = vadd.xlane.f32.xlu0 %v3463
  %v3465 = vpop.xlane.xlu0 %3464
  %v3466 = vsel %vm44, %v3456, 0.0
  %3467 = vadd.xlane.f32.xlu0 %v3466
  %v3468 = vpop.xlane.xlu0 %3467
  %v3469 = vmul.f32 %v3459, %v63
  %v3470 = vmul.f32 %v3462, %v63
  %v3471 = vmul.f32 %v3465, %v63
  %v3472 = vmul.f32 %v3468, %v63
  %v3473 = vadd.f32 %v3469, 1e-05
  %v3474 = vadd.f32 %v3470, 1e-05
  %v3475 = vadd.f32 %v3471, 1e-05
  %v3476 = vadd.f32 %v3472, 1e-05
  %v3477 = vrsqrt.pop %v3473
  %v3478 = vrsqrt.pop %v3474
  %v3479 = vrsqrt.pop %v3475
  %v3480 = vrsqrt.pop %v3476
  %v3481 = vmul.f32 %v3449, %v3477
  %v3482 = vmul.f32 %v3450, %v3478
  %v3483 = vmul.f32 %v3451, %v3479
  %v3484 = vmul.f32 %v3452, %v3480
  %v3485 = vlaneseq
  %v3486 = vshrl.u32 %v3485, 7
  %v3487 = vsub.s32 0, %v3486
  %v3488 = vrot.slane %v29, %v3487
  %v3489 = vmul.f32 %v3481, %v3488
  %v3490 = vmul.f32 %v3482, %v3488
  %v3491 = vmul.f32 %v3483, %v3488
  %v3492 = vmul.f32 %v3484, %v3488
  %v3493 = vlaneseq
  %v3494 = vshrl.u32 %v3493, 7
  %v3495 = vsub.s32 1, %v3494
  %v3496 = vrot.slane %v29, %v3495
  %v3497 = vadd.f32 %v3489, %v3496
  %v3498 = vadd.f32 %v3490, %v3496
  %v3499 = vadd.f32 %v3491, %v3496
  %v3500 = vadd.f32 %v3492, %v3496
  %v3501 = vld [vmem:[%s7] sm:$0xff]
  %v3502 = vld [vmem:[%s7 + $0x8] sm:$0xff]
  %v3503 = vadd.f32 %v3497, %v3501
  %v3504 = vadd.f32 %v3498, %v3502
  %v3505 = vadd.f32 %v3499, %v3501
  %v3506 = vadd.f32 %v3500, %v3502
  %3507 = vst.msk [vmem:[%s8] sm:$0xff] %vm44, %v3503
  %3508 = vst.msk [vmem:[%s8 + $0x8] sm:$0xff] %vm44, %v3504
  %3509 = vst.msk [vmem:[%s8 + $0x10] sm:$0xff] %vm44, %v3505
  %3510 = vst.msk [vmem:[%s8 + $0x18] sm:$0xff] %vm44, %v3506
  // Predicated region
  $region34: #{cpgg_forward.6} parent=0 // pred_check
    _
  $region35: #{cpgg_forward.6} parent=0 // pred_check_branch
    %3512 = sbr.rel (0) target = $region37
  $region36: #{cpgg_forward.6} parent=0 // pred_region
    _
  $region37: #{cpgg_forward.6} parent=0 // pred_fallthru
    _
  // Predicated region
  $region38: #{cpgg_forward.6} parent=0 // pred_check
    _
  $region39: #{cpgg_forward.6} parent=0 // pred_check_branch
    %3514 = sbr.rel (0) target = $region41
  $region40: #{cpgg_forward.6} parent=0 // pred_region
    _
  $region41: #{cpgg_forward.6} parent=0 // pred_fallthru
    _

// kernel: cpgg_forward.7
$region0: #{cpgg_forward.7}
  #allocation0 [shape = 'u32[]', space=smem, size = 0x4, offset = 0x4, fixed_abs, tag = 'smem constant byte address 0x4 - core index']
  #allocation1 [shape = 'u32[144,128]{1,0:T(1,128)}', space=vmem, size = 0x12000, scoped, tag = 'internal scratch']
  %s0 = inlined_call_operand.vmem [shape: f32[32,64], index: 0, kind: input, shape index: {}]
  %s1 = inlined_call_operand.vmem [shape: f32[32,20], index: 1, kind: input, shape index: {}]
  %s2 = inlined_call_operand.vmem [shape: f32[32,1], index: 2, kind: input, shape index: {}]
  %s3 = inlined_call_operand.vmem [shape: f32[128,1], index: 3, kind: input, shape index: {}]
  %s4 = inlined_call_operand.vmem [shape: f32[128,64], index: 4, kind: input, shape index: {}]
  %s5 = inlined_call_operand.vmem [shape: f32[128,20], index: 5, kind: input, shape index: {}]
  %s6 = inlined_call_operand.vmem [shape: f32[14,64], index: 6, kind: input, shape index: {}]
  %s7 = inlined_call_operand.vmem [shape: f32[7,64,64], index: 7, kind: input, shape index: {}]
  %s8 = inlined_call_operand.vmem [shape: f32[20,64], index: 8, kind: input, shape index: {}]
  %s9 = inlined_call_operand.vmem [shape: f32[64,20], index: 9, kind: input, shape index: {}]
  %s10 = inlined_call_operand.vmem [shape: f32[1,20], index: 10, kind: input, shape index: {}]
  %s11 = inlined_call_operand.hbm [shape: f32[1,1], index: 11, kind: output, shape index: {}]
  %s12 = sld [smem:[#allocation0]]
  $region54: #{cpgg_forward.7} parent=0
    _
  %s14 = ssub.s32 1, %s12
  %s15 = scalar_select 0, %s14, %s12
  $region1: #{cpgg_forward.7} parent=0
    #allocation2 [shape = 'u8[512]{0}', space=vmem, size = 0x400, scoped, tag = 'output window, operand 0, single buffered']
    #allocation3 [shape = 's32[1]{0}', space=sflag, size = 0x4, scoped, tag = 'scoped memory for cpgg_forward.7']
    %16 = vsyncpa [#allocation3], 0
    // Predicated region
    $region2: #{cpgg_forward.7} parent=1 // pred_check
      _
    $region3: #{cpgg_forward.7} parent=1 // pred_check_branch
      %18 = sbr.rel (0) target = $region5
    $region4: #{cpgg_forward.7} parent=1 // pred_region
      _
    $region5: #{cpgg_forward.7} parent=1 // pred_fallthru
      _
    // Predicated region
    $region6: #{cpgg_forward.7} parent=1 // pred_check
      _
    $region7: #{cpgg_forward.7} parent=1 // pred_check_branch
      %20 = sbr.rel (0) target = $region9
    $region8: #{cpgg_forward.7} parent=1 // pred_region
      _
    $region9: #{cpgg_forward.7} parent=1 // pred_fallthru
      _
    // Predicated region
    $region10: #{cpgg_forward.7} parent=1 // pred_check
      _
    $region11: #{cpgg_forward.7} parent=1 // pred_check_branch
      %22 = sbr.rel (0) target = $region13
    $region12: #{cpgg_forward.7} parent=1 // pred_region
      _
    $region13: #{cpgg_forward.7} parent=1 // pred_fallthru
      _
    // Predicated region
    $region14: #{cpgg_forward.7} parent=1 // pred_check
      _
    $region15: #{cpgg_forward.7} parent=1 // pred_check_branch
      %24 = sbr.rel (0) target = $region17
    $region16: #{cpgg_forward.7} parent=1 // pred_region
      _
    $region17: #{cpgg_forward.7} parent=1 // pred_fallthru
      _
    // Predicated region
    $region18: #{cpgg_forward.7} parent=1 // pred_check
      _
    $region19: #{cpgg_forward.7} parent=1 // pred_check_branch
      %26 = sbr.rel (0) target = $region21
    $region20: #{cpgg_forward.7} parent=1 // pred_region
      _
    $region21: #{cpgg_forward.7} parent=1 // pred_fallthru
      _
    // Predicated region
    $region22: #{cpgg_forward.7} parent=1 // pred_check
      _
    $region23: #{cpgg_forward.7} parent=1 // pred_check_branch
      %28 = sbr.rel (0) target = $region25
    $region24: #{cpgg_forward.7} parent=1 // pred_region
      _
    $region25: #{cpgg_forward.7} parent=1 // pred_fallthru
      _
    // Predicated region
    $region26: #{cpgg_forward.7} parent=1 // pred_check
      _
    $region27: #{cpgg_forward.7} parent=1 // pred_check_branch
      %30 = sbr.rel (0) target = $region29
    $region28: #{cpgg_forward.7} parent=1 // pred_region
      _
    $region29: #{cpgg_forward.7} parent=1 // pred_fallthru
      _
    // Predicated region
    $region30: #{cpgg_forward.7} parent=1 // pred_check
      _
    $region31: #{cpgg_forward.7} parent=1 // pred_check_branch
      %32 = sbr.rel (0) target = $region33
    $region32: #{cpgg_forward.7} parent=1 // pred_region
      _
    $region33: #{cpgg_forward.7} parent=1 // pred_fallthru
      _
    // Predicated region
    $region34: #{cpgg_forward.7} parent=1 // pred_check
      _
    $region35: #{cpgg_forward.7} parent=1 // pred_check_branch
      %34 = sbr.rel (0) target = $region37
    $region36: #{cpgg_forward.7} parent=1 // pred_region
      _
    $region37: #{cpgg_forward.7} parent=1 // pred_fallthru
      _
    // Predicated region
    $region38: #{cpgg_forward.7} parent=1 // pred_check
      _
    $region39: #{cpgg_forward.7} parent=1 // pred_check_branch
      %36 = sbr.rel (0) target = $region41
    $region40: #{cpgg_forward.7} parent=1 // pred_region
      _
    $region41: #{cpgg_forward.7} parent=1 // pred_fallthru
      _
    // Predicated region
    $region42: #{cpgg_forward.7} parent=1 // pred_check
      _
    $region43: #{cpgg_forward.7} parent=1 // pred_check_branch
      %38 = sbr.rel (0) target = $region45
    $region44: #{cpgg_forward.7} parent=1 // pred_region
      _
    $region45: #{cpgg_forward.7} parent=1 // pred_fallthru
      _
    %v39 = vld [vmem:[%s6] sm:$0xff]
    %v40 = vld [vmem:[%s6 + $0x8] sm:$0x3f]
    %v41 = vld [vmem:[%s0] sm:$0xff]
    %v42 = vld [vmem:[%s0 + $0x8] sm:$0xff]
    %v43 = vld [vmem:[%s0 + $0x10] sm:$0xff]
    %v44 = vld [vmem:[%s0 + $0x18] sm:$0xff]
    %v45 = vld [vmem:[%s1] sm:$0xff]
    %v46 = vld [vmem:[%s1 + $0x8] sm:$0xff]
    %v47 = vld [vmem:[%s1 + $0x10] sm:$0xff]
    %v48 = vld [vmem:[%s1 + $0x18] sm:$0xff]
    %v49 = vld [vmem:[%s2] sm:$0xff]
    %v50 = vld [vmem:[%s2 + $0x8] sm:$0xff]
    %v51 = vld [vmem:[%s2 + $0x10] sm:$0xff]
    %v52 = vld [vmem:[%s2 + $0x18] sm:$0xff]
    %v53 = vld [vmem:[%s3] sm:$0xff]
    %v54 = vld [vmem:[%s3 + $0x8] sm:$0xff]
    %v55 = vld [vmem:[%s3 + $0x10] sm:$0xff]
    %v56 = vld [vmem:[%s3 + $0x18] sm:$0xff]
    %v57 = vld [vmem:[%s3 + $0x20] sm:$0xff]
    %v58 = vld [vmem:[%s3 + $0x28] sm:$0xff]
    %v59 = vld [vmem:[%s3 + $0x30] sm:$0xff]
    %v60 = vld [vmem:[%s3 + $0x38] sm:$0xff]
    %v61 = vld [vmem:[%s3 + $0x40] sm:$0xff]
    %v62 = vld [vmem:[%s3 + $0x48] sm:$0xff]
    %v63 = vld [vmem:[%s3 + $0x50] sm:$0xff]
    %v64 = vld [vmem:[%s3 + $0x58] sm:$0xff]
    %v65 = vld [vmem:[%s3 + $0x60] sm:$0xff]
    %v66 = vld [vmem:[%s3 + $0x68] sm:$0xff]
    %v67 = vld [vmem:[%s3 + $0x70] sm:$0xff]
    %v68 = vld [vmem:[%s3 + $0x78] sm:$0xff]
    %v69 = vld [vmem:[%s5] sm:$0xff]
    %v70 = vld [vmem:[%s5 + $0x8] sm:$0xff]
    %v71 = vld [vmem:[%s5 + $0x10] sm:$0xff]
    %v72 = vld [vmem:[%s5 + $0x18] sm:$0xff]
    %v73 = vld [vmem:[%s5 + $0x20] sm:$0xff]
    %v74 = vld [vmem:[%s5 + $0x28] sm:$0xff]
    %v75 = vld [vmem:[%s5 + $0x30] sm:$0xff]
    %v76 = vld [vmem:[%s5 + $0x38] sm:$0xff]
    %v77 = vld [vmem:[%s5 + $0x40] sm:$0xff]
    %v78 = vld [vmem:[%s5 + $0x48] sm:$0xff]
    %v79 = vld [vmem:[%s5 + $0x50] sm:$0xff]
    %v80 = vld [vmem:[%s5 + $0x58] sm:$0xff]
    %v81 = vld [vmem:[%s5 + $0x60] sm:$0xff]
    %v82 = vld [vmem:[%s5 + $0x68] sm:$0xff]
    %v83 = vld [vmem:[%s5 + $0x70] sm:$0xff]
    %v84 = vld [vmem:[%s5 + $0x78] sm:$0xff]
    %v85 = vrsqrt.pop %v53
    %v86 = vmul.f32 %v53, %v85
    %vm87 = vcmp.eq.f32.partialorder %v53, inf
    %v88 = vsel %vm87, %v53, %v86
    %vm89 = vcmp.eq.f32.partialorder %v53, 0.0
    %v90 = vand.u32 %v53, 2147483648
    %v91 = vsel %vm89, %v90, %v88
    %v92 = vrsqrt.pop %v54
    %v93 = vmul.f32 %v54, %v92
    %vm94 = vcmp.eq.f32.partialorder %v54, inf
    %v95 = vsel %vm94, %v54, %v93
    %vm96 = vcmp.eq.f32.partialorder %v54, 0.0
    %v97 = vand.u32 %v54, 2147483648
    %v98 = vsel %vm96, %v97, %v95
    %v99 = vrsqrt.pop %v55
    %v100 = vmul.f32 %v55, %v99
    %vm101 = vcmp.eq.f32.partialorder %v55, inf
    %v102 = vsel %vm101, %v55, %v100
    %vm103 = vcmp.eq.f32.partialorder %v55, 0.0
    %v104 = vand.u32 %v55, 2147483648
    %v105 = vsel %vm103, %v104, %v102
    %v106 = vrsqrt.pop %v56
    %v107 = vmul.f32 %v56, %v106
    %vm108 = vcmp.eq.f32.partialorder %v56, inf
    %v109 = vsel %vm108, %v56, %v107
    %vm110 = vcmp.eq.f32.partialorder %v56, 0.0
    %v111 = vand.u32 %v56, 2147483648
    %v112 = vsel %vm110, %v111, %v109
    %v113 = vrsqrt.pop %v57
    %v114 = vmul.f32 %v57, %v113
    %vm115 = vcmp.eq.f32.partialorder %v57, inf
    %v116 = vsel %vm115, %v57, %v114
    %vm117 = vcmp.eq.f32.partialorder %v57, 0.0
    %v118 = vand.u32 %v57, 2147483648
    %v119 = vsel %vm117, %v118, %v116
    %v120 = vrsqrt.pop %v58
    %v121 = vmul.f32 %v58, %v120
    %vm122 = vcmp.eq.f32.partialorder %v58, inf
    %v123 = vsel %vm122, %v58, %v121
    %vm124 = vcmp.eq.f32.partialorder %v58, 0.0
    %v125 = vand.u32 %v58, 2147483648
    %v126 = vsel %vm124, %v125, %v123
    %v127 = vrsqrt.pop %v59
    %v128 = vmul.f32 %v59, %v127
    %vm129 = vcmp.eq.f32.partialorder %v59, inf
    %v130 = vsel %vm129, %v59, %v128
    %vm131 = vcmp.eq.f32.partialorder %v59, 0.0
    %v132 = vand.u32 %v59, 2147483648
    %v133 = vsel %vm131, %v132, %v130
    %v134 = vrsqrt.pop %v60
    %v135 = vmul.f32 %v60, %v134
    %vm136 = vcmp.eq.f32.partialorder %v60, inf
    %v137 = vsel %vm136, %v60, %v135
    %vm138 = vcmp.eq.f32.partialorder %v60, 0.0
    %v139 = vand.u32 %v60, 2147483648
    %v140 = vsel %vm138, %v139, %v137
    %v141 = vrsqrt.pop %v61
    %v142 = vmul.f32 %v61, %v141
    %vm143 = vcmp.eq.f32.partialorder %v61, inf
    %v144 = vsel %vm143, %v61, %v142
    %vm145 = vcmp.eq.f32.partialorder %v61, 0.0
    %v146 = vand.u32 %v61, 2147483648
    %v147 = vsel %vm145, %v146, %v144
    %v148 = vrsqrt.pop %v62
    %v149 = vmul.f32 %v62, %v148
    %vm150 = vcmp.eq.f32.partialorder %v62, inf
    %v151 = vsel %vm150, %v62, %v149
    %vm152 = vcmp.eq.f32.partialorder %v62, 0.0
    %v153 = vand.u32 %v62, 2147483648
    %v154 = vsel %vm152, %v153, %v151
    %v155 = vrsqrt.pop %v63
    %v156 = vmul.f32 %v63, %v155
    %vm157 = vcmp.eq.f32.partialorder %v63, inf
    %v158 = vsel %vm157, %v63, %v156
    %vm159 = vcmp.eq.f32.partialorder %v63, 0.0
    %v160 = vand.u32 %v63, 2147483648
    %v161 = vsel %vm159, %v160, %v158
    %v162 = vrsqrt.pop %v64
    %v163 = vmul.f32 %v64, %v162
    %vm164 = vcmp.eq.f32.partialorder %v64, inf
    %v165 = vsel %vm164, %v64, %v163
    %vm166 = vcmp.eq.f32.partialorder %v64, 0.0
    %v167 = vand.u32 %v64, 2147483648
    %v168 = vsel %vm166, %v167, %v165
    %v169 = vrsqrt.pop %v65
    %v170 = vmul.f32 %v65, %v169
    %vm171 = vcmp.eq.f32.partialorder %v65, inf
    %v172 = vsel %vm171, %v65, %v170
    %vm173 = vcmp.eq.f32.partialorder %v65, 0.0
    %v174 = vand.u32 %v65, 2147483648
    %v175 = vsel %vm173, %v174, %v172
    %v176 = vrsqrt.pop %v66
    %v177 = vmul.f32 %v66, %v176
    %vm178 = vcmp.eq.f32.partialorder %v66, inf
    %v179 = vsel %vm178, %v66, %v177
    %vm180 = vcmp.eq.f32.partialorder %v66, 0.0
    %v181 = vand.u32 %v66, 2147483648
    %v182 = vsel %vm180, %v181, %v179
    %v183 = vrsqrt.pop %v67
    %v184 = vmul.f32 %v67, %v183
    %vm185 = vcmp.eq.f32.partialorder %v67, inf
    %v186 = vsel %vm185, %v67, %v184
    %vm187 = vcmp.eq.f32.partialorder %v67, 0.0
    %v188 = vand.u32 %v67, 2147483648
    %v189 = vsel %vm187, %v188, %v186
    %v190 = vrsqrt.pop %v68
    %v191 = vmul.f32 %v68, %v190
    %vm192 = vcmp.eq.f32.partialorder %v68, inf
    %v193 = vsel %vm192, %v68, %v191
    %vm194 = vcmp.eq.f32.partialorder %v68, 0.0
    %v195 = vand.u32 %v68, 2147483648
    %v196 = vsel %vm194, %v195, %v193
    %198 = vset.pattern.permute.xlu0 0
    %199 = vperm.xlu0 %198, %v91
    %v200 = vpop.permute.xlu0 %199
    %203 = vset.pattern.permute.xlu0 0
    %204 = vperm.xlu0 %203, %v98
    %v205 = vpop.permute.xlu0 %204
    %208 = vset.pattern.permute.xlu0 0
    %209 = vperm.xlu0 %208, %v105
    %v210 = vpop.permute.xlu0 %209
    %213 = vset.pattern.permute.xlu0 0
    %214 = vperm.xlu0 %213, %v112
    %v215 = vpop.permute.xlu0 %214
    %218 = vset.pattern.permute.xlu0 0
    %219 = vperm.xlu0 %218, %v119
    %v220 = vpop.permute.xlu0 %219
    %223 = vset.pattern.permute.xlu0 0
    %224 = vperm.xlu0 %223, %v126
    %v225 = vpop.permute.xlu0 %224
    %228 = vset.pattern.permute.xlu0 0
    %229 = vperm.xlu0 %228, %v133
    %v230 = vpop.permute.xlu0 %229
    %233 = vset.pattern.permute.xlu0 0
    %234 = vperm.xlu0 %233, %v140
    %v235 = vpop.permute.xlu0 %234
    %238 = vset.pattern.permute.xlu0 0
    %239 = vperm.xlu0 %238, %v147
    %v240 = vpop.permute.xlu0 %239
    %243 = vset.pattern.permute.xlu0 0
    %244 = vperm.xlu0 %243, %v154
    %v245 = vpop.permute.xlu0 %244
    %248 = vset.pattern.permute.xlu0 0
    %249 = vperm.xlu0 %248, %v161
    %v250 = vpop.permute.xlu0 %249
    %253 = vset.pattern.permute.xlu0 0
    %254 = vperm.xlu0 %253, %v168
    %v255 = vpop.permute.xlu0 %254
    %258 = vset.pattern.permute.xlu0 0
    %259 = vperm.xlu0 %258, %v175
    %v260 = vpop.permute.xlu0 %259
    %263 = vset.pattern.permute.xlu0 0
    %264 = vperm.xlu0 %263, %v182
    %v265 = vpop.permute.xlu0 %264
    %268 = vset.pattern.permute.xlu0 0
    %269 = vperm.xlu0 %268, %v189
    %v270 = vpop.permute.xlu0 %269
    %273 = vset.pattern.permute.xlu0 0
    %274 = vperm.xlu0 %273, %v196
    %v275 = vpop.permute.xlu0 %274
    %v277 = vmul.f32 %v200, %v45
    %v278 = vmul.f32 %v205, %v46
    %v279 = vmul.f32 %v210, %v47
    %v280 = vmul.f32 %v215, %v48
    %v281 = vmul.f32 %v220, %v45
    %v282 = vmul.f32 %v225, %v46
    %v283 = vmul.f32 %v230, %v47
    %v284 = vmul.f32 %v235, %v48
    %v285 = vmul.f32 %v240, %v45
    %v286 = vmul.f32 %v245, %v46
    %v287 = vmul.f32 %v250, %v47
    %v288 = vmul.f32 %v255, %v48
    %v289 = vmul.f32 %v260, %v45
    %v290 = vmul.f32 %v265, %v46
    %v291 = vmul.f32 %v270, %v47
    %v292 = vmul.f32 %v275, %v48
    %v293 = vsub.f32 1.0, %v53
    %v294 = vsub.f32 1.0, %v54
    %v295 = vsub.f32 1.0, %v55
    %v296 = vsub.f32 1.0, %v56
    %v297 = vsub.f32 1.0, %v57
    %v298 = vsub.f32 1.0, %v58
    %v299 = vsub.f32 1.0, %v59
    %v300 = vsub.f32 1.0, %v60
    %v301 = vsub.f32 1.0, %v61
    %v302 = vsub.f32 1.0, %v62
    %v303 = vsub.f32 1.0, %v63
    %v304 = vsub.f32 1.0, %v64
    %v305 = vsub.f32 1.0, %v65
    %v306 = vsub.f32 1.0, %v66
    %v307 = vsub.f32 1.0, %v67
    %v308 = vsub.f32 1.0, %v68
    %v309 = vrsqrt.pop %v293
    %v310 = vmul.f32 %v293, %v309
    %vm311 = vcmp.eq.f32.partialorder %v293, inf
    %v312 = vsel %vm311, %v293, %v310
    %vm313 = vcmp.eq.f32.partialorder %v293, 0.0
    %v314 = vand.u32 %v293, 2147483648
    %v315 = vsel %vm313, %v314, %v312
    %v316 = vrsqrt.pop %v294
    %v317 = vmul.f32 %v294, %v316
    %vm318 = vcmp.eq.f32.partialorder %v294, inf
    %v319 = vsel %vm318, %v294, %v317
    %vm320 = vcmp.eq.f32.partialorder %v294, 0.0
    %v321 = vand.u32 %v294, 2147483648
    %v322 = vsel %vm320, %v321, %v319
    %v323 = vrsqrt.pop %v295
    %v324 = vmul.f32 %v295, %v323
    %vm325 = vcmp.eq.f32.partialorder %v295, inf
    %v326 = vsel %vm325, %v295, %v324
    %vm327 = vcmp.eq.f32.partialorder %v295, 0.0
    %v328 = vand.u32 %v295, 2147483648
    %v329 = vsel %vm327, %v328, %v326
    %v330 = vrsqrt.pop %v296
    %v331 = vmul.f32 %v296, %v330
    %vm332 = vcmp.eq.f32.partialorder %v296, inf
    %v333 = vsel %vm332, %v296, %v331
    %vm334 = vcmp.eq.f32.partialorder %v296, 0.0
    %v335 = vand.u32 %v296, 2147483648
    %v336 = vsel %vm334, %v335, %v333
    %v337 = vrsqrt.pop %v297
    %v338 = vmul.f32 %v297, %v337
    %vm339 = vcmp.eq.f32.partialorder %v297, inf
    %v340 = vsel %vm339, %v297, %v338
    %vm341 = vcmp.eq.f32.partialorder %v297, 0.0
    %v342 = vand.u32 %v297, 2147483648
    %v343 = vsel %vm341, %v342, %v340
    %v344 = vrsqrt.pop %v298
    %v345 = vmul.f32 %v298, %v344
    %vm346 = vcmp.eq.f32.partialorder %v298, inf
    %v347 = vsel %vm346, %v298, %v345
    %vm348 = vcmp.eq.f32.partialorder %v298, 0.0
    %v349 = vand.u32 %v298, 2147483648
    %v350 = vsel %vm348, %v349, %v347
    %v351 = vrsqrt.pop %v299
    %v352 = vmul.f32 %v299, %v351
    %vm353 = vcmp.eq.f32.partialorder %v299, inf
    %v354 = vsel %vm353, %v299, %v352
    %vm355 = vcmp.eq.f32.partialorder %v299, 0.0
    %v356 = vand.u32 %v299, 2147483648
    %v357 = vsel %vm355, %v356, %v354
    %v358 = vrsqrt.pop %v300
    %v359 = vmul.f32 %v300, %v358
    %vm360 = vcmp.eq.f32.partialorder %v300, inf
    %v361 = vsel %vm360, %v300, %v359
    %vm362 = vcmp.eq.f32.partialorder %v300, 0.0
    %v363 = vand.u32 %v300, 2147483648
    %v364 = vsel %vm362, %v363, %v361
    %v365 = vrsqrt.pop %v301
    %v366 = vmul.f32 %v301, %v365
    %vm367 = vcmp.eq.f32.partialorder %v301, inf
    %v368 = vsel %vm367, %v301, %v366
    %vm369 = vcmp.eq.f32.partialorder %v301, 0.0
    %v370 = vand.u32 %v301, 2147483648
    %v371 = vsel %vm369, %v370, %v368
    %v372 = vrsqrt.pop %v302
    %v373 = vmul.f32 %v302, %v372
    %vm374 = vcmp.eq.f32.partialorder %v302, inf
    %v375 = vsel %vm374, %v302, %v373
    %vm376 = vcmp.eq.f32.partialorder %v302, 0.0
    %v377 = vand.u32 %v302, 2147483648
    %v378 = vsel %vm376, %v377, %v375
    %v379 = vrsqrt.pop %v303
    %v380 = vmul.f32 %v303, %v379
    %vm381 = vcmp.eq.f32.partialorder %v303, inf
    %v382 = vsel %vm381, %v303, %v380
    %vm383 = vcmp.eq.f32.partialorder %v303, 0.0
    %v384 = vand.u32 %v303, 2147483648
    %v385 = vsel %vm383, %v384, %v382
    %v386 = vrsqrt.pop %v304
    %v387 = vmul.f32 %v304, %v386
    %vm388 = vcmp.eq.f32.partialorder %v304, inf
    %v389 = vsel %vm388, %v304, %v387
    %vm390 = vcmp.eq.f32.partialorder %v304, 0.0
    %v391 = vand.u32 %v304, 2147483648
    %v392 = vsel %vm390, %v391, %v389
    %v393 = vrsqrt.pop %v305
    %v394 = vmul.f32 %v305, %v393
    %vm395 = vcmp.eq.f32.partialorder %v305, inf
    %v396 = vsel %vm395, %v305, %v394
    %vm397 = vcmp.eq.f32.partialorder %v305, 0.0
    %v398 = vand.u32 %v305, 2147483648
    %v399 = vsel %vm397, %v398, %v396
    %v400 = vrsqrt.pop %v306
    %v401 = vmul.f32 %v306, %v400
    %vm402 = vcmp.eq.f32.partialorder %v306, inf
    %v403 = vsel %vm402, %v306, %v401
    %vm404 = vcmp.eq.f32.partialorder %v306, 0.0
    %v405 = vand.u32 %v306, 2147483648
    %v406 = vsel %vm404, %v405, %v403
    %v407 = vrsqrt.pop %v307
    %v408 = vmul.f32 %v307, %v407
    %vm409 = vcmp.eq.f32.partialorder %v307, inf
    %v410 = vsel %vm409, %v307, %v408
    %vm411 = vcmp.eq.f32.partialorder %v307, 0.0
    %v412 = vand.u32 %v307, 2147483648
    %v413 = vsel %vm411, %v412, %v410
    %v414 = vrsqrt.pop %v308
    %v415 = vmul.f32 %v308, %v414
    %vm416 = vcmp.eq.f32.partialorder %v308, inf
    %v417 = vsel %vm416, %v308, %v415
    %vm418 = vcmp.eq.f32.partialorder %v308, 0.0
    %v419 = vand.u32 %v308, 2147483648
    %v420 = vsel %vm418, %v419, %v417
    %422 = vset.pattern.permute.xlu0 0
    %423 = vperm.xlu0 %422, %v315
    %v424 = vpop.permute.xlu0 %423
    %427 = vset.pattern.permute.xlu0 0
    %428 = vperm.xlu0 %427, %v322
    %v429 = vpop.permute.xlu0 %428
    %432 = vset.pattern.permute.xlu0 0
    %433 = vperm.xlu0 %432, %v329
    %v434 = vpop.permute.xlu0 %433
    %437 = vset.pattern.permute.xlu0 0
    %438 = vperm.xlu0 %437, %v336
    %v439 = vpop.permute.xlu0 %438
    %442 = vset.pattern.permute.xlu0 0
    %443 = vperm.xlu0 %442, %v343
    %v444 = vpop.permute.xlu0 %443
    %447 = vset.pattern.permute.xlu0 0
    %448 = vperm.xlu0 %447, %v350
    %v449 = vpop.permute.xlu0 %448
    %452 = vset.pattern.permute.xlu0 0
    %453 = vperm.xlu0 %452, %v357
    %v454 = vpop.permute.xlu0 %453
    %457 = vset.pattern.permute.xlu0 0
    %458 = vperm.xlu0 %457, %v364
    %v459 = vpop.permute.xlu0 %458
    %462 = vset.pattern.permute.xlu0 0
    %463 = vperm.xlu0 %462, %v371
    %v464 = vpop.permute.xlu0 %463
    %467 = vset.pattern.permute.xlu0 0
    %468 = vperm.xlu0 %467, %v378
    %v469 = vpop.permute.xlu0 %468
    %472 = vset.pattern.permute.xlu0 0
    %473 = vperm.xlu0 %472, %v385
    %v474 = vpop.permute.xlu0 %473
    %477 = vset.pattern.permute.xlu0 0
    %478 = vperm.xlu0 %477, %v392
    %v479 = vpop.permute.xlu0 %478
    %482 = vset.pattern.permute.xlu0 0
    %483 = vperm.xlu0 %482, %v399
    %v484 = vpop.permute.xlu0 %483
    %487 = vset.pattern.permute.xlu0 0
    %488 = vperm.xlu0 %487, %v406
    %v489 = vpop.permute.xlu0 %488
    %492 = vset.pattern.permute.xlu0 0
    %493 = vperm.xlu0 %492, %v413
    %v494 = vpop.permute.xlu0 %493
    %497 = vset.pattern.permute.xlu0 0
    %498 = vperm.xlu0 %497, %v420
    %v499 = vpop.permute.xlu0 %498
    %v501 = vmul.f32 %v424, %v69
    %v502 = vmul.f32 %v429, %v70
    %v503 = vmul.f32 %v434, %v71
    %v504 = vmul.f32 %v439, %v72
    %v505 = vmul.f32 %v444, %v73
    %v506 = vmul.f32 %v449, %v74
    %v507 = vmul.f32 %v454, %v75
    %v508 = vmul.f32 %v459, %v76
    %v509 = vmul.f32 %v464, %v77
    %v510 = vmul.f32 %v469, %v78
    %v511 = vmul.f32 %v474, %v79
    %v512 = vmul.f32 %v479, %v80
    %v513 = vmul.f32 %v484, %v81
    %v514 = vmul.f32 %v489, %v82
    %v515 = vmul.f32 %v494, %v83
    %v516 = vmul.f32 %v499, %v84
    %v517 = vadd.f32 %v277, %v501
    %v518 = vadd.f32 %v278, %v502
    %v519 = vadd.f32 %v279, %v503
    %v520 = vadd.f32 %v280, %v504
    %v521 = vadd.f32 %v281, %v505
    %v522 = vadd.f32 %v282, %v506
    %v523 = vadd.f32 %v283, %v507
    %v524 = vadd.f32 %v284, %v508
    %v525 = vadd.f32 %v285, %v509
    %v526 = vadd.f32 %v286, %v510
    %v527 = vadd.f32 %v287, %v511
    %v528 = vadd.f32 %v288, %v512
    %v529 = vadd.f32 %v289, %v513
    %v530 = vadd.f32 %v290, %v514
    %v531 = vadd.f32 %v291, %v515
    %v532 = vadd.f32 %v292, %v516
    %v533 = vld [vmem:[%s4] sm:$0xff]
    %v534 = vld [vmem:[%s4 + $0x8] sm:$0xff]
    %v535 = vld [vmem:[%s4 + $0x10] sm:$0xff]
    %v536 = vld [vmem:[%s4 + $0x18] sm:$0xff]
    %v537 = vld [vmem:[%s4 + $0x20] sm:$0xff]
    %v538 = vld [vmem:[%s4 + $0x28] sm:$0xff]
    %v539 = vld [vmem:[%s4 + $0x30] sm:$0xff]
    %v540 = vld [vmem:[%s4 + $0x38] sm:$0xff]
    %v541 = vld [vmem:[%s4 + $0x40] sm:$0xff]
    %v542 = vld [vmem:[%s4 + $0x48] sm:$0xff]
    %v543 = vld [vmem:[%s4 + $0x50] sm:$0xff]
    %v544 = vld [vmem:[%s4 + $0x58] sm:$0xff]
    %v545 = vld [vmem:[%s4 + $0x60] sm:$0xff]
    %v546 = vld [vmem:[%s4 + $0x68] sm:$0xff]
    %v547 = vld [vmem:[%s4 + $0x70] sm:$0xff]
    %v548 = vld [vmem:[%s4 + $0x78] sm:$0xff]
    %v549 = vld [vmem:[%s7] sm:$0xff]
    %v550 = vld [vmem:[%s7 + $0x8] sm:$0xff]
    %v551 = vld [vmem:[%s7 + $0x10] sm:$0xff]
    %v552 = vld [vmem:[%s7 + $0x18] sm:$0xff]
    %v553 = vld [vmem:[%s7 + $0x20] sm:$0xff]
    %v554 = vld [vmem:[%s7 + $0x28] sm:$0xff]
    %v555 = vld [vmem:[%s7 + $0x30] sm:$0xff]
    %v556 = vld [vmem:[%s7 + $0x38] sm:$0xff]
    %v557 = vlaneseq
    %v558 = vshrl.u32 %v557, 7
    %v559 = vsub.s32 0, %v558
    %v560 = vrot.slane %v39, %v559
    %vm561 = vcmask 523264
    %v563 = vsel %vm561, %v533, 0
    %v566 = vsel %vm561, %v534, 0
    %v569 = vsel %vm561, %v535, 0
    %v572 = vsel %vm561, %v536, 0
    %v575 = vsel %vm561, %v537, 0
    %v578 = vsel %vm561, %v538, 0
    %v581 = vsel %vm561, %v539, 0
    %v584 = vsel %vm561, %v540, 0
    %v587 = vsel %vm561, %v541, 0
    %v590 = vsel %vm561, %v542, 0
    %v593 = vsel %vm561, %v543, 0
    %v596 = vsel %vm561, %v544, 0
    %v599 = vsel %vm561, %v545, 0
    %v602 = vsel %vm561, %v546, 0
    %v605 = vsel %vm561, %v547, 0
    %v608 = vsel %vm561, %v548, 0
    %610 = vmatprep.subr.mxu0 0.0
    %611 = vmatpush1.msra.mxu0 %v549
    %612 = vmatprep.subr.mxu0 0.0
    %613 = vmatpush1.msra.mxu0 %v550
    %614 = vmatprep.subr.mxu0 0.0
    %615 = vmatpush1.msra.mxu0 %v551
    %616 = vmatprep.subr.mxu0 0.0
    %617 = vmatpush1.msra.mxu0 %v552
    %618 = vmatprep.subr.mxu0 0.0
    %619 = vmatpush1.msra.mxu0 %v553
    %620 = vmatprep.subr.mxu0 0.0
    %621 = vmatpush1.msra.mxu0 %v554
    %622 = vmatprep.subr.mxu0 0.0
    %623 = vmatpush1.msra.mxu0 %v555
    %624 = vmatprep.subr.mxu0 0.0
    %625 = vmatpush1.msra.mxu0 %v556
    %626 = vmatprep.subr.mxu0 0.0
    %627 = vmatpush1.msra.mxu0 0.0
    %628 = vmatprep.subr.mxu0 0.0
    %629 = vmatpush1.msra.mxu0 0.0
    %630 = vmatprep.subr.mxu0 0.0
    %631 = vmatpush1.msra.mxu0 0.0
    %632 = vmatprep.subr.mxu0 0.0
    %633 = vmatpush1.msra.mxu0 0.0
    %634 = vmatprep.subr.mxu0 0.0
    %635 = vmatpush1.msra.mxu0 0.0
    %636 = vmatprep.subr.mxu0 0.0
    %637 = vmatpush1.msra.mxu0 0.0
    %638 = vmatprep.subr.mxu0 0.0
    %639 = vmatpush1.msra.mxu0 0.0
    %640 = vmatprep.subr.mxu0 0.0
    %641 = vmatpush1.msra.mxu0 0.0
    %642 = vmatprep.subr.mxu0 0.0
    %643 = vmatpush1.msra.mxu0 0.0
    %644 = vmatprep.subr.mxu0 0.0
    %645 = vmatpush1.msra.mxu0 0.0
    %646 = vmatprep.subr.mxu0 0.0
    %647 = vmatpush1.msra.mxu0 0.0
    %648 = vmatprep.subr.mxu0 0.0
    %649 = vmatpush1.msra.mxu0 0.0
    %650 = vmatprep.subr.mxu0 0.0
    %651 = vmatpush1.msra.mxu0 0.0
    %652 = vmatprep.subr.mxu0 0.0
    %653 = vmatpush1.msra.mxu0 0.0
    %654 = vmatprep.subr.mxu0 0.0
    %655 = vmatpush1.msra.mxu0 0.0
    %656 = vmatprep.subr.mxu0 0.0
    %657 = vmatpush1.msra.mxu0 0.0
    %658 = vmatprep.subr.mxu0 0.0
    %659 = vmatpush1.msra.mxu0 0.0
    %660 = vmatprep.subr.mxu0 0.0
    %661 = vmatpush1.msra.mxu0 0.0
    %662 = vmatprep.subr.mxu0 0.0
    %663 = vmatpush1.msra.mxu0 0.0
    %664 = vmatprep.subr.mxu0 0.0
    %665 = vmatpush1.msra.mxu0 0.0
    %666 = vmatprep.subr.mxu0 0.0
    %667 = vmatpush1.msra.mxu0 0.0
    %668 = vmatprep.subr.mxu0 0.0
    %669 = vmatpush1.msra.mxu0 0.0
    %670 = vmatprep.subr.mxu0 0.0
    %671 = vmatpush1.msra.mxu0 0.0
    %672 = vmatprep.subr.mxu0 0.0
    %673 = vmatpush1.msra.mxu0 0.0
    %674 = vmatprep.mubr.f32.mxu0 0.0
    %675 = vmatmul.mubr.f32.gmra.mrb[0].mxu0 %v563
    %v676 = vpop.f32.mrb[0].mxu0
    %v677 = vadd.f32 %v560, %v676
    %v678 = vpop.f32.mrb[0].mxu0
    %679 = vmatprep.mubr.f32.mxu0 0.0
    %680 = vmatmul.mubr.f32.gmra.mrb[0].mxu0 %v566
    %v681 = vpop.f32.mrb[0].mxu0
    %v682 = vadd.f32 %v560, %v681
    %v683 = vpop.f32.mrb[0].mxu0
    %684 = vmatprep.mubr.f32.mxu0 0.0
    %685 = vmatmul.mubr.f32.gmra.mrb[0].mxu0 %v569
    %v686 = vpop.f32.mrb[0].mxu0
    %v687 = vadd.f32 %v560, %v686
    %v688 = vpop.f32.mrb[0].mxu0
    %689 = vmatprep.mubr.f32.mxu0 0.0
    %690 = vmatmul.mubr.f32.gmra.mrb[0].mxu0 %v572
    %v691 = vpop.f32.mrb[0].mxu0
    %v692 = vadd.f32 %v560, %v691
    %v693 = vpop.f32.mrb[0].mxu0
    %694 = vmatprep.mubr.f32.mxu0 0.0
    %695 = vmatmul.mubr.f32.gmra.mrb[0].mxu0 %v575
    %v696 = vpop.f32.mrb[0].mxu0
    %v697 = vadd.f32 %v560, %v696
    %v698 = vpop.f32.mrb[0].mxu0
    %699 = vmatprep.mubr.f32.mxu0 0.0
    %700 = vmatmul.mubr.f32.gmra.mrb[0].mxu0 %v578
    %v701 = vpop.f32.mrb[0].mxu0
    %v702 = vadd.f32 %v560, %v701
    %v703 = vpop.f32.mrb[0].mxu0
    %704 = vmatprep.mubr.f32.mxu0 0.0
    %705 = vmatmul.mubr.f32.gmra.mrb[0].mxu0 %v581
    %v706 = vpop.f32.mrb[0].mxu0
    %v707 = vadd.f32 %v560, %v706
    %v708 = vpop.f32.mrb[0].mxu0
    %709 = vmatprep.mubr.f32.mxu0 0.0
    %710 = vmatmul.mubr.f32.gmra.mrb[0].mxu0 %v584
    %v711 = vpop.f32.mrb[0].mxu0
    %v712 = vadd.f32 %v560, %v711
    %v713 = vpop.f32.mrb[0].mxu0
    %714 = vmatprep.mubr.f32.mxu0 0.0
    %715 = vmatmul.mubr.f32.gmra.mrb[0].mxu0 %v587
    %v716 = vpop.f32.mrb[0].mxu0
    %v717 = vadd.f32 %v560, %v716
    %v718 = vpop.f32.mrb[0].mxu0
    %719 = vmatprep.mubr.f32.mxu0 0.0
    %720 = vmatmul.mubr.f32.gmra.mrb[0].mxu0 %v590
    %v721 = vpop.f32.mrb[0].mxu0
    %v722 = vadd.f32 %v560, %v721
    %v723 = vpop.f32.mrb[0].mxu0
    %724 = vmatprep.mubr.f32.mxu0 0.0
    %725 = vmatmul.mubr.f32.gmra.mrb[0].mxu0 %v593
    %v726 = vpop.f32.mrb[0].mxu0
    %v727 = vadd.f32 %v560, %v726
    %v728 = vpop.f32.mrb[0].mxu0
    %729 = vmatprep.mubr.f32.mxu0 0.0
    %730 = vmatmul.mubr.f32.gmra.mrb[0].mxu0 %v596
    %v731 = vpop.f32.mrb[0].mxu0
    %v732 = vadd.f32 %v560, %v731
    %v733 = vpop.f32.mrb[0].mxu0
    %734 = vmatprep.mubr.f32.mxu0 0.0
    %735 = vmatmul.mubr.f32.gmra.mrb[0].mxu0 %v599
    %v736 = vpop.f32.mrb[0].mxu0
    %v737 = vadd.f32 %v560, %v736
    %v738 = vpop.f32.mrb[0].mxu0
    %739 = vmatprep.mubr.f32.mxu0 0.0
    %740 = vmatmul.mubr.f32.gmra.mrb[0].mxu0 %v602
    %v741 = vpop.f32.mrb[0].mxu0
    %v742 = vadd.f32 %v560, %v741
    %v743 = vpop.f32.mrb[0].mxu0
    %744 = vmatprep.mubr.f32.mxu0 0.0
    %745 = vmatmul.mubr.f32.gmra.mrb[0].mxu0 %v605
    %v746 = vpop.f32.mrb[0].mxu0
    %v747 = vadd.f32 %v560, %v746
    %v748 = vpop.f32.mrb[0].mxu0
    %749 = vmatprep.mubr.f32.mxu0 0.0
    %750 = vmatmul.mubr.f32.gmra.mrb[0].mxu0 %v608
    %v751 = vpop.f32.mrb[0].mxu0
    %v752 = vadd.f32 %v560, %v751
    %v753 = vpop.f32.mrb[0].mxu0
    %754 = vdwg.mxu0
    %v755 = vxor.u32 %v677, 2147483648
    %v756 = vxor.u32 %v682, 2147483648
    %v757 = vxor.u32 %v687, 2147483648
    %v758 = vxor.u32 %v692, 2147483648
    %v759 = vxor.u32 %v697, 2147483648
    %v760 = vxor.u32 %v702, 2147483648
    %v761 = vxor.u32 %v707, 2147483648
    %v762 = vxor.u32 %v712, 2147483648
    %v763 = vxor.u32 %v717, 2147483648
    %v764 = vxor.u32 %v722, 2147483648
    %v765 = vxor.u32 %v727, 2147483648
    %v766 = vxor.u32 %v732, 2147483648
    %v767 = vxor.u32 %v737, 2147483648
    %v768 = vxor.u32 %v742, 2147483648
    %v769 = vxor.u32 %v747, 2147483648
    %v770 = vxor.u32 %v752, 2147483648
    %v771 = vmul.f32 %v755, 1.442695
    %v772 = vpow.pop %v771
    %v773 = vmul.f32 %v756, 1.442695
    %v774 = vpow.pop %v773
    %v775 = vmul.f32 %v757, 1.442695
    %v776 = vpow.pop %v775
    %v777 = vmul.f32 %v758, 1.442695
    %v778 = vpow.pop %v777
    %v779 = vmul.f32 %v759, 1.442695
    %v780 = vpow.pop %v779
    %v781 = vmul.f32 %v760, 1.442695
    %v782 = vpow.pop %v781
    %v783 = vmul.f32 %v761, 1.442695
    %v784 = vpow.pop %v783
    %v785 = vmul.f32 %v762, 1.442695
    %v786 = vpow.pop %v785
    %v787 = vmul.f32 %v763, 1.442695
    %v788 = vpow.pop %v787
    %v789 = vmul.f32 %v764, 1.442695
    %v790 = vpow.pop %v789
    %v791 = vmul.f32 %v765, 1.442695
    %v792 = vpow.pop %v791
    %v793 = vmul.f32 %v766, 1.442695
    %v794 = vpow.pop %v793
    %v795 = vmul.f32 %v767, 1.442695
    %v796 = vpow.pop %v795
    %v797 = vmul.f32 %v768, 1.442695
    %v798 = vpow.pop %v797
    %v799 = vmul.f32 %v769, 1.442695
    %v800 = vpow.pop %v799
    %v801 = vmul.f32 %v770, 1.442695
    %v802 = vpow.pop %v801
    %v803 = vadd.f32 %v772, 1.0
    %v804 = vadd.f32 %v774, 1.0
    %v805 = vadd.f32 %v776, 1.0
    %v806 = vadd.f32 %v778, 1.0
    %v807 = vadd.f32 %v780, 1.0
    %v808 = vadd.f32 %v782, 1.0
    %v809 = vadd.f32 %v784, 1.0
    %v810 = vadd.f32 %v786, 1.0
    %v811 = vadd.f32 %v788, 1.0
    %v812 = vadd.f32 %v790, 1.0
    %v813 = vadd.f32 %v792, 1.0
    %v814 = vadd.f32 %v794, 1.0
    %v815 = vadd.f32 %v796, 1.0
    %v816 = vadd.f32 %v798, 1.0
    %v817 = vadd.f32 %v800, 1.0
    %v818 = vadd.f32 %v802, 1.0
    %v819 = vrcp.pop %v803
    %v820 = vmul.f32 1.0, %v819
    %v821 = vrcp.pop %v804
    %v822 = vmul.f32 1.0, %v821
    %v823 = vrcp.pop %v805
    %v824 = vmul.f32 1.0, %v823
    %v825 = vrcp.pop %v806
    %v826 = vmul.f32 1.0, %v825
    %v827 = vrcp.pop %v807
    %v828 = vmul.f32 1.0, %v827
    %v829 = vrcp.pop %v808
    %v830 = vmul.f32 1.0, %v829
    %v831 = vrcp.pop %v809
    %v832 = vmul.f32 1.0, %v831
    %v833 = vrcp.pop %v810
    %v834 = vmul.f32 1.0, %v833
    %v835 = vrcp.pop %v811
    %v836 = vmul.f32 1.0, %v835
    %v837 = vrcp.pop %v812
    %v838 = vmul.f32 1.0, %v837
    %v839 = vrcp.pop %v813
    %v840 = vmul.f32 1.0, %v839
    %v841 = vrcp.pop %v814
    %v842 = vmul.f32 1.0, %v841
    %v843 = vrcp.pop %v815
    %v844 = vmul.f32 1.0, %v843
    %v845 = vrcp.pop %v816
    %v846 = vmul.f32 1.0, %v845
    %v847 = vrcp.pop %v817
    %v848 = vmul.f32 1.0, %v847
    %v849 = vrcp.pop %v818
    %v850 = vmul.f32 1.0, %v849
    %v851 = vmul.f32 %v677, %v820
    %v852 = vmul.f32 %v682, %v822
    %v853 = vmul.f32 %v687, %v824
    %v854 = vmul.f32 %v692, %v826
    %v855 = vmul.f32 %v697, %v828
    %v856 = vmul.f32 %v702, %v830
    %v857 = vmul.f32 %v707, %v832
    %v858 = vmul.f32 %v712, %v834
    %v859 = vmul.f32 %v717, %v836
    %v860 = vmul.f32 %v722, %v838
    %v861 = vmul.f32 %v727, %v840
    %v862 = vmul.f32 %v732, %v842
    %v863 = vmul.f32 %v737, %v844
    %v864 = vmul.f32 %v742, %v846
    %v865 = vmul.f32 %v747, %v848
    %v866 = vmul.f32 %v752, %v850
    %s867 = scalar_lea.vmem %s7, 64
    %v868 = vld [vmem:[%s867] sm:$0xff]
    %v869 = vld [vmem:[%s867 + $0x8] sm:$0xff]
    %v870 = vld [vmem:[%s867 + $0x10] sm:$0xff]
    %v871 = vld [vmem:[%s867 + $0x18] sm:$0xff]
    %v872 = vld [vmem:[%s867 + $0x20] sm:$0xff]
    %v873 = vld [vmem:[%s867 + $0x28] sm:$0xff]
    %v874 = vld [vmem:[%s867 + $0x30] sm:$0xff]
    %v875 = vld [vmem:[%s867 + $0x38] sm:$0xff]
    %v876 = vlaneseq
    %v877 = vshrl.u32 %v876, 7
    %v878 = vsub.s32 1, %v877
    %v879 = vrot.slane %v39, %v878
    %v881 = vsel %vm561, %v851, 0
    %v884 = vsel %vm561, %v852, 0
    %v887 = vsel %vm561, %v853, 0
    %v890 = vsel %vm561, %v854, 0
    %v893 = vsel %vm561, %v855, 0
    %v896 = vsel %vm561, %v856, 0
    %v899 = vsel %vm561, %v857, 0
    %v902 = vsel %vm561, %v858, 0
    %v905 = vsel %vm561, %v859, 0
    %v908 = vsel %vm561, %v860, 0
    %v911 = vsel %vm561, %v861, 0
    %v914 = vsel %vm561, %v862, 0
    %v917 = vsel %vm561, %v863, 0
    %v920 = vsel %vm561, %v864, 0
    %v923 = vsel %vm561, %v865, 0
    %v926 = vsel %vm561, %v866, 0
    %928 = vmatprep.subr.mxu0 0.0
    %929 = vmatpush1.msra.mxu0 %v868
    %930 = vmatprep.subr.mxu0 0.0
    %931 = vmatpush1.msra.mxu0 %v869
    %932 = vmatprep.subr.mxu0 0.0
    %933 = vmatpush1.msra.mxu0 %v870
    %934 = vmatprep.subr.mxu0 0.0
    %935 = vmatpush1.msra.mxu0 %v871
    %936 = vmatprep.subr.mxu0 0.0
    %937 = vmatpush1.msra.mxu0 %v872
    %938 = vmatprep.subr.mxu0 0.0
    %939 = vmatpush1.msra.mxu0 %v873
    %940 = vmatprep.subr.mxu0 0.0
    %941 = vmatpush1.msra.mxu0 %v874
    %942 = vmatprep.subr.mxu0 0.0
    %943 = vmatpush1.msra.mxu0 %v875
    %944 = vmatprep.subr.mxu0 0.0
    %945 = vmatpush1.msra.mxu0 0.0
    %946 = vmatprep.subr.mxu0 0.0
    %947 = vmatpush1.msra.mxu0 0.0
    %948 = vmatprep.subr.mxu0 0.0
    %949 = vmatpush1.msra.mxu0 0.0
    %950 = vmatprep.subr.mxu0 0.0
    %951 = vmatpush1.msra.mxu0 0.0
    %952 = vmatprep.subr.mxu0 0.0
    %953 = vmatpush1.msra.mxu0 0.0
    %954 = vmatprep.subr.mxu0 0.0
    %955 = vmatpush1.msra.mxu0 0.0
    %956 = vmatprep.subr.mxu0 0.0
    %957 = vmatpush1.msra.mxu0 0.0
    %958 = vmatprep.subr.mxu0 0.0
    %959 = vmatpush1.msra.mxu0 0.0
    %960 = vmatprep.subr.mxu0 0.0
    %961 = vmatpush1.msra.mxu0 0.0
    %962 = vmatprep.subr.mxu0 0.0
    %963 = vmatpush1.msra.mxu0 0.0
    %964 = vmatprep.subr.mxu0 0.0
    %965 = vmatpush1.msra.mxu0 0.0
    %966 = vmatprep.subr.mxu0 0.0
    %967 = vmatpush1.msra.mxu0 0.0
    %968 = vmatprep.subr.mxu0 0.0
    %969 = vmatpush1.msra.mxu0 0.0
    %970 = vmatprep.subr.mxu0 0.0
    %971 = vmatpush1.msra.mxu0 0.0
    %972 = vmatprep.subr.mxu0 0.0
    %973 = vmatpush1.msra.mxu0 0.0
    %974 = vmatprep.subr.mxu0 0.0
    %975 = vmatpush1.msra.mxu0 0.0
    %976 = vmatprep.subr.mxu0 0.0
    %977 = vmatpush1.msra.mxu0 0.0
    %978 = vmatprep.subr.mxu0 0.0
    %979 = vmatpush1.msra.mxu0 0.0
    %980 = vmatprep.subr.mxu0 0.0
    %981 = vmatpush1.msra.mxu0 0.0
    %982 = vmatprep.subr.mxu0 0.0
    %983 = vmatpush1.msra.mxu0 0.0
    %984 = vmatprep.subr.mxu0 0.0
    %985 = vmatpush1.msra.mxu0 0.0
    %986 = vmatprep.subr.mxu0 0.0
    %987 = vmatpush1.msra.mxu0 0.0
    %988 = vmatprep.subr.mxu0 0.0
    %989 = vmatpush1.msra.mxu0 0.0
    %990 = vmatprep.subr.mxu0 0.0
    %991 = vmatpush1.msra.mxu0 0.0
    %992 = vmatprep.mubr.f32.mxu0 0.0
    %993 = vmatmul.mubr.f32.gmra.mrb[0].mxu0 %v881
    %v994 = vpop.f32.mrb[0].mxu0
    %v995 = vadd.f32 %v879, %v994
    %v996 = vpop.f32.mrb[0].mxu0
    %997 = vmatprep.mubr.f32.mxu0 0.0
    %998 = vmatmul.mubr.f32.gmra.mrb[0].mxu0 %v884
    %v999 = vpop.f32.mrb[0].mxu0
    %v1000 = vadd.f32 %v879, %v999
    %v1001 = vpop.f32.mrb[0].mxu0
    %1002 = vmatprep.mubr.f32.mxu0 0.0
    %1003 = vmatmul.mubr.f32.gmra.mrb[0].mxu0 %v887
    %v1004 = vpop.f32.mrb[0].mxu0
    %v1005 = vadd.f32 %v879, %v1004
    %v1006 = vpop.f32.mrb[0].mxu0
    %1007 = vmatprep.mubr.f32.mxu0 0.0
    %1008 = vmatmul.mubr.f32.gmra.mrb[0].mxu0 %v890
    %v1009 = vpop.f32.mrb[0].mxu0
    %v1010 = vadd.f32 %v879, %v1009
    %v1011 = vpop.f32.mrb[0].mxu0
    %1012 = vmatprep.mubr.f32.mxu0 0.0
    %1013 = vmatmul.mubr.f32.gmra.mrb[0].mxu0 %v893
    %v1014 = vpop.f32.mrb[0].mxu0
    %v1015 = vadd.f32 %v879, %v1014
    %v1016 = vpop.f32.mrb[0].mxu0
    %1017 = vmatprep.mubr.f32.mxu0 0.0
    %1018 = vmatmul.mubr.f32.gmra.mrb[0].mxu0 %v896
    %v1019 = vpop.f32.mrb[0].mxu0
    %v1020 = vadd.f32 %v879, %v1019
    %v1021 = vpop.f32.mrb[0].mxu0
    %1022 = vmatprep.mubr.f32.mxu0 0.0
    %1023 = vmatmul.mubr.f32.gmra.mrb[0].mxu0 %v899
    %v1024 = vpop.f32.mrb[0].mxu0
    %v1025 = vadd.f32 %v879, %v1024
    %v1026 = vpop.f32.mrb[0].mxu0
    %1027 = vmatprep.mubr.f32.mxu0 0.0
    %1028 = vmatmul.mubr.f32.gmra.mrb[0].mxu0 %v902
    %v1029 = vpop.f32.mrb[0].mxu0
    %v1030 = vadd.f32 %v879, %v1029
    %v1031 = vpop.f32.mrb[0].mxu0
    %1032 = vmatprep.mubr.f32.mxu0 0.0
    %1033 = vmatmul.mubr.f32.gmra.mrb[0].mxu0 %v905
    %v1034 = vpop.f32.mrb[0].mxu0
    %v1035 = vadd.f32 %v879, %v1034
    %v1036 = vpop.f32.mrb[0].mxu0
    %1037 = vmatprep.mubr.f32.mxu0 0.0
    %1038 = vmatmul.mubr.f32.gmra.mrb[0].mxu0 %v908
    %v1039 = vpop.f32.mrb[0].mxu0
    %v1040 = vadd.f32 %v879, %v1039
    %v1041 = vpop.f32.mrb[0].mxu0
    %1042 = vmatprep.mubr.f32.mxu0 0.0
    %1043 = vmatmul.mubr.f32.gmra.mrb[0].mxu0 %v911
    %v1044 = vpop.f32.mrb[0].mxu0
    %v1045 = vadd.f32 %v879, %v1044
    %v1046 = vpop.f32.mrb[0].mxu0
    %1047 = vmatprep.mubr.f32.mxu0 0.0
    %1048 = vmatmul.mubr.f32.gmra.mrb[0].mxu0 %v914
    %v1049 = vpop.f32.mrb[0].mxu0
    %v1050 = vadd.f32 %v879, %v1049
    %v1051 = vpop.f32.mrb[0].mxu0
    %1052 = vmatprep.mubr.f32.mxu0 0.0
    %1053 = vmatmul.mubr.f32.gmra.mrb[0].mxu0 %v917
    %v1054 = vpop.f32.mrb[0].mxu0
    %v1055 = vadd.f32 %v879, %v1054
    %v1056 = vpop.f32.mrb[0].mxu0
    %1057 = vmatprep.mubr.f32.mxu0 0.0
    %1058 = vmatmul.mubr.f32.gmra.mrb[0].mxu0 %v920
    %v1059 = vpop.f32.mrb[0].mxu0
    %v1060 = vadd.f32 %v879, %v1059
    %v1061 = vpop.f32.mrb[0].mxu0
    %1062 = vmatprep.mubr.f32.mxu0 0.0
    %1063 = vmatmul.mubr.f32.gmra.mrb[0].mxu0 %v923
    %v1064 = vpop.f32.mrb[0].mxu0
    %v1065 = vadd.f32 %v879, %v1064
    %v1066 = vpop.f32.mrb[0].mxu0
    %1067 = vmatprep.mubr.f32.mxu0 0.0
    %1068 = vmatmul.mubr.f32.gmra.mrb[0].mxu0 %v926
    %v1069 = vpop.f32.mrb[0].mxu0
    %v1070 = vadd.f32 %v879, %v1069
    %v1071 = vpop.f32.mrb[0].mxu0
    %1072 = vdwg.mxu0
    %s1073 = scalar_lea.vmem %s7, 128
    %v1074 = vld [vmem:[%s1073] sm:$0xff]
    %v1075 = vld [vmem:[%s1073 + $0x8] sm:$0xff]
    %v1076 = vld [vmem:[%s1073 + $0x10] sm:$0xff]
    %v1077 = vld [vmem:[%s1073 + $0x18] sm:$0xff]
    %v1078 = vld [vmem:[%s1073 + $0x20] sm:$0xff]
    %v1079 = vld [vmem:[%s1073 + $0x28] sm:$0xff]
    %v1080 = vld [vmem:[%s1073 + $0x30] sm:$0xff]
    %v1081 = vld [vmem:[%s1073 + $0x38] sm:$0xff]
    %v1082 = vlaneseq
    %v1083 = vshrl.u32 %v1082, 7
    %v1084 = vsub.s32 2, %v1083
    %v1085 = vrot.slane %v39, %v1084
    %v1087 = vsel %vm561, %v41, 0
    %v1090 = vsel %vm561, %v42, 0
    %v1093 = vsel %vm561, %v43, 0
    %v1096 = vsel %vm561, %v44, 0
    %1098 = vmatprep.subr.mxu0 0.0
    %1099 = vmatpush1.msra.mxu0 %v1074
    %1100 = vmatprep.subr.mxu0 0.0
    %1101 = vmatpush1.msra.mxu0 %v1075
    %1102 = vmatprep.subr.mxu0 0.0
    %1103 = vmatpush1.msra.mxu0 %v1076
    %1104 = vmatprep.subr.mxu0 0.0
    %1105 = vmatpush1.msra.mxu0 %v1077
    %1106 = vmatprep.subr.mxu0 0.0
    %1107 = vmatpush1.msra.mxu0 %v1078
    %1108 = vmatprep.subr.mxu0 0.0
    %1109 = vmatpush1.msra.mxu0 %v1079
    %1110 = vmatprep.subr.mxu0 0.0
    %1111 = vmatpush1.msra.mxu0 %v1080
    %1112 = vmatprep.subr.mxu0 0.0
    %1113 = vmatpush1.msra.mxu0 %v1081
    %1114 = vmatprep.subr.mxu0 0.0
    %1115 = vmatpush1.msra.mxu0 0.0
    %1116 = vmatprep.subr.mxu0 0.0
    %1117 = vmatpush1.msra.mxu0 0.0
    %1118 = vmatprep.subr.mxu0 0.0
    %1119 = vmatpush1.msra.mxu0 0.0
    %1120 = vmatprep.subr.mxu0 0.0
    %1121 = vmatpush1.msra.mxu0 0.0
    %1122 = vmatprep.subr.mxu0 0.0
    %1123 = vmatpush1.msra.mxu0 0.0
    %1124 = vmatprep.subr.mxu0 0.0
    %1125 = vmatpush1.msra.mxu0 0.0
    %1126 = vmatprep.subr.mxu0 0.0
    %1127 = vmatpush1.msra.mxu0 0.0
    %1128 = vmatprep.subr.mxu0 0.0
    %1129 = vmatpush1.msra.mxu0 0.0
    %1130 = vmatprep.subr.mxu0 0.0
    %1131 = vmatpush1.msra.mxu0 0.0
    %1132 = vmatprep.subr.mxu0 0.0
    %1133 = vmatpush1.msra.mxu0 0.0
    %1134 = vmatprep.subr.mxu0 0.0
    %1135 = vmatpush1.msra.mxu0 0.0
    %1136 = vmatprep.subr.mxu0 0.0
    %1137 = vmatpush1.msra.mxu0 0.0
    %1138 = vmatprep.subr.mxu0 0.0
    %1139 = vmatpush1.msra.mxu0 0.0
    %1140 = vmatprep.subr.mxu0 0.0
    %1141 = vmatpush1.msra.mxu0 0.0
    %1142 = vmatprep.subr.mxu0 0.0
    %1143 = vmatpush1.msra.mxu0 0.0
    %1144 = vmatprep.subr.mxu0 0.0
    %1145 = vmatpush1.msra.mxu0 0.0
    %1146 = vmatprep.subr.mxu0 0.0
    %1147 = vmatpush1.msra.mxu0 0.0
    %1148 = vmatprep.subr.mxu0 0.0
    %1149 = vmatpush1.msra.mxu0 0.0
    %1150 = vmatprep.subr.mxu0 0.0
    %1151 = vmatpush1.msra.mxu0 0.0
    %1152 = vmatprep.subr.mxu0 0.0
    %1153 = vmatpush1.msra.mxu0 0.0
    %1154 = vmatprep.subr.mxu0 0.0
    %1155 = vmatpush1.msra.mxu0 0.0
    %1156 = vmatprep.subr.mxu0 0.0
    %1157 = vmatpush1.msra.mxu0 0.0
    %1158 = vmatprep.subr.mxu0 0.0
    %1159 = vmatpush1.msra.mxu0 0.0
    %1160 = vmatprep.subr.mxu0 0.0
    %1161 = vmatpush1.msra.mxu0 0.0
    %1162 = vmatprep.mubr.f32.mxu0 0.0
    %1163 = vmatmul.mubr.f32.gmra.mrb[0].mxu0 %v1087
    %v1164 = vpop.f32.mrb[0].mxu0
    %v1165 = vadd.f32 %v1085, %v1164
    %v1166 = vpop.f32.mrb[0].mxu0
    %1167 = vmatprep.mubr.f32.mxu0 0.0
    %1168 = vmatmul.mubr.f32.gmra.mrb[0].mxu0 %v1090
    %v1169 = vpop.f32.mrb[0].mxu0
    %v1170 = vadd.f32 %v1085, %v1169
    %v1171 = vpop.f32.mrb[0].mxu0
    %1172 = vmatprep.mubr.f32.mxu0 0.0
    %1173 = vmatmul.mubr.f32.gmra.mrb[0].mxu0 %v1093
    %v1174 = vpop.f32.mrb[0].mxu0
    %v1175 = vadd.f32 %v1085, %v1174
    %v1176 = vpop.f32.mrb[0].mxu0
    %1177 = vmatprep.mubr.f32.mxu0 0.0
    %1178 = vmatmul.mubr.f32.gmra.mrb[0].mxu0 %v1096
    %v1179 = vpop.f32.mrb[0].mxu0
    %v1180 = vadd.f32 %v1085, %v1179
    %v1181 = vpop.f32.mrb[0].mxu0
    %1182 = vmatprep.mubr.f32.mxu0 0.0
    %1183 = vmatmul.mubr.f32.gmra.mrb[0].mxu0 %v1087
    %v1184 = vpop.f32.mrb[0].mxu0
    %v1185 = vadd.f32 %v1085, %v1184
    %v1186 = vpop.f32.mrb[0].mxu0
    %1187 = vmatprep.mubr.f32.mxu0 0.0
    %1188 = vmatmul.mubr.f32.gmra.mrb[0].mxu0 %v1090
    %v1189 = vpop.f32.mrb[0].mxu0
    %v1190 = vadd.f32 %v1085, %v1189
    %v1191 = vpop.f32.mrb[0].mxu0
    %1192 = vmatprep.mubr.f32.mxu0 0.0
    %1193 = vmatmul.mubr.f32.gmra.mrb[0].mxu0 %v1093
    %v1194 = vpop.f32.mrb[0].mxu0
    %v1195 = vadd.f32 %v1085, %v1194
    %v1196 = vpop.f32.mrb[0].mxu0
    %1197 = vmatprep.mubr.f32.mxu0 0.0
    %1198 = vmatmul.mubr.f32.gmra.mrb[0].mxu0 %v1096
    %v1199 = vpop.f32.mrb[0].mxu0
    %v1200 = vadd.f32 %v1085, %v1199
    %v1201 = vpop.f32.mrb[0].mxu0
    %1202 = vmatprep.mubr.f32.mxu0 0.0
    %1203 = vmatmul.mubr.f32.gmra.mrb[0].mxu0 %v1087
    %v1204 = vpop.f32.mrb[0].mxu0
    %v1205 = vadd.f32 %v1085, %v1204
    %v1206 = vpop.f32.mrb[0].mxu0
    %1207 = vmatprep.mubr.f32.mxu0 0.0
    %1208 = vmatmul.mubr.f32.gmra.mrb[0].mxu0 %v1090
    %v1209 = vpop.f32.mrb[0].mxu0
    %v1210 = vadd.f32 %v1085, %v1209
    %v1211 = vpop.f32.mrb[0].mxu0
    %1212 = vmatprep.mubr.f32.mxu0 0.0
    %1213 = vmatmul.mubr.f32.gmra.mrb[0].mxu0 %v1093
    %v1214 = vpop.f32.mrb[0].mxu0
    %v1215 = vadd.f32 %v1085, %v1214
    %v1216 = vpop.f32.mrb[0].mxu0
    %1217 = vmatprep.mubr.f32.mxu0 0.0
    %1218 = vmatmul.mubr.f32.gmra.mrb[0].mxu0 %v1096
    %v1219 = vpop.f32.mrb[0].mxu0
    %v1220 = vadd.f32 %v1085, %v1219
    %v1221 = vpop.f32.mrb[0].mxu0
    %1222 = vmatprep.mubr.f32.mxu0 0.0
    %1223 = vmatmul.mubr.f32.gmra.mrb[0].mxu0 %v1087
    %v1224 = vpop.f32.mrb[0].mxu0
    %v1225 = vadd.f32 %v1085, %v1224
    %v1226 = vpop.f32.mrb[0].mxu0
    %1227 = vmatprep.mubr.f32.mxu0 0.0
    %1228 = vmatmul.mubr.f32.gmra.mrb[0].mxu0 %v1090
    %v1229 = vpop.f32.mrb[0].mxu0
    %v1230 = vadd.f32 %v1085, %v1229
    %v1231 = vpop.f32.mrb[0].mxu0
    %1232 = vmatprep.mubr.f32.mxu0 0.0
    %1233 = vmatmul.mubr.f32.gmra.mrb[0].mxu0 %v1093
    %v1234 = vpop.f32.mrb[0].mxu0
    %v1235 = vadd.f32 %v1085, %v1234
    %v1236 = vpop.f32.mrb[0].mxu0
    %1237 = vmatprep.mubr.f32.mxu0 0.0
    %1238 = vmatmul.mubr.f32.gmra.mrb[0].mxu0 %v1096
    %v1239 = vpop.f32.mrb[0].mxu0
    %v1240 = vadd.f32 %v1085, %v1239
    %v1241 = vpop.f32.mrb[0].mxu0
    %1242 = vdwg.mxu0
    %v1243 = vadd.f32 %v995, %v1165
    %v1244 = vadd.f32 %v1000, %v1170
    %v1245 = vadd.f32 %v1005, %v1175
    %v1246 = vadd.f32 %v1010, %v1180
    %v1247 = vadd.f32 %v1015, %v1185
    %v1248 = vadd.f32 %v1020, %v1190
    %v1249 = vadd.f32 %v1025, %v1195
    %v1250 = vadd.f32 %v1030, %v1200
    %v1251 = vadd.f32 %v1035, %v1205
    %v1252 = vadd.f32 %v1040, %v1210
    %v1253 = vadd.f32 %v1045, %v1215
    %v1254 = vadd.f32 %v1050, %v1220
    %v1255 = vadd.f32 %v1055, %v1225
    %v1256 = vadd.f32 %v1060, %v1230
    %v1257 = vadd.f32 %v1065, %v1235
    %v1258 = vadd.f32 %v1070, %v1240
    %v1259 = vld [vmem:[%s8] sm:$0xff]
    %v1260 = vld [vmem:[%s8 + $0x8] sm:$0xff]
    %v1261 = vld [vmem:[%s8 + $0x10] sm:$0xf]
    %v1262 = vlaneseq
    %v1263 = vshrl.u32 %v1262, 7
    %v1264 = vsub.s32 3, %v1263
    %v1265 = vrot.slane %v39, %v1264
    %vm1266 = vcmask 162816
    %v1268 = vsel %vm1266, %v517, 0
    %v1271 = vsel %vm1266, %v518, 0
    %v1274 = vsel %vm1266, %v519, 0
    %v1277 = vsel %vm1266, %v520, 0
    %v1280 = vsel %vm1266, %v521, 0
    %v1283 = vsel %vm1266, %v522, 0
    %v1286 = vsel %vm1266, %v523, 0
    %v1289 = vsel %vm1266, %v524, 0
    %v1292 = vsel %vm1266, %v525, 0
    %v1295 = vsel %vm1266, %v526, 0
    %v1298 = vsel %vm1266, %v527, 0
    %v1301 = vsel %vm1266, %v528, 0
    %v1304 = vsel %vm1266, %v529, 0
    %v1307 = vsel %vm1266, %v530, 0
    %v1310 = vsel %vm1266, %v531, 0
    %v1313 = vsel %vm1266, %v532, 0
    %vm1315 = vcmask 1043456
    %v1317 = vsel %vm1315, %v1261, 0
    %1319 = vmatprep.subr.mxu0 0.0
    %1320 = vmatpush1.msra.mxu0 %v1259
    %1321 = vmatprep.subr.mxu0 0.0
    %1322 = vmatpush1.msra.mxu0 %v1260
    %1323 = vmatprep.subr.mxu0 0.0
    %1324 = vmatpush1.msra.mxu0 %v1317
    %1325 = vmatprep.subr.mxu0 0.0
    %1326 = vmatpush1.msra.mxu0 0.0
    %1327 = vmatprep.subr.mxu0 0.0
    %1328 = vmatpush1.msra.mxu0 0.0
    %1329 = vmatprep.subr.mxu0 0.0
    %1330 = vmatpush1.msra.mxu0 0.0
    %1331 = vmatprep.subr.mxu0 0.0
    %1332 = vmatpush1.msra.mxu0 0.0
    %1333 = vmatprep.subr.mxu0 0.0
    %1334 = vmatpush1.msra.mxu0 0.0
    %1335 = vmatprep.subr.mxu0 0.0
    %1336 = vmatpush1.msra.mxu0 0.0
    %1337 = vmatprep.subr.mxu0 0.0
    %1338 = vmatpush1.msra.mxu0 0.0
    %1339 = vmatprep.subr.mxu0 0.0
    %1340 = vmatpush1.msra.mxu0 0.0
    %1341 = vmatprep.subr.mxu0 0.0
    %1342 = vmatpush1.msra.mxu0 0.0
    %1343 = vmatprep.subr.mxu0 0.0
    %1344 = vmatpush1.msra.mxu0 0.0
    %1345 = vmatprep.subr.mxu0 0.0
    %1346 = vmatpush1.msra.mxu0 0.0
    %1347 = vmatprep.subr.mxu0 0.0
    %1348 = vmatpush1.msra.mxu0 0.0
    %1349 = vmatprep.subr.mxu0 0.0
    %1350 = vmatpush1.msra.mxu0 0.0
    %1351 = vmatprep.subr.mxu0 0.0
    %1352 = vmatpush1.msra.mxu0 0.0
    %1353 = vmatprep.subr.mxu0 0.0
    %1354 = vmatpush1.msra.mxu0 0.0
    %1355 = vmatprep.subr.mxu0 0.0
    %1356 = vmatpush1.msra.mxu0 0.0
    %1357 = vmatprep.subr.mxu0 0.0
    %1358 = vmatpush1.msra.mxu0 0.0
    %1359 = vmatprep.subr.mxu0 0.0
    %1360 = vmatpush1.msra.mxu0 0.0
    %1361 = vmatprep.subr.mxu0 0.0
    %1362 = vmatpush1.msra.mxu0 0.0
    %1363 = vmatprep.subr.mxu0 0.0
    %1364 = vmatpush1.msra.mxu0 0.0
    %1365 = vmatprep.subr.mxu0 0.0
    %1366 = vmatpush1.msra.mxu0 0.0
    %1367 = vmatprep.subr.mxu0 0.0
    %1368 = vmatpush1.msra.mxu0 0.0
    %1369 = vmatprep.subr.mxu0 0.0
    %1370 = vmatpush1.msra.mxu0 0.0
    %1371 = vmatprep.subr.mxu0 0.0
    %1372 = vmatpush1.msra.mxu0 0.0
    %1373 = vmatprep.subr.mxu0 0.0
    %1374 = vmatpush1.msra.mxu0 0.0
    %1375 = vmatprep.subr.mxu0 0.0
    %1376 = vmatpush1.msra.mxu0 0.0
    %1377 = vmatprep.subr.mxu0 0.0
    %1378 = vmatpush1.msra.mxu0 0.0
    %1379 = vmatprep.subr.mxu0 0.0
    %1380 = vmatpush1.msra.mxu0 0.0
    %1381 = vmatprep.subr.mxu0 0.0
    %1382 = vmatpush1.msra.mxu0 0.0
    %1383 = vmatprep.mubr.f32.mxu0 0.0
    %1384 = vmatmul.mubr.f32.gmra.mrb[0].mxu0 %v1268
    %v1385 = vpop.f32.mrb[0].mxu0
    %v1386 = vadd.f32 %v1265, %v1385
    %v1387 = vpop.f32.mrb[0].mxu0
    %1388 = vmatprep.mubr.f32.mxu0 0.0
    %1389 = vmatmul.mubr.f32.gmra.mrb[0].mxu0 %v1271
    %v1390 = vpop.f32.mrb[0].mxu0
    %v1391 = vadd.f32 %v1265, %v1390
    %v1392 = vpop.f32.mrb[0].mxu0
    %1393 = vmatprep.mubr.f32.mxu0 0.0
    %1394 = vmatmul.mubr.f32.gmra.mrb[0].mxu0 %v1274
    %v1395 = vpop.f32.mrb[0].mxu0
    %v1396 = vadd.f32 %v1265, %v1395
    %v1397 = vpop.f32.mrb[0].mxu0
    %1398 = vmatprep.mubr.f32.mxu0 0.0
    %1399 = vmatmul.mubr.f32.gmra.mrb[0].mxu0 %v1277
    %v1400 = vpop.f32.mrb[0].mxu0
    %v1401 = vadd.f32 %v1265, %v1400
    %v1402 = vpop.f32.mrb[0].mxu0
    %1403 = vmatprep.mubr.f32.mxu0 0.0
    %1404 = vmatmul.mubr.f32.gmra.mrb[0].mxu0 %v1280
    %v1405 = vpop.f32.mrb[0].mxu0
    %v1406 = vadd.f32 %v1265, %v1405
    %v1407 = vpop.f32.mrb[0].mxu0
    %1408 = vmatprep.mubr.f32.mxu0 0.0
    %1409 = vmatmul.mubr.f32.gmra.mrb[0].mxu0 %v1283
    %v1410 = vpop.f32.mrb[0].mxu0
    %v1411 = vadd.f32 %v1265, %v1410
    %v1412 = vpop.f32.mrb[0].mxu0
    %1413 = vmatprep.mubr.f32.mxu0 0.0
    %1414 = vmatmul.mubr.f32.gmra.mrb[0].mxu0 %v1286
    %v1415 = vpop.f32.mrb[0].mxu0
    %v1416 = vadd.f32 %v1265, %v1415
    %v1417 = vpop.f32.mrb[0].mxu0
    %1418 = vmatprep.mubr.f32.mxu0 0.0
    %1419 = vmatmul.mubr.f32.gmra.mrb[0].mxu0 %v1289
    %v1420 = vpop.f32.mrb[0].mxu0
    %v1421 = vadd.f32 %v1265, %v1420
    %v1422 = vpop.f32.mrb[0].mxu0
    %1423 = vmatprep.mubr.f32.mxu0 0.0
    %1424 = vmatmul.mubr.f32.gmra.mrb[0].mxu0 %v1292
    %v1425 = vpop.f32.mrb[0].mxu0
    %v1426 = vadd.f32 %v1265, %v1425
    %v1427 = vpop.f32.mrb[0].mxu0
    %1428 = vmatprep.mubr.f32.mxu0 0.0
    %1429 = vmatmul.mubr.f32.gmra.mrb[0].mxu0 %v1295
    %v1430 = vpop.f32.mrb[0].mxu0
    %v1431 = vadd.f32 %v1265, %v1430
    %v1432 = vpop.f32.mrb[0].mxu0
    %1433 = vmatprep.mubr.f32.mxu0 0.0
    %1434 = vmatmul.mubr.f32.gmra.mrb[0].mxu0 %v1298
    %v1435 = vpop.f32.mrb[0].mxu0
    %v1436 = vadd.f32 %v1265, %v1435
    %v1437 = vpop.f32.mrb[0].mxu0
    %1438 = vmatprep.mubr.f32.mxu0 0.0
    %1439 = vmatmul.mubr.f32.gmra.mrb[0].mxu0 %v1301
    %v1440 = vpop.f32.mrb[0].mxu0
    %v1441 = vadd.f32 %v1265, %v1440
    %v1442 = vpop.f32.mrb[0].mxu0
    %1443 = vmatprep.mubr.f32.mxu0 0.0
    %1444 = vmatmul.mubr.f32.gmra.mrb[0].mxu0 %v1304
    %v1445 = vpop.f32.mrb[0].mxu0
    %v1446 = vadd.f32 %v1265, %v1445
    %v1447 = vpop.f32.mrb[0].mxu0
    %1448 = vmatprep.mubr.f32.mxu0 0.0
    %1449 = vmatmul.mubr.f32.gmra.mrb[0].mxu0 %v1307
    %v1450 = vpop.f32.mrb[0].mxu0
    %v1451 = vadd.f32 %v1265, %v1450
    %v1452 = vpop.f32.mrb[0].mxu0
    %1453 = vmatprep.mubr.f32.mxu0 0.0
    %1454 = vmatmul.mubr.f32.gmra.mrb[0].mxu0 %v1310
    %v1455 = vpop.f32.mrb[0].mxu0
    %v1456 = vadd.f32 %v1265, %v1455
    %v1457 = vpop.f32.mrb[0].mxu0
    %1458 = vmatprep.mubr.f32.mxu0 0.0
    %1459 = vmatmul.mubr.f32.gmra.mrb[0].mxu0 %v1313
    %v1460 = vpop.f32.mrb[0].mxu0
    %v1461 = vadd.f32 %v1265, %v1460
    %v1462 = vpop.f32.mrb[0].mxu0
    %1463 = vdwg.mxu0
    %v1464 = vxor.u32 %v1386, 2147483648
    %v1465 = vxor.u32 %v1391, 2147483648
    %v1466 = vxor.u32 %v1396, 2147483648
    %v1467 = vxor.u32 %v1401, 2147483648
    %v1468 = vxor.u32 %v1406, 2147483648
    %v1469 = vxor.u32 %v1411, 2147483648
    %v1470 = vxor.u32 %v1416, 2147483648
    %v1471 = vxor.u32 %v1421, 2147483648
    %v1472 = vxor.u32 %v1426, 2147483648
    %v1473 = vxor.u32 %v1431, 2147483648
    %v1474 = vxor.u32 %v1436, 2147483648
    %v1475 = vxor.u32 %v1441, 2147483648
    %v1476 = vxor.u32 %v1446, 2147483648
    %v1477 = vxor.u32 %v1451, 2147483648
    %v1478 = vxor.u32 %v1456, 2147483648
    %v1479 = vxor.u32 %v1461, 2147483648
    %v1480 = vmul.f32 %v1464, 1.442695
    %v1481 = vpow.pop %v1480
    %v1482 = vmul.f32 %v1465, 1.442695
    %v1483 = vpow.pop %v1482
    %v1484 = vmul.f32 %v1466, 1.442695
    %v1485 = vpow.pop %v1484
    %v1486 = vmul.f32 %v1467, 1.442695
    %v1487 = vpow.pop %v1486
    %v1488 = vmul.f32 %v1468, 1.442695
    %v1489 = vpow.pop %v1488
    %v1490 = vmul.f32 %v1469, 1.442695
    %v1491 = vpow.pop %v1490
    %v1492 = vmul.f32 %v1470, 1.442695
    %v1493 = vpow.pop %v1492
    %v1494 = vmul.f32 %v1471, 1.442695
    %v1495 = vpow.pop %v1494
    %v1496 = vmul.f32 %v1472, 1.442695
    %v1497 = vpow.pop %v1496
    %v1498 = vmul.f32 %v1473, 1.442695
    %v1499 = vpow.pop %v1498
    %v1500 = vmul.f32 %v1474, 1.442695
    %v1501 = vpow.pop %v1500
    %v1502 = vmul.f32 %v1475, 1.442695
    %v1503 = vpow.pop %v1502
    %v1504 = vmul.f32 %v1476, 1.442695
    %v1505 = vpow.pop %v1504
    %v1506 = vmul.f32 %v1477, 1.442695
    %v1507 = vpow.pop %v1506
    %v1508 = vmul.f32 %v1478, 1.442695
    %v1509 = vpow.pop %v1508
    %v1510 = vmul.f32 %v1479, 1.442695
    %v1511 = vpow.pop %v1510
    %v1512 = vadd.f32 %v1481, 1.0
    %v1513 = vadd.f32 %v1483, 1.0
    %v1514 = vadd.f32 %v1485, 1.0
    %v1515 = vadd.f32 %v1487, 1.0
    %v1516 = vadd.f32 %v1489, 1.0
    %v1517 = vadd.f32 %v1491, 1.0
    %v1518 = vadd.f32 %v1493, 1.0
    %v1519 = vadd.f32 %v1495, 1.0
    %v1520 = vadd.f32 %v1497, 1.0
    %v1521 = vadd.f32 %v1499, 1.0
    %v1522 = vadd.f32 %v1501, 1.0
    %v1523 = vadd.f32 %v1503, 1.0
    %v1524 = vadd.f32 %v1505, 1.0
    %v1525 = vadd.f32 %v1507, 1.0
    %v1526 = vadd.f32 %v1509, 1.0
    %v1527 = vadd.f32 %v1511, 1.0
    %v1528 = vrcp.pop %v1512
    %v1529 = vmul.f32 1.0, %v1528
    %v1530 = vrcp.pop %v1513
    %v1531 = vmul.f32 1.0, %v1530
    %v1532 = vrcp.pop %v1514
    %v1533 = vmul.f32 1.0, %v1532
    %v1534 = vrcp.pop %v1515
    %v1535 = vmul.f32 1.0, %v1534
    %v1536 = vrcp.pop %v1516
    %v1537 = vmul.f32 1.0, %v1536
    %v1538 = vrcp.pop %v1517
    %v1539 = vmul.f32 1.0, %v1538
    %v1540 = vrcp.pop %v1518
    %v1541 = vmul.f32 1.0, %v1540
    %v1542 = vrcp.pop %v1519
    %v1543 = vmul.f32 1.0, %v1542
    %v1544 = vrcp.pop %v1520
    %v1545 = vmul.f32 1.0, %v1544
    %v1546 = vrcp.pop %v1521
    %v1547 = vmul.f32 1.0, %v1546
    %v1548 = vrcp.pop %v1522
    %v1549 = vmul.f32 1.0, %v1548
    %v1550 = vrcp.pop %v1523
    %v1551 = vmul.f32 1.0, %v1550
    %v1552 = vrcp.pop %v1524
    %v1553 = vmul.f32 1.0, %v1552
    %v1554 = vrcp.pop %v1525
    %v1555 = vmul.f32 1.0, %v1554
    %v1556 = vrcp.pop %v1526
    %v1557 = vmul.f32 1.0, %v1556
    %v1558 = vrcp.pop %v1527
    %v1559 = vmul.f32 1.0, %v1558
    %v1560 = vmul.f32 %v1386, %v1529
    %v1561 = vmul.f32 %v1391, %v1531
    %v1562 = vmul.f32 %v1396, %v1533
    %v1563 = vmul.f32 %v1401, %v1535
    %v1564 = vmul.f32 %v1406, %v1537
    %v1565 = vmul.f32 %v1411, %v1539
    %v1566 = vmul.f32 %v1416, %v1541
    %v1567 = vmul.f32 %v1421, %v1543
    %v1568 = vmul.f32 %v1426, %v1545
    %v1569 = vmul.f32 %v1431, %v1547
    %v1570 = vmul.f32 %v1436, %v1549
    %v1571 = vmul.f32 %v1441, %v1551
    %v1572 = vmul.f32 %v1446, %v1553
    %v1573 = vmul.f32 %v1451, %v1555
    %v1574 = vmul.f32 %v1456, %v1557
    %v1575 = vmul.f32 %v1461, %v1559
    %v1576 = vsel %vm561, %v1560, 0.0
    %1577 = vadd.xlane.f32.xlu0 %v1576
    %v1578 = vpop.xlane.xlu0 %1577
    %v1579 = vsel %vm561, %v1561, 0.0
    %1580 = vadd.xlane.f32.xlu0 %v1579
    %v1581 = vpop.xlane.xlu0 %1580
    %v1582 = vsel %vm561, %v1562, 0.0
    %1583 = vadd.xlane.f32.xlu0 %v1582
    %v1584 = vpop.xlane.xlu0 %1583
    %v1585 = vsel %vm561, %v1563, 0.0
    %1586 = vadd.xlane.f32.xlu0 %v1585
    %v1587 = vpop.xlane.xlu0 %1586
    %v1588 = vsel %vm561, %v1564, 0.0
    %1589 = vadd.xlane.f32.xlu0 %v1588
    %v1590 = vpop.xlane.xlu0 %1589
    %v1591 = vsel %vm561, %v1565, 0.0
    %1592 = vadd.xlane.f32.xlu0 %v1591
    %v1593 = vpop.xlane.xlu0 %1592
    %v1594 = vsel %vm561, %v1566, 0.0
    %1595 = vadd.xlane.f32.xlu0 %v1594
    %v1596 = vpop.xlane.xlu0 %1595
    %v1597 = vsel %vm561, %v1567, 0.0
    %1598 = vadd.xlane.f32.xlu0 %v1597
    %v1599 = vpop.xlane.xlu0 %1598
    %v1600 = vsel %vm561, %v1568, 0.0
    %1601 = vadd.xlane.f32.xlu0 %v1600
    %v1602 = vpop.xlane.xlu0 %1601
    %v1603 = vsel %vm561, %v1569, 0.0
    %1604 = vadd.xlane.f32.xlu0 %v1603
    %v1605 = vpop.xlane.xlu0 %1604
    %v1606 = vsel %vm561, %v1570, 0.0
    %1607 = vadd.xlane.f32.xlu0 %v1606
    %v1608 = vpop.xlane.xlu0 %1607
    %v1609 = vsel %vm561, %v1571, 0.0
    %1610 = vadd.xlane.f32.xlu0 %v1609
    %v1611 = vpop.xlane.xlu0 %1610
    %v1612 = vsel %vm561, %v1572, 0.0
    %1613 = vadd.xlane.f32.xlu0 %v1612
    %v1614 = vpop.xlane.xlu0 %1613
    %v1615 = vsel %vm561, %v1573, 0.0
    %1616 = vadd.xlane.f32.xlu0 %v1615
    %v1617 = vpop.xlane.xlu0 %1616
    %v1618 = vsel %vm561, %v1574, 0.0
    %1619 = vadd.xlane.f32.xlu0 %v1618
    %v1620 = vpop.xlane.xlu0 %1619
    %v1621 = vsel %vm561, %v1575, 0.0
    %1622 = vadd.xlane.f32.xlu0 %v1621
    %v1623 = vpop.xlane.xlu0 %1622
    %v1624 = vrcp.pop 64.0
    %v1625 = vmul.f32 %v1578, %v1624
    %v1626 = vmul.f32 %v1581, %v1624
    %v1627 = vmul.f32 %v1584, %v1624
    %v1628 = vmul.f32 %v1587, %v1624
    %v1629 = vmul.f32 %v1590, %v1624
    %v1630 = vmul.f32 %v1593, %v1624
    %v1631 = vmul.f32 %v1596, %v1624
    %v1632 = vmul.f32 %v1599, %v1624
    %v1633 = vmul.f32 %v1602, %v1624
    %v1634 = vmul.f32 %v1605, %v1624
    %v1635 = vmul.f32 %v1608, %v1624
    %v1636 = vmul.f32 %v1611, %v1624
    %v1637 = vmul.f32 %v1614, %v1624
    %v1638 = vmul.f32 %v1617, %v1624
    %v1639 = vmul.f32 %v1620, %v1624
    %v1640 = vmul.f32 %v1623, %v1624
    %v1641 = vsub.f32 %v1560, %v1625
    %v1642 = vsub.f32 %v1561, %v1626
    %v1643 = vsub.f32 %v1562, %v1627
    %v1644 = vsub.f32 %v1563, %v1628
    %v1645 = vsub.f32 %v1564, %v1629
    %v1646 = vsub.f32 %v1565, %v1630
    %v1647 = vsub.f32 %v1566, %v1631
    %v1648 = vsub.f32 %v1567, %v1632
    %v1649 = vsub.f32 %v1568, %v1633
    %v1650 = vsub.f32 %v1569, %v1634
    %v1651 = vsub.f32 %v1570, %v1635
    %v1652 = vsub.f32 %v1571, %v1636
    %v1653 = vsub.f32 %v1572, %v1637
    %v1654 = vsub.f32 %v1573, %v1638
    %v1655 = vsub.f32 %v1574, %v1639
    %v1656 = vsub.f32 %v1575, %v1640
    %v1657 = vmul.f32 %v1641, %v1641
    %v1658 = vmul.f32 %v1642, %v1642
    %v1659 = vmul.f32 %v1643, %v1643
    %v1660 = vmul.f32 %v1644, %v1644
    %v1661 = vmul.f32 %v1645, %v1645
    %v1662 = vmul.f32 %v1646, %v1646
    %v1663 = vmul.f32 %v1647, %v1647
    %v1664 = vmul.f32 %v1648, %v1648
    %v1665 = vmul.f32 %v1649, %v1649
    %v1666 = vmul.f32 %v1650, %v1650
    %v1667 = vmul.f32 %v1651, %v1651
    %v1668 = vmul.f32 %v1652, %v1652
    %v1669 = vmul.f32 %v1653, %v1653
    %v1670 = vmul.f32 %v1654, %v1654
    %v1671 = vmul.f32 %v1655, %v1655
    %v1672 = vmul.f32 %v1656, %v1656
    %v1673 = vsel %vm561, %v1657, 0.0
    %1674 = vadd.xlane.f32.xlu0 %v1673
    %v1675 = vpop.xlane.xlu0 %1674
    %v1676 = vsel %vm561, %v1658, 0.0
    %1677 = vadd.xlane.f32.xlu0 %v1676
    %v1678 = vpop.xlane.xlu0 %1677
    %v1679 = vsel %vm561, %v1659, 0.0
    %1680 = vadd.xlane.f32.xlu0 %v1679
    %v1681 = vpop.xlane.xlu0 %1680
    %v1682 = vsel %vm561, %v1660, 0.0
    %1683 = vadd.xlane.f32.xlu0 %v1682
    %v1684 = vpop.xlane.xlu0 %1683
    %v1685 = vsel %vm561, %v1661, 0.0
    %1686 = vadd.xlane.f32.xlu0 %v1685
    %v1687 = vpop.xlane.xlu0 %1686
    %v1688 = vsel %vm561, %v1662, 0.0
    %1689 = vadd.xlane.f32.xlu0 %v1688
    %v1690 = vpop.xlane.xlu0 %1689
    %v1691 = vsel %vm561, %v1663, 0.0
    %1692 = vadd.xlane.f32.xlu0 %v1691
    %v1693 = vpop.xlane.xlu0 %1692
    %v1694 = vsel %vm561, %v1664, 0.0
    %1695 = vadd.xlane.f32.xlu0 %v1694
    %v1696 = vpop.xlane.xlu0 %1695
    %v1697 = vsel %vm561, %v1665, 0.0
    %1698 = vadd.xlane.f32.xlu0 %v1697
    %v1699 = vpop.xlane.xlu0 %1698
    %v1700 = vsel %vm561, %v1666, 0.0
    %1701 = vadd.xlane.f32.xlu0 %v1700
    %v1702 = vpop.xlane.xlu0 %1701
    %v1703 = vsel %vm561, %v1667, 0.0
    %1704 = vadd.xlane.f32.xlu0 %v1703
    %v1705 = vpop.xlane.xlu0 %1704
    %v1706 = vsel %vm561, %v1668, 0.0
    %1707 = vadd.xlane.f32.xlu0 %v1706
    %v1708 = vpop.xlane.xlu0 %1707
    %v1709 = vsel %vm561, %v1669, 0.0
    %1710 = vadd.xlane.f32.xlu0 %v1709
    %v1711 = vpop.xlane.xlu0 %1710
    %v1712 = vsel %vm561, %v1670, 0.0
    %1713 = vadd.xlane.f32.xlu0 %v1712
    %v1714 = vpop.xlane.xlu0 %1713
    %v1715 = vsel %vm561, %v1671, 0.0
    %1716 = vadd.xlane.f32.xlu0 %v1715
    %v1717 = vpop.xlane.xlu0 %1716
    %v1718 = vsel %vm561, %v1672, 0.0
    %1719 = vadd.xlane.f32.xlu0 %v1718
    %v1720 = vpop.xlane.xlu0 %1719
    %v1721 = vmul.f32 %v1675, %v1624
    %v1722 = vmul.f32 %v1678, %v1624
    %v1723 = vmul.f32 %v1681, %v1624
    %v1724 = vmul.f32 %v1684, %v1624
    %v1725 = vmul.f32 %v1687, %v1624
    %v1726 = vmul.f32 %v1690, %v1624
    %v1727 = vmul.f32 %v1693, %v1624
    %v1728 = vmul.f32 %v1696, %v1624
    %v1729 = vmul.f32 %v1699, %v1624
    %v1730 = vmul.f32 %v1702, %v1624
    %v1731 = vmul.f32 %v1705, %v1624
    %v1732 = vmul.f32 %v1708, %v1624
    %v1733 = vmul.f32 %v1711, %v1624
    %v1734 = vmul.f32 %v1714, %v1624
    %v1735 = vmul.f32 %v1717, %v1624
    %v1736 = vmul.f32 %v1720, %v1624
    %v1737 = vadd.f32 %v1721, 1e-06
    %v1738 = vadd.f32 %v1722, 1e-06
    %v1739 = vadd.f32 %v1723, 1e-06
    %v1740 = vadd.f32 %v1724, 1e-06
    %v1741 = vadd.f32 %v1725, 1e-06
    %v1742 = vadd.f32 %v1726, 1e-06
    %v1743 = vadd.f32 %v1727, 1e-06
    %v1744 = vadd.f32 %v1728, 1e-06
    %v1745 = vadd.f32 %v1729, 1e-06
    %v1746 = vadd.f32 %v1730, 1e-06
    %v1747 = vadd.f32 %v1731, 1e-06
    %v1748 = vadd.f32 %v1732, 1e-06
    %v1749 = vadd.f32 %v1733, 1e-06
    %v1750 = vadd.f32 %v1734, 1e-06
    %v1751 = vadd.f32 %v1735, 1e-06
    %v1752 = vadd.f32 %v1736, 1e-06
    %v1753 = vrsqrt.pop %v1737
    %v1754 = vrsqrt.pop %v1738
    %v1755 = vrsqrt.pop %v1739
    %v1756 = vrsqrt.pop %v1740
    %v1757 = vrsqrt.pop %v1741
    %v1758 = vrsqrt.pop %v1742
    %v1759 = vrsqrt.pop %v1743
    %v1760 = vrsqrt.pop %v1744
    %v1761 = vrsqrt.pop %v1745
    %v1762 = vrsqrt.pop %v1746
    %v1763 = vrsqrt.pop %v1747
    %v1764 = vrsqrt.pop %v1748
    %v1765 = vrsqrt.pop %v1749
    %v1766 = vrsqrt.pop %v1750
    %v1767 = vrsqrt.pop %v1751
    %v1768 = vrsqrt.pop %v1752
    %v1769 = vmul.f32 %v1641, %v1753
    %v1770 = vmul.f32 %v1642, %v1754
    %v1771 = vmul.f32 %v1643, %v1755
    %v1772 = vmul.f32 %v1644, %v1756
    %v1773 = vmul.f32 %v1645, %v1757
    %v1774 = vmul.f32 %v1646, %v1758
    %v1775 = vmul.f32 %v1647, %v1759
    %v1776 = vmul.f32 %v1648, %v1760
    %v1777 = vmul.f32 %v1649, %v1761
    %v1778 = vmul.f32 %v1650, %v1762
    %v1779 = vmul.f32 %v1651, %v1763
    %v1780 = vmul.f32 %v1652, %v1764
    %v1781 = vmul.f32 %v1653, %v1765
    %v1782 = vmul.f32 %v1654, %v1766
    %v1783 = vmul.f32 %v1655, %v1767
    %v1784 = vmul.f32 %v1656, %v1768
    %v1785 = vlaneseq
    %v1786 = vshrl.u32 %v1785, 7
    %v1787 = vsub.s32 6, %v1786
    %v1788 = vrot.slane %v39, %v1787
    %v1789 = vmul.f32 %v1769, %v1788
    %v1790 = vmul.f32 %v1770, %v1788
    %v1791 = vmul.f32 %v1771, %v1788
    %v1792 = vmul.f32 %v1772, %v1788
    %v1793 = vmul.f32 %v1773, %v1788
    %v1794 = vmul.f32 %v1774, %v1788
    %v1795 = vmul.f32 %v1775, %v1788
    %v1796 = vmul.f32 %v1776, %v1788
    %v1797 = vmul.f32 %v1777, %v1788
    %v1798 = vmul.f32 %v1778, %v1788
    %v1799 = vmul.f32 %v1779, %v1788
    %v1800 = vmul.f32 %v1780, %v1788
    %v1801 = vmul.f32 %v1781, %v1788
    %v1802 = vmul.f32 %v1782, %v1788
    %v1803 = vmul.f32 %v1783, %v1788
    %v1804 = vmul.f32 %v1784, %v1788
    %v1805 = vlaneseq
    %v1806 = vshrl.u32 %v1805, 7
    %v1807 = vsub.s32 7, %v1806
    %v1808 = vrot.slane %v39, %v1807
    %v1809 = vadd.f32 %v1789, %v1808
    %v1810 = vadd.f32 %v1790, %v1808
    %v1811 = vadd.f32 %v1791, %v1808
    %v1812 = vadd.f32 %v1792, %v1808
    %v1813 = vadd.f32 %v1793, %v1808
    %v1814 = vadd.f32 %v1794, %v1808
    %v1815 = vadd.f32 %v1795, %v1808
    %v1816 = vadd.f32 %v1796, %v1808
    %v1817 = vadd.f32 %v1797, %v1808
    %v1818 = vadd.f32 %v1798, %v1808
    %v1819 = vadd.f32 %v1799, %v1808
    %v1820 = vadd.f32 %v1800, %v1808
    %v1821 = vadd.f32 %v1801, %v1808
    %v1822 = vadd.f32 %v1802, %v1808
    %v1823 = vadd.f32 %v1803, %v1808
    %v1824 = vadd.f32 %v1804, %v1808
    %s1825 = scalar_lea.vmem %s7, 192
    %v1826 = vld [vmem:[%s1825] sm:$0xff]
    %v1827 = vld [vmem:[%s1825 + $0x8] sm:$0xff]
    %v1828 = vld [vmem:[%s1825 + $0x10] sm:$0xff]
    %v1829 = vld [vmem:[%s1825 + $0x18] sm:$0xff]
    %v1830 = vld [vmem:[%s1825 + $0x20] sm:$0xff]
    %v1831 = vld [vmem:[%s1825 + $0x28] sm:$0xff]
    %v1832 = vld [vmem:[%s1825 + $0x30] sm:$0xff]
    %v1833 = vld [vmem:[%s1825 + $0x38] sm:$0xff]
    %v1834 = vlaneseq
    %v1835 = vshrl.u32 %v1834, 7
    %v1836 = vsub.s32 0, %v1835
    %v1837 = vrot.slane %v40, %v1836
    %v1839 = vsel %vm561, %v1809, 0
    %v1842 = vsel %vm561, %v1810, 0
    %v1845 = vsel %vm561, %v1811, 0
    %v1848 = vsel %vm561, %v1812, 0
    %v1851 = vsel %vm561, %v1813, 0
    %v1854 = vsel %vm561, %v1814, 0
    %v1857 = vsel %vm561, %v1815, 0
    %v1860 = vsel %vm561, %v1816, 0
    %v1863 = vsel %vm561, %v1817, 0
    %v1866 = vsel %vm561, %v1818, 0
    %v1869 = vsel %vm561, %v1819, 0
    %v1872 = vsel %vm561, %v1820, 0
    %v1875 = vsel %vm561, %v1821, 0
    %v1878 = vsel %vm561, %v1822, 0
    %v1881 = vsel %vm561, %v1823, 0
    %v1884 = vsel %vm561, %v1824, 0
    %1886 = vmatprep.subr.mxu0 0.0
    %1887 = vmatpush1.msra.mxu0 %v1826
    %1888 = vmatprep.subr.mxu0 0.0
    %1889 = vmatpush1.msra.mxu0 %v1827
    %1890 = vmatprep.subr.mxu0 0.0
    %1891 = vmatpush1.msra.mxu0 %v1828
    %1892 = vmatprep.subr.mxu0 0.0
    %1893 = vmatpush1.msra.mxu0 %v1829
    %1894 = vmatprep.subr.mxu0 0.0
    %1895 = vmatpush1.msra.mxu0 %v1830
    %1896 = vmatprep.subr.mxu0 0.0
    %1897 = vmatpush1.msra.mxu0 %v1831
    %1898 = vmatprep.subr.mxu0 0.0
    %1899 = vmatpush1.msra.mxu0 %v1832
    %1900 = vmatprep.subr.mxu0 0.0
    %1901 = vmatpush1.msra.mxu0 %v1833
    %1902 = vmatprep.subr.mxu0 0.0
    %1903 = vmatpush1.msra.mxu0 0.0
    %1904 = vmatprep.subr.mxu0 0.0
    %1905 = vmatpush1.msra.mxu0 0.0
    %1906 = vmatprep.subr.mxu0 0.0
    %1907 = vmatpush1.msra.mxu0 0.0
    %1908 = vmatprep.subr.mxu0 0.0
    %1909 = vmatpush1.msra.mxu0 0.0
    %1910 = vmatprep.subr.mxu0 0.0
    %1911 = vmatpush1.msra.mxu0 0.0
    %1912 = vmatprep.subr.mxu0 0.0
    %1913 = vmatpush1.msra.mxu0 0.0
    %1914 = vmatprep.subr.mxu0 0.0
    %1915 = vmatpush1.msra.mxu0 0.0
    %1916 = vmatprep.subr.mxu0 0.0
    %1917 = vmatpush1.msra.mxu0 0.0
    %1918 = vmatprep.subr.mxu0 0.0
    %1919 = vmatpush1.msra.mxu0 0.0
    %1920 = vmatprep.subr.mxu0 0.0
    %1921 = vmatpush1.msra.mxu0 0.0
    %1922 = vmatprep.subr.mxu0 0.0
    %1923 = vmatpush1.msra.mxu0 0.0
    %1924 = vmatprep.subr.mxu0 0.0
    %1925 = vmatpush1.msra.mxu0 0.0
    %1926 = vmatprep.subr.mxu0 0.0
    %1927 = vmatpush1.msra.mxu0 0.0
    %1928 = vmatprep.subr.mxu0 0.0
    %1929 = vmatpush1.msra.mxu0 0.0
    %1930 = vmatprep.subr.mxu0 0.0
    %1931 = vmatpush1.msra.mxu0 0.0
    %1932 = vmatprep.subr.mxu0 0.0
    %1933 = vmatpush1.msra.mxu0 0.0
    %1934 = vmatprep.subr.mxu0 0.0
    %1935 = vmatpush1.msra.mxu0 0.0
    %1936 = vmatprep.subr.mxu0 0.0
    %1937 = vmatpush1.msra.mxu0 0.0
    %1938 = vmatprep.subr.mxu0 0.0
    %1939 = vmatpush1.msra.mxu0 0.0
    %1940 = vmatprep.subr.mxu0 0.0
    %1941 = vmatpush1.msra.mxu0 0.0
    %1942 = vmatprep.subr.mxu0 0.0
    %1943 = vmatpush1.msra.mxu0 0.0
    %1944 = vmatprep.subr.mxu0 0.0
    %1945 = vmatpush1.msra.mxu0 0.0
    %1946 = vmatprep.subr.mxu0 0.0
    %1947 = vmatpush1.msra.mxu0 0.0
    %1948 = vmatprep.subr.mxu0 0.0
    %1949 = vmatpush1.msra.mxu0 0.0
    %1950 = vmatprep.mubr.f32.mxu0 0.0
    %1951 = vmatmul.mubr.f32.gmra.mrb[0].mxu0 %v1839
    %v1952 = vpop.f32.mrb[0].mxu0
    %v1953 = vadd.f32 %v1837, %v1952
    %v1954 = vpop.f32.mrb[0].mxu0
    %1955 = vmatprep.mubr.f32.mxu0 0.0
    %1956 = vmatmul.mubr.f32.gmra.mrb[0].mxu0 %v1842
    %v1957 = vpop.f32.mrb[0].mxu0
    %v1958 = vadd.f32 %v1837, %v1957
    %v1959 = vpop.f32.mrb[0].mxu0
    %1960 = vmatprep.mubr.f32.mxu0 0.0
    %1961 = vmatmul.mubr.f32.gmra.mrb[0].mxu0 %v1845
    %v1962 = vpop.f32.mrb[0].mxu0
    %v1963 = vadd.f32 %v1837, %v1962
    %v1964 = vpop.f32.mrb[0].mxu0
    %1965 = vmatprep.mubr.f32.mxu0 0.0
    %1966 = vmatmul.mubr.f32.gmra.mrb[0].mxu0 %v1848
    %v1967 = vpop.f32.mrb[0].mxu0
    %v1968 = vadd.f32 %v1837, %v1967
    %v1969 = vpop.f32.mrb[0].mxu0
    %1970 = vmatprep.mubr.f32.mxu0 0.0
    %1971 = vmatmul.mubr.f32.gmra.mrb[0].mxu0 %v1851
    %v1972 = vpop.f32.mrb[0].mxu0
    %v1973 = vadd.f32 %v1837, %v1972
    %v1974 = vpop.f32.mrb[0].mxu0
    %1975 = vmatprep.mubr.f32.mxu0 0.0
    %1976 = vmatmul.mubr.f32.gmra.mrb[0].mxu0 %v1854
    %v1977 = vpop.f32.mrb[0].mxu0
    %v1978 = vadd.f32 %v1837, %v1977
    %v1979 = vpop.f32.mrb[0].mxu0
    %1980 = vmatprep.mubr.f32.mxu0 0.0
    %1981 = vmatmul.mubr.f32.gmra.mrb[0].mxu0 %v1857
    %v1982 = vpop.f32.mrb[0].mxu0
    %v1983 = vadd.f32 %v1837, %v1982
    %v1984 = vpop.f32.mrb[0].mxu0
    %1985 = vmatprep.mubr.f32.mxu0 0.0
    %1986 = vmatmul.mubr.f32.gmra.mrb[0].mxu0 %v1860
    %v1987 = vpop.f32.mrb[0].mxu0
    %v1988 = vadd.f32 %v1837, %v1987
    %v1989 = vpop.f32.mrb[0].mxu0
    %1990 = vmatprep.mubr.f32.mxu0 0.0
    %1991 = vmatmul.mubr.f32.gmra.mrb[0].mxu0 %v1863
    %v1992 = vpop.f32.mrb[0].mxu0
    %v1993 = vadd.f32 %v1837, %v1992
    %v1994 = vpop.f32.mrb[0].mxu0
    %1995 = vmatprep.mubr.f32.mxu0 0.0
    %1996 = vmatmul.mubr.f32.gmra.mrb[0].mxu0 %v1866
    %v1997 = vpop.f32.mrb[0].mxu0
    %v1998 = vadd.f32 %v1837, %v1997
    %v1999 = vpop.f32.mrb[0].mxu0
    %2000 = vmatprep.mubr.f32.mxu0 0.0
    %2001 = vmatmul.mubr.f32.gmra.mrb[0].mxu0 %v1869
    %v2002 = vpop.f32.mrb[0].mxu0
    %v2003 = vadd.f32 %v1837, %v2002
    %v2004 = vpop.f32.mrb[0].mxu0
    %2005 = vmatprep.mubr.f32.mxu0 0.0
    %2006 = vmatmul.mubr.f32.gmra.mrb[0].mxu0 %v1872
    %v2007 = vpop.f32.mrb[0].mxu0
    %v2008 = vadd.f32 %v1837, %v2007
    %v2009 = vpop.f32.mrb[0].mxu0
    %2010 = vmatprep.mubr.f32.mxu0 0.0
    %2011 = vmatmul.mubr.f32.gmra.mrb[0].mxu0 %v1875
    %v2012 = vpop.f32.mrb[0].mxu0
    %v2013 = vadd.f32 %v1837, %v2012
    %v2014 = vpop.f32.mrb[0].mxu0
    %2015 = vmatprep.mubr.f32.mxu0 0.0
    %2016 = vmatmul.mubr.f32.gmra.mrb[0].mxu0 %v1878
    %v2017 = vpop.f32.mrb[0].mxu0
    %v2018 = vadd.f32 %v1837, %v2017
    %v2019 = vpop.f32.mrb[0].mxu0
    %2020 = vmatprep.mubr.f32.mxu0 0.0
    %2021 = vmatmul.mubr.f32.gmra.mrb[0].mxu0 %v1881
    %v2022 = vpop.f32.mrb[0].mxu0
    %v2023 = vadd.f32 %v1837, %v2022
    %v2024 = vpop.f32.mrb[0].mxu0
    %2025 = vmatprep.mubr.f32.mxu0 0.0
    %2026 = vmatmul.mubr.f32.gmra.mrb[0].mxu0 %v1884
    %v2027 = vpop.f32.mrb[0].mxu0
    %v2028 = vadd.f32 %v1837, %v2027
    %v2029 = vpop.f32.mrb[0].mxu0
    %2030 = vdwg.mxu0
    %v2031 = vadd.f32 %v1953, %v1243
    %v2032 = vadd.f32 %v1958, %v1244
    %v2033 = vadd.f32 %v1963, %v1245
    %v2034 = vadd.f32 %v1968, %v1246
    %v2035 = vadd.f32 %v1973, %v1247
    %v2036 = vadd.f32 %v1978, %v1248
    %v2037 = vadd.f32 %v1983, %v1249
    %v2038 = vadd.f32 %v1988, %v1250
    %v2039 = vadd.f32 %v1993, %v1251
    %v2040 = vadd.f32 %v1998, %v1252
    %v2041 = vadd.f32 %v2003, %v1253
    %v2042 = vadd.f32 %v2008, %v1254
    %v2043 = vadd.f32 %v2013, %v1255
    %v2044 = vadd.f32 %v2018, %v1256
    %v2045 = vadd.f32 %v2023, %v1257
    %v2046 = vadd.f32 %v2028, %v1258
    %v2047 = vxor.u32 %v2031, 2147483648
    %v2048 = vxor.u32 %v2032, 2147483648
    %v2049 = vxor.u32 %v2033, 2147483648
    %v2050 = vxor.u32 %v2034, 2147483648
    %v2051 = vxor.u32 %v2035, 2147483648
    %v2052 = vxor.u32 %v2036, 2147483648
    %v2053 = vxor.u32 %v2037, 2147483648
    %v2054 = vxor.u32 %v2038, 2147483648
    %v2055 = vxor.u32 %v2039, 2147483648
    %v2056 = vxor.u32 %v2040, 2147483648
    %v2057 = vxor.u32 %v2041, 2147483648
    %v2058 = vxor.u32 %v2042, 2147483648
    %v2059 = vxor.u32 %v2043, 2147483648
    %v2060 = vxor.u32 %v2044, 2147483648
    %v2061 = vxor.u32 %v2045, 2147483648
    %v2062 = vxor.u32 %v2046, 2147483648
    %v2063 = vmul.f32 %v2047, 1.442695
    %v2064 = vpow.pop %v2063
    %v2065 = vmul.f32 %v2048, 1.442695
    %v2066 = vpow.pop %v2065
    %v2067 = vmul.f32 %v2049, 1.442695
    %v2068 = vpow.pop %v2067
    %v2069 = vmul.f32 %v2050, 1.442695
    %v2070 = vpow.pop %v2069
    %v2071 = vmul.f32 %v2051, 1.442695
    %v2072 = vpow.pop %v2071
    %v2073 = vmul.f32 %v2052, 1.442695
    %v2074 = vpow.pop %v2073
    %v2075 = vmul.f32 %v2053, 1.442695
    %v2076 = vpow.pop %v2075
    %v2077 = vmul.f32 %v2054, 1.442695
    %v2078 = vpow.pop %v2077
    %v2079 = vmul.f32 %v2055, 1.442695
    %v2080 = vpow.pop %v2079
    %v2081 = vmul.f32 %v2056, 1.442695
    %v2082 = vpow.pop %v2081
    %v2083 = vmul.f32 %v2057, 1.442695
    %v2084 = vpow.pop %v2083
    %v2085 = vmul.f32 %v2058, 1.442695
    %v2086 = vpow.pop %v2085
    %v2087 = vmul.f32 %v2059, 1.442695
    %v2088 = vpow.pop %v2087
    %v2089 = vmul.f32 %v2060, 1.442695
    %v2090 = vpow.pop %v2089
    %v2091 = vmul.f32 %v2061, 1.442695
    %v2092 = vpow.pop %v2091
    %v2093 = vmul.f32 %v2062, 1.442695
    %v2094 = vpow.pop %v2093
    %v2095 = vadd.f32 %v2064, 1.0
    %v2096 = vadd.f32 %v2066, 1.0
    %v2097 = vadd.f32 %v2068, 1.0
    %v2098 = vadd.f32 %v2070, 1.0
    %v2099 = vadd.f32 %v2072, 1.0
    %v2100 = vadd.f32 %v2074, 1.0
    %v2101 = vadd.f32 %v2076, 1.0
    %v2102 = vadd.f32 %v2078, 1.0
    %v2103 = vadd.f32 %v2080, 1.0
    %v2104 = vadd.f32 %v2082, 1.0
    %v2105 = vadd.f32 %v2084, 1.0
    %v2106 = vadd.f32 %v2086, 1.0
    %v2107 = vadd.f32 %v2088, 1.0
    %v2108 = vadd.f32 %v2090, 1.0
    %v2109 = vadd.f32 %v2092, 1.0
    %v2110 = vadd.f32 %v2094, 1.0
    %v2111 = vrcp.pop %v2095
    %v2112 = vmul.f32 1.0, %v2111
    %v2113 = vrcp.pop %v2096
    %v2114 = vmul.f32 1.0, %v2113
    %v2115 = vrcp.pop %v2097
    %v2116 = vmul.f32 1.0, %v2115
    %v2117 = vrcp.pop %v2098
    %v2118 = vmul.f32 1.0, %v2117
    %v2119 = vrcp.pop %v2099
    %v2120 = vmul.f32 1.0, %v2119
    %v2121 = vrcp.pop %v2100
    %v2122 = vmul.f32 1.0, %v2121
    %v2123 = vrcp.pop %v2101
    %v2124 = vmul.f32 1.0, %v2123
    %v2125 = vrcp.pop %v2102
    %v2126 = vmul.f32 1.0, %v2125
    %v2127 = vrcp.pop %v2103
    %v2128 = vmul.f32 1.0, %v2127
    %v2129 = vrcp.pop %v2104
    %v2130 = vmul.f32 1.0, %v2129
    %v2131 = vrcp.pop %v2105
    %v2132 = vmul.f32 1.0, %v2131
    %v2133 = vrcp.pop %v2106
    %v2134 = vmul.f32 1.0, %v2133
    %v2135 = vrcp.pop %v2107
    %v2136 = vmul.f32 1.0, %v2135
    %v2137 = vrcp.pop %v2108
    %v2138 = vmul.f32 1.0, %v2137
    %v2139 = vrcp.pop %v2109
    %v2140 = vmul.f32 1.0, %v2139
    %v2141 = vrcp.pop %v2110
    %v2142 = vmul.f32 1.0, %v2141
    %v2143 = vmul.f32 %v2031, %v2112
    %v2144 = vmul.f32 %v2032, %v2114
    %v2145 = vmul.f32 %v2033, %v2116
    %v2146 = vmul.f32 %v2034, %v2118
    %v2147 = vmul.f32 %v2035, %v2120
    %v2148 = vmul.f32 %v2036, %v2122
    %v2149 = vmul.f32 %v2037, %v2124
    %v2150 = vmul.f32 %v2038, %v2126
    %v2151 = vmul.f32 %v2039, %v2128
    %v2152 = vmul.f32 %v2040, %v2130
    %v2153 = vmul.f32 %v2041, %v2132
    %v2154 = vmul.f32 %v2042, %v2134
    %v2155 = vmul.f32 %v2043, %v2136
    %v2156 = vmul.f32 %v2044, %v2138
    %v2157 = vmul.f32 %v2045, %v2140
    %v2158 = vmul.f32 %v2046, %v2142
    %s2159 = scalar_lea.vmem %s7, 256
    %v2160 = vld [vmem:[%s2159] sm:$0xff]
    %v2161 = vld [vmem:[%s2159 + $0x8] sm:$0xff]
    %v2162 = vld [vmem:[%s2159 + $0x10] sm:$0xff]
    %v2163 = vld [vmem:[%s2159 + $0x18] sm:$0xff]
    %v2164 = vld [vmem:[%s2159 + $0x20] sm:$0xff]
    %v2165 = vld [vmem:[%s2159 + $0x28] sm:$0xff]
    %v2166 = vld [vmem:[%s2159 + $0x30] sm:$0xff]
    %v2167 = vld [vmem:[%s2159 + $0x38] sm:$0xff]
    %v2169 = vsel %vm561, %v2143, 0
    %v2172 = vsel %vm561, %v2144, 0
    %v2175 = vsel %vm561, %v2145, 0
    %v2178 = vsel %vm561, %v2146, 0
    %v2181 = vsel %vm561, %v2147, 0
    %v2184 = vsel %vm561, %v2148, 0
    %v2187 = vsel %vm561, %v2149, 0
    %v2190 = vsel %vm561, %v2150, 0
    %v2193 = vsel %vm561, %v2151, 0
    %v2196 = vsel %vm561, %v2152, 0
    %v2199 = vsel %vm561, %v2153, 0
    %v2202 = vsel %vm561, %v2154, 0
    %v2205 = vsel %vm561, %v2155, 0
    %v2208 = vsel %vm561, %v2156, 0
    %v2211 = vsel %vm561, %v2157, 0
    %v2214 = vsel %vm561, %v2158, 0
    %2216 = vmatprep.subr.mxu0 0.0
    %2217 = vmatpush1.msra.mxu0 %v2160
    %2218 = vmatprep.subr.mxu0 0.0
    %2219 = vmatpush1.msra.mxu0 %v2161
    %2220 = vmatprep.subr.mxu0 0.0
    %2221 = vmatpush1.msra.mxu0 %v2162
    %2222 = vmatprep.subr.mxu0 0.0
    %2223 = vmatpush1.msra.mxu0 %v2163
    %2224 = vmatprep.subr.mxu0 0.0
    %2225 = vmatpush1.msra.mxu0 %v2164
    %2226 = vmatprep.subr.mxu0 0.0
    %2227 = vmatpush1.msra.mxu0 %v2165
    %2228 = vmatprep.subr.mxu0 0.0
    %2229 = vmatpush1.msra.mxu0 %v2166
    %2230 = vmatprep.subr.mxu0 0.0
    %2231 = vmatpush1.msra.mxu0 %v2167
    %2232 = vmatprep.subr.mxu0 0.0
    %2233 = vmatpush1.msra.mxu0 0.0
    %2234 = vmatprep.subr.mxu0 0.0
    %2235 = vmatpush1.msra.mxu0 0.0
    %2236 = vmatprep.subr.mxu0 0.0
    %2237 = vmatpush1.msra.mxu0 0.0
    %2238 = vmatprep.subr.mxu0 0.0
    %2239 = vmatpush1.msra.mxu0 0.0
    %2240 = vmatprep.subr.mxu0 0.0
    %2241 = vmatpush1.msra.mxu0 0.0
    %2242 = vmatprep.subr.mxu0 0.0
    %2243 = vmatpush1.msra.mxu0 0.0
    %2244 = vmatprep.subr.mxu0 0.0
    %2245 = vmatpush1.msra.mxu0 0.0
    %2246 = vmatprep.subr.mxu0 0.0
    %2247 = vmatpush1.msra.mxu0 0.0
    %2248 = vmatprep.subr.mxu0 0.0
    %2249 = vmatpush1.msra.mxu0 0.0
    %2250 = vmatprep.subr.mxu0 0.0
    %2251 = vmatpush1.msra.mxu0 0.0
    %2252 = vmatprep.subr.mxu0 0.0
    %2253 = vmatpush1.msra.mxu0 0.0
    %2254 = vmatprep.subr.mxu0 0.0
    %2255 = vmatpush1.msra.mxu0 0.0
    %2256 = vmatprep.subr.mxu0 0.0
    %2257 = vmatpush1.msra.mxu0 0.0
    %2258 = vmatprep.subr.mxu0 0.0
    %2259 = vmatpush1.msra.mxu0 0.0
    %2260 = vmatprep.subr.mxu0 0.0
    %2261 = vmatpush1.msra.mxu0 0.0
    %2262 = vmatprep.subr.mxu0 0.0
    %2263 = vmatpush1.msra.mxu0 0.0
    %2264 = vmatprep.subr.mxu0 0.0
    %2265 = vmatpush1.msra.mxu0 0.0
    %2266 = vmatprep.subr.mxu0 0.0
    %2267 = vmatpush1.msra.mxu0 0.0
    %2268 = vmatprep.subr.mxu0 0.0
    %2269 = vmatpush1.msra.mxu0 0.0
    %2270 = vmatprep.subr.mxu0 0.0
    %2271 = vmatpush1.msra.mxu0 0.0
    %2272 = vmatprep.subr.mxu0 0.0
    %2273 = vmatpush1.msra.mxu0 0.0
    %2274 = vmatprep.subr.mxu0 0.0
    %2275 = vmatpush1.msra.mxu0 0.0
    %2276 = vmatprep.subr.mxu0 0.0
    %2277 = vmatpush1.msra.mxu0 0.0
    %2278 = vmatprep.subr.mxu0 0.0
    %2279 = vmatpush1.msra.mxu0 0.0
    %2280 = vmatprep.mubr.f32.mxu0 0.0
    %2281 = vmatmul.mubr.f32.gmra.mrb[0].mxu0 %v2169
    %v2282 = vpop.f32.mrb[0].mxu0
    %v2283 = vadd.f32 0.0, %v2282
    %v2284 = vpop.f32.mrb[0].mxu0
    %2285 = vmatprep.mubr.f32.mxu0 0.0
    %2286 = vmatmul.mubr.f32.gmra.mrb[0].mxu0 %v2172
    %v2287 = vpop.f32.mrb[0].mxu0
    %v2288 = vadd.f32 0.0, %v2287
    %v2289 = vpop.f32.mrb[0].mxu0
    %2290 = vmatprep.mubr.f32.mxu0 0.0
    %2291 = vmatmul.mubr.f32.gmra.mrb[0].mxu0 %v2175
    %v2292 = vpop.f32.mrb[0].mxu0
    %v2293 = vadd.f32 0.0, %v2292
    %v2294 = vpop.f32.mrb[0].mxu0
    %2295 = vmatprep.mubr.f32.mxu0 0.0
    %2296 = vmatmul.mubr.f32.gmra.mrb[0].mxu0 %v2178
    %v2297 = vpop.f32.mrb[0].mxu0
    %v2298 = vadd.f32 0.0, %v2297
    %v2299 = vpop.f32.mrb[0].mxu0
    %2300 = vmatprep.mubr.f32.mxu0 0.0
    %2301 = vmatmul.mubr.f32.gmra.mrb[0].mxu0 %v2181
    %v2302 = vpop.f32.mrb[0].mxu0
    %v2303 = vadd.f32 0.0, %v2302
    %v2304 = vpop.f32.mrb[0].mxu0
    %2305 = vmatprep.mubr.f32.mxu0 0.0
    %2306 = vmatmul.mubr.f32.gmra.mrb[0].mxu0 %v2184
    %v2307 = vpop.f32.mrb[0].mxu0
    %v2308 = vadd.f32 0.0, %v2307
    %v2309 = vpop.f32.mrb[0].mxu0
    %2310 = vmatprep.mubr.f32.mxu0 0.0
    %2311 = vmatmul.mubr.f32.gmra.mrb[0].mxu0 %v2187
    %v2312 = vpop.f32.mrb[0].mxu0
    %v2313 = vadd.f32 0.0, %v2312
    %v2314 = vpop.f32.mrb[0].mxu0
    %2315 = vmatprep.mubr.f32.mxu0 0.0
    %2316 = vmatmul.mubr.f32.gmra.mrb[0].mxu0 %v2190
    %v2317 = vpop.f32.mrb[0].mxu0
    %v2318 = vadd.f32 0.0, %v2317
    %v2319 = vpop.f32.mrb[0].mxu0
    %2320 = vmatprep.mubr.f32.mxu0 0.0
    %2321 = vmatmul.mubr.f32.gmra.mrb[0].mxu0 %v2193
    %v2322 = vpop.f32.mrb[0].mxu0
    %v2323 = vadd.f32 0.0, %v2322
    %v2324 = vpop.f32.mrb[0].mxu0
    %2325 = vmatprep.mubr.f32.mxu0 0.0
    %2326 = vmatmul.mubr.f32.gmra.mrb[0].mxu0 %v2196
    %v2327 = vpop.f32.mrb[0].mxu0
    %v2328 = vadd.f32 0.0, %v2327
    %v2329 = vpop.f32.mrb[0].mxu0
    %2330 = vmatprep.mubr.f32.mxu0 0.0
    %2331 = vmatmul.mubr.f32.gmra.mrb[0].mxu0 %v2199
    %v2332 = vpop.f32.mrb[0].mxu0
    %v2333 = vadd.f32 0.0, %v2332
    %v2334 = vpop.f32.mrb[0].mxu0
    %2335 = vmatprep.mubr.f32.mxu0 0.0
    %2336 = vmatmul.mubr.f32.gmra.mrb[0].mxu0 %v2202
    %v2337 = vpop.f32.mrb[0].mxu0
    %v2338 = vadd.f32 0.0, %v2337
    %v2339 = vpop.f32.mrb[0].mxu0
    %2340 = vmatprep.mubr.f32.mxu0 0.0
    %2341 = vmatmul.mubr.f32.gmra.mrb[0].mxu0 %v2205
    %v2342 = vpop.f32.mrb[0].mxu0
    %v2343 = vadd.f32 0.0, %v2342
    %v2344 = vpop.f32.mrb[0].mxu0
    %2345 = vmatprep.mubr.f32.mxu0 0.0
    %2346 = vmatmul.mubr.f32.gmra.mrb[0].mxu0 %v2208
    %v2347 = vpop.f32.mrb[0].mxu0
    %v2348 = vadd.f32 0.0, %v2347
    %v2349 = vpop.f32.mrb[0].mxu0
    %2350 = vmatprep.mubr.f32.mxu0 0.0
    %2351 = vmatmul.mubr.f32.gmra.mrb[0].mxu0 %v2211
    %v2352 = vpop.f32.mrb[0].mxu0
    %v2353 = vadd.f32 0.0, %v2352
    %v2354 = vpop.f32.mrb[0].mxu0
    %2355 = vmatprep.mubr.f32.mxu0 0.0
    %2356 = vmatmul.mubr.f32.gmra.mrb[0].mxu0 %v2214
    %v2357 = vpop.f32.mrb[0].mxu0
    %v2358 = vadd.f32 0.0, %v2357
    %v2359 = vpop.f32.mrb[0].mxu0
    %2360 = vdwg.mxu0
    %v2361 = vadd.f32 %v1560, %v2283
    %v2362 = vadd.f32 %v1561, %v2288
    %v2363 = vadd.f32 %v1562, %v2293
    %v2364 = vadd.f32 %v1563, %v2298
    %v2365 = vadd.f32 %v1564, %v2303
    %v2366 = vadd.f32 %v1565, %v2308
    %v2367 = vadd.f32 %v1566, %v2313
    %v2368 = vadd.f32 %v1567, %v2318
    %v2369 = vadd.f32 %v1568, %v2323
    %v2370 = vadd.f32 %v1569, %v2328
    %v2371 = vadd.f32 %v1570, %v2333
    %v2372 = vadd.f32 %v1571, %v2338
    %v2373 = vadd.f32 %v1572, %v2343
    %v2374 = vadd.f32 %v1573, %v2348
    %v2375 = vadd.f32 %v1574, %v2353
    %v2376 = vadd.f32 %v1575, %v2358
    %v2377 = vlaneseq
    %v2378 = vshrl.u32 %v2377, 7
    %v2379 = vsub.s32 1, %v2378
    %v2380 = vrot.slane %v40, %v2379
    %v2381 = vadd.f32 %v2361, %v2380
    %v2382 = vadd.f32 %v2362, %v2380
    %v2383 = vadd.f32 %v2363, %v2380
    %v2384 = vadd.f32 %v2364, %v2380
    %v2385 = vadd.f32 %v2365, %v2380
    %v2386 = vadd.f32 %v2366, %v2380
    %v2387 = vadd.f32 %v2367, %v2380
    %v2388 = vadd.f32 %v2368, %v2380
    %v2389 = vadd.f32 %v2369, %v2380
    %v2390 = vadd.f32 %v2370, %v2380
    %v2391 = vadd.f32 %v2371, %v2380
    %v2392 = vadd.f32 %v2372, %v2380
    %v2393 = vadd.f32 %v2373, %v2380
    %v2394 = vadd.f32 %v2374, %v2380
    %v2395 = vadd.f32 %v2375, %v2380
    %v2396 = vadd.f32 %v2376, %v2380
    %v2397 = vsel %vm561, %v2381, 0.0
    %2398 = vadd.xlane.f32.xlu0 %v2397
    %v2399 = vpop.xlane.xlu0 %2398
    %v2400 = vsel %vm561, %v2382, 0.0
    %2401 = vadd.xlane.f32.xlu0 %v2400
    %v2402 = vpop.xlane.xlu0 %2401
    %v2403 = vsel %vm561, %v2383, 0.0
    %2404 = vadd.xlane.f32.xlu0 %v2403
    %v2405 = vpop.xlane.xlu0 %2404
    %v2406 = vsel %vm561, %v2384, 0.0
    %2407 = vadd.xlane.f32.xlu0 %v2406
    %v2408 = vpop.xlane.xlu0 %2407
    %v2409 = vsel %vm561, %v2385, 0.0
    %2410 = vadd.xlane.f32.xlu0 %v2409
    %v2411 = vpop.xlane.xlu0 %2410
    %v2412 = vsel %vm561, %v2386, 0.0
    %2413 = vadd.xlane.f32.xlu0 %v2412
    %v2414 = vpop.xlane.xlu0 %2413
    %v2415 = vsel %vm561, %v2387, 0.0
    %2416 = vadd.xlane.f32.xlu0 %v2415
    %v2417 = vpop.xlane.xlu0 %2416
    %v2418 = vsel %vm561, %v2388, 0.0
    %2419 = vadd.xlane.f32.xlu0 %v2418
    %v2420 = vpop.xlane.xlu0 %2419
    %v2421 = vsel %vm561, %v2389, 0.0
    %2422 = vadd.xlane.f32.xlu0 %v2421
    %v2423 = vpop.xlane.xlu0 %2422
    %v2424 = vsel %vm561, %v2390, 0.0
    %2425 = vadd.xlane.f32.xlu0 %v2424
    %v2426 = vpop.xlane.xlu0 %2425
    %v2427 = vsel %vm561, %v2391, 0.0
    %2428 = vadd.xlane.f32.xlu0 %v2427
    %v2429 = vpop.xlane.xlu0 %2428
    %v2430 = vsel %vm561, %v2392, 0.0
    %2431 = vadd.xlane.f32.xlu0 %v2430
    %v2432 = vpop.xlane.xlu0 %2431
    %v2433 = vsel %vm561, %v2393, 0.0
    %2434 = vadd.xlane.f32.xlu0 %v2433
    %v2435 = vpop.xlane.xlu0 %2434
    %v2436 = vsel %vm561, %v2394, 0.0
    %2437 = vadd.xlane.f32.xlu0 %v2436
    %v2438 = vpop.xlane.xlu0 %2437
    %v2439 = vsel %vm561, %v2395, 0.0
    %2440 = vadd.xlane.f32.xlu0 %v2439
    %v2441 = vpop.xlane.xlu0 %2440
    %v2442 = vsel %vm561, %v2396, 0.0
    %2443 = vadd.xlane.f32.xlu0 %v2442
    %v2444 = vpop.xlane.xlu0 %2443
    %v2445 = vmul.f32 %v2399, %v1624
    %v2446 = vmul.f32 %v2402, %v1624
    %v2447 = vmul.f32 %v2405, %v1624
    %v2448 = vmul.f32 %v2408, %v1624
    %v2449 = vmul.f32 %v2411, %v1624
    %v2450 = vmul.f32 %v2414, %v1624
    %v2451 = vmul.f32 %v2417, %v1624
    %v2452 = vmul.f32 %v2420, %v1624
    %v2453 = vmul.f32 %v2423, %v1624
    %v2454 = vmul.f32 %v2426, %v1624
    %v2455 = vmul.f32 %v2429, %v1624
    %v2456 = vmul.f32 %v2432, %v1624
    %v2457 = vmul.f32 %v2435, %v1624
    %v2458 = vmul.f32 %v2438, %v1624
    %v2459 = vmul.f32 %v2441, %v1624
    %v2460 = vmul.f32 %v2444, %v1624
    %v2461 = vsub.f32 %v2381, %v2445
    %v2462 = vsub.f32 %v2382, %v2446
    %v2463 = vsub.f32 %v2383, %v2447
    %v2464 = vsub.f32 %v2384, %v2448
    %v2465 = vsub.f32 %v2385, %v2449
    %v2466 = vsub.f32 %v2386, %v2450
    %v2467 = vsub.f32 %v2387, %v2451
    %v2468 = vsub.f32 %v2388, %v2452
    %v2469 = vsub.f32 %v2389, %v2453
    %v2470 = vsub.f32 %v2390, %v2454
    %v2471 = vsub.f32 %v2391, %v2455
    %v2472 = vsub.f32 %v2392, %v2456
    %v2473 = vsub.f32 %v2393, %v2457
    %v2474 = vsub.f32 %v2394, %v2458
    %v2475 = vsub.f32 %v2395, %v2459
    %v2476 = vsub.f32 %v2396, %v2460
    %v2477 = vmul.f32 %v2461, %v2461
    %v2478 = vmul.f32 %v2462, %v2462
    %v2479 = vmul.f32 %v2463, %v2463
    %v2480 = vmul.f32 %v2464, %v2464
    %v2481 = vmul.f32 %v2465, %v2465
    %v2482 = vmul.f32 %v2466, %v2466
    %v2483 = vmul.f32 %v2467, %v2467
    %v2484 = vmul.f32 %v2468, %v2468
    %v2485 = vmul.f32 %v2469, %v2469
    %v2486 = vmul.f32 %v2470, %v2470
    %v2487 = vmul.f32 %v2471, %v2471
    %v2488 = vmul.f32 %v2472, %v2472
    %v2489 = vmul.f32 %v2473, %v2473
    %v2490 = vmul.f32 %v2474, %v2474
    %v2491 = vmul.f32 %v2475, %v2475
    %v2492 = vmul.f32 %v2476, %v2476
    %v2493 = vsel %vm561, %v2477, 0.0
    %2494 = vadd.xlane.f32.xlu0 %v2493
    %v2495 = vpop.xlane.xlu0 %2494
    %v2496 = vsel %vm561, %v2478, 0.0
    %2497 = vadd.xlane.f32.xlu0 %v2496
    %v2498 = vpop.xlane.xlu0 %2497
    %v2499 = vsel %vm561, %v2479, 0.0
    %2500 = vadd.xlane.f32.xlu0 %v2499
    %v2501 = vpop.xlane.xlu0 %2500
    %v2502 = vsel %vm561, %v2480, 0.0
    %2503 = vadd.xlane.f32.xlu0 %v2502
    %v2504 = vpop.xlane.xlu0 %2503
    %v2505 = vsel %vm561, %v2481, 0.0
    %2506 = vadd.xlane.f32.xlu0 %v2505
    %v2507 = vpop.xlane.xlu0 %2506
    %v2508 = vsel %vm561, %v2482, 0.0
    %2509 = vadd.xlane.f32.xlu0 %v2508
    %v2510 = vpop.xlane.xlu0 %2509
    %v2511 = vsel %vm561, %v2483, 0.0
    %2512 = vadd.xlane.f32.xlu0 %v2511
    %v2513 = vpop.xlane.xlu0 %2512
    %v2514 = vsel %vm561, %v2484, 0.0
    %2515 = vadd.xlane.f32.xlu0 %v2514
    %v2516 = vpop.xlane.xlu0 %2515
    %v2517 = vsel %vm561, %v2485, 0.0
    %2518 = vadd.xlane.f32.xlu0 %v2517
    %v2519 = vpop.xlane.xlu0 %2518
    %v2520 = vsel %vm561, %v2486, 0.0
    %2521 = vadd.xlane.f32.xlu0 %v2520
    %v2522 = vpop.xlane.xlu0 %2521
    %v2523 = vsel %vm561, %v2487, 0.0
    %2524 = vadd.xlane.f32.xlu0 %v2523
    %v2525 = vpop.xlane.xlu0 %2524
    %v2526 = vsel %vm561, %v2488, 0.0
    %2527 = vadd.xlane.f32.xlu0 %v2526
    %v2528 = vpop.xlane.xlu0 %2527
    %v2529 = vsel %vm561, %v2489, 0.0
    %2530 = vadd.xlane.f32.xlu0 %v2529
    %v2531 = vpop.xlane.xlu0 %2530
    %v2532 = vsel %vm561, %v2490, 0.0
    %2533 = vadd.xlane.f32.xlu0 %v2532
    %v2534 = vpop.xlane.xlu0 %2533
    %v2535 = vsel %vm561, %v2491, 0.0
    %2536 = vadd.xlane.f32.xlu0 %v2535
    %v2537 = vpop.xlane.xlu0 %2536
    %v2538 = vsel %vm561, %v2492, 0.0
    %2539 = vadd.xlane.f32.xlu0 %v2538
    %v2540 = vpop.xlane.xlu0 %2539
    %v2541 = vmul.f32 %v2495, %v1624
    %v2542 = vmul.f32 %v2498, %v1624
    %v2543 = vmul.f32 %v2501, %v1624
    %v2544 = vmul.f32 %v2504, %v1624
    %v2545 = vmul.f32 %v2507, %v1624
    %v2546 = vmul.f32 %v2510, %v1624
    %v2547 = vmul.f32 %v2513, %v1624
    %v2548 = vmul.f32 %v2516, %v1624
    %v2549 = vmul.f32 %v2519, %v1624
    %v2550 = vmul.f32 %v2522, %v1624
    %v2551 = vmul.f32 %v2525, %v1624
    %v2552 = vmul.f32 %v2528, %v1624
    %v2553 = vmul.f32 %v2531, %v1624
    %v2554 = vmul.f32 %v2534, %v1624
    %v2555 = vmul.f32 %v2537, %v1624
    %v2556 = vmul.f32 %v2540, %v1624
    %v2557 = vadd.f32 %v2541, 1e-06
    %v2558 = vadd.f32 %v2542, 1e-06
    %v2559 = vadd.f32 %v2543, 1e-06
    %v2560 = vadd.f32 %v2544, 1e-06
    %v2561 = vadd.f32 %v2545, 1e-06
    %v2562 = vadd.f32 %v2546, 1e-06
    %v2563 = vadd.f32 %v2547, 1e-06
    %v2564 = vadd.f32 %v2548, 1e-06
    %v2565 = vadd.f32 %v2549, 1e-06
    %v2566 = vadd.f32 %v2550, 1e-06
    %v2567 = vadd.f32 %v2551, 1e-06
    %v2568 = vadd.f32 %v2552, 1e-06
    %v2569 = vadd.f32 %v2553, 1e-06
    %v2570 = vadd.f32 %v2554, 1e-06
    %v2571 = vadd.f32 %v2555, 1e-06
    %v2572 = vadd.f32 %v2556, 1e-06
    %v2573 = vrsqrt.pop %v2557
    %v2574 = vrsqrt.pop %v2558
    %v2575 = vrsqrt.pop %v2559
    %v2576 = vrsqrt.pop %v2560
    %v2577 = vrsqrt.pop %v2561
    %v2578 = vrsqrt.pop %v2562
    %v2579 = vrsqrt.pop %v2563
    %v2580 = vrsqrt.pop %v2564
    %v2581 = vrsqrt.pop %v2565
    %v2582 = vrsqrt.pop %v2566
    %v2583 = vrsqrt.pop %v2567
    %v2584 = vrsqrt.pop %v2568
    %v2585 = vrsqrt.pop %v2569
    %v2586 = vrsqrt.pop %v2570
    %v2587 = vrsqrt.pop %v2571
    %v2588 = vrsqrt.pop %v2572
    %v2589 = vmul.f32 %v2461, %v2573
    %v2590 = vmul.f32 %v2462, %v2574
    %v2591 = vmul.f32 %v2463, %v2575
    %v2592 = vmul.f32 %v2464, %v2576
    %v2593 = vmul.f32 %v2465, %v2577
    %v2594 = vmul.f32 %v2466, %v2578
    %v2595 = vmul.f32 %v2467, %v2579
    %v2596 = vmul.f32 %v2468, %v2580
    %v2597 = vmul.f32 %v2469, %v2581
    %v2598 = vmul.f32 %v2470, %v2582
    %v2599 = vmul.f32 %v2471, %v2583
    %v2600 = vmul.f32 %v2472, %v2584
    %v2601 = vmul.f32 %v2473, %v2585
    %v2602 = vmul.f32 %v2474, %v2586
    %v2603 = vmul.f32 %v2475, %v2587
    %v2604 = vmul.f32 %v2476, %v2588
    %v2605 = vlaneseq
    %v2606 = vshrl.u32 %v2605, 7
    %v2607 = vsub.s32 2, %v2606
    %v2608 = vrot.slane %v40, %v2607
    %v2609 = vmul.f32 %v2589, %v2608
    %v2610 = vmul.f32 %v2590, %v2608
    %v2611 = vmul.f32 %v2591, %v2608
    %v2612 = vmul.f32 %v2592, %v2608
    %v2613 = vmul.f32 %v2593, %v2608
    %v2614 = vmul.f32 %v2594, %v2608
    %v2615 = vmul.f32 %v2595, %v2608
    %v2616 = vmul.f32 %v2596, %v2608
    %v2617 = vmul.f32 %v2597, %v2608
    %v2618 = vmul.f32 %v2598, %v2608
    %v2619 = vmul.f32 %v2599, %v2608
    %v2620 = vmul.f32 %v2600, %v2608
    %v2621 = vmul.f32 %v2601, %v2608
    %v2622 = vmul.f32 %v2602, %v2608
    %v2623 = vmul.f32 %v2603, %v2608
    %v2624 = vmul.f32 %v2604, %v2608
    %v2625 = vlaneseq
    %v2626 = vshrl.u32 %v2625, 7
    %v2627 = vsub.s32 3, %v2626
    %v2628 = vrot.slane %v40, %v2627
    %v2629 = vadd.f32 %v2609, %v2628
    %v2630 = vadd.f32 %v2610, %v2628
    %v2631 = vadd.f32 %v2611, %v2628
    %v2632 = vadd.f32 %v2612, %v2628
    %v2633 = vadd.f32 %v2613, %v2628
    %v2634 = vadd.f32 %v2614, %v2628
    %v2635 = vadd.f32 %v2615, %v2628
    %v2636 = vadd.f32 %v2616, %v2628
    %v2637 = vadd.f32 %v2617, %v2628
    %v2638 = vadd.f32 %v2618, %v2628
    %v2639 = vadd.f32 %v2619, %v2628
    %v2640 = vadd.f32 %v2620, %v2628
    %v2641 = vadd.f32 %v2621, %v2628
    %v2642 = vadd.f32 %v2622, %v2628
    %v2643 = vadd.f32 %v2623, %v2628
    %v2644 = vadd.f32 %v2624, %v2628
    %s2645 = scalar_lea.vmem %s7, 320
    %v2646 = vld [vmem:[%s2645] sm:$0xff]
    %v2647 = vld [vmem:[%s2645 + $0x8] sm:$0xff]
    %v2648 = vld [vmem:[%s2645 + $0x10] sm:$0xff]
    %v2649 = vld [vmem:[%s2645 + $0x18] sm:$0xff]
    %v2650 = vld [vmem:[%s2645 + $0x20] sm:$0xff]
    %v2651 = vld [vmem:[%s2645 + $0x28] sm:$0xff]
    %v2652 = vld [vmem:[%s2645 + $0x30] sm:$0xff]
    %v2653 = vld [vmem:[%s2645 + $0x38] sm:$0xff]
    %v2654 = vlaneseq
    %v2655 = vshrl.u32 %v2654, 7
    %v2656 = vsub.s32 4, %v2655
    %v2657 = vrot.slane %v40, %v2656
    %v2659 = vsel %vm561, %v2629, 0
    %v2662 = vsel %vm561, %v2630, 0
    %v2665 = vsel %vm561, %v2631, 0
    %v2668 = vsel %vm561, %v2632, 0
    %v2671 = vsel %vm561, %v2633, 0
    %v2674 = vsel %vm561, %v2634, 0
    %v2677 = vsel %vm561, %v2635, 0
    %v2680 = vsel %vm561, %v2636, 0
    %v2683 = vsel %vm561, %v2637, 0
    %v2686 = vsel %vm561, %v2638, 0
    %v2689 = vsel %vm561, %v2639, 0
    %v2692 = vsel %vm561, %v2640, 0
    %v2695 = vsel %vm561, %v2641, 0
    %v2698 = vsel %vm561, %v2642, 0
    %v2701 = vsel %vm561, %v2643, 0
    %v2704 = vsel %vm561, %v2644, 0
    %2706 = vmatprep.subr.mxu0 0.0
    %2707 = vmatpush1.msra.mxu0 %v2646
    %2708 = vmatprep.subr.mxu0 0.0
    %2709 = vmatpush1.msra.mxu0 %v2647
    %2710 = vmatprep.subr.mxu0 0.0
    %2711 = vmatpush1.msra.mxu0 %v2648
    %2712 = vmatprep.subr.mxu0 0.0
    %2713 = vmatpush1.msra.mxu0 %v2649
    %2714 = vmatprep.subr.mxu0 0.0
    %2715 = vmatpush1.msra.mxu0 %v2650
    %2716 = vmatprep.subr.mxu0 0.0
    %2717 = vmatpush1.msra.mxu0 %v2651
    %2718 = vmatprep.subr.mxu0 0.0
    %2719 = vmatpush1.msra.mxu0 %v2652
    %2720 = vmatprep.subr.mxu0 0.0
    %2721 = vmatpush1.msra.mxu0 %v2653
    %2722 = vmatprep.subr.mxu0 0.0
    %2723 = vmatpush1.msra.mxu0 0.0
    %2724 = vmatprep.subr.mxu0 0.0
    %2725 = vmatpush1.msra.mxu0 0.0
    %2726 = vmatprep.subr.mxu0 0.0
    %2727 = vmatpush1.msra.mxu0 0.0
    %2728 = vmatprep.subr.mxu0 0.0
    %2729 = vmatpush1.msra.mxu0 0.0
    %2730 = vmatprep.subr.mxu0 0.0
    %2731 = vmatpush1.msra.mxu0 0.0
    %2732 = vmatprep.subr.mxu0 0.0
    %2733 = vmatpush1.msra.mxu0 0.0
    %2734 = vmatprep.subr.mxu0 0.0
    %2735 = vmatpush1.msra.mxu0 0.0
    %2736 = vmatprep.subr.mxu0 0.0
    %2737 = vmatpush1.msra.mxu0 0.0
    %2738 = vmatprep.subr.mxu0 0.0
    %2739 = vmatpush1.msra.mxu0 0.0
    %2740 = vmatprep.subr.mxu0 0.0
    %2741 = vmatpush1.msra.mxu0 0.0
    %2742 = vmatprep.subr.mxu0 0.0
    %2743 = vmatpush1.msra.mxu0 0.0
    %2744 = vmatprep.subr.mxu0 0.0
    %2745 = vmatpush1.msra.mxu0 0.0
    %2746 = vmatprep.subr.mxu0 0.0
    %2747 = vmatpush1.msra.mxu0 0.0
    %2748 = vmatprep.subr.mxu0 0.0
    %2749 = vmatpush1.msra.mxu0 0.0
    %2750 = vmatprep.subr.mxu0 0.0
    %2751 = vmatpush1.msra.mxu0 0.0
    %2752 = vmatprep.subr.mxu0 0.0
    %2753 = vmatpush1.msra.mxu0 0.0
    %2754 = vmatprep.subr.mxu0 0.0
    %2755 = vmatpush1.msra.mxu0 0.0
    %2756 = vmatprep.subr.mxu0 0.0
    %2757 = vmatpush1.msra.mxu0 0.0
    %2758 = vmatprep.subr.mxu0 0.0
    %2759 = vmatpush1.msra.mxu0 0.0
    %2760 = vmatprep.subr.mxu0 0.0
    %2761 = vmatpush1.msra.mxu0 0.0
    %2762 = vmatprep.subr.mxu0 0.0
    %2763 = vmatpush1.msra.mxu0 0.0
    %2764 = vmatprep.subr.mxu0 0.0
    %2765 = vmatpush1.msra.mxu0 0.0
    %2766 = vmatprep.subr.mxu0 0.0
    %2767 = vmatpush1.msra.mxu0 0.0
    %2768 = vmatprep.subr.mxu0 0.0
    %2769 = vmatpush1.msra.mxu0 0.0
    %2770 = vmatprep.mubr.f32.mxu0 0.0
    %2771 = vmatmul.mubr.f32.gmra.mrb[0].mxu0 %v2659
    %v2772 = vpop.f32.mrb[0].mxu0
    %v2773 = vadd.f32 %v2657, %v2772
    %v2774 = vpop.f32.mrb[0].mxu0
    %2775 = vmatprep.mubr.f32.mxu0 0.0
    %2776 = vmatmul.mubr.f32.gmra.mrb[0].mxu0 %v2662
    %v2777 = vpop.f32.mrb[0].mxu0
    %v2778 = vadd.f32 %v2657, %v2777
    %v2779 = vpop.f32.mrb[0].mxu0
    %2780 = vmatprep.mubr.f32.mxu0 0.0
    %2781 = vmatmul.mubr.f32.gmra.mrb[0].mxu0 %v2665
    %v2782 = vpop.f32.mrb[0].mxu0
    %v2783 = vadd.f32 %v2657, %v2782
    %v2784 = vpop.f32.mrb[0].mxu0
    %2785 = vmatprep.mubr.f32.mxu0 0.0
    %2786 = vmatmul.mubr.f32.gmra.mrb[0].mxu0 %v2668
    %v2787 = vpop.f32.mrb[0].mxu0
    %v2788 = vadd.f32 %v2657, %v2787
    %v2789 = vpop.f32.mrb[0].mxu0
    %2790 = vmatprep.mubr.f32.mxu0 0.0
    %2791 = vmatmul.mubr.f32.gmra.mrb[0].mxu0 %v2671
    %v2792 = vpop.f32.mrb[0].mxu0
    %v2793 = vadd.f32 %v2657, %v2792
    %v2794 = vpop.f32.mrb[0].mxu0
    %2795 = vmatprep.mubr.f32.mxu0 0.0
    %2796 = vmatmul.mubr.f32.gmra.mrb[0].mxu0 %v2674
    %v2797 = vpop.f32.mrb[0].mxu0
    %v2798 = vadd.f32 %v2657, %v2797
    %v2799 = vpop.f32.mrb[0].mxu0
    %2800 = vmatprep.mubr.f32.mxu0 0.0
    %2801 = vmatmul.mubr.f32.gmra.mrb[0].mxu0 %v2677
    %v2802 = vpop.f32.mrb[0].mxu0
    %v2803 = vadd.f32 %v2657, %v2802
    %v2804 = vpop.f32.mrb[0].mxu0
    %2805 = vmatprep.mubr.f32.mxu0 0.0
    %2806 = vmatmul.mubr.f32.gmra.mrb[0].mxu0 %v2680
    %v2807 = vpop.f32.mrb[0].mxu0
    %v2808 = vadd.f32 %v2657, %v2807
    %v2809 = vpop.f32.mrb[0].mxu0
    %2810 = vmatprep.mubr.f32.mxu0 0.0
    %2811 = vmatmul.mubr.f32.gmra.mrb[0].mxu0 %v2683
    %v2812 = vpop.f32.mrb[0].mxu0
    %v2813 = vadd.f32 %v2657, %v2812
    %v2814 = vpop.f32.mrb[0].mxu0
    %2815 = vmatprep.mubr.f32.mxu0 0.0
    %2816 = vmatmul.mubr.f32.gmra.mrb[0].mxu0 %v2686
    %v2817 = vpop.f32.mrb[0].mxu0
    %v2818 = vadd.f32 %v2657, %v2817
    %v2819 = vpop.f32.mrb[0].mxu0
    %2820 = vmatprep.mubr.f32.mxu0 0.0
    %2821 = vmatmul.mubr.f32.gmra.mrb[0].mxu0 %v2689
    %v2822 = vpop.f32.mrb[0].mxu0
    %v2823 = vadd.f32 %v2657, %v2822
    %v2824 = vpop.f32.mrb[0].mxu0
    %2825 = vmatprep.mubr.f32.mxu0 0.0
    %2826 = vmatmul.mubr.f32.gmra.mrb[0].mxu0 %v2692
    %v2827 = vpop.f32.mrb[0].mxu0
    %v2828 = vadd.f32 %v2657, %v2827
    %v2829 = vpop.f32.mrb[0].mxu0
    %2830 = vmatprep.mubr.f32.mxu0 0.0
    %2831 = vmatmul.mubr.f32.gmra.mrb[0].mxu0 %v2695
    %v2832 = vpop.f32.mrb[0].mxu0
    %v2833 = vadd.f32 %v2657, %v2832
    %v2834 = vpop.f32.mrb[0].mxu0
    %2835 = vmatprep.mubr.f32.mxu0 0.0
    %2836 = vmatmul.mubr.f32.gmra.mrb[0].mxu0 %v2698
    %v2837 = vpop.f32.mrb[0].mxu0
    %v2838 = vadd.f32 %v2657, %v2837
    %v2839 = vpop.f32.mrb[0].mxu0
    %2840 = vmatprep.mubr.f32.mxu0 0.0
    %2841 = vmatmul.mubr.f32.gmra.mrb[0].mxu0 %v2701
    %v2842 = vpop.f32.mrb[0].mxu0
    %v2843 = vadd.f32 %v2657, %v2842
    %v2844 = vpop.f32.mrb[0].mxu0
    %2845 = vmatprep.mubr.f32.mxu0 0.0
    %2846 = vmatmul.mubr.f32.gmra.mrb[0].mxu0 %v2704
    %v2847 = vpop.f32.mrb[0].mxu0
    %v2848 = vadd.f32 %v2657, %v2847
    %v2849 = vpop.f32.mrb[0].mxu0
    %2850 = vdwg.mxu0
    %v2851 = vadd.f32 %v2773, %v1243
    %v2852 = vadd.f32 %v2778, %v1244
    %v2853 = vadd.f32 %v2783, %v1245
    %v2854 = vadd.f32 %v2788, %v1246
    %v2855 = vadd.f32 %v2793, %v1247
    %v2856 = vadd.f32 %v2798, %v1248
    %v2857 = vadd.f32 %v2803, %v1249
    %v2858 = vadd.f32 %v2808, %v1250
    %v2859 = vadd.f32 %v2813, %v1251
    %v2860 = vadd.f32 %v2818, %v1252
    %v2861 = vadd.f32 %v2823, %v1253
    %v2862 = vadd.f32 %v2828, %v1254
    %v2863 = vadd.f32 %v2833, %v1255
    %v2864 = vadd.f32 %v2838, %v1256
    %v2865 = vadd.f32 %v2843, %v1257
    %v2866 = vadd.f32 %v2848, %v1258
    %v2867 = vxor.u32 %v2851, 2147483648
    %v2868 = vxor.u32 %v2852, 2147483648
    %v2869 = vxor.u32 %v2853, 2147483648
    %v2870 = vxor.u32 %v2854, 2147483648
    %v2871 = vxor.u32 %v2855, 2147483648
    %v2872 = vxor.u32 %v2856, 2147483648
    %v2873 = vxor.u32 %v2857, 2147483648
    %v2874 = vxor.u32 %v2858, 2147483648
    %v2875 = vxor.u32 %v2859, 2147483648
    %v2876 = vxor.u32 %v2860, 2147483648
    %v2877 = vxor.u32 %v2861, 2147483648
    %v2878 = vxor.u32 %v2862, 2147483648
    %v2879 = vxor.u32 %v2863, 2147483648
    %v2880 = vxor.u32 %v2864, 2147483648
    %v2881 = vxor.u32 %v2865, 2147483648
    %v2882 = vxor.u32 %v2866, 2147483648
    %v2883 = vmul.f32 %v2867, 1.442695
    %v2884 = vpow.pop %v2883
    %v2885 = vmul.f32 %v2868, 1.442695
    %v2886 = vpow.pop %v2885
    %v2887 = vmul.f32 %v2869, 1.442695
    %v2888 = vpow.pop %v2887
    %v2889 = vmul.f32 %v2870, 1.442695
    %v2890 = vpow.pop %v2889
    %v2891 = vmul.f32 %v2871, 1.442695
    %v2892 = vpow.pop %v2891
    %v2893 = vmul.f32 %v2872, 1.442695
    %v2894 = vpow.pop %v2893
    %v2895 = vmul.f32 %v2873, 1.442695
    %v2896 = vpow.pop %v2895
    %v2897 = vmul.f32 %v2874, 1.442695
    %v2898 = vpow.pop %v2897
    %v2899 = vmul.f32 %v2875, 1.442695
    %v2900 = vpow.pop %v2899
    %v2901 = vmul.f32 %v2876, 1.442695
    %v2902 = vpow.pop %v2901
    %v2903 = vmul.f32 %v2877, 1.442695
    %v2904 = vpow.pop %v2903
    %v2905 = vmul.f32 %v2878, 1.442695
    %v2906 = vpow.pop %v2905
    %v2907 = vmul.f32 %v2879, 1.442695
    %v2908 = vpow.pop %v2907
    %v2909 = vmul.f32 %v2880, 1.442695
    %v2910 = vpow.pop %v2909
    %v2911 = vmul.f32 %v2881, 1.442695
    %v2912 = vpow.pop %v2911
    %v2913 = vmul.f32 %v2882, 1.442695
    %v2914 = vpow.pop %v2913
    %v2915 = vadd.f32 %v2884, 1.0
    %v2916 = vadd.f32 %v2886, 1.0
    %v2917 = vadd.f32 %v2888, 1.0
    %v2918 = vadd.f32 %v2890, 1.0
    %v2919 = vadd.f32 %v2892, 1.0
    %v2920 = vadd.f32 %v2894, 1.0
    %v2921 = vadd.f32 %v2896, 1.0
    %v2922 = vadd.f32 %v2898, 1.0
    %v2923 = vadd.f32 %v2900, 1.0
    %v2924 = vadd.f32 %v2902, 1.0
    %v2925 = vadd.f32 %v2904, 1.0
    %v2926 = vadd.f32 %v2906, 1.0
    %v2927 = vadd.f32 %v2908, 1.0
    %v2928 = vadd.f32 %v2910, 1.0
    %v2929 = vadd.f32 %v2912, 1.0
    %v2930 = vadd.f32 %v2914, 1.0
    %v2931 = vrcp.pop %v2915
    %v2932 = vmul.f32 1.0, %v2931
    %v2933 = vrcp.pop %v2916
    %v2934 = vmul.f32 1.0, %v2933
    %v2935 = vrcp.pop %v2917
    %v2936 = vmul.f32 1.0, %v2935
    %v2937 = vrcp.pop %v2918
    %v2938 = vmul.f32 1.0, %v2937
    %v2939 = vrcp.pop %v2919
    %v2940 = vmul.f32 1.0, %v2939
    %v2941 = vrcp.pop %v2920
    %v2942 = vmul.f32 1.0, %v2941
    %v2943 = vrcp.pop %v2921
    %v2944 = vmul.f32 1.0, %v2943
    %v2945 = vrcp.pop %v2922
    %v2946 = vmul.f32 1.0, %v2945
    %v2947 = vrcp.pop %v2923
    %v2948 = vmul.f32 1.0, %v2947
    %v2949 = vrcp.pop %v2924
    %v2950 = vmul.f32 1.0, %v2949
    %v2951 = vrcp.pop %v2925
    %v2952 = vmul.f32 1.0, %v2951
    %v2953 = vrcp.pop %v2926
    %v2954 = vmul.f32 1.0, %v2953
    %v2955 = vrcp.pop %v2927
    %v2956 = vmul.f32 1.0, %v2955
    %v2957 = vrcp.pop %v2928
    %v2958 = vmul.f32 1.0, %v2957
    %v2959 = vrcp.pop %v2929
    %v2960 = vmul.f32 1.0, %v2959
    %v2961 = vrcp.pop %v2930
    %v2962 = vmul.f32 1.0, %v2961
    %v2963 = vmul.f32 %v2851, %v2932
    %v2964 = vmul.f32 %v2852, %v2934
    %v2965 = vmul.f32 %v2853, %v2936
    %v2966 = vmul.f32 %v2854, %v2938
    %v2967 = vmul.f32 %v2855, %v2940
    %v2968 = vmul.f32 %v2856, %v2942
    %v2969 = vmul.f32 %v2857, %v2944
    %v2970 = vmul.f32 %v2858, %v2946
    %v2971 = vmul.f32 %v2859, %v2948
    %v2972 = vmul.f32 %v2860, %v2950
    %v2973 = vmul.f32 %v2861, %v2952
    %v2974 = vmul.f32 %v2862, %v2954
    %v2975 = vmul.f32 %v2863, %v2956
    %v2976 = vmul.f32 %v2864, %v2958
    %v2977 = vmul.f32 %v2865, %v2960
    %v2978 = vmul.f32 %v2866, %v2962
    %s2979 = scalar_lea.vmem %s7, 384
    %v2980 = vld [vmem:[%s2979] sm:$0xff]
    %v2981 = vld [vmem:[%s2979 + $0x8] sm:$0xff]
    %v2982 = vld [vmem:[%s2979 + $0x10] sm:$0xff]
    %v2983 = vld [vmem:[%s2979 + $0x18] sm:$0xff]
    %v2984 = vld [vmem:[%s2979 + $0x20] sm:$0xff]
    %v2985 = vld [vmem:[%s2979 + $0x28] sm:$0xff]
    %v2986 = vld [vmem:[%s2979 + $0x30] sm:$0xff]
    %v2987 = vld [vmem:[%s2979 + $0x38] sm:$0xff]
    %v2989 = vsel %vm561, %v2963, 0
    %v2992 = vsel %vm561, %v2964, 0
    %v2995 = vsel %vm561, %v2965, 0
    %v2998 = vsel %vm561, %v2966, 0
    %v3001 = vsel %vm561, %v2967, 0
    %v3004 = vsel %vm561, %v2968, 0
    %v3007 = vsel %vm561, %v2969, 0
    %v3010 = vsel %vm561, %v2970, 0
    %v3013 = vsel %vm561, %v2971, 0
    %v3016 = vsel %vm561, %v2972, 0
    %v3019 = vsel %vm561, %v2973, 0
    %v3022 = vsel %vm561, %v2974, 0
    %v3025 = vsel %vm561, %v2975, 0
    %v3028 = vsel %vm561, %v2976, 0
    %v3031 = vsel %vm561, %v2977, 0
    %v3034 = vsel %vm561, %v2978, 0
    %3036 = vmatprep.subr.mxu0 0.0
    %3037 = vmatpush1.msra.mxu0 %v2980
    %3038 = vmatprep.subr.mxu0 0.0
    %3039 = vmatpush1.msra.mxu0 %v2981
    %3040 = vmatprep.subr.mxu0 0.0
    %3041 = vmatpush1.msra.mxu0 %v2982
    %3042 = vmatprep.subr.mxu0 0.0
    %3043 = vmatpush1.msra.mxu0 %v2983
    %3044 = vmatprep.subr.mxu0 0.0
    %3045 = vmatpush1.msra.mxu0 %v2984
    %3046 = vmatprep.subr.mxu0 0.0
    %3047 = vmatpush1.msra.mxu0 %v2985
    %3048 = vmatprep.subr.mxu0 0.0
    %3049 = vmatpush1.msra.mxu0 %v2986
    %3050 = vmatprep.subr.mxu0 0.0
    %3051 = vmatpush1.msra.mxu0 %v2987
    %3052 = vmatprep.subr.mxu0 0.0
    %3053 = vmatpush1.msra.mxu0 0.0
    %3054 = vmatprep.subr.mxu0 0.0
    %3055 = vmatpush1.msra.mxu0 0.0
    %3056 = vmatprep.subr.mxu0 0.0
    %3057 = vmatpush1.msra.mxu0 0.0
    %3058 = vmatprep.subr.mxu0 0.0
    %3059 = vmatpush1.msra.mxu0 0.0
    %3060 = vmatprep.subr.mxu0 0.0
    %3061 = vmatpush1.msra.mxu0 0.0
    %3062 = vmatprep.subr.mxu0 0.0
    %3063 = vmatpush1.msra.mxu0 0.0
    %3064 = vmatprep.subr.mxu0 0.0
    %3065 = vmatpush1.msra.mxu0 0.0
    %3066 = vmatprep.subr.mxu0 0.0
    %3067 = vmatpush1.msra.mxu0 0.0
    %3068 = vmatprep.subr.mxu0 0.0
    %3069 = vmatpush1.msra.mxu0 0.0
    %3070 = vmatprep.subr.mxu0 0.0
    %3071 = vmatpush1.msra.mxu0 0.0
    %3072 = vmatprep.subr.mxu0 0.0
    %3073 = vmatpush1.msra.mxu0 0.0
    %3074 = vmatprep.subr.mxu0 0.0
    %3075 = vmatpush1.msra.mxu0 0.0
    %3076 = vmatprep.subr.mxu0 0.0
    %3077 = vmatpush1.msra.mxu0 0.0
    %3078 = vmatprep.subr.mxu0 0.0
    %3079 = vmatpush1.msra.mxu0 0.0
    %3080 = vmatprep.subr.mxu0 0.0
    %3081 = vmatpush1.msra.mxu0 0.0
    %3082 = vmatprep.subr.mxu0 0.0
    %3083 = vmatpush1.msra.mxu0 0.0
    %3084 = vmatprep.subr.mxu0 0.0
    %3085 = vmatpush1.msra.mxu0 0.0
    %3086 = vmatprep.subr.mxu0 0.0
    %3087 = vmatpush1.msra.mxu0 0.0
    %3088 = vmatprep.subr.mxu0 0.0
    %3089 = vmatpush1.msra.mxu0 0.0
    %3090 = vmatprep.subr.mxu0 0.0
    %3091 = vmatpush1.msra.mxu0 0.0
    %3092 = vmatprep.subr.mxu0 0.0
    %3093 = vmatpush1.msra.mxu0 0.0
    %3094 = vmatprep.subr.mxu0 0.0
    %3095 = vmatpush1.msra.mxu0 0.0
    %3096 = vmatprep.subr.mxu0 0.0
    %3097 = vmatpush1.msra.mxu0 0.0
    %3098 = vmatprep.subr.mxu0 0.0
    %3099 = vmatpush1.msra.mxu0 0.0
    %3100 = vmatprep.mubr.f32.mxu0 0.0
    %3101 = vmatmul.mubr.f32.gmra.mrb[0].mxu0 %v2989
    %v3102 = vpop.f32.mrb[0].mxu0
    %v3103 = vadd.f32 0.0, %v3102
    %v3104 = vpop.f32.mrb[0].mxu0
    %3105 = vmatprep.mubr.f32.mxu0 0.0
    %3106 = vmatmul.mubr.f32.gmra.mrb[0].mxu0 %v2992
    %v3107 = vpop.f32.mrb[0].mxu0
    %v3108 = vadd.f32 0.0, %v3107
    %v3109 = vpop.f32.mrb[0].mxu0
    %3110 = vmatprep.mubr.f32.mxu0 0.0
    %3111 = vmatmul.mubr.f32.gmra.mrb[0].mxu0 %v2995
    %v3112 = vpop.f32.mrb[0].mxu0
    %v3113 = vadd.f32 0.0, %v3112
    %v3114 = vpop.f32.mrb[0].mxu0
    %3115 = vmatprep.mubr.f32.mxu0 0.0
    %3116 = vmatmul.mubr.f32.gmra.mrb[0].mxu0 %v2998
    %v3117 = vpop.f32.mrb[0].mxu0
    %v3118 = vadd.f32 0.0, %v3117
    %v3119 = vpop.f32.mrb[0].mxu0
    %3120 = vmatprep.mubr.f32.mxu0 0.0
    %3121 = vmatmul.mubr.f32.gmra.mrb[0].mxu0 %v3001
    %v3122 = vpop.f32.mrb[0].mxu0
    %v3123 = vadd.f32 0.0, %v3122
    %v3124 = vpop.f32.mrb[0].mxu0
    %3125 = vmatprep.mubr.f32.mxu0 0.0
    %3126 = vmatmul.mubr.f32.gmra.mrb[0].mxu0 %v3004
    %v3127 = vpop.f32.mrb[0].mxu0
    %v3128 = vadd.f32 0.0, %v3127
    %v3129 = vpop.f32.mrb[0].mxu0
    %3130 = vmatprep.mubr.f32.mxu0 0.0
    %3131 = vmatmul.mubr.f32.gmra.mrb[0].mxu0 %v3007
    %v3132 = vpop.f32.mrb[0].mxu0
    %v3133 = vadd.f32 0.0, %v3132
    %v3134 = vpop.f32.mrb[0].mxu0
    %3135 = vmatprep.mubr.f32.mxu0 0.0
    %3136 = vmatmul.mubr.f32.gmra.mrb[0].mxu0 %v3010
    %v3137 = vpop.f32.mrb[0].mxu0
    %v3138 = vadd.f32 0.0, %v3137
    %v3139 = vpop.f32.mrb[0].mxu0
    %3140 = vmatprep.mubr.f32.mxu0 0.0
    %3141 = vmatmul.mubr.f32.gmra.mrb[0].mxu0 %v3013
    %v3142 = vpop.f32.mrb[0].mxu0
    %v3143 = vadd.f32 0.0, %v3142
    %v3144 = vpop.f32.mrb[0].mxu0
    %3145 = vmatprep.mubr.f32.mxu0 0.0
    %3146 = vmatmul.mubr.f32.gmra.mrb[0].mxu0 %v3016
    %v3147 = vpop.f32.mrb[0].mxu0
    %v3148 = vadd.f32 0.0, %v3147
    %v3149 = vpop.f32.mrb[0].mxu0
    %3150 = vmatprep.mubr.f32.mxu0 0.0
    %3151 = vmatmul.mubr.f32.gmra.mrb[0].mxu0 %v3019
    %v3152 = vpop.f32.mrb[0].mxu0
    %v3153 = vadd.f32 0.0, %v3152
    %v3154 = vpop.f32.mrb[0].mxu0
    %3155 = vmatprep.mubr.f32.mxu0 0.0
    %3156 = vmatmul.mubr.f32.gmra.mrb[0].mxu0 %v3022
    %v3157 = vpop.f32.mrb[0].mxu0
    %v3158 = vadd.f32 0.0, %v3157
    %v3159 = vpop.f32.mrb[0].mxu0
    %3160 = vmatprep.mubr.f32.mxu0 0.0
    %3161 = vmatmul.mubr.f32.gmra.mrb[0].mxu0 %v3025
    %v3162 = vpop.f32.mrb[0].mxu0
    %v3163 = vadd.f32 0.0, %v3162
    %v3164 = vpop.f32.mrb[0].mxu0
    %3165 = vmatprep.mubr.f32.mxu0 0.0
    %3166 = vmatmul.mubr.f32.gmra.mrb[0].mxu0 %v3028
    %v3167 = vpop.f32.mrb[0].mxu0
    %v3168 = vadd.f32 0.0, %v3167
    %v3169 = vpop.f32.mrb[0].mxu0
    %3170 = vmatprep.mubr.f32.mxu0 0.0
    %3171 = vmatmul.mubr.f32.gmra.mrb[0].mxu0 %v3031
    %v3172 = vpop.f32.mrb[0].mxu0
    %v3173 = vadd.f32 0.0, %v3172
    %v3174 = vpop.f32.mrb[0].mxu0
    %3175 = vmatprep.mubr.f32.mxu0 0.0
    %3176 = vmatmul.mubr.f32.gmra.mrb[0].mxu0 %v3034
    %v3177 = vpop.f32.mrb[0].mxu0
    %v3178 = vadd.f32 0.0, %v3177
    %v3179 = vpop.f32.mrb[0].mxu0
    %3180 = vdwg.mxu0
    %v3181 = vadd.f32 %v2381, %v3103
    %v3182 = vadd.f32 %v2382, %v3108
    %v3183 = vadd.f32 %v2383, %v3113
    %v3184 = vadd.f32 %v2384, %v3118
    %v3185 = vadd.f32 %v2385, %v3123
    %v3186 = vadd.f32 %v2386, %v3128
    %v3187 = vadd.f32 %v2387, %v3133
    %v3188 = vadd.f32 %v2388, %v3138
    %v3189 = vadd.f32 %v2389, %v3143
    %v3190 = vadd.f32 %v2390, %v3148
    %v3191 = vadd.f32 %v2391, %v3153
    %v3192 = vadd.f32 %v2392, %v3158
    %v3193 = vadd.f32 %v2393, %v3163
    %v3194 = vadd.f32 %v2394, %v3168
    %v3195 = vadd.f32 %v2395, %v3173
    %v3196 = vadd.f32 %v2396, %v3178
    %v3197 = vlaneseq
    %v3198 = vshrl.u32 %v3197, 7
    %v3199 = vsub.s32 5, %v3198
    %v3200 = vrot.slane %v40, %v3199
    %v3201 = vadd.f32 %v3181, %v3200
    %v3202 = vadd.f32 %v3182, %v3200
    %v3203 = vadd.f32 %v3183, %v3200
    %v3204 = vadd.f32 %v3184, %v3200
    %v3205 = vadd.f32 %v3185, %v3200
    %v3206 = vadd.f32 %v3186, %v3200
    %v3207 = vadd.f32 %v3187, %v3200
    %v3208 = vadd.f32 %v3188, %v3200
    %v3209 = vadd.f32 %v3189, %v3200
    %v3210 = vadd.f32 %v3190, %v3200
    %v3211 = vadd.f32 %v3191, %v3200
    %v3212 = vadd.f32 %v3192, %v3200
    %v3213 = vadd.f32 %v3193, %v3200
    %v3214 = vadd.f32 %v3194, %v3200
    %v3215 = vadd.f32 %v3195, %v3200
    %v3216 = vadd.f32 %v3196, %v3200
    %v3217 = vsel %vm561, %v3201, 0.0
    %3218 = vadd.xlane.f32.xlu0 %v3217
    %v3219 = vpop.xlane.xlu0 %3218
    %v3220 = vsel %vm561, %v3202, 0.0
    %3221 = vadd.xlane.f32.xlu0 %v3220
    %v3222 = vpop.xlane.xlu0 %3221
    %v3223 = vsel %vm561, %v3203, 0.0
    %3224 = vadd.xlane.f32.xlu0 %v3223
    %v3225 = vpop.xlane.xlu0 %3224
    %v3226 = vsel %vm561, %v3204, 0.0
    %3227 = vadd.xlane.f32.xlu0 %v3226
    %v3228 = vpop.xlane.xlu0 %3227
    %v3229 = vsel %vm561, %v3205, 0.0
    %3230 = vadd.xlane.f32.xlu0 %v3229
    %v3231 = vpop.xlane.xlu0 %3230
    %v3232 = vsel %vm561, %v3206, 0.0
    %3233 = vadd.xlane.f32.xlu0 %v3232
    %v3234 = vpop.xlane.xlu0 %3233
    %v3235 = vsel %vm561, %v3207, 0.0
    %3236 = vadd.xlane.f32.xlu0 %v3235
    %v3237 = vpop.xlane.xlu0 %3236
    %v3238 = vsel %vm561, %v3208, 0.0
    %3239 = vadd.xlane.f32.xlu0 %v3238
    %v3240 = vpop.xlane.xlu0 %3239
    %v3241 = vsel %vm561, %v3209, 0.0
    %3242 = vadd.xlane.f32.xlu0 %v3241
    %v3243 = vpop.xlane.xlu0 %3242
    %v3244 = vsel %vm561, %v3210, 0.0
    %3245 = vadd.xlane.f32.xlu0 %v3244
    %v3246 = vpop.xlane.xlu0 %3245
    %v3247 = vsel %vm561, %v3211, 0.0
    %3248 = vadd.xlane.f32.xlu0 %v3247
    %v3249 = vpop.xlane.xlu0 %3248
    %v3250 = vsel %vm561, %v3212, 0.0
    %3251 = vadd.xlane.f32.xlu0 %v3250
    %v3252 = vpop.xlane.xlu0 %3251
    %v3253 = vsel %vm561, %v3213, 0.0
    %3254 = vadd.xlane.f32.xlu0 %v3253
    %v3255 = vpop.xlane.xlu0 %3254
    %v3256 = vsel %vm561, %v3214, 0.0
    %3257 = vadd.xlane.f32.xlu0 %v3256
    %v3258 = vpop.xlane.xlu0 %3257
    %v3259 = vsel %vm561, %v3215, 0.0
    %3260 = vadd.xlane.f32.xlu0 %v3259
    %v3261 = vpop.xlane.xlu0 %3260
    %v3262 = vsel %vm561, %v3216, 0.0
    %3263 = vadd.xlane.f32.xlu0 %v3262
    %v3264 = vpop.xlane.xlu0 %3263
    %v3265 = vmul.f32 %v3219, %v1624
    %v3266 = vmul.f32 %v3222, %v1624
    %v3267 = vmul.f32 %v3225, %v1624
    %v3268 = vmul.f32 %v3228, %v1624
    %v3269 = vmul.f32 %v3231, %v1624
    %v3270 = vmul.f32 %v3234, %v1624
    %v3271 = vmul.f32 %v3237, %v1624
    %v3272 = vmul.f32 %v3240, %v1624
    %v3273 = vmul.f32 %v3243, %v1624
    %v3274 = vmul.f32 %v3246, %v1624
    %v3275 = vmul.f32 %v3249, %v1624
    %v3276 = vmul.f32 %v3252, %v1624
    %v3277 = vmul.f32 %v3255, %v1624
    %v3278 = vmul.f32 %v3258, %v1624
    %v3279 = vmul.f32 %v3261, %v1624
    %v3280 = vmul.f32 %v3264, %v1624
    %v3281 = vsub.f32 %v3201, %v3265
    %v3282 = vsub.f32 %v3202, %v3266
    %v3283 = vsub.f32 %v3203, %v3267
    %v3284 = vsub.f32 %v3204, %v3268
    %v3285 = vsub.f32 %v3205, %v3269
    %v3286 = vsub.f32 %v3206, %v3270
    %v3287 = vsub.f32 %v3207, %v3271
    %v3288 = vsub.f32 %v3208, %v3272
    %v3289 = vsub.f32 %v3209, %v3273
    %v3290 = vsub.f32 %v3210, %v3274
    %v3291 = vsub.f32 %v3211, %v3275
    %v3292 = vsub.f32 %v3212, %v3276
    %v3293 = vsub.f32 %v3213, %v3277
    %v3294 = vsub.f32 %v3214, %v3278
    %v3295 = vsub.f32 %v3215, %v3279
    %v3296 = vsub.f32 %v3216, %v3280
    %v3297 = vmul.f32 %v3281, %v3281
    %v3298 = vmul.f32 %v3282, %v3282
    %v3299 = vmul.f32 %v3283, %v3283
    %v3300 = vmul.f32 %v3284, %v3284
    %v3301 = vmul.f32 %v3285, %v3285
    %v3302 = vmul.f32 %v3286, %v3286
    %v3303 = vmul.f32 %v3287, %v3287
    %v3304 = vmul.f32 %v3288, %v3288
    %v3305 = vmul.f32 %v3289, %v3289
    %v3306 = vmul.f32 %v3290, %v3290
    %v3307 = vmul.f32 %v3291, %v3291
    %v3308 = vmul.f32 %v3292, %v3292
    %v3309 = vmul.f32 %v3293, %v3293
    %v3310 = vmul.f32 %v3294, %v3294
    %v3311 = vmul.f32 %v3295, %v3295
    %v3312 = vmul.f32 %v3296, %v3296
    %v3313 = vsel %vm561, %v3297, 0.0
    %3314 = vadd.xlane.f32.xlu0 %v3313
    %v3315 = vpop.xlane.xlu0 %3314
    %v3316 = vsel %vm561, %v3298, 0.0
    %3317 = vadd.xlane.f32.xlu0 %v3316
    %v3318 = vpop.xlane.xlu0 %3317
    %v3319 = vsel %vm561, %v3299, 0.0
    %3320 = vadd.xlane.f32.xlu0 %v3319
    %v3321 = vpop.xlane.xlu0 %3320
    %v3322 = vsel %vm561, %v3300, 0.0
    %3323 = vadd.xlane.f32.xlu0 %v3322
    %v3324 = vpop.xlane.xlu0 %3323
    %v3325 = vsel %vm561, %v3301, 0.0
    %3326 = vadd.xlane.f32.xlu0 %v3325
    %v3327 = vpop.xlane.xlu0 %3326
    %v3328 = vsel %vm561, %v3302, 0.0
    %3329 = vadd.xlane.f32.xlu0 %v3328
    %v3330 = vpop.xlane.xlu0 %3329
    %v3331 = vsel %vm561, %v3303, 0.0
    %3332 = vadd.xlane.f32.xlu0 %v3331
    %v3333 = vpop.xlane.xlu0 %3332
    %v3334 = vsel %vm561, %v3304, 0.0
    %3335 = vadd.xlane.f32.xlu0 %v3334
    %v3336 = vpop.xlane.xlu0 %3335
    %v3337 = vsel %vm561, %v3305, 0.0
    %3338 = vadd.xlane.f32.xlu0 %v3337
    %v3339 = vpop.xlane.xlu0 %3338
    %v3340 = vsel %vm561, %v3306, 0.0
    %3341 = vadd.xlane.f32.xlu0 %v3340
    %v3342 = vpop.xlane.xlu0 %3341
    %v3343 = vsel %vm561, %v3307, 0.0
    %3344 = vadd.xlane.f32.xlu0 %v3343
    %v3345 = vpop.xlane.xlu0 %3344
    %v3346 = vsel %vm561, %v3308, 0.0
    %3347 = vadd.xlane.f32.xlu0 %v3346
    %v3348 = vpop.xlane.xlu0 %3347
    %v3349 = vsel %vm561, %v3309, 0.0
    %3350 = vadd.xlane.f32.xlu0 %v3349
    %v3351 = vpop.xlane.xlu0 %3350
    %v3352 = vsel %vm561, %v3310, 0.0
    %3353 = vadd.xlane.f32.xlu0 %v3352
    %v3354 = vpop.xlane.xlu0 %3353
    %v3355 = vsel %vm561, %v3311, 0.0
    %3356 = vadd.xlane.f32.xlu0 %v3355
    %v3357 = vpop.xlane.xlu0 %3356
    %v3358 = vsel %vm561, %v3312, 0.0
    %3359 = vadd.xlane.f32.xlu0 %v3358
    %v3360 = vpop.xlane.xlu0 %3359
    %v3361 = vmul.f32 %v3315, %v1624
    %v3362 = vmul.f32 %v3318, %v1624
    %v3363 = vmul.f32 %v3321, %v1624
    %v3364 = vmul.f32 %v3324, %v1624
    %v3365 = vmul.f32 %v3327, %v1624
    %v3366 = vmul.f32 %v3330, %v1624
    %v3367 = vmul.f32 %v3333, %v1624
    %v3368 = vmul.f32 %v3336, %v1624
    %v3369 = vmul.f32 %v3339, %v1624
    %v3370 = vmul.f32 %v3342, %v1624
    %v3371 = vmul.f32 %v3345, %v1624
    %v3372 = vmul.f32 %v3348, %v1624
    %v3373 = vmul.f32 %v3351, %v1624
    %v3374 = vmul.f32 %v3354, %v1624
    %v3375 = vmul.f32 %v3357, %v1624
    %v3376 = vmul.f32 %v3360, %v1624
    %v3377 = vadd.f32 %v3361, 1e-06
    %v3378 = vadd.f32 %v3362, 1e-06
    %v3379 = vadd.f32 %v3363, 1e-06
    %v3380 = vadd.f32 %v3364, 1e-06
    %v3381 = vadd.f32 %v3365, 1e-06
    %v3382 = vadd.f32 %v3366, 1e-06
    %v3383 = vadd.f32 %v3367, 1e-06
    %v3384 = vadd.f32 %v3368, 1e-06
    %v3385 = vadd.f32 %v3369, 1e-06
    %v3386 = vadd.f32 %v3370, 1e-06
    %v3387 = vadd.f32 %v3371, 1e-06
    %v3388 = vadd.f32 %v3372, 1e-06
    %v3389 = vadd.f32 %v3373, 1e-06
    %v3390 = vadd.f32 %v3374, 1e-06
    %v3391 = vadd.f32 %v3375, 1e-06
    %v3392 = vadd.f32 %v3376, 1e-06
    %v3393 = vrsqrt.pop %v3377
    %v3394 = vrsqrt.pop %v3378
    %v3395 = vrsqrt.pop %v3379
    %v3396 = vrsqrt.pop %v3380
    %v3397 = vrsqrt.pop %v3381
    %v3398 = vrsqrt.pop %v3382
    %v3399 = vrsqrt.pop %v3383
    %v3400 = vrsqrt.pop %v3384
    %v3401 = vrsqrt.pop %v3385
    %v3402 = vrsqrt.pop %v3386
    %v3403 = vrsqrt.pop %v3387
    %v3404 = vrsqrt.pop %v3388
    %v3405 = vrsqrt.pop %v3389
    %v3406 = vrsqrt.pop %v3390
    %v3407 = vrsqrt.pop %v3391
    %v3408 = vrsqrt.pop %v3392
    %v3409 = vmul.f32 %v3281, %v3393
    %v3410 = vmul.f32 %v3282, %v3394
    %v3411 = vmul.f32 %v3283, %v3395
    %v3412 = vmul.f32 %v3284, %v3396
    %v3413 = vmul.f32 %v3285, %v3397
    %v3414 = vmul.f32 %v3286, %v3398
    %v3415 = vmul.f32 %v3287, %v3399
    %v3416 = vmul.f32 %v3288, %v3400
    %v3417 = vmul.f32 %v3289, %v3401
    %v3418 = vmul.f32 %v3290, %v3402
    %v3419 = vmul.f32 %v3291, %v3403
    %v3420 = vmul.f32 %v3292, %v3404
    %v3421 = vmul.f32 %v3293, %v3405
    %v3422 = vmul.f32 %v3294, %v3406
    %v3423 = vmul.f32 %v3295, %v3407
    %v3424 = vmul.f32 %v3296, %v3408
    %v3425 = vlaneseq
    %v3426 = vshrl.u32 %v3425, 7
    %v3427 = vsub.s32 4, %v3426
    %v3428 = vrot.slane %v39, %v3427
    %v3429 = vmul.f32 %v3409, %v3428
    %v3430 = vmul.f32 %v3410, %v3428
    %v3431 = vmul.f32 %v3411, %v3428
    %v3432 = vmul.f32 %v3412, %v3428
    %v3433 = vmul.f32 %v3413, %v3428
    %v3434 = vmul.f32 %v3414, %v3428
    %v3435 = vmul.f32 %v3415, %v3428
    %v3436 = vmul.f32 %v3416, %v3428
    %v3437 = vmul.f32 %v3417, %v3428
    %v3438 = vmul.f32 %v3418, %v3428
    %v3439 = vmul.f32 %v3419, %v3428
    %v3440 = vmul.f32 %v3420, %v3428
    %v3441 = vmul.f32 %v3421, %v3428
    %v3442 = vmul.f32 %v3422, %v3428
    %v3443 = vmul.f32 %v3423, %v3428
    %v3444 = vmul.f32 %v3424, %v3428
    %v3445 = vlaneseq
    %v3446 = vshrl.u32 %v3445, 7
    %v3447 = vsub.s32 5, %v3446
    %v3448 = vrot.slane %v39, %v3447
    %v3449 = vadd.f32 %v3429, %v3448
    %v3450 = vadd.f32 %v3430, %v3448
    %v3451 = vadd.f32 %v3431, %v3448
    %v3452 = vadd.f32 %v3432, %v3448
    %v3453 = vadd.f32 %v3433, %v3448
    %v3454 = vadd.f32 %v3434, %v3448
    %v3455 = vadd.f32 %v3435, %v3448
    %v3456 = vadd.f32 %v3436, %v3448
    %v3457 = vadd.f32 %v3437, %v3448
    %v3458 = vadd.f32 %v3438, %v3448
    %v3459 = vadd.f32 %v3439, %v3448
    %v3460 = vadd.f32 %v3440, %v3448
    %v3461 = vadd.f32 %v3441, %v3448
    %v3462 = vadd.f32 %v3442, %v3448
    %v3463 = vadd.f32 %v3443, %v3448
    %v3464 = vadd.f32 %v3444, %v3448
    %v3465 = vld [vmem:[%s9] sm:$0xff]
    %v3466 = vld [vmem:[%s9 + $0x8] sm:$0xff]
    %v3467 = vld [vmem:[%s9 + $0x10] sm:$0xff]
    %v3468 = vld [vmem:[%s9 + $0x18] sm:$0xff]
    %v3469 = vld [vmem:[%s9 + $0x20] sm:$0xff]
    %v3470 = vld [vmem:[%s9 + $0x28] sm:$0xff]
    %v3471 = vld [vmem:[%s9 + $0x30] sm:$0xff]
    %v3472 = vld [vmem:[%s9 + $0x38] sm:$0xff]
    %v3473 = vld [vmem:[%s10] sm:$0x1]
    %v3475 = vlaneseq
    %v3476 = vshrl.u32 %v3475, 7
    %v3477 = vsub.s32 0, %v3476
    %v3478 = vrot.slane %v3473, %v3477
    %v3481 = vsel %vm561, %v3449, 0
    %v3484 = vsel %vm561, %v3450, 0
    %v3487 = vsel %vm561, %v3451, 0
    %v3490 = vsel %vm561, %v3452, 0
    %v3493 = vsel %vm561, %v3453, 0
    %v3496 = vsel %vm561, %v3454, 0
    %v3499 = vsel %vm561, %v3455, 0
    %v3502 = vsel %vm561, %v3456, 0
    %v3505 = vsel %vm561, %v3457, 0
    %v3508 = vsel %vm561, %v3458, 0
    %v3511 = vsel %vm561, %v3459, 0
    %v3514 = vsel %vm561, %v3460, 0
    %v3517 = vsel %vm561, %v3461, 0
    %v3520 = vsel %vm561, %v3462, 0
    %v3523 = vsel %vm561, %v3463, 0
    %v3526 = vsel %vm561, %v3464, 0
    %3528 = vmatprep.subr.mxu0 0.0
    %3529 = vmatpush1.msra.mxu0 %v3465
    %3530 = vmatprep.subr.mxu0 0.0
    %3531 = vmatpush1.msra.mxu0 %v3466
    %3532 = vmatprep.subr.mxu0 0.0
    %3533 = vmatpush1.msra.mxu0 %v3467
    %3534 = vmatprep.subr.mxu0 0.0
    %3535 = vmatpush1.msra.mxu0 %v3468
    %3536 = vmatprep.subr.mxu0 0.0
    %3537 = vmatpush1.msra.mxu0 %v3469
    %3538 = vmatprep.subr.mxu0 0.0
    %3539 = vmatpush1.msra.mxu0 %v3470
    %3540 = vmatprep.subr.mxu0 0.0
    %3541 = vmatpush1.msra.mxu0 %v3471
    %3542 = vmatprep.subr.mxu0 0.0
    %3543 = vmatpush1.msra.mxu0 %v3472
    %3544 = vmatprep.subr.mxu0 0.0
    %3545 = vmatpush1.msra.mxu0 0.0
    %3546 = vmatprep.subr.mxu0 0.0
    %3547 = vmatpush1.msra.mxu0 0.0
    %3548 = vmatprep.subr.mxu0 0.0
    %3549 = vmatpush1.msra.mxu0 0.0
    %3550 = vmatprep.subr.mxu0 0.0
    %3551 = vmatpush1.msra.mxu0 0.0
    %3552 = vmatprep.subr.mxu0 0.0
    %3553 = vmatpush1.msra.mxu0 0.0
    %3554 = vmatprep.subr.mxu0 0.0
    %3555 = vmatpush1.msra.mxu0 0.0
    %3556 = vmatprep.subr.mxu0 0.0
    %3557 = vmatpush1.msra.mxu0 0.0
    %3558 = vmatprep.subr.mxu0 0.0
    %3559 = vmatpush1.msra.mxu0 0.0
    %3560 = vmatprep.subr.mxu0 0.0
    %3561 = vmatpush1.msra.mxu0 0.0
    %3562 = vmatprep.subr.mxu0 0.0
    %3563 = vmatpush1.msra.mxu0 0.0
    %3564 = vmatprep.subr.mxu0 0.0
    %3565 = vmatpush1.msra.mxu0 0.0
    %3566 = vmatprep.subr.mxu0 0.0
    %3567 = vmatpush1.msra.mxu0 0.0
    %3568 = vmatprep.subr.mxu0 0.0
    %3569 = vmatpush1.msra.mxu0 0.0
    %3570 = vmatprep.subr.mxu0 0.0
    %3571 = vmatpush1.msra.mxu0 0.0
    %3572 = vmatprep.subr.mxu0 0.0
    %3573 = vmatpush1.msra.mxu0 0.0
    %3574 = vmatprep.subr.mxu0 0.0
    %3575 = vmatpush1.msra.mxu0 0.0
    %3576 = vmatprep.subr.mxu0 0.0
    %3577 = vmatpush1.msra.mxu0 0.0
    %3578 = vmatprep.subr.mxu0 0.0
    %3579 = vmatpush1.msra.mxu0 0.0
    %3580 = vmatprep.subr.mxu0 0.0
    %3581 = vmatpush1.msra.mxu0 0.0
    %3582 = vmatprep.subr.mxu0 0.0
    %3583 = vmatpush1.msra.mxu0 0.0
    %3584 = vmatprep.subr.mxu0 0.0
    %3585 = vmatpush1.msra.mxu0 0.0
    %3586 = vmatprep.subr.mxu0 0.0
    %3587 = vmatpush1.msra.mxu0 0.0
    %3588 = vmatprep.subr.mxu0 0.0
    %3589 = vmatpush1.msra.mxu0 0.0
    %3590 = vmatprep.subr.mxu0 0.0
    %3591 = vmatpush1.msra.mxu0 0.0
    %3592 = vmatprep.mubr.f32.mxu0 0.0
    %3593 = vmatmul.mubr.f32.gmra.mrb[0].mxu0 %v3481
    %v3594 = vpop.f32.mrb[0].mxu0
    %v3595 = vadd.f32 %v3478, %v3594
    %v3596 = vpop.f32.mrb[0].mxu0
    %3597 = vmatprep.mubr.f32.mxu0 0.0
    %3598 = vmatmul.mubr.f32.gmra.mrb[0].mxu0 %v3484
    %v3599 = vpop.f32.mrb[0].mxu0
    %v3600 = vadd.f32 %v3478, %v3599
    %v3601 = vpop.f32.mrb[0].mxu0
    %3602 = vmatprep.mubr.f32.mxu0 0.0
    %3603 = vmatmul.mubr.f32.gmra.mrb[0].mxu0 %v3487
    %v3604 = vpop.f32.mrb[0].mxu0
    %v3605 = vadd.f32 %v3478, %v3604
    %v3606 = vpop.f32.mrb[0].mxu0
    %3607 = vmatprep.mubr.f32.mxu0 0.0
    %3608 = vmatmul.mubr.f32.gmra.mrb[0].mxu0 %v3490
    %v3609 = vpop.f32.mrb[0].mxu0
    %v3610 = vadd.f32 %v3478, %v3609
    %v3611 = vpop.f32.mrb[0].mxu0
    %3612 = vmatprep.mubr.f32.mxu0 0.0
    %3613 = vmatmul.mubr.f32.gmra.mrb[0].mxu0 %v3493
    %v3614 = vpop.f32.mrb[0].mxu0
    %v3615 = vadd.f32 %v3478, %v3614
    %v3616 = vpop.f32.mrb[0].mxu0
    %3617 = vmatprep.mubr.f32.mxu0 0.0
    %3618 = vmatmul.mubr.f32.gmra.mrb[0].mxu0 %v3496
    %v3619 = vpop.f32.mrb[0].mxu0
    %v3620 = vadd.f32 %v3478, %v3619
    %v3621 = vpop.f32.mrb[0].mxu0
    %3622 = vmatprep.mubr.f32.mxu0 0.0
    %3623 = vmatmul.mubr.f32.gmra.mrb[0].mxu0 %v3499
    %v3624 = vpop.f32.mrb[0].mxu0
    %v3625 = vadd.f32 %v3478, %v3624
    %v3626 = vpop.f32.mrb[0].mxu0
    %3627 = vmatprep.mubr.f32.mxu0 0.0
    %3628 = vmatmul.mubr.f32.gmra.mrb[0].mxu0 %v3502
    %v3629 = vpop.f32.mrb[0].mxu0
    %v3630 = vadd.f32 %v3478, %v3629
    %v3631 = vpop.f32.mrb[0].mxu0
    %3632 = vmatprep.mubr.f32.mxu0 0.0
    %3633 = vmatmul.mubr.f32.gmra.mrb[0].mxu0 %v3505
    %v3634 = vpop.f32.mrb[0].mxu0
    %v3635 = vadd.f32 %v3478, %v3634
    %v3636 = vpop.f32.mrb[0].mxu0
    %3637 = vmatprep.mubr.f32.mxu0 0.0
    %3638 = vmatmul.mubr.f32.gmra.mrb[0].mxu0 %v3508
    %v3639 = vpop.f32.mrb[0].mxu0
    %v3640 = vadd.f32 %v3478, %v3639
    %v3641 = vpop.f32.mrb[0].mxu0
    %3642 = vmatprep.mubr.f32.mxu0 0.0
    %3643 = vmatmul.mubr.f32.gmra.mrb[0].mxu0 %v3511
    %v3644 = vpop.f32.mrb[0].mxu0
    %v3645 = vadd.f32 %v3478, %v3644
    %v3646 = vpop.f32.mrb[0].mxu0
    %3647 = vmatprep.mubr.f32.mxu0 0.0
    %3648 = vmatmul.mubr.f32.gmra.mrb[0].mxu0 %v3514
    %v3649 = vpop.f32.mrb[0].mxu0
    %v3650 = vadd.f32 %v3478, %v3649
    %v3651 = vpop.f32.mrb[0].mxu0
    %3652 = vmatprep.mubr.f32.mxu0 0.0
    %3653 = vmatmul.mubr.f32.gmra.mrb[0].mxu0 %v3517
    %v3654 = vpop.f32.mrb[0].mxu0
    %v3655 = vadd.f32 %v3478, %v3654
    %v3656 = vpop.f32.mrb[0].mxu0
    %3657 = vmatprep.mubr.f32.mxu0 0.0
    %3658 = vmatmul.mubr.f32.gmra.mrb[0].mxu0 %v3520
    %v3659 = vpop.f32.mrb[0].mxu0
    %v3660 = vadd.f32 %v3478, %v3659
    %v3661 = vpop.f32.mrb[0].mxu0
    %3662 = vmatprep.mubr.f32.mxu0 0.0
    %3663 = vmatmul.mubr.f32.gmra.mrb[0].mxu0 %v3523
    %v3664 = vpop.f32.mrb[0].mxu0
    %v3665 = vadd.f32 %v3478, %v3664
    %v3666 = vpop.f32.mrb[0].mxu0
    %3667 = vmatprep.mubr.f32.mxu0 0.0
    %3668 = vmatmul.mubr.f32.gmra.mrb[0].mxu0 %v3526
    %v3669 = vpop.f32.mrb[0].mxu0
    %v3670 = vadd.f32 %v3478, %v3669
    %v3671 = vpop.f32.mrb[0].mxu0
    %3672 = vdwg.mxu0
    %v3673 = vsub.f32 %v3595, %v69
    %v3674 = vsub.f32 %v3600, %v70
    %v3675 = vsub.f32 %v3605, %v71
    %v3676 = vsub.f32 %v3610, %v72
    %v3677 = vsub.f32 %v3615, %v73
    %v3678 = vsub.f32 %v3620, %v74
    %v3679 = vsub.f32 %v3625, %v75
    %v3680 = vsub.f32 %v3630, %v76
    %v3681 = vsub.f32 %v3635, %v77
    %v3682 = vsub.f32 %v3640, %v78
    %v3683 = vsub.f32 %v3645, %v79
    %v3684 = vsub.f32 %v3650, %v80
    %v3685 = vsub.f32 %v3655, %v81
    %v3686 = vsub.f32 %v3660, %v82
    %v3687 = vsub.f32 %v3665, %v83
    %v3688 = vsub.f32 %v3670, %v84
    %v3689 = vmul.f32 %v3673, %v3673
    %v3690 = vmul.f32 %v3674, %v3674
    %v3691 = vmul.f32 %v3675, %v3675
    %v3692 = vmul.f32 %v3676, %v3676
    %v3693 = vmul.f32 %v3677, %v3677
    %v3694 = vmul.f32 %v3678, %v3678
    %v3695 = vmul.f32 %v3679, %v3679
    %v3696 = vmul.f32 %v3680, %v3680
    %v3697 = vmul.f32 %v3681, %v3681
    %v3698 = vmul.f32 %v3682, %v3682
    %v3699 = vmul.f32 %v3683, %v3683
    %v3700 = vmul.f32 %v3684, %v3684
    %v3701 = vmul.f32 %v3685, %v3685
    %v3702 = vmul.f32 %v3686, %v3686
    %v3703 = vmul.f32 %v3687, %v3687
    %v3704 = vmul.f32 %v3688, %v3688
    %v3705 = vsel %vm1266, %v3689, 0.0
    %3706 = vadd.xlane.f32.xlu0 %v3705
    %v3707 = vpop.xlane.xlu0 %3706
    %v3708 = vsel %vm1266, %v3690, 0.0
    %3709 = vadd.xlane.f32.xlu0 %v3708
    %v3710 = vpop.xlane.xlu0 %3709
    %v3711 = vsel %vm1266, %v3691, 0.0
    %3712 = vadd.xlane.f32.xlu0 %v3711
    %v3713 = vpop.xlane.xlu0 %3712
    %v3714 = vsel %vm1266, %v3692, 0.0
    %3715 = vadd.xlane.f32.xlu0 %v3714
    %v3716 = vpop.xlane.xlu0 %3715
    %v3717 = vsel %vm1266, %v3693, 0.0
    %3718 = vadd.xlane.f32.xlu0 %v3717
    %v3719 = vpop.xlane.xlu0 %3718
    %v3720 = vsel %vm1266, %v3694, 0.0
    %3721 = vadd.xlane.f32.xlu0 %v3720
    %v3722 = vpop.xlane.xlu0 %3721
    %v3723 = vsel %vm1266, %v3695, 0.0
    %3724 = vadd.xlane.f32.xlu0 %v3723
    %v3725 = vpop.xlane.xlu0 %3724
    %v3726 = vsel %vm1266, %v3696, 0.0
    %3727 = vadd.xlane.f32.xlu0 %v3726
    %v3728 = vpop.xlane.xlu0 %3727
    %v3729 = vsel %vm1266, %v3697, 0.0
    %3730 = vadd.xlane.f32.xlu0 %v3729
    %v3731 = vpop.xlane.xlu0 %3730
    %v3732 = vsel %vm1266, %v3698, 0.0
    %3733 = vadd.xlane.f32.xlu0 %v3732
    %v3734 = vpop.xlane.xlu0 %3733
    %v3735 = vsel %vm1266, %v3699, 0.0
    %3736 = vadd.xlane.f32.xlu0 %v3735
    %v3737 = vpop.xlane.xlu0 %3736
    %v3738 = vsel %vm1266, %v3700, 0.0
    %3739 = vadd.xlane.f32.xlu0 %v3738
    %v3740 = vpop.xlane.xlu0 %3739
    %v3741 = vsel %vm1266, %v3701, 0.0
    %3742 = vadd.xlane.f32.xlu0 %v3741
    %v3743 = vpop.xlane.xlu0 %3742
    %v3744 = vsel %vm1266, %v3702, 0.0
    %3745 = vadd.xlane.f32.xlu0 %v3744
    %v3746 = vpop.xlane.xlu0 %3745
    %v3747 = vsel %vm1266, %v3703, 0.0
    %3748 = vadd.xlane.f32.xlu0 %v3747
    %v3749 = vpop.xlane.xlu0 %3748
    %v3750 = vsel %vm1266, %v3704, 0.0
    %3751 = vadd.xlane.f32.xlu0 %v3750
    %v3752 = vpop.xlane.xlu0 %3751
    %v3753 = vmul.f32 %v3707, 0.05
    %v3754 = vmul.f32 %v3710, 0.05
    %v3755 = vmul.f32 %v3713, 0.05
    %v3756 = vmul.f32 %v3716, 0.05
    %v3757 = vmul.f32 %v3719, 0.05
    %v3758 = vmul.f32 %v3722, 0.05
    %v3759 = vmul.f32 %v3725, 0.05
    %v3760 = vmul.f32 %v3728, 0.05
    %v3761 = vmul.f32 %v3731, 0.05
    %v3762 = vmul.f32 %v3734, 0.05
    %v3763 = vmul.f32 %v3737, 0.05
    %v3764 = vmul.f32 %v3740, 0.05
    %v3765 = vmul.f32 %v3743, 0.05
    %v3766 = vmul.f32 %v3746, 0.05
    %v3767 = vmul.f32 %v3749, 0.05
    %v3768 = vmul.f32 %v3752, 0.05
    %v3769 = vmul.f32 %v3753, %v49
    %v3770 = vmul.f32 %v3754, %v50
    %v3771 = vmul.f32 %v3755, %v51
    %v3772 = vmul.f32 %v3756, %v52
    %v3773 = vmul.f32 %v3757, %v49
    %v3774 = vmul.f32 %v3758, %v50
    %v3775 = vmul.f32 %v3759, %v51
    %v3776 = vmul.f32 %v3760, %v52
    %v3777 = vmul.f32 %v3761, %v49
    %v3778 = vmul.f32 %v3762, %v50
    %v3779 = vmul.f32 %v3763, %v51
    %v3780 = vmul.f32 %v3764, %v52
    %v3781 = vmul.f32 %v3765, %v49
    %v3782 = vmul.f32 %v3766, %v50
    %v3783 = vmul.f32 %v3767, %v51
    %v3784 = vmul.f32 %v3768, %v52
    %vm3785 = vcmask 7168
    %v3786 = vsel %vm3785, %v3769, 0.0
    %v3787 = vsel %vm3785, %v3770, 0.0
    %v3788 = vadd.f32 %v3786, %v3787
    %v3789 = vsel %vm3785, %v3771, 0.0
    %v3790 = vadd.f32 %v3788, %v3789
    %v3791 = vsel %vm3785, %v3772, 0.0
    %v3792 = vadd.f32 %v3790, %v3791
    %v3793 = vsel %vm3785, %v3773, 0.0
    %v3794 = vadd.f32 %v3792, %v3793
    %v3795 = vsel %vm3785, %v3774, 0.0
    %v3796 = vadd.f32 %v3794, %v3795
    %v3797 = vsel %vm3785, %v3775, 0.0
    %v3798 = vadd.f32 %v3796, %v3797
    %v3799 = vsel %vm3785, %v3776, 0.0
    %v3800 = vadd.f32 %v3798, %v3799
    %v3801 = vsel %vm3785, %v3777, 0.0
    %v3802 = vadd.f32 %v3800, %v3801
    %v3803 = vsel %vm3785, %v3778, 0.0
    %v3804 = vadd.f32 %v3802, %v3803
    %v3805 = vsel %vm3785, %v3779, 0.0
    %v3806 = vadd.f32 %v3804, %v3805
    %v3807 = vsel %vm3785, %v3780, 0.0
    %v3808 = vadd.f32 %v3806, %v3807
    %v3809 = vsel %vm3785, %v3781, 0.0
    %v3810 = vadd.f32 %v3808, %v3809
    %v3811 = vsel %vm3785, %v3782, 0.0
    %v3812 = vadd.f32 %v3810, %v3811
    %v3813 = vsel %vm3785, %v3783, 0.0
    %v3814 = vadd.f32 %v3812, %v3813
    %v3815 = vsel %vm3785, %v3784, 0.0
    %v3816 = vadd.f32 %v3814, %v3815
    %3817 = vadd.xlane.f32.xlu0 %v3816
    %v3818 = vpop.xlane.xlu0 %3817
    %v3819 = vrot.slane %v3818, 4
    %v3820 = vadd.f32 %v3818, %v3819
    %v3821 = vrot.slane %v3820, 2
    %v3822 = vadd.f32 %v3820, %v3821
    %v3823 = vrot.slane %v3822, 1
    %v3824 = vadd.f32 %v3822, %v3823
    %s3825 = vtos %v3824
    %v3826 = vsel %vm3785, %v49, 0.0
    %v3827 = vsel %vm3785, %v50, 0.0
    %v3828 = vadd.f32 %v3826, %v3827
    %v3829 = vsel %vm3785, %v51, 0.0
    %v3830 = vadd.f32 %v3828, %v3829
    %v3831 = vsel %vm3785, %v52, 0.0
    %v3832 = vadd.f32 %v3830, %v3831
    %v3833 = vadd.f32 %v3832, %v3826
    %v3834 = vadd.f32 %v3833, %v3827
    %v3835 = vadd.f32 %v3834, %v3829
    %v3836 = vadd.f32 %v3835, %v3831
    %v3837 = vadd.f32 %v3836, %v3826
    %v3838 = vadd.f32 %v3837, %v3827
    %v3839 = vadd.f32 %v3838, %v3829
    %v3840 = vadd.f32 %v3839, %v3831
    %v3841 = vadd.f32 %v3840, %v3826
    %v3842 = vadd.f32 %v3841, %v3827
    %v3843 = vadd.f32 %v3842, %v3829
    %v3844 = vadd.f32 %v3843, %v3831
    %3845 = vadd.xlane.f32.xlu0 %v3844
    %v3846 = vpop.xlane.xlu0 %3845
    %v3847 = vrot.slane %v3846, 4
    %v3848 = vadd.f32 %v3846, %v3847
    %v3849 = vrot.slane %v3848, 2
    %v3850 = vadd.f32 %v3848, %v3849
    %v3851 = vrot.slane %v3850, 1
    %v3852 = vadd.f32 %v3850, %v3851
    %s3853 = vtos %v3852
    %v3854 = vstv %s3853
    %v3855 = vrcp.pop %v3854
    %s3856 = vtos %v3855
    %s3857 = smul.f32 %s3825, %s3856
    %v3858 = vstv %s3857
    %vm3859 = vcmask 0
    %3860 = vst.msk [vmem:[#allocation2] sm:$0x1] %vm3859, %v3858
    // Predicated region
    $region46: #{cpgg_forward.7} parent=1 // pred_check
      _
    $region47: #{cpgg_forward.7} parent=1 // pred_check_branch
      %3862 = sbr.rel (0) target = $region49
    $region48: #{cpgg_forward.7} parent=1 // pred_region
      %s3864 = ssub.s32 16, 16
      %3865 = vsyncadd [#allocation3], %s3864
      %s3867 = sshll.u32 [#allocation2], 4
      %s3868 = int_to_ptr.vmem [resolvable:$true] %s3867
      %3870 = dma.vmem_to_hbm [thread:$0]  %s3868, 16, %s11, [#allocation3]
    $region49: #{cpgg_forward.7} parent=1 // pred_fallthru
      _
    // Predicated region
    $region50: #{cpgg_forward.7} parent=1 // pred_check
      _
    $region51: #{cpgg_forward.7} parent=1 // pred_check_branch
      %3872 = sbr.rel (0) target = $region53
    $region52: #{cpgg_forward.7} parent=1 // pred_region
      %3873 = dma.done [#allocation3], 16
    $region53: #{cpgg_forward.7} parent=1 // pred_fallthru
      _
    %3874 = vsyncpa [#allocation3], 1

</llo_original>
